<compile_context>
chip_gen: v6e
topology: v6e:2x2x1
jax: 0.10.0
libtpu: 0.0.40
codegen_flags: <defaults>
</compile_context>

<pallas_src>
import functools
import math

import jax
import jax.numpy as jnp
from jax.experimental import pallas as pl
from jax.experimental.pallas import tpu as pltpu


def _round_up(x, m):
    return (x + m - 1) // m * m


def _postnet_kernel(*refs, n_layers, ksize, t_tile, halo, t_real):
    """Fused Postnet forward for one (batch, time-tile) grid cell.

    refs layout:
      refs[0]                      : x_ref (L, C0p) bf16,  L = t_tile + 2*halo
      refs[1 + 2*i], refs[2 + 2*i] : w_i (K, Cin_p, Cout_p) bf16, b_i (1, Cout_p) f32
                                     (inference BatchNorm already folded in)
      refs[1 + 2*n_layers]         : o_ref (t_tile, C_lastp) f32
      refs[2 + 2*n_layers:]        : buf_a, buf_b  (L - 2*pad, Ep) bf16 scratch

    Buffer row r of the layer-l activation corresponds to global time position
      p = tile_idx * t_tile - halo + l*pad + r,
    so conv tap k of the next layer is simply rows [k, k + out_len) of the
    previous buffer: no rolls, all stores start at row 0 (sublane aligned).
    """
    x_ref = refs[0]
    w_refs = [refs[1 + 2 * i] for i in range(n_layers)]
    b_refs = [refs[2 + 2 * i] for i in range(n_layers)]
    o_ref = refs[1 + 2 * n_layers]
    buf_a = refs[2 + 2 * n_layers]
    buf_b = refs[3 + 2 * n_layers]

    pad = (ksize - 1) // 2
    L = x_ref.shape[0]
    # Global time position of row 0 of the input window.
    g0 = pl.program_id(1) * t_tile - halo

    def conv(src_ref, w_ref, b_ref, out_len):
        # 'same' zero-padded cross-correlation == PyTorch Conv1d, channels-last.
        acc = jnp.zeros((out_len, w_ref.shape[2]), jnp.float32)
        for k in range(ksize):                      # static, unrolled (K = 5)
            xk = src_ref[k:k + out_len, :]          # bf16 tap slice (static offset)
            acc = acc + jnp.dot(xk, w_ref[k],       # bf16 x bf16 -> f32 MXU
                                preferred_element_type=jnp.float32)
        return acc + b_ref[...]                     # (1, Cout) folded-BN bias

    bufs = (buf_a, buf_b)
    src = x_ref
    for i in range(n_layers - 1):
        out_len = L - 2 * pad * (i + 1)
        y = jnp.tanh(conv(src, w_refs[i], b_refs[i], out_len))
        # The PyTorch module zero-pads *every* layer at the global sequence
        # boundaries; halo rows outside [0, T) must be zeroed before the next
        # layer (a conv over zeros still yields tanh(bias) != 0).
        p = g0 + pad * (i + 1) + jax.lax.broadcasted_iota(
            jnp.int32, (out_len, 1), 0)
        y = jnp.where((p >= 0) & (p < t_real), y, 0.0)
        # TODO(synk): training-mode dropout(p=0.5) omitted (eval forward); could
        # be added with pltpu.prng_seed + pltpu.stateful_bernoulli masking.
        dst = bufs[i % 2]
        dst[0:out_len, :] = y.astype(dst.dtype)     # bf16 scratch, row-0 aligned
        src = dst

    # Last layer: conv + folded BN, no tanh; out_len == t_tile (full block store).
    o_ref[...] = conv(src, w_refs[-1], b_refs[-1],
                      o_ref.shape[0]).astype(o_ref.dtype)


def postnet_forward(x, ws, bs, *, t_tile=256):
    """x: (B, C0, T) f32 (PyTorch layout); ws[i]: (K, Cin_i, Cout_i) f32 with
    inference BatchNorm folded in; bs[i]: (Cout_i,) f32.

    Returns (B, C_last, T) f32 — the fused Postnet forward (inference mode).
    """
    B, C0, T = x.shape
    n_layers = len(ws)
    assert n_layers >= 2, "Postnet has at least a first and a last convolution"
    K = ws[0].shape[0]
    pad = (K - 1) // 2
    halo = pad * n_layers

    E = ws[0].shape[2]                 # postnet_embedding_dim
    C_last = ws[-1].shape[2]

    # Pad channel dims to multiples of 128 (lane-dense stores, full MXU tiles).
    def lane_pad(c):
        return _round_up(max(c, 128), 128)

    C0p, Ep, C_lastp = lane_pad(C0), lane_pad(E), lane_pad(C_last)
    cins = [C0] + [E] * (n_layers - 1)
    couts = [E] * (n_layers - 1) + [C_last]
    cins_p = [C0p] + [Ep] * (n_layers - 1)
    couts_p = [Ep] * (n_layers - 1) + [C_lastp]

    wps, bps = [], []
    for w, b, cin, cout, cinp, coutp in zip(ws, bs, cins, couts, cins_p, couts_p):
        b = jnp.reshape(b, (-1,))
        wp = jnp.zeros((K, cinp, coutp), jnp.bfloat16)
        wp = wp.at[:, :cin, :cout].set(w.astype(jnp.bfloat16))
        bp = jnp.zeros((1, coutp), jnp.float32)
        bp = bp.at[:, :cout].set(b.astype(jnp.float32))
        wps.append(wp)
        bps.append(bp)

    # Time tiling with halo so both TensorCores get work even when B == 1.
    n_t = max(1, -(-T // t_tile))
    TT = _round_up(-(-T // n_t), 8)
    Tp = n_t * TT
    L = TT + 2 * halo

    # Channels-last, bf16, overlapping time windows: (B, n_t, L, C0p).
    x_btc = jnp.transpose(x, (0, 2, 1)).astype(jnp.bfloat16)
    x_padded = jnp.pad(x_btc, ((0, 0), (halo, Tp - T + halo), (0, C0p - C0)))
    win_idx = (jnp.arange(n_t) * TT)[:, None] + jnp.arange(L)[None, :]
    x_win = x_padded[:, win_idx, :]                 # (B, n_t, L, C0p)

    args = [x_win]
    for wp, bp in zip(wps, bps):
        args.append(wp)
        args.append(bp)

    kernel = functools.partial(_postnet_kernel, n_layers=n_layers, ksize=K,
                               t_tile=TT, halo=halo, t_real=T)

    # VMEM budget: single-buffered weights/biases + 2 bf16 scratch buffers +
    # double-buffered input/output tiles, with headroom.
    weight_bytes = sum(int(w.size) * 2 + int(b.size) * 4 for w, b in zip(wps, bps))
    scratch_bytes = 2 * (L - 2 * pad) * Ep * 2
    io_bytes = 2 * (L * C0p * 2 + TT * C_lastp * 4)
    vmem_limit = int(min(2 * (weight_bytes + scratch_bytes + io_bytes)
                         + (16 << 20), 100 << 20))

    flops = 2 * K * B * Tp * (C0p * Ep + (n_layers - 2) * Ep * Ep + Ep * C_lastp)
    cost = pl.CostEstimate(
        flops=int(flops),
        transcendentals=int((n_layers - 1) * B * Tp * Ep),
        bytes_accessed=int(weight_bytes + int(x_win.size) * 2
                           + B * Tp * C_lastp * 4))

    def _call(single_buffer):
        def rep_spec(shape, imap):
            # Weights/biases are identical for every grid cell -> single-buffer.
            if single_buffer:
                return pl.BlockSpec(shape, imap, pipeline_mode=pl.Buffered(1))
            return pl.BlockSpec(shape, imap)

        in_specs = [pl.BlockSpec((None, None, L, C0p), lambda b, t: (b, t, 0, 0))]
        for wp, bp in zip(wps, bps):
            in_specs.append(rep_spec(wp.shape, lambda b, t: (0, 0, 0)))
            in_specs.append(rep_spec(bp.shape, lambda b, t: (0, 0)))

        return pl.pallas_call(
            kernel,
            out_shape=jax.ShapeDtypeStruct((B, Tp, C_lastp), jnp.float32),
            grid_spec=pltpu.PrefetchScalarGridSpec(
                num_scalar_prefetch=0,
                grid=(B, n_t),
                in_specs=in_specs,
                out_specs=pl.BlockSpec((None, TT, C_lastp), lambda b, t: (b, t, 0)),
                scratch_shapes=[pltpu.VMEM((L - 2 * pad, Ep), jnp.bfloat16),
                                pltpu.VMEM((L - 2 * pad, Ep), jnp.bfloat16)],
            ),
            compiler_params=pltpu.CompilerParams(
                dimension_semantics=("parallel", "parallel"),
                vmem_limit_bytes=vmem_limit,
            ),
            cost_estimate=cost,
        )(*args)

    try:
        out_btc = _call(single_buffer=hasattr(pl, "Buffered"))
    except Exception:
        # Fallback for Pallas builds that reject pipeline_mode=pl.Buffered(1).
        out_btc = _call(single_buffer=False)

    return jnp.transpose(out_btc[:, :T, :C_last], (0, 2, 1))


def init_postnet_params(key, n_mel_channels, postnet_embedding_dim,
                        postnet_kernel_size, postnet_n_convolutions):
    """Mimics ConvNorm (xavier_uniform, tanh/linear gain) + BatchNorm1d stats."""
    dims = ([(n_mel_channels, postnet_embedding_dim)]
            + [(postnet_embedding_dim, postnet_embedding_dim)]
            * (postnet_n_convolutions - 2)
            + [(postnet_embedding_dim, n_mel_channels)])
    gains = [5.0 / 3.0] * (postnet_n_convolutions - 1) + [1.0]   # tanh ... linear
    layers = []
    for (cin, cout), gain in zip(dims, gains):
        key, kw, kb, kg, kbe, km, kv = jax.random.split(key, 7)
        fan_in = cin * postnet_kernel_size
        fan_out = cout * postnet_kernel_size
        w_bound = gain * math.sqrt(6.0 / (fan_in + fan_out))
        w = jax.random.uniform(kw, (cout, cin, postnet_kernel_size),
                               jnp.float32, -w_bound, w_bound)
        b_bound = 1.0 / math.sqrt(fan_in)
        b = jax.random.uniform(kb, (cout,), jnp.float32, -b_bound, b_bound)
        layers.append(dict(
            w=w, b=b,
            gamma=jax.random.uniform(kg, (cout,), jnp.float32, 0.5, 1.5),
            beta=0.1 * jax.random.normal(kbe, (cout,), jnp.float32),
            mean=0.1 * jax.random.normal(km, (cout,), jnp.float32),
            var=jax.random.uniform(kv, (cout,), jnp.float32, 0.5, 1.5),
        ))
    return layers


def fold_bn_into_conv(layers, eps=1e-5):
    """Fold inference BatchNorm into conv weight/bias; convert to (K, Cin, Cout)."""
    ws, bs = [], []
    for p in layers:
        scale = p["gamma"] / jnp.sqrt(p["var"] + eps)              # (Cout,)
        w_f = p["w"] * scale[:, None, None]                        # (Cout, Cin, K)
        b_f = (p["b"] - p["mean"]) * scale + p["beta"]             # (Cout,)
        ws.append(jnp.transpose(w_f, (2, 1, 0)))                   # (K, Cin, Cout)
        bs.append(b_f)
    return ws, bs


def postnet_reference(x, layers, eps=1e-5):
    """Plain-XLA reference: Conv1d + BatchNorm1d (eval) + tanh (all but last)."""
    n = len(layers)
    pad = (layers[0]["w"].shape[-1] - 1) // 2
    y = x
    for i, p in enumerate(layers):
        y = jax.lax.conv_general_dilated(
            y, p["w"], window_strides=(1,), padding=[(pad, pad)],
            dimension_numbers=("NCH", "OIH", "NCH"))
        y = y + p["b"][None, :, None]
        scale = p["gamma"] / jnp.sqrt(p["var"] + eps)
        y = (y - p["mean"][None, :, None]) * scale[None, :, None] \
            + p["beta"][None, :, None]
        if i < n - 1:
            y = jnp.tanh(y)
        # eval-mode dropout == identity
    return y


if __name__ == "__main__":
    # Small hparams consistent with the module (production: 80 mels, 512 emb).
    n_mel_channels = 16
    postnet_embedding_dim = 32
    postnet_kernel_size = 5
    postnet_n_convolutions = 5
    B, T = 2, 30                       # T deliberately not a multiple of 8

    key = jax.random.PRNGKey(0)
    key, kx = jax.random.split(key)
    x = jax.random.normal(kx, (B, n_mel_channels, T), jnp.float32)

    layers = init_postnet_params(key, n_mel_channels, postnet_embedding_dim,
                                 postnet_kernel_size, postnet_n_convolutions)
    ws, bs = fold_bn_into_conv(layers)

    # Small t_tile so the test exercises the halo-tiled time axis (n_t == 2),
    # an interior tile boundary, and the right-boundary mask at T not % 8.
    out = postnet_forward(x, ws, bs, t_tile=16)
    out = jax.block_until_ready(out)

    ref = postnet_reference(x, layers)
    assert out.shape == (B, n_mel_channels, T)
    max_err = float(jnp.max(jnp.abs(out - ref)))
    scale = float(jnp.max(jnp.abs(ref)))
    # bf16 MXU operands vs f32 reference -> tolerance scaled to output magnitude
    # (still far below the O(scale) errors a halo / shift / mask bug produces).
    assert max_err < 5e-2 * max(1.0, scale) + 2e-2, (max_err, scale)

    print("KERNEL_OK")
</pallas_src>

<mosaic_0001>
module attributes {stable_mosaic.version = 11 : i64} {
  func.func @_postnet_kernel(%arg0: i32, %arg1: i32, %arg2: memref<1x1x36x128xbf16, #tpu.memory_space<vmem>>, %arg3: memref<5x128x128xbf16, #tpu.memory_space<vmem>>, %arg4: memref<1x128xf32, #tpu.memory_space<vmem>>, %arg5: memref<5x128x128xbf16, #tpu.memory_space<vmem>>, %arg6: memref<1x128xf32, #tpu.memory_space<vmem>>, %arg7: memref<5x128x128xbf16, #tpu.memory_space<vmem>>, %arg8: memref<1x128xf32, #tpu.memory_space<vmem>>, %arg9: memref<5x128x128xbf16, #tpu.memory_space<vmem>>, %arg10: memref<1x128xf32, #tpu.memory_space<vmem>>, %arg11: memref<5x128x128xbf16, #tpu.memory_space<vmem>>, %arg12: memref<1x128xf32, #tpu.memory_space<vmem>>, %arg13: memref<1x16x128xf32, #tpu.memory_space<vmem>>, %arg14: memref<32x128xbf16, #tpu.memory_space<vmem>>, %arg15: memref<32x128xbf16, #tpu.memory_space<vmem>>) attributes {dimension_semantics = [#tpu.dimension_semantics<parallel>, #tpu.dimension_semantics<parallel>], iteration_bounds = array<i64: 2, 2>, scalar_prefetch = 0 : i64, scratch_operands = 2 : i64, tpu.core_type = #tpu.core_type<tc>, window_params = [{transform_indices = @transform_0, window_bounds = array<i64: 1, 1, 36, 128>}, {pipeline_mode = #tpu.pipeline_mode<synchronous>, transform_indices = @transform_1, window_bounds = array<i64: 5, 128, 128>}, {pipeline_mode = #tpu.pipeline_mode<synchronous>, transform_indices = @transform_2, window_bounds = array<i64: 1, 128>}, {pipeline_mode = #tpu.pipeline_mode<synchronous>, transform_indices = @transform_3, window_bounds = array<i64: 5, 128, 128>}, {pipeline_mode = #tpu.pipeline_mode<synchronous>, transform_indices = @transform_4, window_bounds = array<i64: 1, 128>}, {pipeline_mode = #tpu.pipeline_mode<synchronous>, transform_indices = @transform_5, window_bounds = array<i64: 5, 128, 128>}, {pipeline_mode = #tpu.pipeline_mode<synchronous>, transform_indices = @transform_6, window_bounds = array<i64: 1, 128>}, {pipeline_mode = #tpu.pipeline_mode<synchronous>, transform_indices = @transform_7, window_bounds = array<i64: 5, 128, 128>}, {pipeline_mode = #tpu.pipeline_mode<synchronous>, transform_indices = @transform_8, window_bounds = array<i64: 1, 128>}, {pipeline_mode = #tpu.pipeline_mode<synchronous>, transform_indices = @transform_9, window_bounds = array<i64: 5, 128, 128>}, {pipeline_mode = #tpu.pipeline_mode<synchronous>, transform_indices = @transform_10, window_bounds = array<i64: 1, 128>}, {transform_indices = @transform_11, window_bounds = array<i64: 1, 16, 128>}]} {
    %c16_i32 = arith.constant 16 : i32
    %0 = arith.muli %arg1, %c16_i32 : i32
    %c10_i32 = arith.constant 10 : i32
    %1 = arith.subi %0, %c10_i32 : i32
    %cst = arith.constant 0.000000e+00 : f32
    %2 = vector.broadcast %cst : f32 to vector<32x128xf32>
    %c0 = arith.constant 0 : index
    %c0_0 = arith.constant 0 : index
    %c0_1 = arith.constant 0 : index
    %c0_2 = arith.constant 0 : index
    %3 = vector.load %arg2[%c0, %c0_0, %c0_1, %c0_2] : memref<1x1x36x128xbf16, #tpu.memory_space<vmem>>, vector<1x1x32x128xbf16>
    %4 = vector.shape_cast %3 : vector<1x1x32x128xbf16> to vector<32x128xbf16>
    %c0_3 = arith.constant 0 : index
    %c0_4 = arith.constant 0 : index
    %c0_5 = arith.constant 0 : index
    %5 = vector.load %arg3[%c0_3, %c0_4, %c0_5] : memref<5x128x128xbf16, #tpu.memory_space<vmem>>, vector<1x128x128xbf16>
    %6 = vector.shape_cast %5 : vector<1x128x128xbf16> to vector<128x128xbf16>
    %cst_6 = arith.constant dense<0.000000e+00> : vector<32x128xf32>
    %7 = tpu.matmul %4, %6, %cst_6 {dimension_numbers = #tpu.dot_dimension_numbers<[1], [0], [0], [1], [0, 0, 1, 1], [], []>} : vector<32x128xbf16>, vector<128x128xbf16>, vector<32x128xf32> -> vector<32x128xf32>
    %8 = arith.addf %2, %7 : vector<32x128xf32>
    %c0_7 = arith.constant 0 : index
    %c0_8 = arith.constant 0 : index
    %c1 = arith.constant 1 : index
    %c0_9 = arith.constant 0 : index
    %9 = vector.load %arg2[%c0_7, %c0_8, %c1, %c0_9] : memref<1x1x36x128xbf16, #tpu.memory_space<vmem>>, vector<1x1x32x128xbf16>
    %10 = vector.shape_cast %9 : vector<1x1x32x128xbf16> to vector<32x128xbf16>
    %c1_10 = arith.constant 1 : index
    %c0_11 = arith.constant 0 : index
    %c0_12 = arith.constant 0 : index
    %11 = vector.load %arg3[%c1_10, %c0_11, %c0_12] : memref<5x128x128xbf16, #tpu.memory_space<vmem>>, vector<1x128x128xbf16>
    %12 = vector.shape_cast %11 : vector<1x128x128xbf16> to vector<128x128xbf16>
    %cst_13 = arith.constant dense<0.000000e+00> : vector<32x128xf32>
    %13 = tpu.matmul %10, %12, %cst_13 {dimension_numbers = #tpu.dot_dimension_numbers<[1], [0], [0], [1], [0, 0, 1, 1], [], []>} : vector<32x128xbf16>, vector<128x128xbf16>, vector<32x128xf32> -> vector<32x128xf32>
    %14 = arith.addf %8, %13 : vector<32x128xf32>
    %c0_14 = arith.constant 0 : index
    %c0_15 = arith.constant 0 : index
    %c2 = arith.constant 2 : index
    %c0_16 = arith.constant 0 : index
    %15 = vector.load %arg2[%c0_14, %c0_15, %c2, %c0_16] : memref<1x1x36x128xbf16, #tpu.memory_space<vmem>>, vector<1x1x32x128xbf16>
    %16 = vector.shape_cast %15 : vector<1x1x32x128xbf16> to vector<32x128xbf16>
    %c2_17 = arith.constant 2 : index
    %c0_18 = arith.constant 0 : index
    %c0_19 = arith.constant 0 : index
    %17 = vector.load %arg3[%c2_17, %c0_18, %c0_19] : memref<5x128x128xbf16, #tpu.memory_space<vmem>>, vector<1x128x128xbf16>
    %18 = vector.shape_cast %17 : vector<1x128x128xbf16> to vector<128x128xbf16>
    %cst_20 = arith.constant dense<0.000000e+00> : vector<32x128xf32>
    %19 = tpu.matmul %16, %18, %cst_20 {dimension_numbers = #tpu.dot_dimension_numbers<[1], [0], [0], [1], [0, 0, 1, 1], [], []>} : vector<32x128xbf16>, vector<128x128xbf16>, vector<32x128xf32> -> vector<32x128xf32>
    %20 = arith.addf %14, %19 : vector<32x128xf32>
    %c0_21 = arith.constant 0 : index
    %c0_22 = arith.constant 0 : index
    %c3 = arith.constant 3 : index
    %c0_23 = arith.constant 0 : index
    %21 = vector.load %arg2[%c0_21, %c0_22, %c3, %c0_23] : memref<1x1x36x128xbf16, #tpu.memory_space<vmem>>, vector<1x1x32x128xbf16>
    %22 = vector.shape_cast %21 : vector<1x1x32x128xbf16> to vector<32x128xbf16>
    %c3_24 = arith.constant 3 : index
    %c0_25 = arith.constant 0 : index
    %c0_26 = arith.constant 0 : index
    %23 = vector.load %arg3[%c3_24, %c0_25, %c0_26] : memref<5x128x128xbf16, #tpu.memory_space<vmem>>, vector<1x128x128xbf16>
    %24 = vector.shape_cast %23 : vector<1x128x128xbf16> to vector<128x128xbf16>
    %cst_27 = arith.constant dense<0.000000e+00> : vector<32x128xf32>
    %25 = tpu.matmul %22, %24, %cst_27 {dimension_numbers = #tpu.dot_dimension_numbers<[1], [0], [0], [1], [0, 0, 1, 1], [], []>} : vector<32x128xbf16>, vector<128x128xbf16>, vector<32x128xf32> -> vector<32x128xf32>
    %26 = arith.addf %20, %25 : vector<32x128xf32>
    %c0_28 = arith.constant 0 : index
    %c0_29 = arith.constant 0 : index
    %c4 = arith.constant 4 : index
    %c0_30 = arith.constant 0 : index
    %27 = vector.load %arg2[%c0_28, %c0_29, %c4, %c0_30] : memref<1x1x36x128xbf16, #tpu.memory_space<vmem>>, vector<1x1x32x128xbf16>
    %28 = vector.shape_cast %27 : vector<1x1x32x128xbf16> to vector<32x128xbf16>
    %c4_31 = arith.constant 4 : index
    %c0_32 = arith.constant 0 : index
    %c0_33 = arith.constant 0 : index
    %29 = vector.load %arg3[%c4_31, %c0_32, %c0_33] : memref<5x128x128xbf16, #tpu.memory_space<vmem>>, vector<1x128x128xbf16>
    %30 = vector.shape_cast %29 : vector<1x128x128xbf16> to vector<128x128xbf16>
    %cst_34 = arith.constant dense<0.000000e+00> : vector<32x128xf32>
    %31 = tpu.matmul %28, %30, %cst_34 {dimension_numbers = #tpu.dot_dimension_numbers<[1], [0], [0], [1], [0, 0, 1, 1], [], []>} : vector<32x128xbf16>, vector<128x128xbf16>, vector<32x128xf32> -> vector<32x128xf32>
    %32 = arith.addf %26, %31 : vector<32x128xf32>
    %c0_35 = arith.constant 0 : index
    %c0_36 = arith.constant 0 : index
    %33 = vector.load %arg4[%c0_35, %c0_36] : memref<1x128xf32, #tpu.memory_space<vmem>>, vector<1x128xf32>
    %34 = vector.broadcast %33 : vector<1x128xf32> to vector<32x128xf32>
    %35 = arith.addf %32, %34 : vector<32x128xf32>
    %36 = math.tanh %35 : vector<32x128xf32>
    %c2_i32 = arith.constant 2 : i32
    %37 = arith.addi %1, %c2_i32 : i32
    %38 = tpu.iota {dimensions = array<i32: 0>} : vector<32x1xi32>
    %39 = vector.broadcast %37 : i32 to vector<32x1xi32>
    %40 = arith.addi %39, %38 : vector<32x1xi32>
    %c0_i32 = arith.constant 0 : i32
    %41 = vector.broadcast %c0_i32 : i32 to vector<32x1xi32>
    %42 = arith.cmpi sge, %40, %41 : vector<32x1xi32>
    %c30_i32 = arith.constant 30 : i32
    %43 = vector.broadcast %c30_i32 : i32 to vector<32x1xi32>
    %44 = arith.cmpi slt, %40, %43 : vector<32x1xi32>
    %45 = arith.andi %42, %44 : vector<32x1xi1>
    %cst_37 = arith.constant 0.000000e+00 : f32
    %46 = vector.shape_cast %45 : vector<32x1xi1> to vector<32x1xi1>
    %47 = vector.broadcast %46 : vector<32x1xi1> to vector<32x128xi1>
    %48 = vector.broadcast %cst_37 : f32 to vector<32x128xf32>
    %49 = arith.select %47, %36, %48 : vector<32x128xi1>, vector<32x128xf32>
    %50 = arith.truncf %49 : vector<32x128xf32> to vector<32x128xbf16>
    %c0_38 = arith.constant 0 : index
    %c0_39 = arith.constant 0 : index
    %51 = vector.load %arg14[%c0_38, %c0_39] : memref<32x128xbf16, #tpu.memory_space<vmem>>, vector<32x128xbf16>
    tpu.vector_store %arg14[%c0_38, %c0_39], %50 {strides = array<i32>} : memref<32x128xbf16, #tpu.memory_space<vmem>>, vector<32x128xbf16>,
    %cst_40 = arith.constant 0.000000e+00 : f32
    %52 = vector.broadcast %cst_40 : f32 to vector<28x128xf32>
    %c0_41 = arith.constant 0 : index
    %c0_42 = arith.constant 0 : index
    %53 = vector.load %arg14[%c0_41, %c0_42] : memref<32x128xbf16, #tpu.memory_space<vmem>>, vector<28x128xbf16>
    %c0_43 = arith.constant 0 : index
    %c0_44 = arith.constant 0 : index
    %c0_45 = arith.constant 0 : index
    %54 = vector.load %arg5[%c0_43, %c0_44, %c0_45] : memref<5x128x128xbf16, #tpu.memory_space<vmem>>, vector<1x128x128xbf16>
    %55 = vector.shape_cast %54 : vector<1x128x128xbf16> to vector<128x128xbf16>
    %cst_46 = arith.constant dense<0.000000e+00> : vector<28x128xf32>
    %56 = tpu.matmul %53, %55, %cst_46 {dimension_numbers = #tpu.dot_dimension_numbers<[1], [0], [0], [1], [0, 0, 1, 1], [], []>} : vector<28x128xbf16>, vector<128x128xbf16>, vector<28x128xf32> -> vector<28x128xf32>
    %57 = arith.addf %52, %56 : vector<28x128xf32>
    %c1_47 = arith.constant 1 : index
    %c0_48 = arith.constant 0 : index
    %58 = vector.load %arg14[%c1_47, %c0_48] : memref<32x128xbf16, #tpu.memory_space<vmem>>, vector<28x128xbf16>
    %c1_49 = arith.constant 1 : index
    %c0_50 = arith.constant 0 : index
    %c0_51 = arith.constant 0 : index
    %59 = vector.load %arg5[%c1_49, %c0_50, %c0_51] : memref<5x128x128xbf16, #tpu.memory_space<vmem>>, vector<1x128x128xbf16>
    %60 = vector.shape_cast %59 : vector<1x128x128xbf16> to vector<128x128xbf16>
    %cst_52 = arith.constant dense<0.000000e+00> : vector<28x128xf32>
    %61 = tpu.matmul %58, %60, %cst_52 {dimension_numbers = #tpu.dot_dimension_numbers<[1], [0], [0], [1], [0, 0, 1, 1], [], []>} : vector<28x128xbf16>, vector<128x128xbf16>, vector<28x128xf32> -> vector<28x128xf32>
    %62 = arith.addf %57, %61 : vector<28x128xf32>
    %c2_53 = arith.constant 2 : index
    %c0_54 = arith.constant 0 : index
    %63 = vector.load %arg14[%c2_53, %c0_54] : memref<32x128xbf16, #tpu.memory_space<vmem>>, vector<28x128xbf16>
    %c2_55 = arith.constant 2 : index
    %c0_56 = arith.constant 0 : index
    %c0_57 = arith.constant 0 : index
    %64 = vector.load %arg5[%c2_55, %c0_56, %c0_57] : memref<5x128x128xbf16, #tpu.memory_space<vmem>>, vector<1x128x128xbf16>
    %65 = vector.shape_cast %64 : vector<1x128x128xbf16> to vector<128x128xbf16>
    %cst_58 = arith.constant dense<0.000000e+00> : vector<28x128xf32>
    %66 = tpu.matmul %63, %65, %cst_58 {dimension_numbers = #tpu.dot_dimension_numbers<[1], [0], [0], [1], [0, 0, 1, 1], [], []>} : vector<28x128xbf16>, vector<128x128xbf16>, vector<28x128xf32> -> vector<28x128xf32>
    %67 = arith.addf %62, %66 : vector<28x128xf32>
    %c3_59 = arith.constant 3 : index
    %c0_60 = arith.constant 0 : index
    %68 = vector.load %arg14[%c3_59, %c0_60] : memref<32x128xbf16, #tpu.memory_space<vmem>>, vector<28x128xbf16>
    %c3_61 = arith.constant 3 : index
    %c0_62 = arith.constant 0 : index
    %c0_63 = arith.constant 0 : index
    %69 = vector.load %arg5[%c3_61, %c0_62, %c0_63] : memref<5x128x128xbf16, #tpu.memory_space<vmem>>, vector<1x128x128xbf16>
    %70 = vector.shape_cast %69 : vector<1x128x128xbf16> to vector<128x128xbf16>
    %cst_64 = arith.constant dense<0.000000e+00> : vector<28x128xf32>
    %71 = tpu.matmul %68, %70, %cst_64 {dimension_numbers = #tpu.dot_dimension_numbers<[1], [0], [0], [1], [0, 0, 1, 1], [], []>} : vector<28x128xbf16>, vector<128x128xbf16>, vector<28x128xf32> -> vector<28x128xf32>
    %72 = arith.addf %67, %71 : vector<28x128xf32>
    %c4_65 = arith.constant 4 : index
    %c0_66 = arith.constant 0 : index
    %73 = vector.load %arg14[%c4_65, %c0_66] : memref<32x128xbf16, #tpu.memory_space<vmem>>, vector<28x128xbf16>
    %c4_67 = arith.constant 4 : index
    %c0_68 = arith.constant 0 : index
    %c0_69 = arith.constant 0 : index
    %74 = vector.load %arg5[%c4_67, %c0_68, %c0_69] : memref<5x128x128xbf16, #tpu.memory_space<vmem>>, vector<1x128x128xbf16>
    %75 = vector.shape_cast %74 : vector<1x128x128xbf16> to vector<128x128xbf16>
    %cst_70 = arith.constant dense<0.000000e+00> : vector<28x128xf32>
    %76 = tpu.matmul %73, %75, %cst_70 {dimension_numbers = #tpu.dot_dimension_numbers<[1], [0], [0], [1], [0, 0, 1, 1], [], []>} : vector<28x128xbf16>, vector<128x128xbf16>, vector<28x128xf32> -> vector<28x128xf32>
    %77 = arith.addf %72, %76 : vector<28x128xf32>
    %c0_71 = arith.constant 0 : index
    %c0_72 = arith.constant 0 : index
    %78 = vector.load %arg6[%c0_71, %c0_72] : memref<1x128xf32, #tpu.memory_space<vmem>>, vector<1x128xf32>
    %79 = vector.broadcast %78 : vector<1x128xf32> to vector<28x128xf32>
    %80 = arith.addf %77, %79 : vector<28x128xf32>
    %81 = math.tanh %80 : vector<28x128xf32>
    %c4_i32 = arith.constant 4 : i32
    %82 = arith.addi %1, %c4_i32 : i32
    %83 = tpu.iota {dimensions = array<i32: 0>} : vector<28x1xi32>
    %84 = vector.broadcast %82 : i32 to vector<28x1xi32>
    %85 = arith.addi %84, %83 : vector<28x1xi32>
    %c0_i32_73 = arith.constant 0 : i32
    %86 = vector.broadcast %c0_i32_73 : i32 to vector<28x1xi32>
    %87 = arith.cmpi sge, %85, %86 : vector<28x1xi32>
    %c30_i32_74 = arith.constant 30 : i32
    %88 = vector.broadcast %c30_i32_74 : i32 to vector<28x1xi32>
    %89 = arith.cmpi slt, %85, %88 : vector<28x1xi32>
    %90 = arith.andi %87, %89 : vector<28x1xi1>
    %cst_75 = arith.constant 0.000000e+00 : f32
    %91 = vector.shape_cast %90 : vector<28x1xi1> to vector<28x1xi1>
    %92 = vector.broadcast %91 : vector<28x1xi1> to vector<28x128xi1>
    %93 = vector.broadcast %cst_75 : f32 to vector<28x128xf32>
    %94 = arith.select %92, %81, %93 : vector<28x128xi1>, vector<28x128xf32>
    %95 = arith.truncf %94 : vector<28x128xf32> to vector<28x128xbf16>
    %c0_76 = arith.constant 0 : index
    %c0_77 = arith.constant 0 : index
    %96 = vector.load %arg15[%c0_76, %c0_77] : memref<32x128xbf16, #tpu.memory_space<vmem>>, vector<28x128xbf16>
    tpu.vector_store %arg15[%c0_76, %c0_77], %95 {strides = array<i32>} : memref<32x128xbf16, #tpu.memory_space<vmem>>, vector<28x128xbf16>,
    %cst_78 = arith.constant 0.000000e+00 : f32
    %97 = vector.broadcast %cst_78 : f32 to vector<24x128xf32>
    %c0_79 = arith.constant 0 : index
    %c0_80 = arith.constant 0 : index
    %98 = vector.load %arg15[%c0_79, %c0_80] : memref<32x128xbf16, #tpu.memory_space<vmem>>, vector<24x128xbf16>
    %c0_81 = arith.constant 0 : index
    %c0_82 = arith.constant 0 : index
    %c0_83 = arith.constant 0 : index
    %99 = vector.load %arg7[%c0_81, %c0_82, %c0_83] : memref<5x128x128xbf16, #tpu.memory_space<vmem>>, vector<1x128x128xbf16>
    %100 = vector.shape_cast %99 : vector<1x128x128xbf16> to vector<128x128xbf16>
    %cst_84 = arith.constant dense<0.000000e+00> : vector<24x128xf32>
    %101 = tpu.matmul %98, %100, %cst_84 {dimension_numbers = #tpu.dot_dimension_numbers<[1], [0], [0], [1], [0, 0, 1, 1], [], []>} : vector<24x128xbf16>, vector<128x128xbf16>, vector<24x128xf32> -> vector<24x128xf32>
    %102 = arith.addf %97, %101 : vector<24x128xf32>
    %c1_85 = arith.constant 1 : index
    %c0_86 = arith.constant 0 : index
    %103 = vector.load %arg15[%c1_85, %c0_86] : memref<32x128xbf16, #tpu.memory_space<vmem>>, vector<24x128xbf16>
    %c1_87 = arith.constant 1 : index
    %c0_88 = arith.constant 0 : index
    %c0_89 = arith.constant 0 : index
    %104 = vector.load %arg7[%c1_87, %c0_88, %c0_89] : memref<5x128x128xbf16, #tpu.memory_space<vmem>>, vector<1x128x128xbf16>
    %105 = vector.shape_cast %104 : vector<1x128x128xbf16> to vector<128x128xbf16>
    %cst_90 = arith.constant dense<0.000000e+00> : vector<24x128xf32>
    %106 = tpu.matmul %103, %105, %cst_90 {dimension_numbers = #tpu.dot_dimension_numbers<[1], [0], [0], [1], [0, 0, 1, 1], [], []>} : vector<24x128xbf16>, vector<128x128xbf16>, vector<24x128xf32> -> vector<24x128xf32>
    %107 = arith.addf %102, %106 : vector<24x128xf32>
    %c2_91 = arith.constant 2 : index
    %c0_92 = arith.constant 0 : index
    %108 = vector.load %arg15[%c2_91, %c0_92] : memref<32x128xbf16, #tpu.memory_space<vmem>>, vector<24x128xbf16>
    %c2_93 = arith.constant 2 : index
    %c0_94 = arith.constant 0 : index
    %c0_95 = arith.constant 0 : index
    %109 = vector.load %arg7[%c2_93, %c0_94, %c0_95] : memref<5x128x128xbf16, #tpu.memory_space<vmem>>, vector<1x128x128xbf16>
    %110 = vector.shape_cast %109 : vector<1x128x128xbf16> to vector<128x128xbf16>
    %cst_96 = arith.constant dense<0.000000e+00> : vector<24x128xf32>
    %111 = tpu.matmul %108, %110, %cst_96 {dimension_numbers = #tpu.dot_dimension_numbers<[1], [0], [0], [1], [0, 0, 1, 1], [], []>} : vector<24x128xbf16>, vector<128x128xbf16>, vector<24x128xf32> -> vector<24x128xf32>
    %112 = arith.addf %107, %111 : vector<24x128xf32>
    %c3_97 = arith.constant 3 : index
    %c0_98 = arith.constant 0 : index
    %113 = vector.load %arg15[%c3_97, %c0_98] : memref<32x128xbf16, #tpu.memory_space<vmem>>, vector<24x128xbf16>
    %c3_99 = arith.constant 3 : index
    %c0_100 = arith.constant 0 : index
    %c0_101 = arith.constant 0 : index
    %114 = vector.load %arg7[%c3_99, %c0_100, %c0_101] : memref<5x128x128xbf16, #tpu.memory_space<vmem>>, vector<1x128x128xbf16>
    %115 = vector.shape_cast %114 : vector<1x128x128xbf16> to vector<128x128xbf16>
    %cst_102 = arith.constant dense<0.000000e+00> : vector<24x128xf32>
    %116 = tpu.matmul %113, %115, %cst_102 {dimension_numbers = #tpu.dot_dimension_numbers<[1], [0], [0], [1], [0, 0, 1, 1], [], []>} : vector<24x128xbf16>, vector<128x128xbf16>, vector<24x128xf32> -> vector<24x128xf32>
    %117 = arith.addf %112, %116 : vector<24x128xf32>
    %c4_103 = arith.constant 4 : index
    %c0_104 = arith.constant 0 : index
    %118 = vector.load %arg15[%c4_103, %c0_104] : memref<32x128xbf16, #tpu.memory_space<vmem>>, vector<24x128xbf16>
    %c4_105 = arith.constant 4 : index
    %c0_106 = arith.constant 0 : index
    %c0_107 = arith.constant 0 : index
    %119 = vector.load %arg7[%c4_105, %c0_106, %c0_107] : memref<5x128x128xbf16, #tpu.memory_space<vmem>>, vector<1x128x128xbf16>
    %120 = vector.shape_cast %119 : vector<1x128x128xbf16> to vector<128x128xbf16>
    %cst_108 = arith.constant dense<0.000000e+00> : vector<24x128xf32>
    %121 = tpu.matmul %118, %120, %cst_108 {dimension_numbers = #tpu.dot_dimension_numbers<[1], [0], [0], [1], [0, 0, 1, 1], [], []>} : vector<24x128xbf16>, vector<128x128xbf16>, vector<24x128xf32> -> vector<24x128xf32>
    %122 = arith.addf %117, %121 : vector<24x128xf32>
    %c0_109 = arith.constant 0 : index
    %c0_110 = arith.constant 0 : index
    %123 = vector.load %arg8[%c0_109, %c0_110] : memref<1x128xf32, #tpu.memory_space<vmem>>, vector<1x128xf32>
    %124 = vector.broadcast %123 : vector<1x128xf32> to vector<24x128xf32>
    %125 = arith.addf %122, %124 : vector<24x128xf32>
    %126 = math.tanh %125 : vector<24x128xf32>
    %c6_i32 = arith.constant 6 : i32
    %127 = arith.addi %1, %c6_i32 : i32
    %128 = tpu.iota {dimensions = array<i32: 0>} : vector<24x1xi32>
    %129 = vector.broadcast %127 : i32 to vector<24x1xi32>
    %130 = arith.addi %129, %128 : vector<24x1xi32>
    %c0_i32_111 = arith.constant 0 : i32
    %131 = vector.broadcast %c0_i32_111 : i32 to vector<24x1xi32>
    %132 = arith.cmpi sge, %130, %131 : vector<24x1xi32>
    %c30_i32_112 = arith.constant 30 : i32
    %133 = vector.broadcast %c30_i32_112 : i32 to vector<24x1xi32>
    %134 = arith.cmpi slt, %130, %133 : vector<24x1xi32>
    %135 = arith.andi %132, %134 : vector<24x1xi1>
    %cst_113 = arith.constant 0.000000e+00 : f32
    %136 = vector.shape_cast %135 : vector<24x1xi1> to vector<24x1xi1>
    %137 = vector.broadcast %136 : vector<24x1xi1> to vector<24x128xi1>
    %138 = vector.broadcast %cst_113 : f32 to vector<24x128xf32>
    %139 = arith.select %137, %126, %138 : vector<24x128xi1>, vector<24x128xf32>
    %140 = arith.truncf %139 : vector<24x128xf32> to vector<24x128xbf16>
    %c0_114 = arith.constant 0 : index
    %c0_115 = arith.constant 0 : index
    %141 = vector.load %arg14[%c0_114, %c0_115] : memref<32x128xbf16, #tpu.memory_space<vmem>>, vector<24x128xbf16>
    tpu.vector_store %arg14[%c0_114, %c0_115], %140 {strides = array<i32>} : memref<32x128xbf16, #tpu.memory_space<vmem>>, vector<24x128xbf16>,
    %cst_116 = arith.constant 0.000000e+00 : f32
    %142 = vector.broadcast %cst_116 : f32 to vector<20x128xf32>
    %c0_117 = arith.constant 0 : index
    %c0_118 = arith.constant 0 : index
    %143 = vector.load %arg14[%c0_117, %c0_118] : memref<32x128xbf16, #tpu.memory_space<vmem>>, vector<20x128xbf16>
    %c0_119 = arith.constant 0 : index
    %c0_120 = arith.constant 0 : index
    %c0_121 = arith.constant 0 : index
    %144 = vector.load %arg9[%c0_119, %c0_120, %c0_121] : memref<5x128x128xbf16, #tpu.memory_space<vmem>>, vector<1x128x128xbf16>
    %145 = vector.shape_cast %144 : vector<1x128x128xbf16> to vector<128x128xbf16>
    %cst_122 = arith.constant dense<0.000000e+00> : vector<20x128xf32>
    %146 = tpu.matmul %143, %145, %cst_122 {dimension_numbers = #tpu.dot_dimension_numbers<[1], [0], [0], [1], [0, 0, 1, 1], [], []>} : vector<20x128xbf16>, vector<128x128xbf16>, vector<20x128xf32> -> vector<20x128xf32>
    %147 = arith.addf %142, %146 : vector<20x128xf32>
    %c1_123 = arith.constant 1 : index
    %c0_124 = arith.constant 0 : index
    %148 = vector.load %arg14[%c1_123, %c0_124] : memref<32x128xbf16, #tpu.memory_space<vmem>>, vector<20x128xbf16>
    %c1_125 = arith.constant 1 : index
    %c0_126 = arith.constant 0 : index
    %c0_127 = arith.constant 0 : index
    %149 = vector.load %arg9[%c1_125, %c0_126, %c0_127] : memref<5x128x128xbf16, #tpu.memory_space<vmem>>, vector<1x128x128xbf16>
    %150 = vector.shape_cast %149 : vector<1x128x128xbf16> to vector<128x128xbf16>
    %cst_128 = arith.constant dense<0.000000e+00> : vector<20x128xf32>
    %151 = tpu.matmul %148, %150, %cst_128 {dimension_numbers = #tpu.dot_dimension_numbers<[1], [0], [0], [1], [0, 0, 1, 1], [], []>} : vector<20x128xbf16>, vector<128x128xbf16>, vector<20x128xf32> -> vector<20x128xf32>
    %152 = arith.addf %147, %151 : vector<20x128xf32>
    %c2_129 = arith.constant 2 : index
    %c0_130 = arith.constant 0 : index
    %153 = vector.load %arg14[%c2_129, %c0_130] : memref<32x128xbf16, #tpu.memory_space<vmem>>, vector<20x128xbf16>
    %c2_131 = arith.constant 2 : index
    %c0_132 = arith.constant 0 : index
    %c0_133 = arith.constant 0 : index
    %154 = vector.load %arg9[%c2_131, %c0_132, %c0_133] : memref<5x128x128xbf16, #tpu.memory_space<vmem>>, vector<1x128x128xbf16>
    %155 = vector.shape_cast %154 : vector<1x128x128xbf16> to vector<128x128xbf16>
    %cst_134 = arith.constant dense<0.000000e+00> : vector<20x128xf32>
    %156 = tpu.matmul %153, %155, %cst_134 {dimension_numbers = #tpu.dot_dimension_numbers<[1], [0], [0], [1], [0, 0, 1, 1], [], []>} : vector<20x128xbf16>, vector<128x128xbf16>, vector<20x128xf32> -> vector<20x128xf32>
    %157 = arith.addf %152, %156 : vector<20x128xf32>
    %c3_135 = arith.constant 3 : index
    %c0_136 = arith.constant 0 : index
    %158 = vector.load %arg14[%c3_135, %c0_136] : memref<32x128xbf16, #tpu.memory_space<vmem>>, vector<20x128xbf16>
    %c3_137 = arith.constant 3 : index
    %c0_138 = arith.constant 0 : index
    %c0_139 = arith.constant 0 : index
    %159 = vector.load %arg9[%c3_137, %c0_138, %c0_139] : memref<5x128x128xbf16, #tpu.memory_space<vmem>>, vector<1x128x128xbf16>
    %160 = vector.shape_cast %159 : vector<1x128x128xbf16> to vector<128x128xbf16>
    %cst_140 = arith.constant dense<0.000000e+00> : vector<20x128xf32>
    %161 = tpu.matmul %158, %160, %cst_140 {dimension_numbers = #tpu.dot_dimension_numbers<[1], [0], [0], [1], [0, 0, 1, 1], [], []>} : vector<20x128xbf16>, vector<128x128xbf16>, vector<20x128xf32> -> vector<20x128xf32>
    %162 = arith.addf %157, %161 : vector<20x128xf32>
    %c4_141 = arith.constant 4 : index
    %c0_142 = arith.constant 0 : index
    %163 = vector.load %arg14[%c4_141, %c0_142] : memref<32x128xbf16, #tpu.memory_space<vmem>>, vector<20x128xbf16>
    %c4_143 = arith.constant 4 : index
    %c0_144 = arith.constant 0 : index
    %c0_145 = arith.constant 0 : index
    %164 = vector.load %arg9[%c4_143, %c0_144, %c0_145] : memref<5x128x128xbf16, #tpu.memory_space<vmem>>, vector<1x128x128xbf16>
    %165 = vector.shape_cast %164 : vector<1x128x128xbf16> to vector<128x128xbf16>
    %cst_146 = arith.constant dense<0.000000e+00> : vector<20x128xf32>
    %166 = tpu.matmul %163, %165, %cst_146 {dimension_numbers = #tpu.dot_dimension_numbers<[1], [0], [0], [1], [0, 0, 1, 1], [], []>} : vector<20x128xbf16>, vector<128x128xbf16>, vector<20x128xf32> -> vector<20x128xf32>
    %167 = arith.addf %162, %166 : vector<20x128xf32>
    %c0_147 = arith.constant 0 : index
    %c0_148 = arith.constant 0 : index
    %168 = vector.load %arg10[%c0_147, %c0_148] : memref<1x128xf32, #tpu.memory_space<vmem>>, vector<1x128xf32>
    %169 = vector.broadcast %168 : vector<1x128xf32> to vector<20x128xf32>
    %170 = arith.addf %167, %169 : vector<20x128xf32>
    %171 = math.tanh %170 : vector<20x128xf32>
    %c8_i32 = arith.constant 8 : i32
    %172 = arith.addi %1, %c8_i32 : i32
    %173 = tpu.iota {dimensions = array<i32: 0>} : vector<20x1xi32>
    %174 = vector.broadcast %172 : i32 to vector<20x1xi32>
    %175 = arith.addi %174, %173 : vector<20x1xi32>
    %c0_i32_149 = arith.constant 0 : i32
    %176 = vector.broadcast %c0_i32_149 : i32 to vector<20x1xi32>
    %177 = arith.cmpi sge, %175, %176 : vector<20x1xi32>
    %c30_i32_150 = arith.constant 30 : i32
    %178 = vector.broadcast %c30_i32_150 : i32 to vector<20x1xi32>
    %179 = arith.cmpi slt, %175, %178 : vector<20x1xi32>
    %180 = arith.andi %177, %179 : vector<20x1xi1>
    %cst_151 = arith.constant 0.000000e+00 : f32
    %181 = vector.shape_cast %180 : vector<20x1xi1> to vector<20x1xi1>
    %182 = vector.broadcast %181 : vector<20x1xi1> to vector<20x128xi1>
    %183 = vector.broadcast %cst_151 : f32 to vector<20x128xf32>
    %184 = arith.select %182, %171, %183 : vector<20x128xi1>, vector<20x128xf32>
    %185 = arith.truncf %184 : vector<20x128xf32> to vector<20x128xbf16>
    %c0_152 = arith.constant 0 : index
    %c0_153 = arith.constant 0 : index
    %186 = vector.load %arg15[%c0_152, %c0_153] : memref<32x128xbf16, #tpu.memory_space<vmem>>, vector<20x128xbf16>
    tpu.vector_store %arg15[%c0_152, %c0_153], %185 {strides = array<i32>} : memref<32x128xbf16, #tpu.memory_space<vmem>>, vector<20x128xbf16>,
    %cst_154 = arith.constant 0.000000e+00 : f32
    %187 = vector.broadcast %cst_154 : f32 to vector<16x128xf32>
    %c0_155 = arith.constant 0 : index
    %c0_156 = arith.constant 0 : index
    %188 = vector.load %arg15[%c0_155, %c0_156] : memref<32x128xbf16, #tpu.memory_space<vmem>>, vector<16x128xbf16>
    %c0_157 = arith.constant 0 : index
    %c0_158 = arith.constant 0 : index
    %c0_159 = arith.constant 0 : index
    %189 = vector.load %arg11[%c0_157, %c0_158, %c0_159] : memref<5x128x128xbf16, #tpu.memory_space<vmem>>, vector<1x128x128xbf16>
    %190 = vector.shape_cast %189 : vector<1x128x128xbf16> to vector<128x128xbf16>
    %cst_160 = arith.constant dense<0.000000e+00> : vector<16x128xf32>
    %191 = tpu.matmul %188, %190, %cst_160 {dimension_numbers = #tpu.dot_dimension_numbers<[1], [0], [0], [1], [0, 0, 1, 1], [], []>} : vector<16x128xbf16>, vector<128x128xbf16>, vector<16x128xf32> -> vector<16x128xf32>
    %192 = arith.addf %187, %191 : vector<16x128xf32>
    %c1_161 = arith.constant 1 : index
    %c0_162 = arith.constant 0 : index
    %193 = vector.load %arg15[%c1_161, %c0_162] : memref<32x128xbf16, #tpu.memory_space<vmem>>, vector<16x128xbf16>
    %c1_163 = arith.constant 1 : index
    %c0_164 = arith.constant 0 : index
    %c0_165 = arith.constant 0 : index
    %194 = vector.load %arg11[%c1_163, %c0_164, %c0_165] : memref<5x128x128xbf16, #tpu.memory_space<vmem>>, vector<1x128x128xbf16>
    %195 = vector.shape_cast %194 : vector<1x128x128xbf16> to vector<128x128xbf16>
    %cst_166 = arith.constant dense<0.000000e+00> : vector<16x128xf32>
    %196 = tpu.matmul %193, %195, %cst_166 {dimension_numbers = #tpu.dot_dimension_numbers<[1], [0], [0], [1], [0, 0, 1, 1], [], []>} : vector<16x128xbf16>, vector<128x128xbf16>, vector<16x128xf32> -> vector<16x128xf32>
    %197 = arith.addf %192, %196 : vector<16x128xf32>
    %c2_167 = arith.constant 2 : index
    %c0_168 = arith.constant 0 : index
    %198 = vector.load %arg15[%c2_167, %c0_168] : memref<32x128xbf16, #tpu.memory_space<vmem>>, vector<16x128xbf16>
    %c2_169 = arith.constant 2 : index
    %c0_170 = arith.constant 0 : index
    %c0_171 = arith.constant 0 : index
    %199 = vector.load %arg11[%c2_169, %c0_170, %c0_171] : memref<5x128x128xbf16, #tpu.memory_space<vmem>>, vector<1x128x128xbf16>
    %200 = vector.shape_cast %199 : vector<1x128x128xbf16> to vector<128x128xbf16>
    %cst_172 = arith.constant dense<0.000000e+00> : vector<16x128xf32>
    %201 = tpu.matmul %198, %200, %cst_172 {dimension_numbers = #tpu.dot_dimension_numbers<[1], [0], [0], [1], [0, 0, 1, 1], [], []>} : vector<16x128xbf16>, vector<128x128xbf16>, vector<16x128xf32> -> vector<16x128xf32>
    %202 = arith.addf %197, %201 : vector<16x128xf32>
    %c3_173 = arith.constant 3 : index
    %c0_174 = arith.constant 0 : index
    %203 = vector.load %arg15[%c3_173, %c0_174] : memref<32x128xbf16, #tpu.memory_space<vmem>>, vector<16x128xbf16>
    %c3_175 = arith.constant 3 : index
    %c0_176 = arith.constant 0 : index
    %c0_177 = arith.constant 0 : index
    %204 = vector.load %arg11[%c3_175, %c0_176, %c0_177] : memref<5x128x128xbf16, #tpu.memory_space<vmem>>, vector<1x128x128xbf16>
    %205 = vector.shape_cast %204 : vector<1x128x128xbf16> to vector<128x128xbf16>
    %cst_178 = arith.constant dense<0.000000e+00> : vector<16x128xf32>
    %206 = tpu.matmul %203, %205, %cst_178 {dimension_numbers = #tpu.dot_dimension_numbers<[1], [0], [0], [1], [0, 0, 1, 1], [], []>} : vector<16x128xbf16>, vector<128x128xbf16>, vector<16x128xf32> -> vector<16x128xf32>
    %207 = arith.addf %202, %206 : vector<16x128xf32>
    %c4_179 = arith.constant 4 : index
    %c0_180 = arith.constant 0 : index
    %208 = vector.load %arg15[%c4_179, %c0_180] : memref<32x128xbf16, #tpu.memory_space<vmem>>, vector<16x128xbf16>
    %c4_181 = arith.constant 4 : index
    %c0_182 = arith.constant 0 : index
    %c0_183 = arith.constant 0 : index
    %209 = vector.load %arg11[%c4_181, %c0_182, %c0_183] : memref<5x128x128xbf16, #tpu.memory_space<vmem>>, vector<1x128x128xbf16>
    %210 = vector.shape_cast %209 : vector<1x128x128xbf16> to vector<128x128xbf16>
    %cst_184 = arith.constant dense<0.000000e+00> : vector<16x128xf32>
    %211 = tpu.matmul %208, %210, %cst_184 {dimension_numbers = #tpu.dot_dimension_numbers<[1], [0], [0], [1], [0, 0, 1, 1], [], []>} : vector<16x128xbf16>, vector<128x128xbf16>, vector<16x128xf32> -> vector<16x128xf32>
    %212 = arith.addf %207, %211 : vector<16x128xf32>
    %c0_185 = arith.constant 0 : index
    %c0_186 = arith.constant 0 : index
    %213 = vector.load %arg12[%c0_185, %c0_186] : memref<1x128xf32, #tpu.memory_space<vmem>>, vector<1x128xf32>
    %214 = vector.broadcast %213 : vector<1x128xf32> to vector<16x128xf32>
    %215 = arith.addf %212, %214 : vector<16x128xf32>
    %c0_187 = arith.constant 0 : index
    %c0_188 = arith.constant 0 : index
    %c0_189 = arith.constant 0 : index
    %216 = vector.load %arg13[%c0_187, %c0_188, %c0_189] : memref<1x16x128xf32, #tpu.memory_space<vmem>>, vector<1x16x128xf32>
    %217 = vector.shape_cast %216 : vector<1x16x128xf32> to vector<16x128xf32>
    %218 = vector.shape_cast %215 : vector<16x128xf32> to vector<1x16x128xf32>
    tpu.vector_store %arg13[%c0_187, %c0_188, %c0_189], %218 {strides = array<i32>} : memref<1x16x128xf32, #tpu.memory_space<vmem>>, vector<1x16x128xf32>,
    return
  }
  func.func @transform_0(%arg0: i32, %arg1: i32) -> (i32, i32, i32, i32) {
    %c0_i32 = arith.constant 0 : i32
    %c0_i32_0 = arith.constant 0 : i32
    %c0_i32_1 = arith.constant 0 : i32
    return %arg0, %arg1, %c0_i32, %c0_i32_0 : i32, i32, i32, i32
  }
  func.func @transform_1(%arg0: i32, %arg1: i32) -> (i32, i32, i32) {
    %c0_i32 = arith.constant 0 : i32
    %c0_i32_0 = arith.constant 0 : i32
    %c0_i32_1 = arith.constant 0 : i32
    %c0_i32_2 = arith.constant 0 : i32
    return %c0_i32, %c0_i32_0, %c0_i32_1 : i32, i32, i32
  }
  func.func @transform_2(%arg0: i32, %arg1: i32) -> (i32, i32) {
    %c0_i32 = arith.constant 0 : i32
    %c0_i32_0 = arith.constant 0 : i32
    %c0_i32_1 = arith.constant 0 : i32
    return %c0_i32, %c0_i32_0 : i32, i32
  }
  func.func @transform_3(%arg0: i32, %arg1: i32) -> (i32, i32, i32) {
    %c0_i32 = arith.constant 0 : i32
    %c0_i32_0 = arith.constant 0 : i32
    %c0_i32_1 = arith.constant 0 : i32
    %c0_i32_2 = arith.constant 0 : i32
    return %c0_i32, %c0_i32_0, %c0_i32_1 : i32, i32, i32
  }
  func.func @transform_4(%arg0: i32, %arg1: i32) -> (i32, i32) {
    %c0_i32 = arith.constant 0 : i32
    %c0_i32_0 = arith.constant 0 : i32
    %c0_i32_1 = arith.constant 0 : i32
    return %c0_i32, %c0_i32_0 : i32, i32
  }
  func.func @transform_5(%arg0: i32, %arg1: i32) -> (i32, i32, i32) {
    %c0_i32 = arith.constant 0 : i32
    %c0_i32_0 = arith.constant 0 : i32
    %c0_i32_1 = arith.constant 0 : i32
    %c0_i32_2 = arith.constant 0 : i32
    return %c0_i32, %c0_i32_0, %c0_i32_1 : i32, i32, i32
  }
  func.func @transform_6(%arg0: i32, %arg1: i32) -> (i32, i32) {
    %c0_i32 = arith.constant 0 : i32
    %c0_i32_0 = arith.constant 0 : i32
    %c0_i32_1 = arith.constant 0 : i32
    return %c0_i32, %c0_i32_0 : i32, i32
  }
  func.func @transform_7(%arg0: i32, %arg1: i32) -> (i32, i32, i32) {
    %c0_i32 = arith.constant 0 : i32
    %c0_i32_0 = arith.constant 0 : i32
    %c0_i32_1 = arith.constant 0 : i32
    %c0_i32_2 = arith.constant 0 : i32
    return %c0_i32, %c0_i32_0, %c0_i32_1 : i32, i32, i32
  }
  func.func @transform_8(%arg0: i32, %arg1: i32) -> (i32, i32) {
    %c0_i32 = arith.constant 0 : i32
    %c0_i32_0 = arith.constant 0 : i32
    %c0_i32_1 = arith.constant 0 : i32
    return %c0_i32, %c0_i32_0 : i32, i32
  }
  func.func @transform_9(%arg0: i32, %arg1: i32) -> (i32, i32, i32) {
    %c0_i32 = arith.constant 0 : i32
    %c0_i32_0 = arith.constant 0 : i32
    %c0_i32_1 = arith.constant 0 : i32
    %c0_i32_2 = arith.constant 0 : i32
    return %c0_i32, %c0_i32_0, %c0_i32_1 : i32, i32, i32
  }
  func.func @transform_10(%arg0: i32, %arg1: i32) -> (i32, i32) {
    %c0_i32 = arith.constant 0 : i32
    %c0_i32_0 = arith.constant 0 : i32
    %c0_i32_1 = arith.constant 0 : i32
    return %c0_i32, %c0_i32_0 : i32, i32
  }
  func.func @transform_11(%arg0: i32, %arg1: i32) -> (i32, i32, i32) {
    %c0_i32 = arith.constant 0 : i32
    %c0_i32_0 = arith.constant 0 : i32
    return %arg0, %arg1, %c0_i32 : i32, i32, i32
  }
}

module attributes {stable_mosaic.version = 11 : i64} {
  func.func @_postnet_kernel(%arg0: i32, %arg1: i32, %arg2: memref<1x1x36x128xbf16, #tpu.memory_space<vmem>>, %arg3: memref<5x128x128xbf16, #tpu.memory_space<vmem>>, %arg4: memref<1x128xf32, #tpu.memory_space<vmem>>, %arg5: memref<5x128x128xbf16, #tpu.memory_space<vmem>>, %arg6: memref<1x128xf32, #tpu.memory_space<vmem>>, %arg7: memref<5x128x128xbf16, #tpu.memory_space<vmem>>, %arg8: memref<1x128xf32, #tpu.memory_space<vmem>>, %arg9: memref<5x128x128xbf16, #tpu.memory_space<vmem>>, %arg10: memref<1x128xf32, #tpu.memory_space<vmem>>, %arg11: memref<5x128x128xbf16, #tpu.memory_space<vmem>>, %arg12: memref<1x128xf32, #tpu.memory_space<vmem>>, %arg13: memref<1x16x128xf32, #tpu.memory_space<vmem>>, %arg14: memref<32x128xbf16, #tpu.memory_space<vmem>>, %arg15: memref<32x128xbf16, #tpu.memory_space<vmem>>) attributes {dimension_semantics = [#tpu.dimension_semantics<parallel>, #tpu.dimension_semantics<parallel>], iteration_bounds = array<i64: 2, 2>, scalar_prefetch = 0 : i64, scratch_operands = 2 : i64, tpu.core_type = #tpu.core_type<tc>, window_params = [{transform_indices = @transform_0, window_bounds = array<i64: 1, 1, 36, 128>}, {pipeline_mode = #tpu.pipeline_mode<synchronous>, transform_indices = @transform_1, window_bounds = array<i64: 5, 128, 128>}, {pipeline_mode = #tpu.pipeline_mode<synchronous>, transform_indices = @transform_2, window_bounds = array<i64: 1, 128>}, {pipeline_mode = #tpu.pipeline_mode<synchronous>, transform_indices = @transform_3, window_bounds = array<i64: 5, 128, 128>}, {pipeline_mode = #tpu.pipeline_mode<synchronous>, transform_indices = @transform_4, window_bounds = array<i64: 1, 128>}, {pipeline_mode = #tpu.pipeline_mode<synchronous>, transform_indices = @transform_5, window_bounds = array<i64: 5, 128, 128>}, {pipeline_mode = #tpu.pipeline_mode<synchronous>, transform_indices = @transform_6, window_bounds = array<i64: 1, 128>}, {pipeline_mode = #tpu.pipeline_mode<synchronous>, transform_indices = @transform_7, window_bounds = array<i64: 5, 128, 128>}, {pipeline_mode = #tpu.pipeline_mode<synchronous>, transform_indices = @transform_8, window_bounds = array<i64: 1, 128>}, {pipeline_mode = #tpu.pipeline_mode<synchronous>, transform_indices = @transform_9, window_bounds = array<i64: 5, 128, 128>}, {pipeline_mode = #tpu.pipeline_mode<synchronous>, transform_indices = @transform_10, window_bounds = array<i64: 1, 128>}, {transform_indices = @transform_11, window_bounds = array<i64: 1, 16, 128>}]} {
    %c16_i32 = arith.constant 16 : i32
    %0 = arith.muli %arg1, %c16_i32 : i32
    %c10_i32 = arith.constant 10 : i32
    %1 = arith.subi %0, %c10_i32 : i32
    %cst = arith.constant 0.000000e+00 : f32
    %2 = vector.broadcast %cst : f32 to vector<32x128xf32>
    %c0 = arith.constant 0 : index
    %c0_0 = arith.constant 0 : index
    %c0_1 = arith.constant 0 : index
    %c0_2 = arith.constant 0 : index
    %3 = vector.load %arg2[%c0, %c0_0, %c0_1, %c0_2] : memref<1x1x36x128xbf16, #tpu.memory_space<vmem>>, vector<1x1x32x128xbf16>
    %4 = vector.shape_cast %3 : vector<1x1x32x128xbf16> to vector<32x128xbf16>
    %c0_3 = arith.constant 0 : index
    %c0_4 = arith.constant 0 : index
    %c0_5 = arith.constant 0 : index
    %5 = vector.load %arg3[%c0_3, %c0_4, %c0_5] : memref<5x128x128xbf16, #tpu.memory_space<vmem>>, vector<1x128x128xbf16>
    %6 = vector.shape_cast %5 : vector<1x128x128xbf16> to vector<128x128xbf16>
    %cst_6 = arith.constant dense<0.000000e+00> : vector<32x128xf32>
    %7 = tpu.matmul %4, %6, %cst_6 {dimension_numbers = #tpu.dot_dimension_numbers<[1], [0], [0], [1], [0, 0, 1, 1], [], []>} : vector<32x128xbf16>, vector<128x128xbf16>, vector<32x128xf32> -> vector<32x128xf32>
    %8 = arith.addf %2, %7 : vector<32x128xf32>
    %c0_7 = arith.constant 0 : index
    %c0_8 = arith.constant 0 : index
    %c1 = arith.constant 1 : index
    %c0_9 = arith.constant 0 : index
    %9 = vector.load %arg2[%c0_7, %c0_8, %c1, %c0_9] : memref<1x1x36x128xbf16, #tpu.memory_space<vmem>>, vector<1x1x32x128xbf16>
    %10 = vector.shape_cast %9 : vector<1x1x32x128xbf16> to vector<32x128xbf16>
    %c1_10 = arith.constant 1 : index
    %c0_11 = arith.constant 0 : index
    %c0_12 = arith.constant 0 : index
    %11 = vector.load %arg3[%c1_10, %c0_11, %c0_12] : memref<5x128x128xbf16, #tpu.memory_space<vmem>>, vector<1x128x128xbf16>
    %12 = vector.shape_cast %11 : vector<1x128x128xbf16> to vector<128x128xbf16>
    %cst_13 = arith.constant dense<0.000000e+00> : vector<32x128xf32>
    %13 = tpu.matmul %10, %12, %cst_13 {dimension_numbers = #tpu.dot_dimension_numbers<[1], [0], [0], [1], [0, 0, 1, 1], [], []>} : vector<32x128xbf16>, vector<128x128xbf16>, vector<32x128xf32> -> vector<32x128xf32>
    %14 = arith.addf %8, %13 : vector<32x128xf32>
    %c0_14 = arith.constant 0 : index
    %c0_15 = arith.constant 0 : index
    %c2 = arith.constant 2 : index
    %c0_16 = arith.constant 0 : index
    %15 = vector.load %arg2[%c0_14, %c0_15, %c2, %c0_16] : memref<1x1x36x128xbf16, #tpu.memory_space<vmem>>, vector<1x1x32x128xbf16>
    %16 = vector.shape_cast %15 : vector<1x1x32x128xbf16> to vector<32x128xbf16>
    %c2_17 = arith.constant 2 : index
    %c0_18 = arith.constant 0 : index
    %c0_19 = arith.constant 0 : index
    %17 = vector.load %arg3[%c2_17, %c0_18, %c0_19] : memref<5x128x128xbf16, #tpu.memory_space<vmem>>, vector<1x128x128xbf16>
    %18 = vector.shape_cast %17 : vector<1x128x128xbf16> to vector<128x128xbf16>
    %cst_20 = arith.constant dense<0.000000e+00> : vector<32x128xf32>
    %19 = tpu.matmul %16, %18, %cst_20 {dimension_numbers = #tpu.dot_dimension_numbers<[1], [0], [0], [1], [0, 0, 1, 1], [], []>} : vector<32x128xbf16>, vector<128x128xbf16>, vector<32x128xf32> -> vector<32x128xf32>
    %20 = arith.addf %14, %19 : vector<32x128xf32>
    %c0_21 = arith.constant 0 : index
    %c0_22 = arith.constant 0 : index
    %c3 = arith.constant 3 : index
    %c0_23 = arith.constant 0 : index
    %21 = vector.load %arg2[%c0_21, %c0_22, %c3, %c0_23] : memref<1x1x36x128xbf16, #tpu.memory_space<vmem>>, vector<1x1x32x128xbf16>
    %22 = vector.shape_cast %21 : vector<1x1x32x128xbf16> to vector<32x128xbf16>
    %c3_24 = arith.constant 3 : index
    %c0_25 = arith.constant 0 : index
    %c0_26 = arith.constant 0 : index
    %23 = vector.load %arg3[%c3_24, %c0_25, %c0_26] : memref<5x128x128xbf16, #tpu.memory_space<vmem>>, vector<1x128x128xbf16>
    %24 = vector.shape_cast %23 : vector<1x128x128xbf16> to vector<128x128xbf16>
    %cst_27 = arith.constant dense<0.000000e+00> : vector<32x128xf32>
    %25 = tpu.matmul %22, %24, %cst_27 {dimension_numbers = #tpu.dot_dimension_numbers<[1], [0], [0], [1], [0, 0, 1, 1], [], []>} : vector<32x128xbf16>, vector<128x128xbf16>, vector<32x128xf32> -> vector<32x128xf32>
    %26 = arith.addf %20, %25 : vector<32x128xf32>
    %c0_28 = arith.constant 0 : index
    %c0_29 = arith.constant 0 : index
    %c4 = arith.constant 4 : index
    %c0_30 = arith.constant 0 : index
    %27 = vector.load %arg2[%c0_28, %c0_29, %c4, %c0_30] : memref<1x1x36x128xbf16, #tpu.memory_space<vmem>>, vector<1x1x32x128xbf16>
    %28 = vector.shape_cast %27 : vector<1x1x32x128xbf16> to vector<32x128xbf16>
    %c4_31 = arith.constant 4 : index
    %c0_32 = arith.constant 0 : index
    %c0_33 = arith.constant 0 : index
    %29 = vector.load %arg3[%c4_31, %c0_32, %c0_33] : memref<5x128x128xbf16, #tpu.memory_space<vmem>>, vector<1x128x128xbf16>
    %30 = vector.shape_cast %29 : vector<1x128x128xbf16> to vector<128x128xbf16>
    %cst_34 = arith.constant dense<0.000000e+00> : vector<32x128xf32>
    %31 = tpu.matmul %28, %30, %cst_34 {dimension_numbers = #tpu.dot_dimension_numbers<[1], [0], [0], [1], [0, 0, 1, 1], [], []>} : vector<32x128xbf16>, vector<128x128xbf16>, vector<32x128xf32> -> vector<32x128xf32>
    %32 = arith.addf %26, %31 : vector<32x128xf32>
    %c0_35 = arith.constant 0 : index
    %c0_36 = arith.constant 0 : index
    %33 = vector.load %arg4[%c0_35, %c0_36] : memref<1x128xf32, #tpu.memory_space<vmem>>, vector<1x128xf32>
    %34 = vector.broadcast %33 : vector<1x128xf32> to vector<32x128xf32>
    %35 = arith.addf %32, %34 : vector<32x128xf32>
    %36 = math.tanh %35 : vector<32x128xf32>
    %c2_i32 = arith.constant 2 : i32
    %37 = arith.addi %1, %c2_i32 : i32
    %38 = tpu.iota {dimensions = array<i32: 0>} : vector<32x1xi32>
    %39 = vector.broadcast %37 : i32 to vector<32x1xi32>
    %40 = arith.addi %39, %38 : vector<32x1xi32>
    %c0_i32 = arith.constant 0 : i32
    %41 = vector.broadcast %c0_i32 : i32 to vector<32x1xi32>
    %42 = arith.cmpi sge, %40, %41 : vector<32x1xi32>
    %c30_i32 = arith.constant 30 : i32
    %43 = vector.broadcast %c30_i32 : i32 to vector<32x1xi32>
    %44 = arith.cmpi slt, %40, %43 : vector<32x1xi32>
    %45 = arith.andi %42, %44 : vector<32x1xi1>
    %cst_37 = arith.constant 0.000000e+00 : f32
    %46 = vector.shape_cast %45 : vector<32x1xi1> to vector<32x1xi1>
    %47 = vector.broadcast %46 : vector<32x1xi1> to vector<32x128xi1>
    %48 = vector.broadcast %cst_37 : f32 to vector<32x128xf32>
    %49 = arith.select %47, %36, %48 : vector<32x128xi1>, vector<32x128xf32>
    %50 = arith.truncf %49 : vector<32x128xf32> to vector<32x128xbf16>
    %c0_38 = arith.constant 0 : index
    %c0_39 = arith.constant 0 : index
    %51 = vector.load %arg14[%c0_38, %c0_39] : memref<32x128xbf16, #tpu.memory_space<vmem>>, vector<32x128xbf16>
    tpu.vector_store %arg14[%c0_38, %c0_39], %50 {strides = array<i32>} : memref<32x128xbf16, #tpu.memory_space<vmem>>, vector<32x128xbf16>,
    %cst_40 = arith.constant 0.000000e+00 : f32
    %52 = vector.broadcast %cst_40 : f32 to vector<28x128xf32>
    %c0_41 = arith.constant 0 : index
    %c0_42 = arith.constant 0 : index
    %53 = vector.load %arg14[%c0_41, %c0_42] : memref<32x128xbf16, #tpu.memory_space<vmem>>, vector<28x128xbf16>
    %c0_43 = arith.constant 0 : index
    %c0_44 = arith.constant 0 : index
    %c0_45 = arith.constant 0 : index
    %54 = vector.load %arg5[%c0_43, %c0_44, %c0_45] : memref<5x128x128xbf16, #tpu.memory_space<vmem>>, vector<1x128x128xbf16>
    %55 = vector.shape_cast %54 : vector<1x128x128xbf16> to vector<128x128xbf16>
    %cst_46 = arith.constant dense<0.000000e+00> : vector<28x128xf32>
    %56 = tpu.matmul %53, %55, %cst_46 {dimension_numbers = #tpu.dot_dimension_numbers<[1], [0], [0], [1], [0, 0, 1, 1], [], []>} : vector<28x128xbf16>, vector<128x128xbf16>, vector<28x128xf32> -> vector<28x128xf32>
    %57 = arith.addf %52, %56 : vector<28x128xf32>
    %c1_47 = arith.constant 1 : index
    %c0_48 = arith.constant 0 : index
    %58 = vector.load %arg14[%c1_47, %c0_48] : memref<32x128xbf16, #tpu.memory_space<vmem>>, vector<28x128xbf16>
    %c1_49 = arith.constant 1 : index
    %c0_50 = arith.constant 0 : index
    %c0_51 = arith.constant 0 : index
    %59 = vector.load %arg5[%c1_49, %c0_50, %c0_51] : memref<5x128x128xbf16, #tpu.memory_space<vmem>>, vector<1x128x128xbf16>
    %60 = vector.shape_cast %59 : vector<1x128x128xbf16> to vector<128x128xbf16>
    %cst_52 = arith.constant dense<0.000000e+00> : vector<28x128xf32>
    %61 = tpu.matmul %58, %60, %cst_52 {dimension_numbers = #tpu.dot_dimension_numbers<[1], [0], [0], [1], [0, 0, 1, 1], [], []>} : vector<28x128xbf16>, vector<128x128xbf16>, vector<28x128xf32> -> vector<28x128xf32>
    %62 = arith.addf %57, %61 : vector<28x128xf32>
    %c2_53 = arith.constant 2 : index
    %c0_54 = arith.constant 0 : index
    %63 = vector.load %arg14[%c2_53, %c0_54] : memref<32x128xbf16, #tpu.memory_space<vmem>>, vector<28x128xbf16>
    %c2_55 = arith.constant 2 : index
    %c0_56 = arith.constant 0 : index
    %c0_57 = arith.constant 0 : index
    %64 = vector.load %arg5[%c2_55, %c0_56, %c0_57] : memref<5x128x128xbf16, #tpu.memory_space<vmem>>, vector<1x128x128xbf16>
    %65 = vector.shape_cast %64 : vector<1x128x128xbf16> to vector<128x128xbf16>
    %cst_58 = arith.constant dense<0.000000e+00> : vector<28x128xf32>
    %66 = tpu.matmul %63, %65, %cst_58 {dimension_numbers = #tpu.dot_dimension_numbers<[1], [0], [0], [1], [0, 0, 1, 1], [], []>} : vector<28x128xbf16>, vector<128x128xbf16>, vector<28x128xf32> -> vector<28x128xf32>
    %67 = arith.addf %62, %66 : vector<28x128xf32>
    %c3_59 = arith.constant 3 : index
    %c0_60 = arith.constant 0 : index
    %68 = vector.load %arg14[%c3_59, %c0_60] : memref<32x128xbf16, #tpu.memory_space<vmem>>, vector<28x128xbf16>
    %c3_61 = arith.constant 3 : index
    %c0_62 = arith.constant 0 : index
    %c0_63 = arith.constant 0 : index
    %69 = vector.load %arg5[%c3_61, %c0_62, %c0_63] : memref<5x128x128xbf16, #tpu.memory_space<vmem>>, vector<1x128x128xbf16>
    %70 = vector.shape_cast %69 : vector<1x128x128xbf16> to vector<128x128xbf16>
    %cst_64 = arith.constant dense<0.000000e+00> : vector<28x128xf32>
    %71 = tpu.matmul %68, %70, %cst_64 {dimension_numbers = #tpu.dot_dimension_numbers<[1], [0], [0], [1], [0, 0, 1, 1], [], []>} : vector<28x128xbf16>, vector<128x128xbf16>, vector<28x128xf32> -> vector<28x128xf32>
    %72 = arith.addf %67, %71 : vector<28x128xf32>
    %c4_65 = arith.constant 4 : index
    %c0_66 = arith.constant 0 : index
    %73 = vector.load %arg14[%c4_65, %c0_66] : memref<32x128xbf16, #tpu.memory_space<vmem>>, vector<28x128xbf16>
    %c4_67 = arith.constant 4 : index
    %c0_68 = arith.constant 0 : index
    %c0_69 = arith.constant 0 : index
    %74 = vector.load %arg5[%c4_67, %c0_68, %c0_69] : memref<5x128x128xbf16, #tpu.memory_space<vmem>>, vector<1x128x128xbf16>
    %75 = vector.shape_cast %74 : vector<1x128x128xbf16> to vector<128x128xbf16>
    %cst_70 = arith.constant dense<0.000000e+00> : vector<28x128xf32>
    %76 = tpu.matmul %73, %75, %cst_70 {dimension_numbers = #tpu.dot_dimension_numbers<[1], [0], [0], [1], [0, 0, 1, 1], [], []>} : vector<28x128xbf16>, vector<128x128xbf16>, vector<28x128xf32> -> vector<28x128xf32>
    %77 = arith.addf %72, %76 : vector<28x128xf32>
    %c0_71 = arith.constant 0 : index
    %c0_72 = arith.constant 0 : index
    %78 = vector.load %arg6[%c0_71, %c0_72] : memref<1x128xf32, #tpu.memory_space<vmem>>, vector<1x128xf32>
    %79 = vector.broadcast %78 : vector<1x128xf32> to vector<28x128xf32>
    %80 = arith.addf %77, %79 : vector<28x128xf32>
    %81 = math.tanh %80 : vector<28x128xf32>
    %c4_i32 = arith.constant 4 : i32
    %82 = arith.addi %1, %c4_i32 : i32
    %83 = tpu.iota {dimensions = array<i32: 0>} : vector<28x1xi32>
    %84 = vector.broadcast %82 : i32 to vector<28x1xi32>
    %85 = arith.addi %84, %83 : vector<28x1xi32>
    %c0_i32_73 = arith.constant 0 : i32
    %86 = vector.broadcast %c0_i32_73 : i32 to vector<28x1xi32>
    %87 = arith.cmpi sge, %85, %86 : vector<28x1xi32>
    %c30_i32_74 = arith.constant 30 : i32
    %88 = vector.broadcast %c30_i32_74 : i32 to vector<28x1xi32>
    %89 = arith.cmpi slt, %85, %88 : vector<28x1xi32>
    %90 = arith.andi %87, %89 : vector<28x1xi1>
    %cst_75 = arith.constant 0.000000e+00 : f32
    %91 = vector.shape_cast %90 : vector<28x1xi1> to vector<28x1xi1>
    %92 = vector.broadcast %91 : vector<28x1xi1> to vector<28x128xi1>
    %93 = vector.broadcast %cst_75 : f32 to vector<28x128xf32>
    %94 = arith.select %92, %81, %93 : vector<28x128xi1>, vector<28x128xf32>
    %95 = arith.truncf %94 : vector<28x128xf32> to vector<28x128xbf16>
    %c0_76 = arith.constant 0 : index
    %c0_77 = arith.constant 0 : index
    %96 = vector.load %arg15[%c0_76, %c0_77] : memref<32x128xbf16, #tpu.memory_space<vmem>>, vector<28x128xbf16>
    tpu.vector_store %arg15[%c0_76, %c0_77], %95 {strides = array<i32>} : memref<32x128xbf16, #tpu.memory_space<vmem>>, vector<28x128xbf16>,
    %cst_78 = arith.constant 0.000000e+00 : f32
    %97 = vector.broadcast %cst_78 : f32 to vector<24x128xf32>
    %c0_79 = arith.constant 0 : index
    %c0_80 = arith.constant 0 : index
    %98 = vector.load %arg15[%c0_79, %c0_80] : memref<32x128xbf16, #tpu.memory_space<vmem>>, vector<24x128xbf16>
    %c0_81 = arith.constant 0 : index
    %c0_82 = arith.constant 0 : index
    %c0_83 = arith.constant 0 : index
    %99 = vector.load %arg7[%c0_81, %c0_82, %c0_83] : memref<5x128x128xbf16, #tpu.memory_space<vmem>>, vector<1x128x128xbf16>
    %100 = vector.shape_cast %99 : vector<1x128x128xbf16> to vector<128x128xbf16>
    %cst_84 = arith.constant dense<0.000000e+00> : vector<24x128xf32>
    %101 = tpu.matmul %98, %100, %cst_84 {dimension_numbers = #tpu.dot_dimension_numbers<[1], [0], [0], [1], [0, 0, 1, 1], [], []>} : vector<24x128xbf16>, vector<128x128xbf16>, vector<24x128xf32> -> vector<24x128xf32>
    %102 = arith.addf %97, %101 : vector<24x128xf32>
    %c1_85 = arith.constant 1 : index
    %c0_86 = arith.constant 0 : index
    %103 = vector.load %arg15[%c1_85, %c0_86] : memref<32x128xbf16, #tpu.memory_space<vmem>>, vector<24x128xbf16>
    %c1_87 = arith.constant 1 : index
    %c0_88 = arith.constant 0 : index
    %c0_89 = arith.constant 0 : index
    %104 = vector.load %arg7[%c1_87, %c0_88, %c0_89] : memref<5x128x128xbf16, #tpu.memory_space<vmem>>, vector<1x128x128xbf16>
    %105 = vector.shape_cast %104 : vector<1x128x128xbf16> to vector<128x128xbf16>
    %cst_90 = arith.constant dense<0.000000e+00> : vector<24x128xf32>
    %106 = tpu.matmul %103, %105, %cst_90 {dimension_numbers = #tpu.dot_dimension_numbers<[1], [0], [0], [1], [0, 0, 1, 1], [], []>} : vector<24x128xbf16>, vector<128x128xbf16>, vector<24x128xf32> -> vector<24x128xf32>
    %107 = arith.addf %102, %106 : vector<24x128xf32>
    %c2_91 = arith.constant 2 : index
    %c0_92 = arith.constant 0 : index
    %108 = vector.load %arg15[%c2_91, %c0_92] : memref<32x128xbf16, #tpu.memory_space<vmem>>, vector<24x128xbf16>
    %c2_93 = arith.constant 2 : index
    %c0_94 = arith.constant 0 : index
    %c0_95 = arith.constant 0 : index
    %109 = vector.load %arg7[%c2_93, %c0_94, %c0_95] : memref<5x128x128xbf16, #tpu.memory_space<vmem>>, vector<1x128x128xbf16>
    %110 = vector.shape_cast %109 : vector<1x128x128xbf16> to vector<128x128xbf16>
    %cst_96 = arith.constant dense<0.000000e+00> : vector<24x128xf32>
    %111 = tpu.matmul %108, %110, %cst_96 {dimension_numbers = #tpu.dot_dimension_numbers<[1], [0], [0], [1], [0, 0, 1, 1], [], []>} : vector<24x128xbf16>, vector<128x128xbf16>, vector<24x128xf32> -> vector<24x128xf32>
    %112 = arith.addf %107, %111 : vector<24x128xf32>
    %c3_97 = arith.constant 3 : index
    %c0_98 = arith.constant 0 : index
    %113 = vector.load %arg15[%c3_97, %c0_98] : memref<32x128xbf16, #tpu.memory_space<vmem>>, vector<24x128xbf16>
    %c3_99 = arith.constant 3 : index
    %c0_100 = arith.constant 0 : index
    %c0_101 = arith.constant 0 : index
    %114 = vector.load %arg7[%c3_99, %c0_100, %c0_101] : memref<5x128x128xbf16, #tpu.memory_space<vmem>>, vector<1x128x128xbf16>
    %115 = vector.shape_cast %114 : vector<1x128x128xbf16> to vector<128x128xbf16>
    %cst_102 = arith.constant dense<0.000000e+00> : vector<24x128xf32>
    %116 = tpu.matmul %113, %115, %cst_102 {dimension_numbers = #tpu.dot_dimension_numbers<[1], [0], [0], [1], [0, 0, 1, 1], [], []>} : vector<24x128xbf16>, vector<128x128xbf16>, vector<24x128xf32> -> vector<24x128xf32>
    %117 = arith.addf %112, %116 : vector<24x128xf32>
    %c4_103 = arith.constant 4 : index
    %c0_104 = arith.constant 0 : index
    %118 = vector.load %arg15[%c4_103, %c0_104] : memref<32x128xbf16, #tpu.memory_space<vmem>>, vector<24x128xbf16>
    %c4_105 = arith.constant 4 : index
    %c0_106 = arith.constant 0 : index
    %c0_107 = arith.constant 0 : index
    %119 = vector.load %arg7[%c4_105, %c0_106, %c0_107] : memref<5x128x128xbf16, #tpu.memory_space<vmem>>, vector<1x128x128xbf16>
    %120 = vector.shape_cast %119 : vector<1x128x128xbf16> to vector<128x128xbf16>
    %cst_108 = arith.constant dense<0.000000e+00> : vector<24x128xf32>
    %121 = tpu.matmul %118, %120, %cst_108 {dimension_numbers = #tpu.dot_dimension_numbers<[1], [0], [0], [1], [0, 0, 1, 1], [], []>} : vector<24x128xbf16>, vector<128x128xbf16>, vector<24x128xf32> -> vector<24x128xf32>
    %122 = arith.addf %117, %121 : vector<24x128xf32>
    %c0_109 = arith.constant 0 : index
    %c0_110 = arith.constant 0 : index
    %123 = vector.load %arg8[%c0_109, %c0_110] : memref<1x128xf32, #tpu.memory_space<vmem>>, vector<1x128xf32>
    %124 = vector.broadcast %123 : vector<1x128xf32> to vector<24x128xf32>
    %125 = arith.addf %122, %124 : vector<24x128xf32>
    %126 = math.tanh %125 : vector<24x128xf32>
    %c6_i32 = arith.constant 6 : i32
    %127 = arith.addi %1, %c6_i32 : i32
    %128 = tpu.iota {dimensions = array<i32: 0>} : vector<24x1xi32>
    %129 = vector.broadcast %127 : i32 to vector<24x1xi32>
    %130 = arith.addi %129, %128 : vector<24x1xi32>
    %c0_i32_111 = arith.constant 0 : i32
    %131 = vector.broadcast %c0_i32_111 : i32 to vector<24x1xi32>
    %132 = arith.cmpi sge, %130, %131 : vector<24x1xi32>
    %c30_i32_112 = arith.constant 30 : i32
    %133 = vector.broadcast %c30_i32_112 : i32 to vector<24x1xi32>
    %134 = arith.cmpi slt, %130, %133 : vector<24x1xi32>
    %135 = arith.andi %132, %134 : vector<24x1xi1>
    %cst_113 = arith.constant 0.000000e+00 : f32
    %136 = vector.shape_cast %135 : vector<24x1xi1> to vector<24x1xi1>
    %137 = vector.broadcast %136 : vector<24x1xi1> to vector<24x128xi1>
    %138 = vector.broadcast %cst_113 : f32 to vector<24x128xf32>
    %139 = arith.select %137, %126, %138 : vector<24x128xi1>, vector<24x128xf32>
    %140 = arith.truncf %139 : vector<24x128xf32> to vector<24x128xbf16>
    %c0_114 = arith.constant 0 : index
    %c0_115 = arith.constant 0 : index
    %141 = vector.load %arg14[%c0_114, %c0_115] : memref<32x128xbf16, #tpu.memory_space<vmem>>, vector<24x128xbf16>
    tpu.vector_store %arg14[%c0_114, %c0_115], %140 {strides = array<i32>} : memref<32x128xbf16, #tpu.memory_space<vmem>>, vector<24x128xbf16>,
    %cst_116 = arith.constant 0.000000e+00 : f32
    %142 = vector.broadcast %cst_116 : f32 to vector<20x128xf32>
    %c0_117 = arith.constant 0 : index
    %c0_118 = arith.constant 0 : index
    %143 = vector.load %arg14[%c0_117, %c0_118] : memref<32x128xbf16, #tpu.memory_space<vmem>>, vector<20x128xbf16>
    %c0_119 = arith.constant 0 : index
    %c0_120 = arith.constant 0 : index
    %c0_121 = arith.constant 0 : index
    %144 = vector.load %arg9[%c0_119, %c0_120, %c0_121] : memref<5x128x128xbf16, #tpu.memory_space<vmem>>, vector<1x128x128xbf16>
    %145 = vector.shape_cast %144 : vector<1x128x128xbf16> to vector<128x128xbf16>
    %cst_122 = arith.constant dense<0.000000e+00> : vector<20x128xf32>
    %146 = tpu.matmul %143, %145, %cst_122 {dimension_numbers = #tpu.dot_dimension_numbers<[1], [0], [0], [1], [0, 0, 1, 1], [], []>} : vector<20x128xbf16>, vector<128x128xbf16>, vector<20x128xf32> -> vector<20x128xf32>
    %147 = arith.addf %142, %146 : vector<20x128xf32>
    %c1_123 = arith.constant 1 : index
    %c0_124 = arith.constant 0 : index
    %148 = vector.load %arg14[%c1_123, %c0_124] : memref<32x128xbf16, #tpu.memory_space<vmem>>, vector<20x128xbf16>
    %c1_125 = arith.constant 1 : index
    %c0_126 = arith.constant 0 : index
    %c0_127 = arith.constant 0 : index
    %149 = vector.load %arg9[%c1_125, %c0_126, %c0_127] : memref<5x128x128xbf16, #tpu.memory_space<vmem>>, vector<1x128x128xbf16>
    %150 = vector.shape_cast %149 : vector<1x128x128xbf16> to vector<128x128xbf16>
    %cst_128 = arith.constant dense<0.000000e+00> : vector<20x128xf32>
    %151 = tpu.matmul %148, %150, %cst_128 {dimension_numbers = #tpu.dot_dimension_numbers<[1], [0], [0], [1], [0, 0, 1, 1], [], []>} : vector<20x128xbf16>, vector<128x128xbf16>, vector<20x128xf32> -> vector<20x128xf32>
    %152 = arith.addf %147, %151 : vector<20x128xf32>
    %c2_129 = arith.constant 2 : index
    %c0_130 = arith.constant 0 : index
    %153 = vector.load %arg14[%c2_129, %c0_130] : memref<32x128xbf16, #tpu.memory_space<vmem>>, vector<20x128xbf16>
    %c2_131 = arith.constant 2 : index
    %c0_132 = arith.constant 0 : index
    %c0_133 = arith.constant 0 : index
    %154 = vector.load %arg9[%c2_131, %c0_132, %c0_133] : memref<5x128x128xbf16, #tpu.memory_space<vmem>>, vector<1x128x128xbf16>
    %155 = vector.shape_cast %154 : vector<1x128x128xbf16> to vector<128x128xbf16>
    %cst_134 = arith.constant dense<0.000000e+00> : vector<20x128xf32>
    %156 = tpu.matmul %153, %155, %cst_134 {dimension_numbers = #tpu.dot_dimension_numbers<[1], [0], [0], [1], [0, 0, 1, 1], [], []>} : vector<20x128xbf16>, vector<128x128xbf16>, vector<20x128xf32> -> vector<20x128xf32>
    %157 = arith.addf %152, %156 : vector<20x128xf32>
    %c3_135 = arith.constant 3 : index
    %c0_136 = arith.constant 0 : index
    %158 = vector.load %arg14[%c3_135, %c0_136] : memref<32x128xbf16, #tpu.memory_space<vmem>>, vector<20x128xbf16>
    %c3_137 = arith.constant 3 : index
    %c0_138 = arith.constant 0 : index
    %c0_139 = arith.constant 0 : index
    %159 = vector.load %arg9[%c3_137, %c0_138, %c0_139] : memref<5x128x128xbf16, #tpu.memory_space<vmem>>, vector<1x128x128xbf16>
    %160 = vector.shape_cast %159 : vector<1x128x128xbf16> to vector<128x128xbf16>
    %cst_140 = arith.constant dense<0.000000e+00> : vector<20x128xf32>
    %161 = tpu.matmul %158, %160, %cst_140 {dimension_numbers = #tpu.dot_dimension_numbers<[1], [0], [0], [1], [0, 0, 1, 1], [], []>} : vector<20x128xbf16>, vector<128x128xbf16>, vector<20x128xf32> -> vector<20x128xf32>
    %162 = arith.addf %157, %161 : vector<20x128xf32>
    %c4_141 = arith.constant 4 : index
    %c0_142 = arith.constant 0 : index
    %163 = vector.load %arg14[%c4_141, %c0_142] : memref<32x128xbf16, #tpu.memory_space<vmem>>, vector<20x128xbf16>
    %c4_143 = arith.constant 4 : index
    %c0_144 = arith.constant 0 : index
    %c0_145 = arith.constant 0 : index
    %164 = vector.load %arg9[%c4_143, %c0_144, %c0_145] : memref<5x128x128xbf16, #tpu.memory_space<vmem>>, vector<1x128x128xbf16>
    %165 = vector.shape_cast %164 : vector<1x128x128xbf16> to vector<128x128xbf16>
    %cst_146 = arith.constant dense<0.000000e+00> : vector<20x128xf32>
    %166 = tpu.matmul %163, %165, %cst_146 {dimension_numbers = #tpu.dot_dimension_numbers<[1], [0], [0], [1], [0, 0, 1, 1], [], []>} : vector<20x128xbf16>, vector<128x128xbf16>, vector<20x128xf32> -> vector<20x128xf32>
    %167 = arith.addf %162, %166 : vector<20x128xf32>
    %c0_147 = arith.constant 0 : index
    %c0_148 = arith.constant 0 : index
    %168 = vector.load %arg10[%c0_147, %c0_148] : memref<1x128xf32, #tpu.memory_space<vmem>>, vector<1x128xf32>
    %169 = vector.broadcast %168 : vector<1x128xf32> to vector<20x128xf32>
    %170 = arith.addf %167, %169 : vector<20x128xf32>
    %171 = math.tanh %170 : vector<20x128xf32>
    %c8_i32 = arith.constant 8 : i32
    %172 = arith.addi %1, %c8_i32 : i32
    %173 = tpu.iota {dimensions = array<i32: 0>} : vector<20x1xi32>
    %174 = vector.broadcast %172 : i32 to vector<20x1xi32>
    %175 = arith.addi %174, %173 : vector<20x1xi32>
    %c0_i32_149 = arith.constant 0 : i32
    %176 = vector.broadcast %c0_i32_149 : i32 to vector<20x1xi32>
    %177 = arith.cmpi sge, %175, %176 : vector<20x1xi32>
    %c30_i32_150 = arith.constant 30 : i32
    %178 = vector.broadcast %c30_i32_150 : i32 to vector<20x1xi32>
    %179 = arith.cmpi slt, %175, %178 : vector<20x1xi32>
    %180 = arith.andi %177, %179 : vector<20x1xi1>
    %cst_151 = arith.constant 0.000000e+00 : f32
    %181 = vector.shape_cast %180 : vector<20x1xi1> to vector<20x1xi1>
    %182 = vector.broadcast %181 : vector<20x1xi1> to vector<20x128xi1>
    %183 = vector.broadcast %cst_151 : f32 to vector<20x128xf32>
    %184 = arith.select %182, %171, %183 : vector<20x128xi1>, vector<20x128xf32>
    %185 = arith.truncf %184 : vector<20x128xf32> to vector<20x128xbf16>
    %c0_152 = arith.constant 0 : index
    %c0_153 = arith.constant 0 : index
    %186 = vector.load %arg15[%c0_152, %c0_153] : memref<32x128xbf16, #tpu.memory_space<vmem>>, vector<20x128xbf16>
    tpu.vector_store %arg15[%c0_152, %c0_153], %185 {strides = array<i32>} : memref<32x128xbf16, #tpu.memory_space<vmem>>, vector<20x128xbf16>,
    %cst_154 = arith.constant 0.000000e+00 : f32
    %187 = vector.broadcast %cst_154 : f32 to vector<16x128xf32>
    %c0_155 = arith.constant 0 : index
    %c0_156 = arith.constant 0 : index
    %188 = vector.load %arg15[%c0_155, %c0_156] : memref<32x128xbf16, #tpu.memory_space<vmem>>, vector<16x128xbf16>
    %c0_157 = arith.constant 0 : index
    %c0_158 = arith.constant 0 : index
    %c0_159 = arith.constant 0 : index
    %189 = vector.load %arg11[%c0_157, %c0_158, %c0_159] : memref<5x128x128xbf16, #tpu.memory_space<vmem>>, vector<1x128x128xbf16>
    %190 = vector.shape_cast %189 : vector<1x128x128xbf16> to vector<128x128xbf16>
    %cst_160 = arith.constant dense<0.000000e+00> : vector<16x128xf32>
    %191 = tpu.matmul %188, %190, %cst_160 {dimension_numbers = #tpu.dot_dimension_numbers<[1], [0], [0], [1], [0, 0, 1, 1], [], []>} : vector<16x128xbf16>, vector<128x128xbf16>, vector<16x128xf32> -> vector<16x128xf32>
    %192 = arith.addf %187, %191 : vector<16x128xf32>
    %c1_161 = arith.constant 1 : index
    %c0_162 = arith.constant 0 : index
    %193 = vector.load %arg15[%c1_161, %c0_162] : memref<32x128xbf16, #tpu.memory_space<vmem>>, vector<16x128xbf16>
    %c1_163 = arith.constant 1 : index
    %c0_164 = arith.constant 0 : index
    %c0_165 = arith.constant 0 : index
    %194 = vector.load %arg11[%c1_163, %c0_164, %c0_165] : memref<5x128x128xbf16, #tpu.memory_space<vmem>>, vector<1x128x128xbf16>
    %195 = vector.shape_cast %194 : vector<1x128x128xbf16> to vector<128x128xbf16>
    %cst_166 = arith.constant dense<0.000000e+00> : vector<16x128xf32>
    %196 = tpu.matmul %193, %195, %cst_166 {dimension_numbers = #tpu.dot_dimension_numbers<[1], [0], [0], [1], [0, 0, 1, 1], [], []>} : vector<16x128xbf16>, vector<128x128xbf16>, vector<16x128xf32> -> vector<16x128xf32>
    %197 = arith.addf %192, %196 : vector<16x128xf32>
    %c2_167 = arith.constant 2 : index
    %c0_168 = arith.constant 0 : index
    %198 = vector.load %arg15[%c2_167, %c0_168] : memref<32x128xbf16, #tpu.memory_space<vmem>>, vector<16x128xbf16>
    %c2_169 = arith.constant 2 : index
    %c0_170 = arith.constant 0 : index
    %c0_171 = arith.constant 0 : index
    %199 = vector.load %arg11[%c2_169, %c0_170, %c0_171] : memref<5x128x128xbf16, #tpu.memory_space<vmem>>, vector<1x128x128xbf16>
    %200 = vector.shape_cast %199 : vector<1x128x128xbf16> to vector<128x128xbf16>
    %cst_172 = arith.constant dense<0.000000e+00> : vector<16x128xf32>
    %201 = tpu.matmul %198, %200, %cst_172 {dimension_numbers = #tpu.dot_dimension_numbers<[1], [0], [0], [1], [0, 0, 1, 1], [], []>} : vector<16x128xbf16>, vector<128x128xbf16>, vector<16x128xf32> -> vector<16x128xf32>
    %202 = arith.addf %197, %201 : vector<16x128xf32>
    %c3_173 = arith.constant 3 : index
    %c0_174 = arith.constant 0 : index
    %203 = vector.load %arg15[%c3_173, %c0_174] : memref<32x128xbf16, #tpu.memory_space<vmem>>, vector<16x128xbf16>
    %c3_175 = arith.constant 3 : index
    %c0_176 = arith.constant 0 : index
    %c0_177 = arith.constant 0 : index
    %204 = vector.load %arg11[%c3_175, %c0_176, %c0_177] : memref<5x128x128xbf16, #tpu.memory_space<vmem>>, vector<1x128x128xbf16>
    %205 = vector.shape_cast %204 : vector<1x128x128xbf16> to vector<128x128xbf16>
    %cst_178 = arith.constant dense<0.000000e+00> : vector<16x128xf32>
    %206 = tpu.matmul %203, %205, %cst_178 {dimension_numbers = #tpu.dot_dimension_numbers<[1], [0], [0], [1], [0, 0, 1, 1], [], []>} : vector<16x128xbf16>, vector<128x128xbf16>, vector<16x128xf32> -> vector<16x128xf32>
    %207 = arith.addf %202, %206 : vector<16x128xf32>
    %c4_179 = arith.constant 4 : index
    %c0_180 = arith.constant 0 : index
    %208 = vector.load %arg15[%c4_179, %c0_180] : memref<32x128xbf16, #tpu.memory_space<vmem>>, vector<16x128xbf16>
    %c4_181 = arith.constant 4 : index
    %c0_182 = arith.constant 0 : index
    %c0_183 = arith.constant 0 : index
    %209 = vector.load %arg11[%c4_181, %c0_182, %c0_183] : memref<5x128x128xbf16, #tpu.memory_space<vmem>>, vector<1x128x128xbf16>
    %210 = vector.shape_cast %209 : vector<1x128x128xbf16> to vector<128x128xbf16>
    %cst_184 = arith.constant dense<0.000000e+00> : vector<16x128xf32>
    %211 = tpu.matmul %208, %210, %cst_184 {dimension_numbers = #tpu.dot_dimension_numbers<[1], [0], [0], [1], [0, 0, 1, 1], [], []>} : vector<16x128xbf16>, vector<128x128xbf16>, vector<16x128xf32> -> vector<16x128xf32>
    %212 = arith.addf %207, %211 : vector<16x128xf32>
    %c0_185 = arith.constant 0 : index
    %c0_186 = arith.constant 0 : index
    %213 = vector.load %arg12[%c0_185, %c0_186] : memref<1x128xf32, #tpu.memory_space<vmem>>, vector<1x128xf32>
    %214 = vector.broadcast %213 : vector<1x128xf32> to vector<16x128xf32>
    %215 = arith.addf %212, %214 : vector<16x128xf32>
    %c0_187 = arith.constant 0 : index
    %c0_188 = arith.constant 0 : index
    %c0_189 = arith.constant 0 : index
    %216 = vector.load %arg13[%c0_187, %c0_188, %c0_189] : memref<1x16x128xf32, #tpu.memory_space<vmem>>, vector<1x16x128xf32>
    %217 = vector.shape_cast %216 : vector<1x16x128xf32> to vector<16x128xf32>
    %218 = vector.shape_cast %215 : vector<16x128xf32> to vector<1x16x128xf32>
    tpu.vector_store %arg13[%c0_187, %c0_188, %c0_189], %218 {strides = array<i32>} : memref<1x16x128xf32, #tpu.memory_space<vmem>>, vector<1x16x128xf32>,
    return
  }
  func.func @transform_0(%arg0: i32, %arg1: i32) -> (i32, i32, i32, i32) {
    %c0_i32 = arith.constant 0 : i32
    %c0_i32_0 = arith.constant 0 : i32
    %c0_i32_1 = arith.constant 0 : i32
    return %arg0, %arg1, %c0_i32, %c0_i32_0 : i32, i32, i32, i32
  }
  func.func @transform_1(%arg0: i32, %arg1: i32) -> (i32, i32, i32) {
    %c0_i32 = arith.constant 0 : i32
    %c0_i32_0 = arith.constant 0 : i32
    %c0_i32_1 = arith.constant 0 : i32
    %c0_i32_2 = arith.constant 0 : i32
    return %c0_i32, %c0_i32_0, %c0_i32_1 : i32, i32, i32
  }
  func.func @transform_2(%arg0: i32, %arg1: i32) -> (i32, i32) {
    %c0_i32 = arith.constant 0 : i32
    %c0_i32_0 = arith.constant 0 : i32
    %c0_i32_1 = arith.constant 0 : i32
    return %c0_i32, %c0_i32_0 : i32, i32
  }
  func.func @transform_3(%arg0: i32, %arg1: i32) -> (i32, i32, i32) {
    %c0_i32 = arith.constant 0 : i32
    %c0_i32_0 = arith.constant 0 : i32
    %c0_i32_1 = arith.constant 0 : i32
    %c0_i32_2 = arith.constant 0 : i32
    return %c0_i32, %c0_i32_0, %c0_i32_1 : i32, i32, i32
  }
  func.func @transform_4(%arg0: i32, %arg1: i32) -> (i32, i32) {
    %c0_i32 = arith.constant 0 : i32
    %c0_i32_0 = arith.constant 0 : i32
    %c0_i32_1 = arith.constant 0 : i32
    return %c0_i32, %c0_i32_0 : i32, i32
  }
  func.func @transform_5(%arg0: i32, %arg1: i32) -> (i32, i32, i32) {
    %c0_i32 = arith.constant 0 : i32
    %c0_i32_0 = arith.constant 0 : i32
    %c0_i32_1 = arith.constant 0 : i32
    %c0_i32_2 = arith.constant 0 : i32
    return %c0_i32, %c0_i32_0, %c0_i32_1 : i32, i32, i32
  }
  func.func @transform_6(%arg0: i32, %arg1: i32) -> (i32, i32) {
    %c0_i32 = arith.constant 0 : i32
    %c0_i32_0 = arith.constant 0 : i32
    %c0_i32_1 = arith.constant 0 : i32
    return %c0_i32, %c0_i32_0 : i32, i32
  }
  func.func @transform_7(%arg0: i32, %arg1: i32) -> (i32, i32, i32) {
    %c0_i32 = arith.constant 0 : i32
    %c0_i32_0 = arith.constant 0 : i32
    %c0_i32_1 = arith.constant 0 : i32
    %c0_i32_2 = arith.constant 0 : i32
    return %c0_i32, %c0_i32_0, %c0_i32_1 : i32, i32, i32
  }
  func.func @transform_8(%arg0: i32, %arg1: i32) -> (i32, i32) {
    %c0_i32 = arith.constant 0 : i32
    %c0_i32_0 = arith.constant 0 : i32
    %c0_i32_1 = arith.constant 0 : i32
    return %c0_i32, %c0_i32_0 : i32, i32
  }
  func.func @transform_9(%arg0: i32, %arg1: i32) -> (i32, i32, i32) {
    %c0_i32 = arith.constant 0 : i32
    %c0_i32_0 = arith.constant 0 : i32
    %c0_i32_1 = arith.constant 0 : i32
    %c0_i32_2 = arith.constant 0 : i32
    return %c0_i32, %c0_i32_0, %c0_i32_1 : i32, i32, i32
  }
  func.func @transform_10(%arg0: i32, %arg1: i32) -> (i32, i32) {
    %c0_i32 = arith.constant 0 : i32
    %c0_i32_0 = arith.constant 0 : i32
    %c0_i32_1 = arith.constant 0 : i32
    return %c0_i32, %c0_i32_0 : i32, i32
  }
  func.func @transform_11(%arg0: i32, %arg1: i32) -> (i32, i32, i32) {
    %c0_i32 = arith.constant 0 : i32
    %c0_i32_0 = arith.constant 0 : i32
    return %arg0, %arg1, %c0_i32 : i32, i32, i32
  }
}

</mosaic_0001>

<llo_original>
// kernel: tpu_custom_call.1
$region0: #{tpu_custom_call.1}
  #allocation0 [shape = 'u32[]', space=smem, size = 0x4, offset = 0x4, fixed_abs, tag = 'smem constant byte address 0x4 - core index']
  #allocation1 [shape = 'u32[144,128]{1,0:T(1,128)}', space=vmem, size = 0x12000, scoped, tag = 'internal scratch']
  #allocation2 [shape = 'bf16[32,128]{1,0:T(8,128)(2,1)}', space=vmem, size = 0x2000, scoped, tag = 'scratch operand']
  #allocation3 [shape = 'bf16[32,128]{1,0:T(8,128)(2,1)}', space=vmem, size = 0x2000, scoped, tag = 'scratch operand']
  %s0 = inlined_call_operand.vmem [shape: bf16[2,2,36,128], index: 0, kind: input, shape index: {}]
  %s1 = inlined_call_operand.hbm [shape: bf16[5,128,128], index: 1, kind: input, shape index: {}]
  %s2 = inlined_call_operand.vmem [shape: f32[1,128], index: 2, kind: input, shape index: {}]
  %s3 = inlined_call_operand.hbm [shape: bf16[5,128,128], index: 3, kind: input, shape index: {}]
  %s4 = inlined_call_operand.vmem [shape: f32[1,128], index: 4, kind: input, shape index: {}]
  %s5 = inlined_call_operand.hbm [shape: bf16[5,128,128], index: 5, kind: input, shape index: {}]
  %s6 = inlined_call_operand.vmem [shape: f32[1,128], index: 6, kind: input, shape index: {}]
  %s7 = inlined_call_operand.hbm [shape: bf16[5,128,128], index: 7, kind: input, shape index: {}]
  %s8 = inlined_call_operand.vmem [shape: f32[1,128], index: 8, kind: input, shape index: {}]
  %s9 = inlined_call_operand.hbm [shape: bf16[5,128,128], index: 9, kind: input, shape index: {}]
  %s10 = inlined_call_operand.vmem [shape: f32[1,128], index: 10, kind: input, shape index: {}]
  %s11 = inlined_call_operand.hbm [shape: f32[2,32,128], index: 11, kind: output, shape index: {}]
  %s12 = sld [smem:[#allocation0]]
  $region97: #{tpu_custom_call.1} parent=0
    _
  %s14 = ssub.s32 1, %s12
  %s15 = scalar_select 0, %s14, %s12
  $region1: #{tpu_custom_call.1} parent=0
    #allocation4 [shape = 'u8[163840]{0}', space=vmem, size = 0x28000, scoped, tag = 'input window, operand 1, single buffered']
    #allocation5 [shape = 's32[2]{0}', space=sflag, size = 0x8, scoped, tag = 'scoped memory for tpu_custom_call.1']
    #allocation6 [shape = 's32[2]{0}', space=sflag, size = 0x8, scoped, tag = 'scoped memory for tpu_custom_call.1']
    #allocation7 [shape = 'u8[163840]{0}', space=vmem, size = 0x28000, scoped, tag = 'input window, operand 3, single buffered']
    #allocation8 [shape = 's32[1]{0}', space=sflag, size = 0x4, scoped, tag = 'scoped memory for tpu_custom_call.1']
    #allocation9 [shape = 'u8[163840]{0}', space=vmem, size = 0x28000, scoped, tag = 'input window, operand 5, single buffered']
    #allocation10 [shape = 'u8[163840]{0}', space=vmem, size = 0x28000, scoped, tag = 'input window, operand 7, single buffered']
    #allocation11 [shape = 's32[1]{0}', space=sflag, size = 0x4, scoped, tag = 'scoped memory for tpu_custom_call.1']
    #allocation12 [shape = 'u8[163840]{0}', space=vmem, size = 0x28000, scoped, tag = 'input window, operand 9, single buffered']
    #allocation13 [shape = 'u8[16384]{0}', space=vmem, size = 0x4000, scoped, tag = 'output window, operand 0']
    %16 = vsyncpa [#allocation5], 0
    %17 = vsyncpa [#allocation8], 0
    %18 = vsyncpa [#allocation11], 0
    %19 = vsyncpa [#allocation6], 0
    %s20 = scalar_lea.sflag [#allocation6], 1
    %21 = vsyncpa %s20, 0
    loop: start=0, step=1, limit=6
    $region2: #{tpu_custom_call.1} parent=1 // loop_pre_header
      _
    $region3: #{tpu_custom_call.1} parent=1 // loop_header
      %s23 = sphi 0, %s27
      %p24 = scmp.ge.s32.totalorder %s23, 6
      %s30 = sphi 0, %s42
      %s31 = sphi 0, %s38
      %s32 = sphi 0, %s30
      %s33 = sphi 0, %s31
      %s34 = sphi 0, %s32
      %s35 = sphi 0, %s33
      %s47 = sphi 0, %s49
      %s50 = sphi 0, %s47
      %s51 = sphi 0, %s50
      %s67 = sphi 0, %s51
      %s71 = sphi 0, %s71
      %s73 = sphi 0, %s71
      %s74 = sphi 0, %s73
      %s88 = sphi 0, %s74
      %s92 = sphi 0, %s92
      %s94 = sphi 0, %s92
      %s95 = sphi 0, %s94
      %s109 = sphi 0, %s95
      %s113 = sphi 0, %s113
      %s115 = sphi 0, %s113
      %s116 = sphi 0, %s115
      %s130 = sphi 0, %s116
      %s134 = sphi 0, %s134
      %s136 = sphi 0, %s134
      %s137 = sphi 0, %s136
      %s151 = sphi 0, %s137
      %s155 = sphi 0, %s155
      %s157 = sphi 0, %s155
      %s158 = sphi 0, %s157
      %s172 = sphi 0, %s158
      %s176 = sphi 0, %s176
      %s178 = sphi 0, %s176
      %s179 = sphi 0, %s178
      %s193 = sphi 0, %s179
      %s197 = sphi 0, %s197
      %s199 = sphi 0, %s197
      %s200 = sphi 0, %s199
      %s214 = sphi 0, %s200
      %s218 = sphi 0, %s218
      %s220 = sphi 0, %s218
      %s221 = sphi 0, %s220
      %s235 = sphi 0, %s221
      %s239 = sphi 0, %s239
      %s241 = sphi 0, %s239
      %s242 = sphi 0, %s241
      %s256 = sphi 0, %s242
      %s260 = sphi 0, %s260
      %s262 = sphi 0, %s260
      %s263 = sphi 0, %s262
      %s277 = sphi 0, %s263
      %s285 = sphi 0, %s287
      %s288 = sphi 0, %s285
      %s289 = sphi 0, %s288
      %s305 = sphi 0, %s289
    $region4: #{tpu_custom_call.1} parent=1 // loop_header_branch
      %26 = sbr.rel (%p24) target = $region8
    $region5: #{tpu_custom_call.1} parent=1 // loop_body
      %s28 = ssub.s32 %s23, 1
      %s29 = ssub.s32 %s23, 2
      %s36 = sadd.s32 1, %s31
      %p37 = scmp.ge.s32.totalorder %s36, 2
      %s38 = scalar_select %p37, 0, %s36
      %s39 = sadd.s32 1, %s30
      %s40 = scalar_select %p37, %s39, %s30
      %p41 = scmp.ge.s32.totalorder %s40, 2
      %s42 = scalar_select %p41, 0, %s40
      %s43 = ssub.s32 %s30, %s42
      %s44 = ssub.s32 %s31, %s38
      %s45 = sor.u32 %s43, %s44
      %p46 = scmp.eq.s32.totalorder %s45, 0
      %s48 = sadd.s32 %s47, 1
      %s49 = scalar_select %p46, %s47, %s48
      %p52 = pneg %p46
      %p53 = scmp.eq.s32.totalorder %s23, 3
      %p54 = por %p52, %p53
      %p55 = scmp.ne.s32.totalorder %s47, %s50
      %p56 = scmp.eq.s32.totalorder %s23, 0
      %p57 = por %p55, %p56
      %p58 = scmp.ne.s32.totalorder %s47, %s50
      %p59 = scmp.eq.s32.totalorder %s28, 3
      %p60 = por %p58, %p59
      %p61 = scmp.ne.s32.totalorder %s50, %s51
      %p62 = scmp.eq.s32.totalorder %s28, 0
      %p63 = por %p61, %p62
      %p64 = scmp.ne.s32.totalorder %s50, %s51
      %p65 = scmp.eq.s32.totalorder %s29, 3
      %p66 = por %p64, %p65
      %p68 = scmp.ne.s32.totalorder %s51, %s67
      %p69 = scmp.eq.s32.totalorder %s29, 0
      %p70 = por %p68, %p69
      %s72 = sadd.s32 %s71, 1
      %p75 = scmp.eq.s32.totalorder %s23, 3
      %p76 = scmp.ne.s32.totalorder %s71, %s73
      %p77 = scmp.eq.s32.totalorder %s23, 0
      %p78 = por %p76, %p77
      %p79 = scmp.ne.s32.totalorder %s71, %s73
      %p80 = scmp.eq.s32.totalorder %s28, 3
      %p81 = por %p79, %p80
      %p82 = scmp.ne.s32.totalorder %s73, %s74
      %p83 = scmp.eq.s32.totalorder %s28, 0
      %p84 = por %p82, %p83
      %p85 = scmp.ne.s32.totalorder %s73, %s74
      %p86 = scmp.eq.s32.totalorder %s29, 3
      %p87 = por %p85, %p86
      %p89 = scmp.ne.s32.totalorder %s74, %s88
      %p90 = scmp.eq.s32.totalorder %s29, 0
      %p91 = por %p89, %p90
      %s93 = sadd.s32 %s92, 1
      %p96 = scmp.eq.s32.totalorder %s23, 3
      %p97 = scmp.ne.s32.totalorder %s92, %s94
      %p98 = scmp.eq.s32.totalorder %s23, 0
      %p99 = por %p97, %p98
      %p100 = scmp.ne.s32.totalorder %s92, %s94
      %p101 = scmp.eq.s32.totalorder %s28, 3
      %p102 = por %p100, %p101
      %p103 = scmp.ne.s32.totalorder %s94, %s95
      %p104 = scmp.eq.s32.totalorder %s28, 0
      %p105 = por %p103, %p104
      %p106 = scmp.ne.s32.totalorder %s94, %s95
      %p107 = scmp.eq.s32.totalorder %s29, 3
      %p108 = por %p106, %p107
      %p110 = scmp.ne.s32.totalorder %s95, %s109
      %p111 = scmp.eq.s32.totalorder %s29, 0
      %p112 = por %p110, %p111
      %s114 = sadd.s32 %s113, 1
      %p117 = scmp.eq.s32.totalorder %s23, 3
      %p118 = scmp.ne.s32.totalorder %s113, %s115
      %p119 = scmp.eq.s32.totalorder %s23, 0
      %p120 = por %p118, %p119
      %p121 = scmp.ne.s32.totalorder %s113, %s115
      %p122 = scmp.eq.s32.totalorder %s28, 3
      %p123 = por %p121, %p122
      %p124 = scmp.ne.s32.totalorder %s115, %s116
      %p125 = scmp.eq.s32.totalorder %s28, 0
      %p126 = por %p124, %p125
      %p127 = scmp.ne.s32.totalorder %s115, %s116
      %p128 = scmp.eq.s32.totalorder %s29, 3
      %p129 = por %p127, %p128
      %p131 = scmp.ne.s32.totalorder %s116, %s130
      %p132 = scmp.eq.s32.totalorder %s29, 0
      %p133 = por %p131, %p132
      %s135 = sadd.s32 %s134, 1
      %p138 = scmp.eq.s32.totalorder %s23, 3
      %p139 = scmp.ne.s32.totalorder %s134, %s136
      %p140 = scmp.eq.s32.totalorder %s23, 0
      %p141 = por %p139, %p140
      %p142 = scmp.ne.s32.totalorder %s134, %s136
      %p143 = scmp.eq.s32.totalorder %s28, 3
      %p144 = por %p142, %p143
      %p145 = scmp.ne.s32.totalorder %s136, %s137
      %p146 = scmp.eq.s32.totalorder %s28, 0
      %p147 = por %p145, %p146
      %p148 = scmp.ne.s32.totalorder %s136, %s137
      %p149 = scmp.eq.s32.totalorder %s29, 3
      %p150 = por %p148, %p149
      %p152 = scmp.ne.s32.totalorder %s137, %s151
      %p153 = scmp.eq.s32.totalorder %s29, 0
      %p154 = por %p152, %p153
      %s156 = sadd.s32 %s155, 1
      %p159 = scmp.eq.s32.totalorder %s23, 3
      %p160 = scmp.ne.s32.totalorder %s155, %s157
      %p161 = scmp.eq.s32.totalorder %s23, 0
      %p162 = por %p160, %p161
      %p163 = scmp.ne.s32.totalorder %s155, %s157
      %p164 = scmp.eq.s32.totalorder %s28, 3
      %p165 = por %p163, %p164
      %p166 = scmp.ne.s32.totalorder %s157, %s158
      %p167 = scmp.eq.s32.totalorder %s28, 0
      %p168 = por %p166, %p167
      %p169 = scmp.ne.s32.totalorder %s157, %s158
      %p170 = scmp.eq.s32.totalorder %s29, 3
      %p171 = por %p169, %p170
      %p173 = scmp.ne.s32.totalorder %s158, %s172
      %p174 = scmp.eq.s32.totalorder %s29, 0
      %p175 = por %p173, %p174
      %s177 = sadd.s32 %s176, 1
      %p180 = scmp.eq.s32.totalorder %s23, 3
      %p181 = scmp.ne.s32.totalorder %s176, %s178
      %p182 = scmp.eq.s32.totalorder %s23, 0
      %p183 = por %p181, %p182
      %p184 = scmp.ne.s32.totalorder %s176, %s178
      %p185 = scmp.eq.s32.totalorder %s28, 3
      %p186 = por %p184, %p185
      %p187 = scmp.ne.s32.totalorder %s178, %s179
      %p188 = scmp.eq.s32.totalorder %s28, 0
      %p189 = por %p187, %p188
      %p190 = scmp.ne.s32.totalorder %s178, %s179
      %p191 = scmp.eq.s32.totalorder %s29, 3
      %p192 = por %p190, %p191
      %p194 = scmp.ne.s32.totalorder %s179, %s193
      %p195 = scmp.eq.s32.totalorder %s29, 0
      %p196 = por %p194, %p195
      %s198 = sadd.s32 %s197, 1
      %p201 = scmp.eq.s32.totalorder %s23, 3
      %p202 = scmp.ne.s32.totalorder %s197, %s199
      %p203 = scmp.eq.s32.totalorder %s23, 0
      %p204 = por %p202, %p203
      %p205 = scmp.ne.s32.totalorder %s197, %s199
      %p206 = scmp.eq.s32.totalorder %s28, 3
      %p207 = por %p205, %p206
      %p208 = scmp.ne.s32.totalorder %s199, %s200
      %p209 = scmp.eq.s32.totalorder %s28, 0
      %p210 = por %p208, %p209
      %p211 = scmp.ne.s32.totalorder %s199, %s200
      %p212 = scmp.eq.s32.totalorder %s29, 3
      %p213 = por %p211, %p212
      %p215 = scmp.ne.s32.totalorder %s200, %s214
      %p216 = scmp.eq.s32.totalorder %s29, 0
      %p217 = por %p215, %p216
      %s219 = sadd.s32 %s218, 1
      %p222 = scmp.eq.s32.totalorder %s23, 3
      %p223 = scmp.ne.s32.totalorder %s218, %s220
      %p224 = scmp.eq.s32.totalorder %s23, 0
      %p225 = por %p223, %p224
      %p226 = scmp.ne.s32.totalorder %s218, %s220
      %p227 = scmp.eq.s32.totalorder %s28, 3
      %p228 = por %p226, %p227
      %p229 = scmp.ne.s32.totalorder %s220, %s221
      %p230 = scmp.eq.s32.totalorder %s28, 0
      %p231 = por %p229, %p230
      %p232 = scmp.ne.s32.totalorder %s220, %s221
      %p233 = scmp.eq.s32.totalorder %s29, 3
      %p234 = por %p232, %p233
      %p236 = scmp.ne.s32.totalorder %s221, %s235
      %p237 = scmp.eq.s32.totalorder %s29, 0
      %p238 = por %p236, %p237
      %s240 = sadd.s32 %s239, 1
      %p243 = scmp.eq.s32.totalorder %s23, 3
      %p244 = scmp.ne.s32.totalorder %s239, %s241
      %p245 = scmp.eq.s32.totalorder %s23, 0
      %p246 = por %p244, %p245
      %p247 = scmp.ne.s32.totalorder %s239, %s241
      %p248 = scmp.eq.s32.totalorder %s28, 3
      %p249 = por %p247, %p248
      %p250 = scmp.ne.s32.totalorder %s241, %s242
      %p251 = scmp.eq.s32.totalorder %s28, 0
      %p252 = por %p250, %p251
      %p253 = scmp.ne.s32.totalorder %s241, %s242
      %p254 = scmp.eq.s32.totalorder %s29, 3
      %p255 = por %p253, %p254
      %p257 = scmp.ne.s32.totalorder %s242, %s256
      %p258 = scmp.eq.s32.totalorder %s29, 0
      %p259 = por %p257, %p258
      %s261 = sadd.s32 %s260, 1
      %p264 = scmp.eq.s32.totalorder %s23, 3
      %p265 = scmp.ne.s32.totalorder %s260, %s262
      %p266 = scmp.eq.s32.totalorder %s23, 0
      %p267 = por %p265, %p266
      %p268 = scmp.ne.s32.totalorder %s260, %s262
      %p269 = scmp.eq.s32.totalorder %s28, 3
      %p270 = por %p268, %p269
      %p271 = scmp.ne.s32.totalorder %s262, %s263
      %p272 = scmp.eq.s32.totalorder %s28, 0
      %p273 = por %p271, %p272
      %p274 = scmp.ne.s32.totalorder %s262, %s263
      %p275 = scmp.eq.s32.totalorder %s29, 3
      %p276 = por %p274, %p275
      %p278 = scmp.ne.s32.totalorder %s263, %s277
      %p279 = scmp.eq.s32.totalorder %s29, 0
      %p280 = por %p278, %p279
      %s281 = ssub.s32 %s30, %s42
      %s282 = ssub.s32 %s31, %s38
      %s283 = sor.u32 %s281, %s282
      %p284 = scmp.eq.s32.totalorder %s283, 0
      %s286 = sadd.s32 %s285, 1
      %s287 = scalar_select %p284, %s285, %s286
      %p290 = pneg %p284
      %p291 = scmp.eq.s32.totalorder %s23, 3
      %p292 = por %p290, %p291
      %p293 = scmp.ne.s32.totalorder %s285, %s288
      %p294 = scmp.eq.s32.totalorder %s23, 0
      %p295 = por %p293, %p294
      %p296 = scmp.ne.s32.totalorder %s285, %s288
      %p297 = scmp.eq.s32.totalorder %s28, 3
      %p298 = por %p296, %p297
      %p299 = scmp.ne.s32.totalorder %s288, %s289
      %p300 = scmp.eq.s32.totalorder %s28, 0
      %p301 = por %p299, %p300
      %p302 = scmp.ne.s32.totalorder %s288, %s289
      %p303 = scmp.eq.s32.totalorder %s29, 3
      %p304 = por %p302, %p303
      %p306 = scmp.ne.s32.totalorder %s289, %s305
      %p307 = scmp.eq.s32.totalorder %s29, 0
      %p308 = por %p306, %p307
      %p309 = scmp.le.s32.totalorder 1, %s23
      %p310 = scmp.lt.s32.totalorder %s23, 5
      %p311 = pnand %p309, %p310
      %p312 = pneg %p311
      // Predicated region
      $region9: #{tpu_custom_call.1} parent=5 // pred_check
        _
      $region10: #{tpu_custom_call.1} parent=5 // pred_check_branch
        %314 = sbr.rel (%p311) target = $region12
      $region11: #{tpu_custom_call.1} parent=5 // pred_region
        %s315 = ssub.s32 %s23, 1
        // Predicated region
        $region13: #{tpu_custom_call.1} parent=11 // pred_check
          %p316 = pneg %p84
        $region14: #{tpu_custom_call.1} parent=11 // pred_check_branch
          %318 = sbr.rel (%p316) target = $region16
        $region15: #{tpu_custom_call.1} parent=11 // pred_region
          %s320 = ssub.s32 5120, 5120
          %321 = vsyncadd [#allocation5], %s320
          %s322 = sshll.u32 [#allocation4], 4
          %s323 = int_to_ptr.vmem [resolvable:$true] %s322
          %328 = dma.hbm_to_vmem [thread:$0]  %s1, 5120, %s323, [#allocation5], 64, 64, 4
        $region16: #{tpu_custom_call.1} parent=11 // pred_fallthru
          _
        // Predicated region
        $region17: #{tpu_custom_call.1} parent=11 // pred_check
          %p329 = pneg %p105
        $region18: #{tpu_custom_call.1} parent=11 // pred_check_branch
          %331 = sbr.rel (%p329) target = $region20
        $region19: #{tpu_custom_call.1} parent=11 // pred_region
          _
        $region20: #{tpu_custom_call.1} parent=11 // pred_fallthru
          _
        // Predicated region
        $region21: #{tpu_custom_call.1} parent=11 // pred_check
          %p332 = pneg %p126
        $region22: #{tpu_custom_call.1} parent=11 // pred_check_branch
          %334 = sbr.rel (%p332) target = $region24
        $region23: #{tpu_custom_call.1} parent=11 // pred_region
          %s336 = ssub.s32 5120, 5120
          %337 = vsyncadd [#allocation8], %s336
          %s338 = sshll.u32 [#allocation7], 4
          %s339 = int_to_ptr.vmem [resolvable:$true] %s338
          %344 = dma.hbm_to_vmem [thread:$0]  %s3, 5120, %s339, [#allocation8], 64, 64, 4
        $region24: #{tpu_custom_call.1} parent=11 // pred_fallthru
          _
        // Predicated region
        $region25: #{tpu_custom_call.1} parent=11 // pred_check
          %p345 = pneg %p147
        $region26: #{tpu_custom_call.1} parent=11 // pred_check_branch
          %347 = sbr.rel (%p345) target = $region28
        $region27: #{tpu_custom_call.1} parent=11 // pred_region
          _
        $region28: #{tpu_custom_call.1} parent=11 // pred_fallthru
          _
        // Predicated region
        $region29: #{tpu_custom_call.1} parent=11 // pred_check
          %p348 = pneg %p168
        $region30: #{tpu_custom_call.1} parent=11 // pred_check_branch
          %350 = sbr.rel (%p348) target = $region32
        $region31: #{tpu_custom_call.1} parent=11 // pred_region
          %s352 = ssub.s32 5120, 5120
          %353 = vsyncadd [#allocation8], %s352
          %s354 = sshll.u32 [#allocation9], 4
          %s355 = int_to_ptr.vmem [resolvable:$true] %s354
          %360 = dma.hbm_to_vmem [thread:$0]  %s5, 5120, %s355, [#allocation8], 64, 64, 4
        $region32: #{tpu_custom_call.1} parent=11 // pred_fallthru
          _
        // Predicated region
        $region33: #{tpu_custom_call.1} parent=11 // pred_check
          %p361 = pneg %p189
        $region34: #{tpu_custom_call.1} parent=11 // pred_check_branch
          %363 = sbr.rel (%p361) target = $region36
        $region35: #{tpu_custom_call.1} parent=11 // pred_region
          _
        $region36: #{tpu_custom_call.1} parent=11 // pred_fallthru
          _
        // Predicated region
        $region37: #{tpu_custom_call.1} parent=11 // pred_check
          %p364 = pneg %p210
        $region38: #{tpu_custom_call.1} parent=11 // pred_check_branch
          %366 = sbr.rel (%p364) target = $region40
        $region39: #{tpu_custom_call.1} parent=11 // pred_region
          %s368 = ssub.s32 5120, 5120
          %369 = vsyncadd [#allocation11], %s368
          %s370 = sshll.u32 [#allocation10], 4
          %s371 = int_to_ptr.vmem [resolvable:$true] %s370
          %376 = dma.hbm_to_vmem [thread:$0]  %s7, 5120, %s371, [#allocation11], 64, 64, 4
        $region40: #{tpu_custom_call.1} parent=11 // pred_fallthru
          _
        // Predicated region
        $region41: #{tpu_custom_call.1} parent=11 // pred_check
          %p377 = pneg %p231
        $region42: #{tpu_custom_call.1} parent=11 // pred_check_branch
          %379 = sbr.rel (%p377) target = $region44
        $region43: #{tpu_custom_call.1} parent=11 // pred_region
          _
        $region44: #{tpu_custom_call.1} parent=11 // pred_fallthru
          _
        // Predicated region
        $region45: #{tpu_custom_call.1} parent=11 // pred_check
          %p380 = pneg %p252
        $region46: #{tpu_custom_call.1} parent=11 // pred_check_branch
          %382 = sbr.rel (%p380) target = $region48
        $region47: #{tpu_custom_call.1} parent=11 // pred_region
          %s384 = ssub.s32 5120, 5120
          %385 = vsyncadd [#allocation11], %s384
          %s386 = sshll.u32 [#allocation12], 4
          %s387 = int_to_ptr.vmem [resolvable:$true] %s386
          %392 = dma.hbm_to_vmem [thread:$0]  %s9, 5120, %s387, [#allocation11], 64, 64, 4
        $region48: #{tpu_custom_call.1} parent=11 // pred_fallthru
          _
        // Predicated region
        $region49: #{tpu_custom_call.1} parent=11 // pred_check
          %p393 = pneg %p273
        $region50: #{tpu_custom_call.1} parent=11 // pred_check_branch
          %395 = sbr.rel (%p393) target = $region52
        $region51: #{tpu_custom_call.1} parent=11 // pred_region
          _
        $region52: #{tpu_custom_call.1} parent=11 // pred_fallthru
          _
      $region12: #{tpu_custom_call.1} parent=5 // pred_fallthru
        _
      %p396 = scmp.lt.s32.totalorder %s23, 4
      // Predicated region
      $region53: #{tpu_custom_call.1} parent=5 // pred_check
        %p397 = pneg %p396
      $region54: #{tpu_custom_call.1} parent=5 // pred_check_branch
        %399 = sbr.rel (%p397) target = $region56
      $region55: #{tpu_custom_call.1} parent=5 // pred_region
        // Predicated region
        $region57: #{tpu_custom_call.1} parent=55 // pred_check
          %p400 = pneg %p57
        $region58: #{tpu_custom_call.1} parent=55 // pred_check_branch
          %402 = sbr.rel (%p400) target = $region60
        $region59: #{tpu_custom_call.1} parent=55 // pred_region
          %p403 = scmp.lt.s32.totalorder %s30, 1
          %s404 = scalar_select %p403, %s30, 1
          %p405 = scmp.lt.s32.totalorder %s31, 1
          %s406 = scalar_select %p405, %s31, 1
          %s407 = smul.addr %s406, 5
          %s408 = smul.addr %s404, 10
          %s409 = sadd.s32 %s407, %s408
          %s410 = smul.addr %s409, 4
          %s411 = scalar_lea.vmem %s0, %s410
        $region60: #{tpu_custom_call.1} parent=55 // pred_fallthru
          _
      $region56: #{tpu_custom_call.1} parent=5 // pred_fallthru
        _
      %p412 = scmp.le.s32.totalorder 1, %s23
      %p413 = scmp.lt.s32.totalorder %s23, 5
      %p414 = pnand %p412, %p413
      %p415 = pneg %p414
      // Predicated region
      $region61: #{tpu_custom_call.1} parent=5 // pred_check
        _
      $region62: #{tpu_custom_call.1} parent=5 // pred_check_branch
        %417 = sbr.rel (%p414) target = $region64
      $region63: #{tpu_custom_call.1} parent=5 // pred_region
        %s418 = ssub.s32 %s23, 1
        // Predicated region
        $region65: #{tpu_custom_call.1} parent=63 // pred_check
          %p419 = pneg %p84
        $region66: #{tpu_custom_call.1} parent=63 // pred_check_branch
          %421 = sbr.rel (%p419) target = $region68
        $region67: #{tpu_custom_call.1} parent=63 // pred_region
          %422 = dma.done [#allocation5], 5120
        $region68: #{tpu_custom_call.1} parent=63 // pred_fallthru
          _
        // Predicated region
        $region69: #{tpu_custom_call.1} parent=63 // pred_check
          %p423 = pneg %p126
        $region70: #{tpu_custom_call.1} parent=63 // pred_check_branch
          %425 = sbr.rel (%p423) target = $region72
        $region71: #{tpu_custom_call.1} parent=63 // pred_region
          %426 = dma.done [#allocation8], 5120
        $region72: #{tpu_custom_call.1} parent=63 // pred_fallthru
          _
        // Predicated region
        $region73: #{tpu_custom_call.1} parent=63 // pred_check
          %p427 = pneg %p168
        $region74: #{tpu_custom_call.1} parent=63 // pred_check_branch
          %429 = sbr.rel (%p427) target = $region76
        $region75: #{tpu_custom_call.1} parent=63 // pred_region
          %430 = dma.done [#allocation8], 5120
        $region76: #{tpu_custom_call.1} parent=63 // pred_fallthru
          _
        // Predicated region
        $region77: #{tpu_custom_call.1} parent=63 // pred_check
          %p431 = pneg %p210
        $region78: #{tpu_custom_call.1} parent=63 // pred_check_branch
          %433 = sbr.rel (%p431) target = $region80
        $region79: #{tpu_custom_call.1} parent=63 // pred_region
          %434 = dma.done [#allocation11], 5120
        $region80: #{tpu_custom_call.1} parent=63 // pred_fallthru
          _
        // Predicated region
        $region81: #{tpu_custom_call.1} parent=63 // pred_check
          %p435 = pneg %p252
        $region82: #{tpu_custom_call.1} parent=63 // pred_check_branch
          %437 = sbr.rel (%p435) target = $region84
        $region83: #{tpu_custom_call.1} parent=63 // pred_region
          %438 = dma.done [#allocation11], 5120
        $region84: #{tpu_custom_call.1} parent=63 // pred_fallthru
          _
        %p439 = scmp.lt.s32.totalorder %s32, 1
        %s440 = scalar_select %p439, %s32, 1
        %p441 = scmp.lt.s32.totalorder %s33, 1
        %s442 = scalar_select %p441, %s33, 1
        %s443 = smul.addr %s442, 5
        %s444 = smul.addr %s440, 10
        %s445 = sadd.s32 %s443, %s444
        %s446 = smul.addr %s445, 4
        %s447 = scalar_lea.vmem %s0, %s446
        %p448 = pneg %p63
        %p449 = pneg %p60
        %p450 = pneg %p84
        %p451 = pneg %p81
        %p452 = pneg %p105
        %p453 = pneg %p102
        %p454 = pneg %p126
        %p455 = pneg %p123
        %p456 = pneg %p147
        %p457 = pneg %p144
        %p458 = pneg %p168
        %p459 = pneg %p165
        %p460 = pneg %p189
        %p461 = pneg %p186
        %p462 = pneg %p210
        %p463 = pneg %p207
        %p464 = pneg %p231
        %p465 = pneg %p228
        %p466 = pneg %p252
        %p467 = pneg %p249
        %p468 = pneg %p273
        %p469 = pneg %p270
        %p470 = pneg %p301
        %p471 = pneg %p298
        %s472 = sand.u32 %s288, 1
        %s473 = scalar_lea.sflag [#allocation6], %s472
        %s474 = sand.u32 %s288, 1
        %s475 = smul.addr %s474, 16
        %s476 = scalar_lea.vmem [#allocation13], %s475
        %p477 = scmp.lt.s32.totalorder %s32, 1
        %s478 = scalar_select %p477, %s32, 1
        %p479 = scmp.lt.s32.totalorder %s33, 1
        %s480 = scalar_select %p479, %s33, 1
        %s481 = smul.addr %s480, 5
        %s482 = smul.addr %s478, 10
        %s483 = sadd.s32 %s481, %s482
        %s484 = smul.addr %s483, 4
        %s485 = scalar_lea.vmem %s0, %s484
        %s486 = smul.u32 2, %s33
        %s488 = smul.u32 %s33, 16
        %v489 = vld [vmem:[%s485] sm:$0xf]
        %v490 = vld [vmem:[%s485 + $0x4] sm:$0xf]
        %v491 = vld [vmem:[%s485 + $0x8] sm:$0xf]
        %v492 = vld [vmem:[%s485 + $0xc] sm:$0xf]
        %v493 = vld [vmem:[#allocation4] sm:$0xf]
        %v494 = vld [vmem:[#allocation4 + $0x4] sm:$0xf]
        %v495 = vld [vmem:[#allocation4 + $0x8] sm:$0xf]
        %v496 = vld [vmem:[#allocation4 + $0xc] sm:$0xf]
        %v497 = vld [vmem:[#allocation4 + $0x10] sm:$0xf]
        %v498 = vld [vmem:[#allocation4 + $0x14] sm:$0xf]
        %v499 = vld [vmem:[#allocation4 + $0x18] sm:$0xf]
        %v500 = vld [vmem:[#allocation4 + $0x1c] sm:$0xf]
        %v501 = vld [vmem:[#allocation4 + $0x20] sm:$0xf]
        %v502 = vld [vmem:[#allocation4 + $0x24] sm:$0xf]
        %v503 = vld [vmem:[#allocation4 + $0x28] sm:$0xf]
        %v504 = vld [vmem:[#allocation4 + $0x2c] sm:$0xf]
        %v505 = vld [vmem:[#allocation4 + $0x30] sm:$0xf]
        %v506 = vld [vmem:[#allocation4 + $0x34] sm:$0xf]
        %v507 = vld [vmem:[#allocation4 + $0x38] sm:$0xf]
        %v508 = vld [vmem:[#allocation4 + $0x3c] sm:$0xf]
        %v509 = vld [vmem:[%s485 + $0x10] sm:$0x1]
        %s510 = scalar_lea.vmem [#allocation4], 64
        %v511 = vld [vmem:[%s510] sm:$0xf]
        %v512 = vld [vmem:[%s510 + $0x4] sm:$0xf]
        %v513 = vld [vmem:[%s510 + $0x8] sm:$0xf]
        %v514 = vld [vmem:[%s510 + $0xc] sm:$0xf]
        %v515 = vld [vmem:[%s510 + $0x10] sm:$0xf]
        %v516 = vld [vmem:[%s510 + $0x14] sm:$0xf]
        %v517 = vld [vmem:[%s510 + $0x18] sm:$0xf]
        %v518 = vld [vmem:[%s510 + $0x1c] sm:$0xf]
        %v519 = vld [vmem:[%s510 + $0x20] sm:$0xf]
        %v520 = vld [vmem:[%s510 + $0x24] sm:$0xf]
        %v521 = vld [vmem:[%s510 + $0x28] sm:$0xf]
        %v522 = vld [vmem:[%s510 + $0x2c] sm:$0xf]
        %v523 = vld [vmem:[%s510 + $0x30] sm:$0xf]
        %v524 = vld [vmem:[%s510 + $0x34] sm:$0xf]
        %v525 = vld [vmem:[%s510 + $0x38] sm:$0xf]
        %v526 = vld [vmem:[%s510 + $0x3c] sm:$0xf]
        %v532 = vunpack.c.l.b16 %v489
        %v533 = vunpack.c.l.b16 %v490
        %v534 = vunpack.c.l.b16 %v491
        %v535 = vunpack.c.l.b16 %v492
        %v536 = vunpack.c.l.b16 %v509
        %v537 = vpack.c.b16 %v533, %v532
        %v538 = vpack.c.b16 %v535, %v534
        %v539 = vpack.c.b16 %v536, %v536
        %vm540 = vsmask.f32 7424
        %v542 = vshrl.u32 %v537, 16
        %v544 = vshll.u32 %v537, 16
        %v546 = vrot.slane %v544, 1
        %v547 = vor.u32 %v542, %v546
        %v549 = vshll.u32 %v538, 16
        %v551 = vrot.slane %v549, 1
        %v552 = vsel %vm540, %v547, %v551
        %v553 = vshrl.u32 %v538, 16
        %v555 = vor.u32 %v553, %v551
        %v557 = vshll.u32 %v539, 16
        %v559 = vrot.slane %v557, 1
        %v560 = vsel %vm540, %v555, %v559
        %v579 = vunpack.c.l.b16 %v511
        %v580 = vunpack.c.l.b16 %v512
        %v581 = vunpack.c.l.b16 %v513
        %v582 = vunpack.c.l.b16 %v514
        %v583 = vunpack.c.l.b16 %v515
        %v584 = vunpack.c.l.b16 %v516
        %v585 = vunpack.c.l.b16 %v517
        %v586 = vunpack.c.l.b16 %v518
        %v587 = vunpack.c.l.b16 %v519
        %v588 = vunpack.c.l.b16 %v520
        %v589 = vunpack.c.l.b16 %v521
        %v590 = vunpack.c.l.b16 %v522
        %v591 = vunpack.c.l.b16 %v523
        %v592 = vunpack.c.l.b16 %v524
        %v593 = vunpack.c.l.b16 %v525
        %v594 = vunpack.c.l.b16 %v526
        %v595 = vpack.c.b16 %v580, %v579
        %v596 = vpack.c.b16 %v582, %v581
        %v597 = vpack.c.b16 %v584, %v583
        %v598 = vpack.c.b16 %v586, %v585
        %v599 = vpack.c.b16 %v588, %v587
        %v600 = vpack.c.b16 %v590, %v589
        %v601 = vpack.c.b16 %v592, %v591
        %v602 = vpack.c.b16 %v594, %v593
        %611 = vmatprep.subr.bf16.mxu0 0
        %612 = vmatpush1.bf16.msra.mxu0 %v602
        %613 = vmatprep.subr.bf16.mxu0 0
        %614 = vmatpush1.bf16.msra.mxu0 %v601
        %615 = vmatprep.subr.bf16.mxu0 0
        %616 = vmatpush1.bf16.msra.mxu0 %v600
        %617 = vmatprep.subr.bf16.mxu0 0
        %618 = vmatpush1.bf16.msra.mxu0 %v599
        %619 = vmatprep.subr.bf16.mxu0 0
        %620 = vmatpush1.bf16.msra.mxu0 %v598
        %621 = vmatprep.subr.bf16.mxu0 0
        %622 = vmatpush1.bf16.msra.mxu0 %v597
        %623 = vmatprep.subr.bf16.mxu0 0
        %624 = vmatpush1.bf16.msra.mxu0 %v596
        %625 = vmatprep.subr.bf16.mxu0 0
        %626 = vmatpush1.bf16.msra.mxu0 %v595
        %627 = vmatprep.subr.bf16.mxu0 0
        %628 = vmatpush2.bf16.msra.mxu0 0
        %629 = vmatprep.subr.bf16.mxu0 0
        %630 = vmatpush2.bf16.msra.mxu0 0
        %631 = vmatprep.subr.bf16.mxu0 0
        %632 = vmatpush2.bf16.msra.mxu0 0
        %633 = vmatprep.subr.bf16.mxu0 0
        %634 = vmatpush2.bf16.msra.mxu0 0
        %635 = vmatprep.subr.bf16.mxu0 0
        %636 = vmatpush2.bf16.msra.mxu0 0
        %637 = vmatprep.subr.bf16.mxu0 0
        %638 = vmatpush2.bf16.msra.mxu0 0
        %639 = vmatprep.subr.bf16.mxu0 0
        %640 = vmatpush2.bf16.msra.mxu0 0
        %641 = vmatprep.subr.bf16.mxu0 0
        %642 = vmatpush2.bf16.msra.mxu0 0
        %643 = vmatprep.mubr.bf16.mxu0 0
        %644 = vmatmul.mubr.bf16.gmra.mxu0 %v552
        %v645 = vpop.f32.mrf.mxu0
        %v646 = vadd.f32 0.0, %v645
        %v647 = vpop.f32.mrf.mxu0
        %v648 = vpop.f32.mrf.mxu0
        %v649 = vadd.f32 0.0, %v648
        %v650 = vpop.f32.mrf.mxu0
        %651 = vmatprep.mubr.bf16.mxu0 0
        %652 = vmatmul.mubr.bf16.gmra.mxu0 %v560
        %v653 = vpop.f32.mrf.mxu0
        %v654 = vadd.f32 0.0, %v653
        %v655 = vpop.f32.mrf.mxu0
        %v656 = vpop.f32.mrf.mxu0
        %v657 = vadd.f32 0.0, %v656
        %v658 = vpop.f32.mrf.mxu0
        %659 = vdwg.mxu0
        %v678 = vunpack.c.l.b16 %v493
        %v679 = vunpack.c.l.b16 %v494
        %v680 = vunpack.c.l.b16 %v495
        %v681 = vunpack.c.l.b16 %v496
        %v682 = vunpack.c.l.b16 %v497
        %v683 = vunpack.c.l.b16 %v498
        %v684 = vunpack.c.l.b16 %v499
        %v685 = vunpack.c.l.b16 %v500
        %v686 = vunpack.c.l.b16 %v501
        %v687 = vunpack.c.l.b16 %v502
        %v688 = vunpack.c.l.b16 %v503
        %v689 = vunpack.c.l.b16 %v504
        %v690 = vunpack.c.l.b16 %v505
        %v691 = vunpack.c.l.b16 %v506
        %v692 = vunpack.c.l.b16 %v507
        %v693 = vunpack.c.l.b16 %v508
        %v694 = vpack.c.b16 %v679, %v678
        %v695 = vpack.c.b16 %v681, %v680
        %v696 = vpack.c.b16 %v683, %v682
        %v697 = vpack.c.b16 %v685, %v684
        %v698 = vpack.c.b16 %v687, %v686
        %v699 = vpack.c.b16 %v689, %v688
        %v700 = vpack.c.b16 %v691, %v690
        %v701 = vpack.c.b16 %v693, %v692
        %710 = vmatprep.subr.bf16.mxu0 0
        %711 = vmatpush1.bf16.msra.mxu0 %v701
        %712 = vmatprep.subr.bf16.mxu0 0
        %713 = vmatpush1.bf16.msra.mxu0 %v700
        %714 = vmatprep.subr.bf16.mxu0 0
        %715 = vmatpush1.bf16.msra.mxu0 %v699
        %716 = vmatprep.subr.bf16.mxu0 0
        %717 = vmatpush1.bf16.msra.mxu0 %v698
        %718 = vmatprep.subr.bf16.mxu0 0
        %719 = vmatpush1.bf16.msra.mxu0 %v697
        %720 = vmatprep.subr.bf16.mxu0 0
        %721 = vmatpush1.bf16.msra.mxu0 %v696
        %722 = vmatprep.subr.bf16.mxu0 0
        %723 = vmatpush1.bf16.msra.mxu0 %v695
        %724 = vmatprep.subr.bf16.mxu0 0
        %725 = vmatpush1.bf16.msra.mxu0 %v694
        %726 = vmatprep.subr.bf16.mxu0 0
        %727 = vmatpush2.bf16.msra.mxu0 0
        %728 = vmatprep.subr.bf16.mxu0 0
        %729 = vmatpush2.bf16.msra.mxu0 0
        %730 = vmatprep.subr.bf16.mxu0 0
        %731 = vmatpush2.bf16.msra.mxu0 0
        %732 = vmatprep.subr.bf16.mxu0 0
        %733 = vmatpush2.bf16.msra.mxu0 0
        %734 = vmatprep.subr.bf16.mxu0 0
        %735 = vmatpush2.bf16.msra.mxu0 0
        %736 = vmatprep.subr.bf16.mxu0 0
        %737 = vmatpush2.bf16.msra.mxu0 0
        %738 = vmatprep.subr.bf16.mxu0 0
        %739 = vmatpush2.bf16.msra.mxu0 0
        %740 = vmatprep.subr.bf16.mxu0 0
        %741 = vmatpush2.bf16.msra.mxu0 0
        %742 = vmatprep.mubr.bf16.mxu0 0
        %743 = vmatmul.mubr.bf16.gmra.mxu0 %v537
        %v744 = vpop.f32.mrf.mxu0
        %v745 = vadd.f32 %v646, %v744
        %v746 = vpop.f32.mrf.mxu0
        %v747 = vpop.f32.mrf.mxu0
        %v748 = vadd.f32 %v649, %v747
        %v749 = vpop.f32.mrf.mxu0
        %750 = vmatprep.mubr.bf16.mxu0 0
        %751 = vmatmul.mubr.bf16.gmra.mxu0 %v538
        %v752 = vpop.f32.mrf.mxu0
        %v753 = vadd.f32 %v654, %v752
        %v754 = vpop.f32.mrf.mxu0
        %v755 = vpop.f32.mrf.mxu0
        %v756 = vadd.f32 %v657, %v755
        %v757 = vpop.f32.mrf.mxu0
        %758 = vdwg.mxu0
        %v759 = vld [vmem:[%s485] sm:$0xe]
        %s760 = scalar_lea.vmem [#allocation4], 128
        %v761 = vld [vmem:[%s760] sm:$0xf]
        %v762 = vld [vmem:[%s760 + $0x4] sm:$0xf]
        %v763 = vld [vmem:[%s760 + $0x8] sm:$0xf]
        %v764 = vld [vmem:[%s760 + $0xc] sm:$0xf]
        %v765 = vld [vmem:[%s760 + $0x10] sm:$0xf]
        %v766 = vld [vmem:[%s760 + $0x14] sm:$0xf]
        %v767 = vld [vmem:[%s760 + $0x18] sm:$0xf]
        %v768 = vld [vmem:[%s760 + $0x1c] sm:$0xf]
        %v769 = vld [vmem:[%s760 + $0x20] sm:$0xf]
        %v770 = vld [vmem:[%s760 + $0x24] sm:$0xf]
        %v771 = vld [vmem:[%s760 + $0x28] sm:$0xf]
        %v772 = vld [vmem:[%s760 + $0x2c] sm:$0xf]
        %v773 = vld [vmem:[%s760 + $0x30] sm:$0xf]
        %v774 = vld [vmem:[%s760 + $0x34] sm:$0xf]
        %v775 = vld [vmem:[%s760 + $0x38] sm:$0xf]
        %v776 = vld [vmem:[%s760 + $0x3c] sm:$0xf]
        %v778 = vunpack.c.l.b16 %v759
        %v779 = vpack.c.b16 %v533, %v778
        %vm780 = vcmask 1046528
        %v781 = vrot.slane %v779, 1
        %v782 = vrot.slane %v538, 1
        %v783 = vsel %vm780, %v781, %v782
        %v784 = vrot.slane %v539, 1
        %v785 = vsel %vm780, %v782, %v784
        %v804 = vunpack.c.l.b16 %v761
        %v805 = vunpack.c.l.b16 %v762
        %v806 = vunpack.c.l.b16 %v763
        %v807 = vunpack.c.l.b16 %v764
        %v808 = vunpack.c.l.b16 %v765
        %v809 = vunpack.c.l.b16 %v766
        %v810 = vunpack.c.l.b16 %v767
        %v811 = vunpack.c.l.b16 %v768
        %v812 = vunpack.c.l.b16 %v769
        %v813 = vunpack.c.l.b16 %v770
        %v814 = vunpack.c.l.b16 %v771
        %v815 = vunpack.c.l.b16 %v772
        %v816 = vunpack.c.l.b16 %v773
        %v817 = vunpack.c.l.b16 %v774
        %v818 = vunpack.c.l.b16 %v775
        %v819 = vunpack.c.l.b16 %v776
        %v820 = vpack.c.b16 %v805, %v804
        %v821 = vpack.c.b16 %v807, %v806
        %v822 = vpack.c.b16 %v809, %v808
        %v823 = vpack.c.b16 %v811, %v810
        %v824 = vpack.c.b16 %v813, %v812
        %v825 = vpack.c.b16 %v815, %v814
        %v826 = vpack.c.b16 %v817, %v816
        %v827 = vpack.c.b16 %v819, %v818
        %836 = vmatprep.subr.bf16.mxu0 0
        %837 = vmatpush1.bf16.msra.mxu0 %v827
        %838 = vmatprep.subr.bf16.mxu0 0
        %839 = vmatpush1.bf16.msra.mxu0 %v826
        %840 = vmatprep.subr.bf16.mxu0 0
        %841 = vmatpush1.bf16.msra.mxu0 %v825
        %842 = vmatprep.subr.bf16.mxu0 0
        %843 = vmatpush1.bf16.msra.mxu0 %v824
        %844 = vmatprep.subr.bf16.mxu0 0
        %845 = vmatpush1.bf16.msra.mxu0 %v823
        %846 = vmatprep.subr.bf16.mxu0 0
        %847 = vmatpush1.bf16.msra.mxu0 %v822
        %848 = vmatprep.subr.bf16.mxu0 0
        %849 = vmatpush1.bf16.msra.mxu0 %v821
        %850 = vmatprep.subr.bf16.mxu0 0
        %851 = vmatpush1.bf16.msra.mxu0 %v820
        %852 = vmatprep.subr.bf16.mxu0 0
        %853 = vmatpush2.bf16.msra.mxu0 0
        %854 = vmatprep.subr.bf16.mxu0 0
        %855 = vmatpush2.bf16.msra.mxu0 0
        %856 = vmatprep.subr.bf16.mxu0 0
        %857 = vmatpush2.bf16.msra.mxu0 0
        %858 = vmatprep.subr.bf16.mxu0 0
        %859 = vmatpush2.bf16.msra.mxu0 0
        %860 = vmatprep.subr.bf16.mxu0 0
        %861 = vmatpush2.bf16.msra.mxu0 0
        %862 = vmatprep.subr.bf16.mxu0 0
        %863 = vmatpush2.bf16.msra.mxu0 0
        %864 = vmatprep.subr.bf16.mxu0 0
        %865 = vmatpush2.bf16.msra.mxu0 0
        %866 = vmatprep.subr.bf16.mxu0 0
        %867 = vmatpush2.bf16.msra.mxu0 0
        %868 = vmatprep.mubr.bf16.mxu0 0
        %869 = vmatmul.mubr.bf16.gmra.mxu0 %v783
        %v870 = vpop.f32.mrf.mxu0
        %v871 = vadd.f32 0.0, %v870
        %v872 = vpop.f32.mrf.mxu0
        %v873 = vpop.f32.mrf.mxu0
        %v874 = vadd.f32 0.0, %v873
        %v875 = vpop.f32.mrf.mxu0
        %876 = vmatprep.mubr.bf16.mxu0 0
        %877 = vmatmul.mubr.bf16.gmra.mxu0 %v785
        %v878 = vpop.f32.mrf.mxu0
        %v879 = vadd.f32 0.0, %v878
        %v880 = vpop.f32.mrf.mxu0
        %v881 = vpop.f32.mrf.mxu0
        %v882 = vadd.f32 0.0, %v881
        %v883 = vpop.f32.mrf.mxu0
        %884 = vdwg.mxu0
        %v885 = vadd.f32 %v745, %v871
        %v886 = vadd.f32 %v748, %v874
        %v887 = vadd.f32 %v753, %v879
        %v888 = vadd.f32 %v756, %v882
        %v889 = vld [vmem:[%s485 + $0x10] sm:$0x3]
        %s890 = scalar_lea.vmem [#allocation4], 192
        %v891 = vld [vmem:[%s890] sm:$0xf]
        %v892 = vld [vmem:[%s890 + $0x4] sm:$0xf]
        %v893 = vld [vmem:[%s890 + $0x8] sm:$0xf]
        %v894 = vld [vmem:[%s890 + $0xc] sm:$0xf]
        %v895 = vld [vmem:[%s890 + $0x10] sm:$0xf]
        %v896 = vld [vmem:[%s890 + $0x14] sm:$0xf]
        %v897 = vld [vmem:[%s890 + $0x18] sm:$0xf]
        %v898 = vld [vmem:[%s890 + $0x1c] sm:$0xf]
        %v899 = vld [vmem:[%s890 + $0x20] sm:$0xf]
        %v900 = vld [vmem:[%s890 + $0x24] sm:$0xf]
        %v901 = vld [vmem:[%s890 + $0x28] sm:$0xf]
        %v902 = vld [vmem:[%s890 + $0x2c] sm:$0xf]
        %v903 = vld [vmem:[%s890 + $0x30] sm:$0xf]
        %v904 = vld [vmem:[%s890 + $0x34] sm:$0xf]
        %v905 = vld [vmem:[%s890 + $0x38] sm:$0xf]
        %v906 = vld [vmem:[%s890 + $0x3c] sm:$0xf]
        %v908 = vunpack.c.l.b16 %v889
        %v909 = vpack.c.b16 %v908, %v908
        %vm910 = vsmask.f32 6400
        %v912 = vshrl.u32 %v779, 16
        %v914 = vrot.slane %v912, 1
        %v915 = vshll.u32 %v779, 16
        %v917 = vrot.slane %v915, 2
        %v918 = vor.u32 %v914, %v917
        %v919 = vrot.slane %v553, 1
        %v920 = vrot.slane %v549, 2
        %v921 = vor.u32 %v919, %v920
        %v922 = vsel %vm910, %v918, %v921
        %v924 = vshrl.u32 %v909, 16
        %v926 = vrot.slane %v924, 1
        %v927 = vshll.u32 %v909, 16
        %v929 = vrot.slane %v927, 2
        %v930 = vor.u32 %v926, %v929
        %v931 = vsel %vm910, %v921, %v930
        %v950 = vunpack.c.l.b16 %v891
        %v951 = vunpack.c.l.b16 %v892
        %v952 = vunpack.c.l.b16 %v893
        %v953 = vunpack.c.l.b16 %v894
        %v954 = vunpack.c.l.b16 %v895
        %v955 = vunpack.c.l.b16 %v896
        %v956 = vunpack.c.l.b16 %v897
        %v957 = vunpack.c.l.b16 %v898
        %v958 = vunpack.c.l.b16 %v899
        %v959 = vunpack.c.l.b16 %v900
        %v960 = vunpack.c.l.b16 %v901
        %v961 = vunpack.c.l.b16 %v902
        %v962 = vunpack.c.l.b16 %v903
        %v963 = vunpack.c.l.b16 %v904
        %v964 = vunpack.c.l.b16 %v905
        %v965 = vunpack.c.l.b16 %v906
        %v966 = vpack.c.b16 %v951, %v950
        %v967 = vpack.c.b16 %v953, %v952
        %v968 = vpack.c.b16 %v955, %v954
        %v969 = vpack.c.b16 %v957, %v956
        %v970 = vpack.c.b16 %v959, %v958
        %v971 = vpack.c.b16 %v961, %v960
        %v972 = vpack.c.b16 %v963, %v962
        %v973 = vpack.c.b16 %v965, %v964
        %982 = vmatprep.subr.bf16.mxu0 0
        %983 = vmatpush1.bf16.msra.mxu0 %v973
        %984 = vmatprep.subr.bf16.mxu0 0
        %985 = vmatpush1.bf16.msra.mxu0 %v972
        %986 = vmatprep.subr.bf16.mxu0 0
        %987 = vmatpush1.bf16.msra.mxu0 %v971
        %988 = vmatprep.subr.bf16.mxu0 0
        %989 = vmatpush1.bf16.msra.mxu0 %v970
        %990 = vmatprep.subr.bf16.mxu0 0
        %991 = vmatpush1.bf16.msra.mxu0 %v969
        %992 = vmatprep.subr.bf16.mxu0 0
        %993 = vmatpush1.bf16.msra.mxu0 %v968
        %994 = vmatprep.subr.bf16.mxu0 0
        %995 = vmatpush1.bf16.msra.mxu0 %v967
        %996 = vmatprep.subr.bf16.mxu0 0
        %997 = vmatpush1.bf16.msra.mxu0 %v966
        %998 = vmatprep.subr.bf16.mxu0 0
        %999 = vmatpush2.bf16.msra.mxu0 0
        %1000 = vmatprep.subr.bf16.mxu0 0
        %1001 = vmatpush2.bf16.msra.mxu0 0
        %1002 = vmatprep.subr.bf16.mxu0 0
        %1003 = vmatpush2.bf16.msra.mxu0 0
        %1004 = vmatprep.subr.bf16.mxu0 0
        %1005 = vmatpush2.bf16.msra.mxu0 0
        %1006 = vmatprep.subr.bf16.mxu0 0
        %1007 = vmatpush2.bf16.msra.mxu0 0
        %1008 = vmatprep.subr.bf16.mxu0 0
        %1009 = vmatpush2.bf16.msra.mxu0 0
        %1010 = vmatprep.subr.bf16.mxu0 0
        %1011 = vmatpush2.bf16.msra.mxu0 0
        %1012 = vmatprep.subr.bf16.mxu0 0
        %1013 = vmatpush2.bf16.msra.mxu0 0
        %1014 = vmatprep.mubr.bf16.mxu0 0
        %1015 = vmatmul.mubr.bf16.gmra.mxu0 %v922
        %v1016 = vpop.f32.mrf.mxu0
        %v1017 = vadd.f32 0.0, %v1016
        %v1018 = vpop.f32.mrf.mxu0
        %v1019 = vpop.f32.mrf.mxu0
        %v1020 = vadd.f32 0.0, %v1019
        %v1021 = vpop.f32.mrf.mxu0
        %1022 = vmatprep.mubr.bf16.mxu0 0
        %1023 = vmatmul.mubr.bf16.gmra.mxu0 %v931
        %v1024 = vpop.f32.mrf.mxu0
        %v1025 = vadd.f32 0.0, %v1024
        %v1026 = vpop.f32.mrf.mxu0
        %v1027 = vpop.f32.mrf.mxu0
        %v1028 = vadd.f32 0.0, %v1027
        %v1029 = vpop.f32.mrf.mxu0
        %1030 = vdwg.mxu0
        %v1031 = vadd.f32 %v885, %v1017
        %v1032 = vadd.f32 %v886, %v1020
        %v1033 = vadd.f32 %v887, %v1025
        %v1034 = vadd.f32 %v888, %v1028
        %v1035 = vld [vmem:[%s485] sm:$0xc]
        %s1036 = scalar_lea.vmem [#allocation4], 256
        %v1037 = vld [vmem:[%s1036] sm:$0xf]
        %v1038 = vld [vmem:[%s1036 + $0x4] sm:$0xf]
        %v1039 = vld [vmem:[%s1036 + $0x8] sm:$0xf]
        %v1040 = vld [vmem:[%s1036 + $0xc] sm:$0xf]
        %v1041 = vld [vmem:[%s1036 + $0x10] sm:$0xf]
        %v1042 = vld [vmem:[%s1036 + $0x14] sm:$0xf]
        %v1043 = vld [vmem:[%s1036 + $0x18] sm:$0xf]
        %v1044 = vld [vmem:[%s1036 + $0x1c] sm:$0xf]
        %v1045 = vld [vmem:[%s1036 + $0x20] sm:$0xf]
        %v1046 = vld [vmem:[%s1036 + $0x24] sm:$0xf]
        %v1047 = vld [vmem:[%s1036 + $0x28] sm:$0xf]
        %v1048 = vld [vmem:[%s1036 + $0x2c] sm:$0xf]
        %v1049 = vld [vmem:[%s1036 + $0x30] sm:$0xf]
        %v1050 = vld [vmem:[%s1036 + $0x34] sm:$0xf]
        %v1051 = vld [vmem:[%s1036 + $0x38] sm:$0xf]
        %v1052 = vld [vmem:[%s1036 + $0x3c] sm:$0xf]
        %v1054 = vunpack.c.l.b16 %v1035
        %v1055 = vpack.c.b16 %v533, %v1054
        %vm1056 = vcmask 1045504
        %v1057 = vrot.slane %v1055, 2
        %v1058 = vrot.slane %v538, 2
        %v1059 = vsel %vm1056, %v1057, %v1058
        %v1060 = vrot.slane %v909, 2
        %v1061 = vsel %vm1056, %v1058, %v1060
        %v1080 = vunpack.c.l.b16 %v1037
        %v1081 = vunpack.c.l.b16 %v1038
        %v1082 = vunpack.c.l.b16 %v1039
        %v1083 = vunpack.c.l.b16 %v1040
        %v1084 = vunpack.c.l.b16 %v1041
        %v1085 = vunpack.c.l.b16 %v1042
        %v1086 = vunpack.c.l.b16 %v1043
        %v1087 = vunpack.c.l.b16 %v1044
        %v1088 = vunpack.c.l.b16 %v1045
        %v1089 = vunpack.c.l.b16 %v1046
        %v1090 = vunpack.c.l.b16 %v1047
        %v1091 = vunpack.c.l.b16 %v1048
        %v1092 = vunpack.c.l.b16 %v1049
        %v1093 = vunpack.c.l.b16 %v1050
        %v1094 = vunpack.c.l.b16 %v1051
        %v1095 = vunpack.c.l.b16 %v1052
        %v1096 = vpack.c.b16 %v1081, %v1080
        %v1097 = vpack.c.b16 %v1083, %v1082
        %v1098 = vpack.c.b16 %v1085, %v1084
        %v1099 = vpack.c.b16 %v1087, %v1086
        %v1100 = vpack.c.b16 %v1089, %v1088
        %v1101 = vpack.c.b16 %v1091, %v1090
        %v1102 = vpack.c.b16 %v1093, %v1092
        %v1103 = vpack.c.b16 %v1095, %v1094
        %1112 = vmatprep.subr.bf16.mxu0 0
        %1113 = vmatpush1.bf16.msra.mxu0 %v1103
        %1114 = vmatprep.subr.bf16.mxu0 0
        %1115 = vmatpush1.bf16.msra.mxu0 %v1102
        %1116 = vmatprep.subr.bf16.mxu0 0
        %1117 = vmatpush1.bf16.msra.mxu0 %v1101
        %1118 = vmatprep.subr.bf16.mxu0 0
        %1119 = vmatpush1.bf16.msra.mxu0 %v1100
        %1120 = vmatprep.subr.bf16.mxu0 0
        %1121 = vmatpush1.bf16.msra.mxu0 %v1099
        %1122 = vmatprep.subr.bf16.mxu0 0
        %1123 = vmatpush1.bf16.msra.mxu0 %v1098
        %1124 = vmatprep.subr.bf16.mxu0 0
        %1125 = vmatpush1.bf16.msra.mxu0 %v1097
        %1126 = vmatprep.subr.bf16.mxu0 0
        %1127 = vmatpush1.bf16.msra.mxu0 %v1096
        %1128 = vmatprep.subr.bf16.mxu0 0
        %1129 = vmatpush2.bf16.msra.mxu0 0
        %1130 = vmatprep.subr.bf16.mxu0 0
        %1131 = vmatpush2.bf16.msra.mxu0 0
        %1132 = vmatprep.subr.bf16.mxu0 0
        %1133 = vmatpush2.bf16.msra.mxu0 0
        %1134 = vmatprep.subr.bf16.mxu0 0
        %1135 = vmatpush2.bf16.msra.mxu0 0
        %1136 = vmatprep.subr.bf16.mxu0 0
        %1137 = vmatpush2.bf16.msra.mxu0 0
        %1138 = vmatprep.subr.bf16.mxu0 0
        %1139 = vmatpush2.bf16.msra.mxu0 0
        %1140 = vmatprep.subr.bf16.mxu0 0
        %1141 = vmatpush2.bf16.msra.mxu0 0
        %1142 = vmatprep.subr.bf16.mxu0 0
        %1143 = vmatpush2.bf16.msra.mxu0 0
        %1144 = vmatprep.mubr.bf16.mxu0 0
        %1145 = vmatmul.mubr.bf16.gmra.mxu0 %v1059
        %v1146 = vpop.f32.mrf.mxu0
        %v1147 = vadd.f32 0.0, %v1146
        %v1148 = vpop.f32.mrf.mxu0
        %v1149 = vpop.f32.mrf.mxu0
        %v1150 = vadd.f32 0.0, %v1149
        %v1151 = vpop.f32.mrf.mxu0
        %1152 = vmatprep.mubr.bf16.mxu0 0
        %1153 = vmatmul.mubr.bf16.gmra.mxu0 %v1061
        %v1154 = vpop.f32.mrf.mxu0
        %v1155 = vadd.f32 0.0, %v1154
        %v1156 = vpop.f32.mrf.mxu0
        %v1157 = vpop.f32.mrf.mxu0
        %v1158 = vadd.f32 0.0, %v1157
        %v1159 = vpop.f32.mrf.mxu0
        %1160 = vdwg.mxu0
        %v1161 = vadd.f32 %v1031, %v1147
        %v1162 = vadd.f32 %v1032, %v1150
        %v1163 = vadd.f32 %v1033, %v1155
        %v1164 = vadd.f32 %v1034, %v1158
        %v1165 = vld [vmem:[%s2] sm:$0x1]
        %v1167 = vlaneseq
        %v1168 = vshrl.u32 %v1167, 7
        %v1169 = vsub.s32 0, %v1168
        %v1170 = vrot.slane %v1165, %v1169
        %v1172 = vadd.f32 %v1161, %v1170
        %v1173 = vadd.f32 %v1162, %v1170
        %v1174 = vadd.f32 %v1163, %v1170
        %v1175 = vadd.f32 %v1164, %v1170
        %v1176 = vtanh.pop %v1172
        %v1177 = vtanh.pop %v1173
        %v1178 = vtanh.pop %v1174
        %v1179 = vtanh.pop %v1175
        %s1180 = sadd.s32 %s488, 4294967288
        %v1181 = vlaneseq
        %v1182 = vshrl.u32 %v1181, 7
        %v1183 = vadd.s32 %v1182, 8
        %v1184 = vadd.s32 %v1182, 16
        %v1185 = vadd.s32 %v1182, 24
        %v1186 = vstv %s1180
        %v1187 = vadd.s32 %v1186, %v1182
        %v1188 = vadd.s32 %v1186, %v1183
        %v1189 = vadd.s32 %v1186, %v1184
        %v1190 = vadd.s32 %v1186, %v1185
        %vm1191 = vcmp.ge.s32.totalorder %v1187, 0
        %vm1192 = vcmp.ge.s32.totalorder %v1188, 0
        %vm1193 = vcmp.ge.s32.totalorder %v1189, 0
        %vm1194 = vcmp.ge.s32.totalorder %v1190, 0
        %vm1195 = vcmp.lt.s32.totalorder %v1187, 30
        %vm1196 = vcmp.lt.s32.totalorder %v1188, 30
        %vm1197 = vcmp.lt.s32.totalorder %v1189, 30
        %vm1198 = vcmp.lt.s32.totalorder %v1190, 30
        %vm1199 = vmand %vm1191, %vm1195
        %vm1200 = vmand %vm1192, %vm1196
        %vm1201 = vmand %vm1193, %vm1197
        %vm1202 = vmand %vm1194, %vm1198
        %v1203 = vsel %vm1199, 1, 0
        %v1204 = vsel %vm1200, 1, 0
        %v1205 = vsel %vm1201, 1, 0
        %v1206 = vsel %vm1202, 1, 0
        %vm1207 = vcmp.eq.s32.totalorder %v1203, 1
        %vm1208 = vcmp.eq.s32.totalorder %v1204, 1
        %vm1209 = vcmp.eq.s32.totalorder %v1205, 1
        %vm1210 = vcmp.eq.s32.totalorder %v1206, 1
        %v1211 = vsel %vm1207, %v1176, 0.0
        %v1212 = vsel %vm1208, %v1177, 0.0
        %v1213 = vsel %vm1209, %v1178, 0.0
        %v1214 = vsel %vm1210, %v1179, 0.0
        %v1215 = vpack.c.bf16 %v1212, %v1211
        %v1216 = vpack.c.bf16 %v1214, %v1213
        %v1219 = vunpack.c.l.b16 %v1215
        %v1220 = vunpack.c.h.b16 %v1215
        %v1221 = vunpack.c.l.b16 %v1216
        %v1222 = vunpack.c.h.b16 %v1216
        %v1223 = vpack.c.b16 %v1219, %v1219
        %v1224 = vpack.c.b16 %v1220, %v1220
        %v1225 = vpack.c.b16 %v1221, %v1221
        %v1226 = vpack.c.b16 %v1222, %v1222
        %1231 = vst [vmem:[#allocation2] sm:$0xf] %v1223
        %1232 = vst [vmem:[#allocation2 + $0x4] sm:$0xf] %v1224
        %1233 = vst [vmem:[#allocation2 + $0x8] sm:$0xf] %v1225
        %1234 = vst [vmem:[#allocation2 + $0xc] sm:$0xf] %v1226
        %v1235 = vld [vmem:[#allocation2] sm:$0xf]
        %v1236 = vld [vmem:[#allocation2 + $0x4] sm:$0xf]
        %v1237 = vld [vmem:[#allocation2 + $0x8] sm:$0xf]
        %v1238 = vld [vmem:[#allocation2 + $0xc] sm:$0x3]
        %v1239 = vld [vmem:[#allocation7] sm:$0xf]
        %v1240 = vld [vmem:[#allocation7 + $0x4] sm:$0xf]
        %v1241 = vld [vmem:[#allocation7 + $0x8] sm:$0xf]
        %v1242 = vld [vmem:[#allocation7 + $0xc] sm:$0xf]
        %v1243 = vld [vmem:[#allocation7 + $0x10] sm:$0xf]
        %v1244 = vld [vmem:[#allocation7 + $0x14] sm:$0xf]
        %v1245 = vld [vmem:[#allocation7 + $0x18] sm:$0xf]
        %v1246 = vld [vmem:[#allocation7 + $0x1c] sm:$0xf]
        %v1247 = vld [vmem:[#allocation7 + $0x20] sm:$0xf]
        %v1248 = vld [vmem:[#allocation7 + $0x24] sm:$0xf]
        %v1249 = vld [vmem:[#allocation7 + $0x28] sm:$0xf]
        %v1250 = vld [vmem:[#allocation7 + $0x2c] sm:$0xf]
        %v1251 = vld [vmem:[#allocation7 + $0x30] sm:$0xf]
        %v1252 = vld [vmem:[#allocation7 + $0x34] sm:$0xf]
        %v1253 = vld [vmem:[#allocation7 + $0x38] sm:$0xf]
        %v1254 = vld [vmem:[#allocation7 + $0x3c] sm:$0xf]
        %v1255 = vld [vmem:[#allocation2 + $0xc] sm:$0x7]
        %s1256 = scalar_lea.vmem [#allocation7], 64
        %v1257 = vld [vmem:[%s1256] sm:$0xf]
        %v1258 = vld [vmem:[%s1256 + $0x4] sm:$0xf]
        %v1259 = vld [vmem:[%s1256 + $0x8] sm:$0xf]
        %v1260 = vld [vmem:[%s1256 + $0xc] sm:$0xf]
        %v1261 = vld [vmem:[%s1256 + $0x10] sm:$0xf]
        %v1262 = vld [vmem:[%s1256 + $0x14] sm:$0xf]
        %v1263 = vld [vmem:[%s1256 + $0x18] sm:$0xf]
        %v1264 = vld [vmem:[%s1256 + $0x1c] sm:$0xf]
        %v1265 = vld [vmem:[%s1256 + $0x20] sm:$0xf]
        %v1266 = vld [vmem:[%s1256 + $0x24] sm:$0xf]
        %v1267 = vld [vmem:[%s1256 + $0x28] sm:$0xf]
        %v1268 = vld [vmem:[%s1256 + $0x2c] sm:$0xf]
        %v1269 = vld [vmem:[%s1256 + $0x30] sm:$0xf]
        %v1270 = vld [vmem:[%s1256 + $0x34] sm:$0xf]
        %v1271 = vld [vmem:[%s1256 + $0x38] sm:$0xf]
        %v1272 = vld [vmem:[%s1256 + $0x3c] sm:$0xf]
        %v1277 = vunpack.c.l.b16 %v1235
        %v1278 = vunpack.c.l.b16 %v1236
        %v1279 = vunpack.c.l.b16 %v1237
        %v1280 = vunpack.c.l.b16 %v1255
        %v1281 = vpack.c.b16 %v1278, %v1277
        %v1282 = vpack.c.b16 %v1280, %v1279
        %v1284 = vshrl.u32 %v1281, 16
        %v1286 = vshll.u32 %v1281, 16
        %v1288 = vrot.slane %v1286, 1
        %v1289 = vor.u32 %v1284, %v1288
        %v1291 = vshll.u32 %v1282, 16
        %v1293 = vrot.slane %v1291, 1
        %v1294 = vsel %vm540, %v1289, %v1293
        %v1295 = vshrl.u32 %v1282, 16
        %v1297 = vor.u32 %v1295, %v1293
        %v1316 = vunpack.c.l.b16 %v1257
        %v1317 = vunpack.c.l.b16 %v1258
        %v1318 = vunpack.c.l.b16 %v1259
        %v1319 = vunpack.c.l.b16 %v1260
        %v1320 = vunpack.c.l.b16 %v1261
        %v1321 = vunpack.c.l.b16 %v1262
        %v1322 = vunpack.c.l.b16 %v1263
        %v1323 = vunpack.c.l.b16 %v1264
        %v1324 = vunpack.c.l.b16 %v1265
        %v1325 = vunpack.c.l.b16 %v1266
        %v1326 = vunpack.c.l.b16 %v1267
        %v1327 = vunpack.c.l.b16 %v1268
        %v1328 = vunpack.c.l.b16 %v1269
        %v1329 = vunpack.c.l.b16 %v1270
        %v1330 = vunpack.c.l.b16 %v1271
        %v1331 = vunpack.c.l.b16 %v1272
        %v1332 = vpack.c.b16 %v1317, %v1316
        %v1333 = vpack.c.b16 %v1319, %v1318
        %v1334 = vpack.c.b16 %v1321, %v1320
        %v1335 = vpack.c.b16 %v1323, %v1322
        %v1336 = vpack.c.b16 %v1325, %v1324
        %v1337 = vpack.c.b16 %v1327, %v1326
        %v1338 = vpack.c.b16 %v1329, %v1328
        %v1339 = vpack.c.b16 %v1331, %v1330
        %1348 = vmatprep.subr.bf16.mxu0 0
        %1349 = vmatpush1.bf16.msra.mxu0 %v1339
        %1350 = vmatprep.subr.bf16.mxu0 0
        %1351 = vmatpush1.bf16.msra.mxu0 %v1338
        %1352 = vmatprep.subr.bf16.mxu0 0
        %1353 = vmatpush1.bf16.msra.mxu0 %v1337
        %1354 = vmatprep.subr.bf16.mxu0 0
        %1355 = vmatpush1.bf16.msra.mxu0 %v1336
        %1356 = vmatprep.subr.bf16.mxu0 0
        %1357 = vmatpush1.bf16.msra.mxu0 %v1335
        %1358 = vmatprep.subr.bf16.mxu0 0
        %1359 = vmatpush1.bf16.msra.mxu0 %v1334
        %1360 = vmatprep.subr.bf16.mxu0 0
        %1361 = vmatpush1.bf16.msra.mxu0 %v1333
        %1362 = vmatprep.subr.bf16.mxu0 0
        %1363 = vmatpush1.bf16.msra.mxu0 %v1332
        %1364 = vmatprep.subr.bf16.mxu0 0
        %1365 = vmatpush2.bf16.msra.mxu0 0
        %1366 = vmatprep.subr.bf16.mxu0 0
        %1367 = vmatpush2.bf16.msra.mxu0 0
        %1368 = vmatprep.subr.bf16.mxu0 0
        %1369 = vmatpush2.bf16.msra.mxu0 0
        %1370 = vmatprep.subr.bf16.mxu0 0
        %1371 = vmatpush2.bf16.msra.mxu0 0
        %1372 = vmatprep.subr.bf16.mxu0 0
        %1373 = vmatpush2.bf16.msra.mxu0 0
        %1374 = vmatprep.subr.bf16.mxu0 0
        %1375 = vmatpush2.bf16.msra.mxu0 0
        %1376 = vmatprep.subr.bf16.mxu0 0
        %1377 = vmatpush2.bf16.msra.mxu0 0
        %1378 = vmatprep.subr.bf16.mxu0 0
        %1379 = vmatpush2.bf16.msra.mxu0 0
        %1380 = vmatprep.mubr.bf16.mxu0 0
        %1381 = vmatmul.mubr.bf16.gmra.mxu0 %v1294
        %v1382 = vpop.f32.mrf.mxu0
        %v1383 = vadd.f32 0.0, %v1382
        %v1384 = vpop.f32.mrf.mxu0
        %v1385 = vpop.f32.mrf.mxu0
        %v1386 = vadd.f32 0.0, %v1385
        %v1387 = vpop.f32.mrf.mxu0
        %1388 = vmatprep.mubr.bf16.mxu0 0
        %1389 = vmatmul.mubr.bf16.gmra.mxu0 %v1297
        %v1390 = vpop.f32.mrf.mxu0
        %v1391 = vadd.f32 0.0, %v1390
        %v1392 = vpop.f32.mrf.mxu0
        %v1393 = vpop.f32.mrf.mxu0
        %v1394 = vadd.f32 0.0, %v1393
        %v1395 = vpop.f32.mrf.mxu0
        %1396 = vdwg.mxu0
        %v1398 = vunpack.c.l.b16 %v1238
        %v1399 = vpack.c.b16 %v1398, %v1279
        %v1418 = vunpack.c.l.b16 %v1239
        %v1419 = vunpack.c.l.b16 %v1240
        %v1420 = vunpack.c.l.b16 %v1241
        %v1421 = vunpack.c.l.b16 %v1242
        %v1422 = vunpack.c.l.b16 %v1243
        %v1423 = vunpack.c.l.b16 %v1244
        %v1424 = vunpack.c.l.b16 %v1245
        %v1425 = vunpack.c.l.b16 %v1246
        %v1426 = vunpack.c.l.b16 %v1247
        %v1427 = vunpack.c.l.b16 %v1248
        %v1428 = vunpack.c.l.b16 %v1249
        %v1429 = vunpack.c.l.b16 %v1250
        %v1430 = vunpack.c.l.b16 %v1251
        %v1431 = vunpack.c.l.b16 %v1252
        %v1432 = vunpack.c.l.b16 %v1253
        %v1433 = vunpack.c.l.b16 %v1254
        %v1434 = vpack.c.b16 %v1419, %v1418
        %v1435 = vpack.c.b16 %v1421, %v1420
        %v1436 = vpack.c.b16 %v1423, %v1422
        %v1437 = vpack.c.b16 %v1425, %v1424
        %v1438 = vpack.c.b16 %v1427, %v1426
        %v1439 = vpack.c.b16 %v1429, %v1428
        %v1440 = vpack.c.b16 %v1431, %v1430
        %v1441 = vpack.c.b16 %v1433, %v1432
        %1450 = vmatprep.subr.bf16.mxu0 0
        %1451 = vmatpush1.bf16.msra.mxu0 %v1441
        %1452 = vmatprep.subr.bf16.mxu0 0
        %1453 = vmatpush1.bf16.msra.mxu0 %v1440
        %1454 = vmatprep.subr.bf16.mxu0 0
        %1455 = vmatpush1.bf16.msra.mxu0 %v1439
        %1456 = vmatprep.subr.bf16.mxu0 0
        %1457 = vmatpush1.bf16.msra.mxu0 %v1438
        %1458 = vmatprep.subr.bf16.mxu0 0
        %1459 = vmatpush1.bf16.msra.mxu0 %v1437
        %1460 = vmatprep.subr.bf16.mxu0 0
        %1461 = vmatpush1.bf16.msra.mxu0 %v1436
        %1462 = vmatprep.subr.bf16.mxu0 0
        %1463 = vmatpush1.bf16.msra.mxu0 %v1435
        %1464 = vmatprep.subr.bf16.mxu0 0
        %1465 = vmatpush1.bf16.msra.mxu0 %v1434
        %1466 = vmatprep.subr.bf16.mxu0 0
        %1467 = vmatpush2.bf16.msra.mxu0 0
        %1468 = vmatprep.subr.bf16.mxu0 0
        %1469 = vmatpush2.bf16.msra.mxu0 0
        %1470 = vmatprep.subr.bf16.mxu0 0
        %1471 = vmatpush2.bf16.msra.mxu0 0
        %1472 = vmatprep.subr.bf16.mxu0 0
        %1473 = vmatpush2.bf16.msra.mxu0 0
        %1474 = vmatprep.subr.bf16.mxu0 0
        %1475 = vmatpush2.bf16.msra.mxu0 0
        %1476 = vmatprep.subr.bf16.mxu0 0
        %1477 = vmatpush2.bf16.msra.mxu0 0
        %1478 = vmatprep.subr.bf16.mxu0 0
        %1479 = vmatpush2.bf16.msra.mxu0 0
        %1480 = vmatprep.subr.bf16.mxu0 0
        %1481 = vmatpush2.bf16.msra.mxu0 0
        %1482 = vmatprep.mubr.bf16.mxu0 0
        %1483 = vmatmul.mubr.bf16.gmra.mxu0 %v1281
        %v1484 = vpop.f32.mrf.mxu0
        %v1485 = vadd.f32 %v1383, %v1484
        %v1486 = vpop.f32.mrf.mxu0
        %v1487 = vpop.f32.mrf.mxu0
        %v1488 = vadd.f32 %v1386, %v1487
        %v1489 = vpop.f32.mrf.mxu0
        %1490 = vmatprep.mubr.bf16.mxu0 0
        %1491 = vmatmul.mubr.bf16.gmra.mxu0 %v1399
        %v1492 = vpop.f32.mrf.mxu0
        %v1493 = vadd.f32 %v1391, %v1492
        %v1494 = vpop.f32.mrf.mxu0
        %v1495 = vpop.f32.mrf.mxu0
        %v1496 = vadd.f32 %v1394, %v1495
        %v1497 = vpop.f32.mrf.mxu0
        %1498 = vdwg.mxu0
        %v1499 = vld [vmem:[#allocation2] sm:$0xe]
        %s1500 = scalar_lea.vmem [#allocation7], 128
        %v1501 = vld [vmem:[%s1500] sm:$0xf]
        %v1502 = vld [vmem:[%s1500 + $0x4] sm:$0xf]
        %v1503 = vld [vmem:[%s1500 + $0x8] sm:$0xf]
        %v1504 = vld [vmem:[%s1500 + $0xc] sm:$0xf]
        %v1505 = vld [vmem:[%s1500 + $0x10] sm:$0xf]
        %v1506 = vld [vmem:[%s1500 + $0x14] sm:$0xf]
        %v1507 = vld [vmem:[%s1500 + $0x18] sm:$0xf]
        %v1508 = vld [vmem:[%s1500 + $0x1c] sm:$0xf]
        %v1509 = vld [vmem:[%s1500 + $0x20] sm:$0xf]
        %v1510 = vld [vmem:[%s1500 + $0x24] sm:$0xf]
        %v1511 = vld [vmem:[%s1500 + $0x28] sm:$0xf]
        %v1512 = vld [vmem:[%s1500 + $0x2c] sm:$0xf]
        %v1513 = vld [vmem:[%s1500 + $0x30] sm:$0xf]
        %v1514 = vld [vmem:[%s1500 + $0x34] sm:$0xf]
        %v1515 = vld [vmem:[%s1500 + $0x38] sm:$0xf]
        %v1516 = vld [vmem:[%s1500 + $0x3c] sm:$0xf]
        %v1518 = vunpack.c.l.b16 %v1499
        %v1519 = vpack.c.b16 %v1278, %v1518
        %v1520 = vrot.slane %v1519, 1
        %v1521 = vrot.slane %v1282, 1
        %v1522 = vsel %vm780, %v1520, %v1521
        %v1541 = vunpack.c.l.b16 %v1501
        %v1542 = vunpack.c.l.b16 %v1502
        %v1543 = vunpack.c.l.b16 %v1503
        %v1544 = vunpack.c.l.b16 %v1504
        %v1545 = vunpack.c.l.b16 %v1505
        %v1546 = vunpack.c.l.b16 %v1506
        %v1547 = vunpack.c.l.b16 %v1507
        %v1548 = vunpack.c.l.b16 %v1508
        %v1549 = vunpack.c.l.b16 %v1509
        %v1550 = vunpack.c.l.b16 %v1510
        %v1551 = vunpack.c.l.b16 %v1511
        %v1552 = vunpack.c.l.b16 %v1512
        %v1553 = vunpack.c.l.b16 %v1513
        %v1554 = vunpack.c.l.b16 %v1514
        %v1555 = vunpack.c.l.b16 %v1515
        %v1556 = vunpack.c.l.b16 %v1516
        %v1557 = vpack.c.b16 %v1542, %v1541
        %v1558 = vpack.c.b16 %v1544, %v1543
        %v1559 = vpack.c.b16 %v1546, %v1545
        %v1560 = vpack.c.b16 %v1548, %v1547
        %v1561 = vpack.c.b16 %v1550, %v1549
        %v1562 = vpack.c.b16 %v1552, %v1551
        %v1563 = vpack.c.b16 %v1554, %v1553
        %v1564 = vpack.c.b16 %v1556, %v1555
        %1573 = vmatprep.subr.bf16.mxu0 0
        %1574 = vmatpush1.bf16.msra.mxu0 %v1564
        %1575 = vmatprep.subr.bf16.mxu0 0
        %1576 = vmatpush1.bf16.msra.mxu0 %v1563
        %1577 = vmatprep.subr.bf16.mxu0 0
        %1578 = vmatpush1.bf16.msra.mxu0 %v1562
        %1579 = vmatprep.subr.bf16.mxu0 0
        %1580 = vmatpush1.bf16.msra.mxu0 %v1561
        %1581 = vmatprep.subr.bf16.mxu0 0
        %1582 = vmatpush1.bf16.msra.mxu0 %v1560
        %1583 = vmatprep.subr.bf16.mxu0 0
        %1584 = vmatpush1.bf16.msra.mxu0 %v1559
        %1585 = vmatprep.subr.bf16.mxu0 0
        %1586 = vmatpush1.bf16.msra.mxu0 %v1558
        %1587 = vmatprep.subr.bf16.mxu0 0
        %1588 = vmatpush1.bf16.msra.mxu0 %v1557
        %1589 = vmatprep.subr.bf16.mxu0 0
        %1590 = vmatpush2.bf16.msra.mxu0 0
        %1591 = vmatprep.subr.bf16.mxu0 0
        %1592 = vmatpush2.bf16.msra.mxu0 0
        %1593 = vmatprep.subr.bf16.mxu0 0
        %1594 = vmatpush2.bf16.msra.mxu0 0
        %1595 = vmatprep.subr.bf16.mxu0 0
        %1596 = vmatpush2.bf16.msra.mxu0 0
        %1597 = vmatprep.subr.bf16.mxu0 0
        %1598 = vmatpush2.bf16.msra.mxu0 0
        %1599 = vmatprep.subr.bf16.mxu0 0
        %1600 = vmatpush2.bf16.msra.mxu0 0
        %1601 = vmatprep.subr.bf16.mxu0 0
        %1602 = vmatpush2.bf16.msra.mxu0 0
        %1603 = vmatprep.subr.bf16.mxu0 0
        %1604 = vmatpush2.bf16.msra.mxu0 0
        %1605 = vmatprep.mubr.bf16.mxu0 0
        %1606 = vmatmul.mubr.bf16.gmra.mxu0 %v1522
        %v1607 = vpop.f32.mrf.mxu0
        %v1608 = vadd.f32 0.0, %v1607
        %v1609 = vpop.f32.mrf.mxu0
        %v1610 = vpop.f32.mrf.mxu0
        %v1611 = vadd.f32 0.0, %v1610
        %v1612 = vpop.f32.mrf.mxu0
        %1613 = vmatprep.mubr.bf16.mxu0 0
        %1614 = vmatmul.mubr.bf16.gmra.mxu0 %v1521
        %v1615 = vpop.f32.mrf.mxu0
        %v1616 = vadd.f32 0.0, %v1615
        %v1617 = vpop.f32.mrf.mxu0
        %v1618 = vpop.f32.mrf.mxu0
        %v1619 = vadd.f32 0.0, %v1618
        %v1620 = vpop.f32.mrf.mxu0
        %1621 = vdwg.mxu0
        %v1622 = vadd.f32 %v1485, %v1608
        %v1623 = vadd.f32 %v1488, %v1611
        %v1624 = vadd.f32 %v1493, %v1616
        %v1625 = vadd.f32 %v1496, %v1619
        %v1626 = vld [vmem:[#allocation2 + $0xc] sm:$0xf]
        %s1627 = scalar_lea.vmem [#allocation7], 192
        %v1628 = vld [vmem:[%s1627] sm:$0xf]
        %v1629 = vld [vmem:[%s1627 + $0x4] sm:$0xf]
        %v1630 = vld [vmem:[%s1627 + $0x8] sm:$0xf]
        %v1631 = vld [vmem:[%s1627 + $0xc] sm:$0xf]
        %v1632 = vld [vmem:[%s1627 + $0x10] sm:$0xf]
        %v1633 = vld [vmem:[%s1627 + $0x14] sm:$0xf]
        %v1634 = vld [vmem:[%s1627 + $0x18] sm:$0xf]
        %v1635 = vld [vmem:[%s1627 + $0x1c] sm:$0xf]
        %v1636 = vld [vmem:[%s1627 + $0x20] sm:$0xf]
        %v1637 = vld [vmem:[%s1627 + $0x24] sm:$0xf]
        %v1638 = vld [vmem:[%s1627 + $0x28] sm:$0xf]
        %v1639 = vld [vmem:[%s1627 + $0x2c] sm:$0xf]
        %v1640 = vld [vmem:[%s1627 + $0x30] sm:$0xf]
        %v1641 = vld [vmem:[%s1627 + $0x34] sm:$0xf]
        %v1642 = vld [vmem:[%s1627 + $0x38] sm:$0xf]
        %v1643 = vld [vmem:[%s1627 + $0x3c] sm:$0xf]
        %v1645 = vunpack.c.l.b16 %v1626
        %v1646 = vpack.c.b16 %v1645, %v1279
        %v1648 = vshrl.u32 %v1519, 16
        %v1650 = vrot.slane %v1648, 1
        %v1651 = vshll.u32 %v1519, 16
        %v1653 = vrot.slane %v1651, 2
        %v1654 = vor.u32 %v1650, %v1653
        %v1656 = vshrl.u32 %v1646, 16
        %v1658 = vrot.slane %v1656, 1
        %v1659 = vshll.u32 %v1646, 16
        %v1661 = vrot.slane %v1659, 2
        %v1662 = vor.u32 %v1658, %v1661
        %v1663 = vsel %vm910, %v1654, %v1662
        %v1682 = vunpack.c.l.b16 %v1628
        %v1683 = vunpack.c.l.b16 %v1629
        %v1684 = vunpack.c.l.b16 %v1630
        %v1685 = vunpack.c.l.b16 %v1631
        %v1686 = vunpack.c.l.b16 %v1632
        %v1687 = vunpack.c.l.b16 %v1633
        %v1688 = vunpack.c.l.b16 %v1634
        %v1689 = vunpack.c.l.b16 %v1635
        %v1690 = vunpack.c.l.b16 %v1636
        %v1691 = vunpack.c.l.b16 %v1637
        %v1692 = vunpack.c.l.b16 %v1638
        %v1693 = vunpack.c.l.b16 %v1639
        %v1694 = vunpack.c.l.b16 %v1640
        %v1695 = vunpack.c.l.b16 %v1641
        %v1696 = vunpack.c.l.b16 %v1642
        %v1697 = vunpack.c.l.b16 %v1643
        %v1698 = vpack.c.b16 %v1683, %v1682
        %v1699 = vpack.c.b16 %v1685, %v1684
        %v1700 = vpack.c.b16 %v1687, %v1686
        %v1701 = vpack.c.b16 %v1689, %v1688
        %v1702 = vpack.c.b16 %v1691, %v1690
        %v1703 = vpack.c.b16 %v1693, %v1692
        %v1704 = vpack.c.b16 %v1695, %v1694
        %v1705 = vpack.c.b16 %v1697, %v1696
        %1714 = vmatprep.subr.bf16.mxu0 0
        %1715 = vmatpush1.bf16.msra.mxu0 %v1705
        %1716 = vmatprep.subr.bf16.mxu0 0
        %1717 = vmatpush1.bf16.msra.mxu0 %v1704
        %1718 = vmatprep.subr.bf16.mxu0 0
        %1719 = vmatpush1.bf16.msra.mxu0 %v1703
        %1720 = vmatprep.subr.bf16.mxu0 0
        %1721 = vmatpush1.bf16.msra.mxu0 %v1702
        %1722 = vmatprep.subr.bf16.mxu0 0
        %1723 = vmatpush1.bf16.msra.mxu0 %v1701
        %1724 = vmatprep.subr.bf16.mxu0 0
        %1725 = vmatpush1.bf16.msra.mxu0 %v1700
        %1726 = vmatprep.subr.bf16.mxu0 0
        %1727 = vmatpush1.bf16.msra.mxu0 %v1699
        %1728 = vmatprep.subr.bf16.mxu0 0
        %1729 = vmatpush1.bf16.msra.mxu0 %v1698
        %1730 = vmatprep.subr.bf16.mxu0 0
        %1731 = vmatpush2.bf16.msra.mxu0 0
        %1732 = vmatprep.subr.bf16.mxu0 0
        %1733 = vmatpush2.bf16.msra.mxu0 0
        %1734 = vmatprep.subr.bf16.mxu0 0
        %1735 = vmatpush2.bf16.msra.mxu0 0
        %1736 = vmatprep.subr.bf16.mxu0 0
        %1737 = vmatpush2.bf16.msra.mxu0 0
        %1738 = vmatprep.subr.bf16.mxu0 0
        %1739 = vmatpush2.bf16.msra.mxu0 0
        %1740 = vmatprep.subr.bf16.mxu0 0
        %1741 = vmatpush2.bf16.msra.mxu0 0
        %1742 = vmatprep.subr.bf16.mxu0 0
        %1743 = vmatpush2.bf16.msra.mxu0 0
        %1744 = vmatprep.subr.bf16.mxu0 0
        %1745 = vmatpush2.bf16.msra.mxu0 0
        %1746 = vmatprep.mubr.bf16.mxu0 0
        %1747 = vmatmul.mubr.bf16.gmra.mxu0 %v1663
        %v1748 = vpop.f32.mrf.mxu0
        %v1749 = vadd.f32 0.0, %v1748
        %v1750 = vpop.f32.mrf.mxu0
        %v1751 = vpop.f32.mrf.mxu0
        %v1752 = vadd.f32 0.0, %v1751
        %v1753 = vpop.f32.mrf.mxu0
        %1754 = vmatprep.mubr.bf16.mxu0 0
        %1755 = vmatmul.mubr.bf16.gmra.mxu0 %v1662
        %v1756 = vpop.f32.mrf.mxu0
        %v1757 = vadd.f32 0.0, %v1756
        %v1758 = vpop.f32.mrf.mxu0
        %v1759 = vpop.f32.mrf.mxu0
        %v1760 = vadd.f32 0.0, %v1759
        %v1761 = vpop.f32.mrf.mxu0
        %1762 = vdwg.mxu0
        %v1763 = vadd.f32 %v1622, %v1749
        %v1764 = vadd.f32 %v1623, %v1752
        %v1765 = vadd.f32 %v1624, %v1757
        %v1766 = vadd.f32 %v1625, %v1760
        %v1767 = vld [vmem:[#allocation2] sm:$0xc]
        %s1768 = scalar_lea.vmem [#allocation7], 256
        %v1769 = vld [vmem:[%s1768] sm:$0xf]
        %v1770 = vld [vmem:[%s1768 + $0x4] sm:$0xf]
        %v1771 = vld [vmem:[%s1768 + $0x8] sm:$0xf]
        %v1772 = vld [vmem:[%s1768 + $0xc] sm:$0xf]
        %v1773 = vld [vmem:[%s1768 + $0x10] sm:$0xf]
        %v1774 = vld [vmem:[%s1768 + $0x14] sm:$0xf]
        %v1775 = vld [vmem:[%s1768 + $0x18] sm:$0xf]
        %v1776 = vld [vmem:[%s1768 + $0x1c] sm:$0xf]
        %v1777 = vld [vmem:[%s1768 + $0x20] sm:$0xf]
        %v1778 = vld [vmem:[%s1768 + $0x24] sm:$0xf]
        %v1779 = vld [vmem:[%s1768 + $0x28] sm:$0xf]
        %v1780 = vld [vmem:[%s1768 + $0x2c] sm:$0xf]
        %v1781 = vld [vmem:[%s1768 + $0x30] sm:$0xf]
        %v1782 = vld [vmem:[%s1768 + $0x34] sm:$0xf]
        %v1783 = vld [vmem:[%s1768 + $0x38] sm:$0xf]
        %v1784 = vld [vmem:[%s1768 + $0x3c] sm:$0xf]
        %v1786 = vunpack.c.l.b16 %v1767
        %v1787 = vpack.c.b16 %v1278, %v1786
        %v1788 = vrot.slane %v1787, 2
        %v1789 = vrot.slane %v1646, 2
        %v1790 = vsel %vm1056, %v1788, %v1789
        %v1809 = vunpack.c.l.b16 %v1769
        %v1810 = vunpack.c.l.b16 %v1770
        %v1811 = vunpack.c.l.b16 %v1771
        %v1812 = vunpack.c.l.b16 %v1772
        %v1813 = vunpack.c.l.b16 %v1773
        %v1814 = vunpack.c.l.b16 %v1774
        %v1815 = vunpack.c.l.b16 %v1775
        %v1816 = vunpack.c.l.b16 %v1776
        %v1817 = vunpack.c.l.b16 %v1777
        %v1818 = vunpack.c.l.b16 %v1778
        %v1819 = vunpack.c.l.b16 %v1779
        %v1820 = vunpack.c.l.b16 %v1780
        %v1821 = vunpack.c.l.b16 %v1781
        %v1822 = vunpack.c.l.b16 %v1782
        %v1823 = vunpack.c.l.b16 %v1783
        %v1824 = vunpack.c.l.b16 %v1784
        %v1825 = vpack.c.b16 %v1810, %v1809
        %v1826 = vpack.c.b16 %v1812, %v1811
        %v1827 = vpack.c.b16 %v1814, %v1813
        %v1828 = vpack.c.b16 %v1816, %v1815
        %v1829 = vpack.c.b16 %v1818, %v1817
        %v1830 = vpack.c.b16 %v1820, %v1819
        %v1831 = vpack.c.b16 %v1822, %v1821
        %v1832 = vpack.c.b16 %v1824, %v1823
        %1841 = vmatprep.subr.bf16.mxu0 0
        %1842 = vmatpush1.bf16.msra.mxu0 %v1832
        %1843 = vmatprep.subr.bf16.mxu0 0
        %1844 = vmatpush1.bf16.msra.mxu0 %v1831
        %1845 = vmatprep.subr.bf16.mxu0 0
        %1846 = vmatpush1.bf16.msra.mxu0 %v1830
        %1847 = vmatprep.subr.bf16.mxu0 0
        %1848 = vmatpush1.bf16.msra.mxu0 %v1829
        %1849 = vmatprep.subr.bf16.mxu0 0
        %1850 = vmatpush1.bf16.msra.mxu0 %v1828
        %1851 = vmatprep.subr.bf16.mxu0 0
        %1852 = vmatpush1.bf16.msra.mxu0 %v1827
        %1853 = vmatprep.subr.bf16.mxu0 0
        %1854 = vmatpush1.bf16.msra.mxu0 %v1826
        %1855 = vmatprep.subr.bf16.mxu0 0
        %1856 = vmatpush1.bf16.msra.mxu0 %v1825
        %1857 = vmatprep.subr.bf16.mxu0 0
        %1858 = vmatpush2.bf16.msra.mxu0 0
        %1859 = vmatprep.subr.bf16.mxu0 0
        %1860 = vmatpush2.bf16.msra.mxu0 0
        %1861 = vmatprep.subr.bf16.mxu0 0
        %1862 = vmatpush2.bf16.msra.mxu0 0
        %1863 = vmatprep.subr.bf16.mxu0 0
        %1864 = vmatpush2.bf16.msra.mxu0 0
        %1865 = vmatprep.subr.bf16.mxu0 0
        %1866 = vmatpush2.bf16.msra.mxu0 0
        %1867 = vmatprep.subr.bf16.mxu0 0
        %1868 = vmatpush2.bf16.msra.mxu0 0
        %1869 = vmatprep.subr.bf16.mxu0 0
        %1870 = vmatpush2.bf16.msra.mxu0 0
        %1871 = vmatprep.subr.bf16.mxu0 0
        %1872 = vmatpush2.bf16.msra.mxu0 0
        %1873 = vmatprep.mubr.bf16.mxu0 0
        %1874 = vmatmul.mubr.bf16.gmra.mxu0 %v1790
        %v1875 = vpop.f32.mrf.mxu0
        %v1876 = vadd.f32 0.0, %v1875
        %v1877 = vpop.f32.mrf.mxu0
        %v1878 = vpop.f32.mrf.mxu0
        %v1879 = vadd.f32 0.0, %v1878
        %v1880 = vpop.f32.mrf.mxu0
        %1881 = vmatprep.mubr.bf16.mxu0 0
        %1882 = vmatmul.mubr.bf16.gmra.mxu0 %v1789
        %v1883 = vpop.f32.mrf.mxu0
        %v1884 = vadd.f32 0.0, %v1883
        %v1885 = vpop.f32.mrf.mxu0
        %v1886 = vpop.f32.mrf.mxu0
        %v1887 = vadd.f32 0.0, %v1886
        %v1888 = vpop.f32.mrf.mxu0
        %1889 = vdwg.mxu0
        %v1890 = vadd.f32 %v1763, %v1876
        %v1891 = vadd.f32 %v1764, %v1879
        %v1892 = vadd.f32 %v1765, %v1884
        %v1893 = vadd.f32 %v1766, %v1887
        %v1894 = vld [vmem:[%s4] sm:$0x1]
        %v1896 = vlaneseq
        %v1897 = vshrl.u32 %v1896, 7
        %v1898 = vsub.s32 0, %v1897
        %v1899 = vrot.slane %v1894, %v1898
        %v1901 = vadd.f32 %v1890, %v1899
        %v1902 = vadd.f32 %v1891, %v1899
        %v1903 = vadd.f32 %v1892, %v1899
        %v1904 = vadd.f32 %v1893, %v1899
        %v1905 = vtanh.pop %v1901
        %v1906 = vtanh.pop %v1902
        %v1907 = vtanh.pop %v1903
        %v1908 = vtanh.pop %v1904
        %s1909 = sadd.s32 %s488, 4294967290
        %v1910 = vstv %s1909
        %v1911 = vadd.s32 %v1910, %v1182
        %v1912 = vadd.s32 %v1910, %v1183
        %v1913 = vadd.s32 %v1910, %v1184
        %v1914 = vadd.s32 %v1910, %v1185
        %vm1915 = vcmp.ge.s32.totalorder %v1911, 0
        %vm1916 = vcmp.ge.s32.totalorder %v1912, 0
        %vm1917 = vcmp.ge.s32.totalorder %v1913, 0
        %vm1918 = vcmp.ge.s32.totalorder %v1914, 0
        %vm1919 = vcmp.lt.s32.totalorder %v1911, 30
        %vm1920 = vcmp.lt.s32.totalorder %v1912, 30
        %vm1921 = vcmp.lt.s32.totalorder %v1913, 30
        %vm1922 = vcmp.lt.s32.totalorder %v1914, 30
        %vm1923 = vmand %vm1915, %vm1919
        %vm1924 = vmand %vm1916, %vm1920
        %vm1925 = vmand %vm1917, %vm1921
        %vm1926 = vmand %vm1918, %vm1922
        %v1927 = vsel %vm1923, 1, 0
        %v1928 = vsel %vm1924, 1, 0
        %v1929 = vsel %vm1925, 1, 0
        %v1930 = vsel %vm1926, 1, 0
        %vm1931 = vcmp.eq.s32.totalorder %v1927, 1
        %vm1932 = vcmp.eq.s32.totalorder %v1928, 1
        %vm1933 = vcmp.eq.s32.totalorder %v1929, 1
        %vm1934 = vcmp.eq.s32.totalorder %v1930, 1
        %v1935 = vsel %vm1931, %v1905, 0.0
        %v1936 = vsel %vm1932, %v1906, 0.0
        %v1937 = vsel %vm1933, %v1907, 0.0
        %v1938 = vsel %vm1934, %v1908, 0.0
        %v1939 = vpack.c.bf16 %v1936, %v1935
        %v1940 = vpack.c.bf16 %v1938, %v1937
        %v1943 = vunpack.c.l.b16 %v1939
        %v1944 = vunpack.c.h.b16 %v1939
        %v1945 = vunpack.c.l.b16 %v1940
        %v1946 = vunpack.c.h.b16 %v1940
        %v1947 = vpack.c.b16 %v1943, %v1943
        %v1948 = vpack.c.b16 %v1944, %v1944
        %v1949 = vpack.c.b16 %v1945, %v1945
        %v1950 = vpack.c.b16 %v1946, %v1946
        %1955 = vst [vmem:[#allocation3] sm:$0xf] %v1947
        %1956 = vst [vmem:[#allocation3 + $0x4] sm:$0xf] %v1948
        %1957 = vst [vmem:[#allocation3 + $0x8] sm:$0xf] %v1949
        %1958 = vst [vmem:[#allocation3 + $0xc] sm:$0x3] %v1950
        %v1959 = vld [vmem:[#allocation3] sm:$0xf]
        %v1960 = vld [vmem:[#allocation3 + $0x4] sm:$0xf]
        %v1961 = vld [vmem:[#allocation3 + $0x8] sm:$0xf]
        %v1962 = vld [vmem:[#allocation9] sm:$0xf]
        %v1963 = vld [vmem:[#allocation9 + $0x4] sm:$0xf]
        %v1964 = vld [vmem:[#allocation9 + $0x8] sm:$0xf]
        %v1965 = vld [vmem:[#allocation9 + $0xc] sm:$0xf]
        %v1966 = vld [vmem:[#allocation9 + $0x10] sm:$0xf]
        %v1967 = vld [vmem:[#allocation9 + $0x14] sm:$0xf]
        %v1968 = vld [vmem:[#allocation9 + $0x18] sm:$0xf]
        %v1969 = vld [vmem:[#allocation9 + $0x1c] sm:$0xf]
        %v1970 = vld [vmem:[#allocation9 + $0x20] sm:$0xf]
        %v1971 = vld [vmem:[#allocation9 + $0x24] sm:$0xf]
        %v1972 = vld [vmem:[#allocation9 + $0x28] sm:$0xf]
        %v1973 = vld [vmem:[#allocation9 + $0x2c] sm:$0xf]
        %v1974 = vld [vmem:[#allocation9 + $0x30] sm:$0xf]
        %v1975 = vld [vmem:[#allocation9 + $0x34] sm:$0xf]
        %v1976 = vld [vmem:[#allocation9 + $0x38] sm:$0xf]
        %v1977 = vld [vmem:[#allocation9 + $0x3c] sm:$0xf]
        %v1978 = vld [vmem:[#allocation3] sm:$0xf]
        %v1979 = vld [vmem:[#allocation3 + $0x4] sm:$0xf]
        %v1980 = vld [vmem:[#allocation3 + $0x8] sm:$0xf]
        %v1981 = vld [vmem:[#allocation3 + $0xc] sm:$0x1]
        %s1982 = scalar_lea.vmem [#allocation9], 64
        %v1983 = vld [vmem:[%s1982] sm:$0xf]
        %v1984 = vld [vmem:[%s1982 + $0x4] sm:$0xf]
        %v1985 = vld [vmem:[%s1982 + $0x8] sm:$0xf]
        %v1986 = vld [vmem:[%s1982 + $0xc] sm:$0xf]
        %v1987 = vld [vmem:[%s1982 + $0x10] sm:$0xf]
        %v1988 = vld [vmem:[%s1982 + $0x14] sm:$0xf]
        %v1989 = vld [vmem:[%s1982 + $0x18] sm:$0xf]
        %v1990 = vld [vmem:[%s1982 + $0x1c] sm:$0xf]
        %v1991 = vld [vmem:[%s1982 + $0x20] sm:$0xf]
        %v1992 = vld [vmem:[%s1982 + $0x24] sm:$0xf]
        %v1993 = vld [vmem:[%s1982 + $0x28] sm:$0xf]
        %v1994 = vld [vmem:[%s1982 + $0x2c] sm:$0xf]
        %v1995 = vld [vmem:[%s1982 + $0x30] sm:$0xf]
        %v1996 = vld [vmem:[%s1982 + $0x34] sm:$0xf]
        %v1997 = vld [vmem:[%s1982 + $0x38] sm:$0xf]
        %v1998 = vld [vmem:[%s1982 + $0x3c] sm:$0xf]
        %v2003 = vunpack.c.l.b16 %v1978
        %v2004 = vunpack.c.l.b16 %v1979
        %v2005 = vunpack.c.l.b16 %v1980
        %v2006 = vunpack.c.l.b16 %v1981
        %v2007 = vpack.c.b16 %v2004, %v2003
        %v2008 = vpack.c.b16 %v2006, %v2005
        %v2010 = vshrl.u32 %v2007, 16
        %v2012 = vshll.u32 %v2007, 16
        %v2014 = vrot.slane %v2012, 1
        %v2015 = vor.u32 %v2010, %v2014
        %v2017 = vshll.u32 %v2008, 16
        %v2019 = vrot.slane %v2017, 1
        %v2020 = vsel %vm540, %v2015, %v2019
        %v2021 = vshrl.u32 %v2008, 16
        %v2023 = vor.u32 %v2021, %v2019
        %v2042 = vunpack.c.l.b16 %v1983
        %v2043 = vunpack.c.l.b16 %v1984
        %v2044 = vunpack.c.l.b16 %v1985
        %v2045 = vunpack.c.l.b16 %v1986
        %v2046 = vunpack.c.l.b16 %v1987
        %v2047 = vunpack.c.l.b16 %v1988
        %v2048 = vunpack.c.l.b16 %v1989
        %v2049 = vunpack.c.l.b16 %v1990
        %v2050 = vunpack.c.l.b16 %v1991
        %v2051 = vunpack.c.l.b16 %v1992
        %v2052 = vunpack.c.l.b16 %v1993
        %v2053 = vunpack.c.l.b16 %v1994
        %v2054 = vunpack.c.l.b16 %v1995
        %v2055 = vunpack.c.l.b16 %v1996
        %v2056 = vunpack.c.l.b16 %v1997
        %v2057 = vunpack.c.l.b16 %v1998
        %v2058 = vpack.c.b16 %v2043, %v2042
        %v2059 = vpack.c.b16 %v2045, %v2044
        %v2060 = vpack.c.b16 %v2047, %v2046
        %v2061 = vpack.c.b16 %v2049, %v2048
        %v2062 = vpack.c.b16 %v2051, %v2050
        %v2063 = vpack.c.b16 %v2053, %v2052
        %v2064 = vpack.c.b16 %v2055, %v2054
        %v2065 = vpack.c.b16 %v2057, %v2056
        %2074 = vmatprep.subr.bf16.mxu0 0
        %2075 = vmatpush1.bf16.msra.mxu0 %v2065
        %2076 = vmatprep.subr.bf16.mxu0 0
        %2077 = vmatpush1.bf16.msra.mxu0 %v2064
        %2078 = vmatprep.subr.bf16.mxu0 0
        %2079 = vmatpush1.bf16.msra.mxu0 %v2063
        %2080 = vmatprep.subr.bf16.mxu0 0
        %2081 = vmatpush1.bf16.msra.mxu0 %v2062
        %2082 = vmatprep.subr.bf16.mxu0 0
        %2083 = vmatpush1.bf16.msra.mxu0 %v2061
        %2084 = vmatprep.subr.bf16.mxu0 0
        %2085 = vmatpush1.bf16.msra.mxu0 %v2060
        %2086 = vmatprep.subr.bf16.mxu0 0
        %2087 = vmatpush1.bf16.msra.mxu0 %v2059
        %2088 = vmatprep.subr.bf16.mxu0 0
        %2089 = vmatpush1.bf16.msra.mxu0 %v2058
        %2090 = vmatprep.subr.bf16.mxu0 0
        %2091 = vmatpush2.bf16.msra.mxu0 0
        %2092 = vmatprep.subr.bf16.mxu0 0
        %2093 = vmatpush2.bf16.msra.mxu0 0
        %2094 = vmatprep.subr.bf16.mxu0 0
        %2095 = vmatpush2.bf16.msra.mxu0 0
        %2096 = vmatprep.subr.bf16.mxu0 0
        %2097 = vmatpush2.bf16.msra.mxu0 0
        %2098 = vmatprep.subr.bf16.mxu0 0
        %2099 = vmatpush2.bf16.msra.mxu0 0
        %2100 = vmatprep.subr.bf16.mxu0 0
        %2101 = vmatpush2.bf16.msra.mxu0 0
        %2102 = vmatprep.subr.bf16.mxu0 0
        %2103 = vmatpush2.bf16.msra.mxu0 0
        %2104 = vmatprep.subr.bf16.mxu0 0
        %2105 = vmatpush2.bf16.msra.mxu0 0
        %2106 = vmatprep.mubr.bf16.mxu0 0
        %2107 = vmatmul.mubr.bf16.gmra.mxu0 %v2020
        %v2108 = vpop.f32.mrf.mxu0
        %v2109 = vadd.f32 0.0, %v2108
        %v2110 = vpop.f32.mrf.mxu0
        %v2111 = vpop.f32.mrf.mxu0
        %v2112 = vadd.f32 0.0, %v2111
        %v2113 = vpop.f32.mrf.mxu0
        %2114 = vmatprep.mubr.bf16.mxu0 0
        %2115 = vmatmul.mubr.bf16.gmra.mxu0 %v2023
        %v2116 = vpop.f32.mrf.mxu0
        %v2117 = vadd.f32 0.0, %v2116
        %v2118 = vpop.f32.mrf.mxu0
        %v2119 = vpop.f32.mrf.mxu0
        %v2120 = vpop.f32.mrf.mxu0
        %2121 = vdwg.mxu0
        %v2125 = vunpack.c.l.b16 %v1959
        %v2126 = vunpack.c.l.b16 %v1960
        %v2127 = vunpack.c.l.b16 %v1961
        %v2128 = vpack.c.b16 %v2126, %v2125
        %v2129 = vpack.c.b16 %v2127, %v2127
        %v2148 = vunpack.c.l.b16 %v1962
        %v2149 = vunpack.c.l.b16 %v1963
        %v2150 = vunpack.c.l.b16 %v1964
        %v2151 = vunpack.c.l.b16 %v1965
        %v2152 = vunpack.c.l.b16 %v1966
        %v2153 = vunpack.c.l.b16 %v1967
        %v2154 = vunpack.c.l.b16 %v1968
        %v2155 = vunpack.c.l.b16 %v1969
        %v2156 = vunpack.c.l.b16 %v1970
        %v2157 = vunpack.c.l.b16 %v1971
        %v2158 = vunpack.c.l.b16 %v1972
        %v2159 = vunpack.c.l.b16 %v1973
        %v2160 = vunpack.c.l.b16 %v1974
        %v2161 = vunpack.c.l.b16 %v1975
        %v2162 = vunpack.c.l.b16 %v1976
        %v2163 = vunpack.c.l.b16 %v1977
        %v2164 = vpack.c.b16 %v2149, %v2148
        %v2165 = vpack.c.b16 %v2151, %v2150
        %v2166 = vpack.c.b16 %v2153, %v2152
        %v2167 = vpack.c.b16 %v2155, %v2154
        %v2168 = vpack.c.b16 %v2157, %v2156
        %v2169 = vpack.c.b16 %v2159, %v2158
        %v2170 = vpack.c.b16 %v2161, %v2160
        %v2171 = vpack.c.b16 %v2163, %v2162
        %2180 = vmatprep.subr.bf16.mxu0 0
        %2181 = vmatpush1.bf16.msra.mxu0 %v2171
        %2182 = vmatprep.subr.bf16.mxu0 0
        %2183 = vmatpush1.bf16.msra.mxu0 %v2170
        %2184 = vmatprep.subr.bf16.mxu0 0
        %2185 = vmatpush1.bf16.msra.mxu0 %v2169
        %2186 = vmatprep.subr.bf16.mxu0 0
        %2187 = vmatpush1.bf16.msra.mxu0 %v2168
        %2188 = vmatprep.subr.bf16.mxu0 0
        %2189 = vmatpush1.bf16.msra.mxu0 %v2167
        %2190 = vmatprep.subr.bf16.mxu0 0
        %2191 = vmatpush1.bf16.msra.mxu0 %v2166
        %2192 = vmatprep.subr.bf16.mxu0 0
        %2193 = vmatpush1.bf16.msra.mxu0 %v2165
        %2194 = vmatprep.subr.bf16.mxu0 0
        %2195 = vmatpush1.bf16.msra.mxu0 %v2164
        %2196 = vmatprep.subr.bf16.mxu0 0
        %2197 = vmatpush2.bf16.msra.mxu0 0
        %2198 = vmatprep.subr.bf16.mxu0 0
        %2199 = vmatpush2.bf16.msra.mxu0 0
        %2200 = vmatprep.subr.bf16.mxu0 0
        %2201 = vmatpush2.bf16.msra.mxu0 0
        %2202 = vmatprep.subr.bf16.mxu0 0
        %2203 = vmatpush2.bf16.msra.mxu0 0
        %2204 = vmatprep.subr.bf16.mxu0 0
        %2205 = vmatpush2.bf16.msra.mxu0 0
        %2206 = vmatprep.subr.bf16.mxu0 0
        %2207 = vmatpush2.bf16.msra.mxu0 0
        %2208 = vmatprep.subr.bf16.mxu0 0
        %2209 = vmatpush2.bf16.msra.mxu0 0
        %2210 = vmatprep.subr.bf16.mxu0 0
        %2211 = vmatpush2.bf16.msra.mxu0 0
        %2212 = vmatprep.mubr.bf16.mxu0 0
        %2213 = vmatmul.mubr.bf16.gmra.mxu0 %v2128
        %v2214 = vpop.f32.mrf.mxu0
        %v2215 = vadd.f32 %v2109, %v2214
        %v2216 = vpop.f32.mrf.mxu0
        %v2217 = vpop.f32.mrf.mxu0
        %v2218 = vadd.f32 %v2112, %v2217
        %v2219 = vpop.f32.mrf.mxu0
        %2220 = vmatprep.mubr.bf16.mxu0 0
        %2221 = vmatmul.mubr.bf16.gmra.mxu0 %v2129
        %v2222 = vpop.f32.mrf.mxu0
        %v2223 = vadd.f32 %v2117, %v2222
        %v2224 = vpop.f32.mrf.mxu0
        %v2225 = vpop.f32.mrf.mxu0
        %v2226 = vpop.f32.mrf.mxu0
        %2227 = vdwg.mxu0
        %v2228 = vld [vmem:[#allocation3] sm:$0xe]
        %s2229 = scalar_lea.vmem [#allocation9], 128
        %v2230 = vld [vmem:[%s2229] sm:$0xf]
        %v2231 = vld [vmem:[%s2229 + $0x4] sm:$0xf]
        %v2232 = vld [vmem:[%s2229 + $0x8] sm:$0xf]
        %v2233 = vld [vmem:[%s2229 + $0xc] sm:$0xf]
        %v2234 = vld [vmem:[%s2229 + $0x10] sm:$0xf]
        %v2235 = vld [vmem:[%s2229 + $0x14] sm:$0xf]
        %v2236 = vld [vmem:[%s2229 + $0x18] sm:$0xf]
        %v2237 = vld [vmem:[%s2229 + $0x1c] sm:$0xf]
        %v2238 = vld [vmem:[%s2229 + $0x20] sm:$0xf]
        %v2239 = vld [vmem:[%s2229 + $0x24] sm:$0xf]
        %v2240 = vld [vmem:[%s2229 + $0x28] sm:$0xf]
        %v2241 = vld [vmem:[%s2229 + $0x2c] sm:$0xf]
        %v2242 = vld [vmem:[%s2229 + $0x30] sm:$0xf]
        %v2243 = vld [vmem:[%s2229 + $0x34] sm:$0xf]
        %v2244 = vld [vmem:[%s2229 + $0x38] sm:$0xf]
        %v2245 = vld [vmem:[%s2229 + $0x3c] sm:$0xf]
        %v2247 = vunpack.c.l.b16 %v2228
        %v2248 = vpack.c.b16 %v2004, %v2247
        %v2249 = vrot.slane %v2248, 1
        %v2250 = vrot.slane %v2008, 1
        %v2251 = vsel %vm780, %v2249, %v2250
        %v2270 = vunpack.c.l.b16 %v2230
        %v2271 = vunpack.c.l.b16 %v2231
        %v2272 = vunpack.c.l.b16 %v2232
        %v2273 = vunpack.c.l.b16 %v2233
        %v2274 = vunpack.c.l.b16 %v2234
        %v2275 = vunpack.c.l.b16 %v2235
        %v2276 = vunpack.c.l.b16 %v2236
        %v2277 = vunpack.c.l.b16 %v2237
        %v2278 = vunpack.c.l.b16 %v2238
        %v2279 = vunpack.c.l.b16 %v2239
        %v2280 = vunpack.c.l.b16 %v2240
        %v2281 = vunpack.c.l.b16 %v2241
        %v2282 = vunpack.c.l.b16 %v2242
        %v2283 = vunpack.c.l.b16 %v2243
        %v2284 = vunpack.c.l.b16 %v2244
        %v2285 = vunpack.c.l.b16 %v2245
        %v2286 = vpack.c.b16 %v2271, %v2270
        %v2287 = vpack.c.b16 %v2273, %v2272
        %v2288 = vpack.c.b16 %v2275, %v2274
        %v2289 = vpack.c.b16 %v2277, %v2276
        %v2290 = vpack.c.b16 %v2279, %v2278
        %v2291 = vpack.c.b16 %v2281, %v2280
        %v2292 = vpack.c.b16 %v2283, %v2282
        %v2293 = vpack.c.b16 %v2285, %v2284
        %2302 = vmatprep.subr.bf16.mxu0 0
        %2303 = vmatpush1.bf16.msra.mxu0 %v2293
        %2304 = vmatprep.subr.bf16.mxu0 0
        %2305 = vmatpush1.bf16.msra.mxu0 %v2292
        %2306 = vmatprep.subr.bf16.mxu0 0
        %2307 = vmatpush1.bf16.msra.mxu0 %v2291
        %2308 = vmatprep.subr.bf16.mxu0 0
        %2309 = vmatpush1.bf16.msra.mxu0 %v2290
        %2310 = vmatprep.subr.bf16.mxu0 0
        %2311 = vmatpush1.bf16.msra.mxu0 %v2289
        %2312 = vmatprep.subr.bf16.mxu0 0
        %2313 = vmatpush1.bf16.msra.mxu0 %v2288
        %2314 = vmatprep.subr.bf16.mxu0 0
        %2315 = vmatpush1.bf16.msra.mxu0 %v2287
        %2316 = vmatprep.subr.bf16.mxu0 0
        %2317 = vmatpush1.bf16.msra.mxu0 %v2286
        %2318 = vmatprep.subr.bf16.mxu0 0
        %2319 = vmatpush2.bf16.msra.mxu0 0
        %2320 = vmatprep.subr.bf16.mxu0 0
        %2321 = vmatpush2.bf16.msra.mxu0 0
        %2322 = vmatprep.subr.bf16.mxu0 0
        %2323 = vmatpush2.bf16.msra.mxu0 0
        %2324 = vmatprep.subr.bf16.mxu0 0
        %2325 = vmatpush2.bf16.msra.mxu0 0
        %2326 = vmatprep.subr.bf16.mxu0 0
        %2327 = vmatpush2.bf16.msra.mxu0 0
        %2328 = vmatprep.subr.bf16.mxu0 0
        %2329 = vmatpush2.bf16.msra.mxu0 0
        %2330 = vmatprep.subr.bf16.mxu0 0
        %2331 = vmatpush2.bf16.msra.mxu0 0
        %2332 = vmatprep.subr.bf16.mxu0 0
        %2333 = vmatpush2.bf16.msra.mxu0 0
        %2334 = vmatprep.mubr.bf16.mxu0 0
        %2335 = vmatmul.mubr.bf16.gmra.mxu0 %v2251
        %v2336 = vpop.f32.mrf.mxu0
        %v2337 = vadd.f32 0.0, %v2336
        %v2338 = vpop.f32.mrf.mxu0
        %v2339 = vpop.f32.mrf.mxu0
        %v2340 = vadd.f32 0.0, %v2339
        %v2341 = vpop.f32.mrf.mxu0
        %2342 = vmatprep.mubr.bf16.mxu0 0
        %2343 = vmatmul.mubr.bf16.gmra.mxu0 %v2250
        %v2344 = vpop.f32.mrf.mxu0
        %v2345 = vadd.f32 0.0, %v2344
        %v2346 = vpop.f32.mrf.mxu0
        %v2347 = vpop.f32.mrf.mxu0
        %v2348 = vpop.f32.mrf.mxu0
        %2349 = vdwg.mxu0
        %v2350 = vadd.f32 %v2215, %v2337
        %v2351 = vadd.f32 %v2218, %v2340
        %v2352 = vadd.f32 %v2223, %v2345
        %v2353 = vld [vmem:[#allocation3 + $0xc] sm:$0x3]
        %s2354 = scalar_lea.vmem [#allocation9], 192
        %v2355 = vld [vmem:[%s2354] sm:$0xf]
        %v2356 = vld [vmem:[%s2354 + $0x4] sm:$0xf]
        %v2357 = vld [vmem:[%s2354 + $0x8] sm:$0xf]
        %v2358 = vld [vmem:[%s2354 + $0xc] sm:$0xf]
        %v2359 = vld [vmem:[%s2354 + $0x10] sm:$0xf]
        %v2360 = vld [vmem:[%s2354 + $0x14] sm:$0xf]
        %v2361 = vld [vmem:[%s2354 + $0x18] sm:$0xf]
        %v2362 = vld [vmem:[%s2354 + $0x1c] sm:$0xf]
        %v2363 = vld [vmem:[%s2354 + $0x20] sm:$0xf]
        %v2364 = vld [vmem:[%s2354 + $0x24] sm:$0xf]
        %v2365 = vld [vmem:[%s2354 + $0x28] sm:$0xf]
        %v2366 = vld [vmem:[%s2354 + $0x2c] sm:$0xf]
        %v2367 = vld [vmem:[%s2354 + $0x30] sm:$0xf]
        %v2368 = vld [vmem:[%s2354 + $0x34] sm:$0xf]
        %v2369 = vld [vmem:[%s2354 + $0x38] sm:$0xf]
        %v2370 = vld [vmem:[%s2354 + $0x3c] sm:$0xf]
        %v2372 = vunpack.c.l.b16 %v2353
        %v2373 = vpack.c.b16 %v2372, %v2005
        %v2375 = vshrl.u32 %v2248, 16
        %v2377 = vrot.slane %v2375, 1
        %v2378 = vshll.u32 %v2248, 16
        %v2380 = vrot.slane %v2378, 2
        %v2381 = vor.u32 %v2377, %v2380
        %v2383 = vshrl.u32 %v2373, 16
        %v2385 = vrot.slane %v2383, 1
        %v2386 = vshll.u32 %v2373, 16
        %v2388 = vrot.slane %v2386, 2
        %v2389 = vor.u32 %v2385, %v2388
        %v2390 = vsel %vm910, %v2381, %v2389
        %v2409 = vunpack.c.l.b16 %v2355
        %v2410 = vunpack.c.l.b16 %v2356
        %v2411 = vunpack.c.l.b16 %v2357
        %v2412 = vunpack.c.l.b16 %v2358
        %v2413 = vunpack.c.l.b16 %v2359
        %v2414 = vunpack.c.l.b16 %v2360
        %v2415 = vunpack.c.l.b16 %v2361
        %v2416 = vunpack.c.l.b16 %v2362
        %v2417 = vunpack.c.l.b16 %v2363
        %v2418 = vunpack.c.l.b16 %v2364
        %v2419 = vunpack.c.l.b16 %v2365
        %v2420 = vunpack.c.l.b16 %v2366
        %v2421 = vunpack.c.l.b16 %v2367
        %v2422 = vunpack.c.l.b16 %v2368
        %v2423 = vunpack.c.l.b16 %v2369
        %v2424 = vunpack.c.l.b16 %v2370
        %v2425 = vpack.c.b16 %v2410, %v2409
        %v2426 = vpack.c.b16 %v2412, %v2411
        %v2427 = vpack.c.b16 %v2414, %v2413
        %v2428 = vpack.c.b16 %v2416, %v2415
        %v2429 = vpack.c.b16 %v2418, %v2417
        %v2430 = vpack.c.b16 %v2420, %v2419
        %v2431 = vpack.c.b16 %v2422, %v2421
        %v2432 = vpack.c.b16 %v2424, %v2423
        %2441 = vmatprep.subr.bf16.mxu0 0
        %2442 = vmatpush1.bf16.msra.mxu0 %v2432
        %2443 = vmatprep.subr.bf16.mxu0 0
        %2444 = vmatpush1.bf16.msra.mxu0 %v2431
        %2445 = vmatprep.subr.bf16.mxu0 0
        %2446 = vmatpush1.bf16.msra.mxu0 %v2430
        %2447 = vmatprep.subr.bf16.mxu0 0
        %2448 = vmatpush1.bf16.msra.mxu0 %v2429
        %2449 = vmatprep.subr.bf16.mxu0 0
        %2450 = vmatpush1.bf16.msra.mxu0 %v2428
        %2451 = vmatprep.subr.bf16.mxu0 0
        %2452 = vmatpush1.bf16.msra.mxu0 %v2427
        %2453 = vmatprep.subr.bf16.mxu0 0
        %2454 = vmatpush1.bf16.msra.mxu0 %v2426
        %2455 = vmatprep.subr.bf16.mxu0 0
        %2456 = vmatpush1.bf16.msra.mxu0 %v2425
        %2457 = vmatprep.subr.bf16.mxu0 0
        %2458 = vmatpush2.bf16.msra.mxu0 0
        %2459 = vmatprep.subr.bf16.mxu0 0
        %2460 = vmatpush2.bf16.msra.mxu0 0
        %2461 = vmatprep.subr.bf16.mxu0 0
        %2462 = vmatpush2.bf16.msra.mxu0 0
        %2463 = vmatprep.subr.bf16.mxu0 0
        %2464 = vmatpush2.bf16.msra.mxu0 0
        %2465 = vmatprep.subr.bf16.mxu0 0
        %2466 = vmatpush2.bf16.msra.mxu0 0
        %2467 = vmatprep.subr.bf16.mxu0 0
        %2468 = vmatpush2.bf16.msra.mxu0 0
        %2469 = vmatprep.subr.bf16.mxu0 0
        %2470 = vmatpush2.bf16.msra.mxu0 0
        %2471 = vmatprep.subr.bf16.mxu0 0
        %2472 = vmatpush2.bf16.msra.mxu0 0
        %2473 = vmatprep.mubr.bf16.mxu0 0
        %2474 = vmatmul.mubr.bf16.gmra.mxu0 %v2390
        %v2475 = vpop.f32.mrf.mxu0
        %v2476 = vadd.f32 0.0, %v2475
        %v2477 = vpop.f32.mrf.mxu0
        %v2478 = vpop.f32.mrf.mxu0
        %v2479 = vadd.f32 0.0, %v2478
        %v2480 = vpop.f32.mrf.mxu0
        %2481 = vmatprep.mubr.bf16.mxu0 0
        %2482 = vmatmul.mubr.bf16.gmra.mxu0 %v2389
        %v2483 = vpop.f32.mrf.mxu0
        %v2484 = vadd.f32 0.0, %v2483
        %v2485 = vpop.f32.mrf.mxu0
        %v2486 = vpop.f32.mrf.mxu0
        %v2487 = vpop.f32.mrf.mxu0
        %2488 = vdwg.mxu0
        %v2489 = vadd.f32 %v2350, %v2476
        %v2490 = vadd.f32 %v2351, %v2479
        %v2491 = vadd.f32 %v2352, %v2484
        %v2492 = vld [vmem:[#allocation3] sm:$0xc]
        %s2493 = scalar_lea.vmem [#allocation9], 256
        %v2494 = vld [vmem:[%s2493] sm:$0xf]
        %v2495 = vld [vmem:[%s2493 + $0x4] sm:$0xf]
        %v2496 = vld [vmem:[%s2493 + $0x8] sm:$0xf]
        %v2497 = vld [vmem:[%s2493 + $0xc] sm:$0xf]
        %v2498 = vld [vmem:[%s2493 + $0x10] sm:$0xf]
        %v2499 = vld [vmem:[%s2493 + $0x14] sm:$0xf]
        %v2500 = vld [vmem:[%s2493 + $0x18] sm:$0xf]
        %v2501 = vld [vmem:[%s2493 + $0x1c] sm:$0xf]
        %v2502 = vld [vmem:[%s2493 + $0x20] sm:$0xf]
        %v2503 = vld [vmem:[%s2493 + $0x24] sm:$0xf]
        %v2504 = vld [vmem:[%s2493 + $0x28] sm:$0xf]
        %v2505 = vld [vmem:[%s2493 + $0x2c] sm:$0xf]
        %v2506 = vld [vmem:[%s2493 + $0x30] sm:$0xf]
        %v2507 = vld [vmem:[%s2493 + $0x34] sm:$0xf]
        %v2508 = vld [vmem:[%s2493 + $0x38] sm:$0xf]
        %v2509 = vld [vmem:[%s2493 + $0x3c] sm:$0xf]
        %v2511 = vunpack.c.l.b16 %v2492
        %v2512 = vpack.c.b16 %v2004, %v2511
        %v2513 = vrot.slane %v2512, 2
        %v2514 = vrot.slane %v2373, 2
        %v2515 = vsel %vm1056, %v2513, %v2514
        %v2534 = vunpack.c.l.b16 %v2494
        %v2535 = vunpack.c.l.b16 %v2495
        %v2536 = vunpack.c.l.b16 %v2496
        %v2537 = vunpack.c.l.b16 %v2497
        %v2538 = vunpack.c.l.b16 %v2498
        %v2539 = vunpack.c.l.b16 %v2499
        %v2540 = vunpack.c.l.b16 %v2500
        %v2541 = vunpack.c.l.b16 %v2501
        %v2542 = vunpack.c.l.b16 %v2502
        %v2543 = vunpack.c.l.b16 %v2503
        %v2544 = vunpack.c.l.b16 %v2504
        %v2545 = vunpack.c.l.b16 %v2505
        %v2546 = vunpack.c.l.b16 %v2506
        %v2547 = vunpack.c.l.b16 %v2507
        %v2548 = vunpack.c.l.b16 %v2508
        %v2549 = vunpack.c.l.b16 %v2509
        %v2550 = vpack.c.b16 %v2535, %v2534
        %v2551 = vpack.c.b16 %v2537, %v2536
        %v2552 = vpack.c.b16 %v2539, %v2538
        %v2553 = vpack.c.b16 %v2541, %v2540
        %v2554 = vpack.c.b16 %v2543, %v2542
        %v2555 = vpack.c.b16 %v2545, %v2544
        %v2556 = vpack.c.b16 %v2547, %v2546
        %v2557 = vpack.c.b16 %v2549, %v2548
        %2566 = vmatprep.subr.bf16.mxu0 0
        %2567 = vmatpush1.bf16.msra.mxu0 %v2557
        %2568 = vmatprep.subr.bf16.mxu0 0
        %2569 = vmatpush1.bf16.msra.mxu0 %v2556
        %2570 = vmatprep.subr.bf16.mxu0 0
        %2571 = vmatpush1.bf16.msra.mxu0 %v2555
        %2572 = vmatprep.subr.bf16.mxu0 0
        %2573 = vmatpush1.bf16.msra.mxu0 %v2554
        %2574 = vmatprep.subr.bf16.mxu0 0
        %2575 = vmatpush1.bf16.msra.mxu0 %v2553
        %2576 = vmatprep.subr.bf16.mxu0 0
        %2577 = vmatpush1.bf16.msra.mxu0 %v2552
        %2578 = vmatprep.subr.bf16.mxu0 0
        %2579 = vmatpush1.bf16.msra.mxu0 %v2551
        %2580 = vmatprep.subr.bf16.mxu0 0
        %2581 = vmatpush1.bf16.msra.mxu0 %v2550
        %2582 = vmatprep.subr.bf16.mxu0 0
        %2583 = vmatpush2.bf16.msra.mxu0 0
        %2584 = vmatprep.subr.bf16.mxu0 0
        %2585 = vmatpush2.bf16.msra.mxu0 0
        %2586 = vmatprep.subr.bf16.mxu0 0
        %2587 = vmatpush2.bf16.msra.mxu0 0
        %2588 = vmatprep.subr.bf16.mxu0 0
        %2589 = vmatpush2.bf16.msra.mxu0 0
        %2590 = vmatprep.subr.bf16.mxu0 0
        %2591 = vmatpush2.bf16.msra.mxu0 0
        %2592 = vmatprep.subr.bf16.mxu0 0
        %2593 = vmatpush2.bf16.msra.mxu0 0
        %2594 = vmatprep.subr.bf16.mxu0 0
        %2595 = vmatpush2.bf16.msra.mxu0 0
        %2596 = vmatprep.subr.bf16.mxu0 0
        %2597 = vmatpush2.bf16.msra.mxu0 0
        %2598 = vmatprep.mubr.bf16.mxu0 0
        %2599 = vmatmul.mubr.bf16.gmra.mxu0 %v2515
        %v2600 = vpop.f32.mrf.mxu0
        %v2601 = vadd.f32 0.0, %v2600
        %v2602 = vpop.f32.mrf.mxu0
        %v2603 = vpop.f32.mrf.mxu0
        %v2604 = vadd.f32 0.0, %v2603
        %v2605 = vpop.f32.mrf.mxu0
        %2606 = vmatprep.mubr.bf16.mxu0 0
        %2607 = vmatmul.mubr.bf16.gmra.mxu0 %v2514
        %v2608 = vpop.f32.mrf.mxu0
        %v2609 = vadd.f32 0.0, %v2608
        %v2610 = vpop.f32.mrf.mxu0
        %v2611 = vpop.f32.mrf.mxu0
        %v2612 = vpop.f32.mrf.mxu0
        %2613 = vdwg.mxu0
        %v2614 = vadd.f32 %v2489, %v2601
        %v2615 = vadd.f32 %v2490, %v2604
        %v2616 = vadd.f32 %v2491, %v2609
        %v2617 = vld [vmem:[%s6] sm:$0x1]
        %v2619 = vlaneseq
        %v2620 = vshrl.u32 %v2619, 7
        %v2621 = vsub.s32 0, %v2620
        %v2622 = vrot.slane %v2617, %v2621
        %v2624 = vadd.f32 %v2614, %v2622
        %v2625 = vadd.f32 %v2615, %v2622
        %v2626 = vadd.f32 %v2616, %v2622
        %v2627 = vtanh.pop %v2624
        %v2628 = vtanh.pop %v2625
        %v2629 = vtanh.pop %v2626
        %s2630 = sadd.s32 %s488, 4294967292
        %v2631 = vstv %s2630
        %v2632 = vadd.s32 %v2631, %v1182
        %v2633 = vadd.s32 %v2631, %v1183
        %v2634 = vadd.s32 %v2631, %v1184
        %vm2635 = vcmp.ge.s32.totalorder %v2632, 0
        %vm2636 = vcmp.ge.s32.totalorder %v2633, 0
        %vm2637 = vcmp.ge.s32.totalorder %v2634, 0
        %vm2638 = vcmp.lt.s32.totalorder %v2632, 30
        %vm2639 = vcmp.lt.s32.totalorder %v2633, 30
        %vm2640 = vcmp.lt.s32.totalorder %v2634, 30
        %vm2641 = vmand %vm2635, %vm2638
        %vm2642 = vmand %vm2636, %vm2639
        %vm2643 = vmand %vm2637, %vm2640
        %v2644 = vsel %vm2641, 1, 0
        %v2645 = vsel %vm2642, 1, 0
        %v2646 = vsel %vm2643, 1, 0
        %vm2647 = vcmp.eq.s32.totalorder %v2644, 1
        %vm2648 = vcmp.eq.s32.totalorder %v2645, 1
        %vm2649 = vcmp.eq.s32.totalorder %v2646, 1
        %v2650 = vsel %vm2647, %v2627, 0.0
        %v2651 = vsel %vm2648, %v2628, 0.0
        %v2652 = vsel %vm2649, %v2629, 0.0
        %v2653 = vpack.c.bf16 %v2651, %v2650
        %v2654 = vpack.c.bf16 %v2652, %v2652
        %v2657 = vunpack.c.l.b16 %v2653
        %v2658 = vunpack.c.h.b16 %v2653
        %v2659 = vunpack.c.l.b16 %v2654
        %v2660 = vpack.c.b16 %v2657, %v2657
        %v2661 = vpack.c.b16 %v2658, %v2658
        %v2662 = vpack.c.b16 %v2659, %v2659
        %2666 = vst [vmem:[#allocation2] sm:$0xf] %v2660
        %2667 = vst [vmem:[#allocation2 + $0x4] sm:$0xf] %v2661
        %2668 = vst [vmem:[#allocation2 + $0x8] sm:$0xf] %v2662
        %v2669 = vld [vmem:[#allocation2] sm:$0xf]
        %v2670 = vld [vmem:[#allocation2 + $0x4] sm:$0xf]
        %v2671 = vld [vmem:[#allocation2 + $0x8] sm:$0x3]
        %v2672 = vld [vmem:[#allocation10] sm:$0xf]
        %v2673 = vld [vmem:[#allocation10 + $0x4] sm:$0xf]
        %v2674 = vld [vmem:[#allocation10 + $0x8] sm:$0xf]
        %v2675 = vld [vmem:[#allocation10 + $0xc] sm:$0xf]
        %v2676 = vld [vmem:[#allocation10 + $0x10] sm:$0xf]
        %v2677 = vld [vmem:[#allocation10 + $0x14] sm:$0xf]
        %v2678 = vld [vmem:[#allocation10 + $0x18] sm:$0xf]
        %v2679 = vld [vmem:[#allocation10 + $0x1c] sm:$0xf]
        %v2680 = vld [vmem:[#allocation10 + $0x20] sm:$0xf]
        %v2681 = vld [vmem:[#allocation10 + $0x24] sm:$0xf]
        %v2682 = vld [vmem:[#allocation10 + $0x28] sm:$0xf]
        %v2683 = vld [vmem:[#allocation10 + $0x2c] sm:$0xf]
        %v2684 = vld [vmem:[#allocation10 + $0x30] sm:$0xf]
        %v2685 = vld [vmem:[#allocation10 + $0x34] sm:$0xf]
        %v2686 = vld [vmem:[#allocation10 + $0x38] sm:$0xf]
        %v2687 = vld [vmem:[#allocation10 + $0x3c] sm:$0xf]
        %v2688 = vld [vmem:[#allocation2 + $0x8] sm:$0x7]
        %s2689 = scalar_lea.vmem [#allocation10], 64
        %v2690 = vld [vmem:[%s2689] sm:$0xf]
        %v2691 = vld [vmem:[%s2689 + $0x4] sm:$0xf]
        %v2692 = vld [vmem:[%s2689 + $0x8] sm:$0xf]
        %v2693 = vld [vmem:[%s2689 + $0xc] sm:$0xf]
        %v2694 = vld [vmem:[%s2689 + $0x10] sm:$0xf]
        %v2695 = vld [vmem:[%s2689 + $0x14] sm:$0xf]
        %v2696 = vld [vmem:[%s2689 + $0x18] sm:$0xf]
        %v2697 = vld [vmem:[%s2689 + $0x1c] sm:$0xf]
        %v2698 = vld [vmem:[%s2689 + $0x20] sm:$0xf]
        %v2699 = vld [vmem:[%s2689 + $0x24] sm:$0xf]
        %v2700 = vld [vmem:[%s2689 + $0x28] sm:$0xf]
        %v2701 = vld [vmem:[%s2689 + $0x2c] sm:$0xf]
        %v2702 = vld [vmem:[%s2689 + $0x30] sm:$0xf]
        %v2703 = vld [vmem:[%s2689 + $0x34] sm:$0xf]
        %v2704 = vld [vmem:[%s2689 + $0x38] sm:$0xf]
        %v2705 = vld [vmem:[%s2689 + $0x3c] sm:$0xf]
        %v2709 = vunpack.c.l.b16 %v2669
        %v2710 = vunpack.c.l.b16 %v2670
        %v2711 = vunpack.c.l.b16 %v2688
        %v2712 = vpack.c.b16 %v2710, %v2709
        %v2713 = vpack.c.b16 %v2711, %v2711
        %v2715 = vshrl.u32 %v2712, 16
        %v2717 = vshll.u32 %v2712, 16
        %v2719 = vrot.slane %v2717, 1
        %v2720 = vor.u32 %v2715, %v2719
        %v2722 = vshll.u32 %v2713, 16
        %v2724 = vrot.slane %v2722, 1
        %v2725 = vsel %vm540, %v2720, %v2724
        %v2726 = vshrl.u32 %v2713, 16
        %v2728 = vor.u32 %v2726, %v2724
        %v2747 = vunpack.c.l.b16 %v2690
        %v2748 = vunpack.c.l.b16 %v2691
        %v2749 = vunpack.c.l.b16 %v2692
        %v2750 = vunpack.c.l.b16 %v2693
        %v2751 = vunpack.c.l.b16 %v2694
        %v2752 = vunpack.c.l.b16 %v2695
        %v2753 = vunpack.c.l.b16 %v2696
        %v2754 = vunpack.c.l.b16 %v2697
        %v2755 = vunpack.c.l.b16 %v2698
        %v2756 = vunpack.c.l.b16 %v2699
        %v2757 = vunpack.c.l.b16 %v2700
        %v2758 = vunpack.c.l.b16 %v2701
        %v2759 = vunpack.c.l.b16 %v2702
        %v2760 = vunpack.c.l.b16 %v2703
        %v2761 = vunpack.c.l.b16 %v2704
        %v2762 = vunpack.c.l.b16 %v2705
        %v2763 = vpack.c.b16 %v2748, %v2747
        %v2764 = vpack.c.b16 %v2750, %v2749
        %v2765 = vpack.c.b16 %v2752, %v2751
        %v2766 = vpack.c.b16 %v2754, %v2753
        %v2767 = vpack.c.b16 %v2756, %v2755
        %v2768 = vpack.c.b16 %v2758, %v2757
        %v2769 = vpack.c.b16 %v2760, %v2759
        %v2770 = vpack.c.b16 %v2762, %v2761
        %2779 = vmatprep.subr.bf16.mxu0 0
        %2780 = vmatpush1.bf16.msra.mxu0 %v2770
        %2781 = vmatprep.subr.bf16.mxu0 0
        %2782 = vmatpush1.bf16.msra.mxu0 %v2769
        %2783 = vmatprep.subr.bf16.mxu0 0
        %2784 = vmatpush1.bf16.msra.mxu0 %v2768
        %2785 = vmatprep.subr.bf16.mxu0 0
        %2786 = vmatpush1.bf16.msra.mxu0 %v2767
        %2787 = vmatprep.subr.bf16.mxu0 0
        %2788 = vmatpush1.bf16.msra.mxu0 %v2766
        %2789 = vmatprep.subr.bf16.mxu0 0
        %2790 = vmatpush1.bf16.msra.mxu0 %v2765
        %2791 = vmatprep.subr.bf16.mxu0 0
        %2792 = vmatpush1.bf16.msra.mxu0 %v2764
        %2793 = vmatprep.subr.bf16.mxu0 0
        %2794 = vmatpush1.bf16.msra.mxu0 %v2763
        %2795 = vmatprep.subr.bf16.mxu0 0
        %2796 = vmatpush2.bf16.msra.mxu0 0
        %2797 = vmatprep.subr.bf16.mxu0 0
        %2798 = vmatpush2.bf16.msra.mxu0 0
        %2799 = vmatprep.subr.bf16.mxu0 0
        %2800 = vmatpush2.bf16.msra.mxu0 0
        %2801 = vmatprep.subr.bf16.mxu0 0
        %2802 = vmatpush2.bf16.msra.mxu0 0
        %2803 = vmatprep.subr.bf16.mxu0 0
        %2804 = vmatpush2.bf16.msra.mxu0 0
        %2805 = vmatprep.subr.bf16.mxu0 0
        %2806 = vmatpush2.bf16.msra.mxu0 0
        %2807 = vmatprep.subr.bf16.mxu0 0
        %2808 = vmatpush2.bf16.msra.mxu0 0
        %2809 = vmatprep.subr.bf16.mxu0 0
        %2810 = vmatpush2.bf16.msra.mxu0 0
        %2811 = vmatprep.mubr.bf16.mxu0 0
        %2812 = vmatmul.mubr.bf16.gmra.mxu0 %v2725
        %v2813 = vpop.f32.mrf.mxu0
        %v2814 = vadd.f32 0.0, %v2813
        %v2815 = vpop.f32.mrf.mxu0
        %v2816 = vpop.f32.mrf.mxu0
        %v2817 = vadd.f32 0.0, %v2816
        %v2818 = vpop.f32.mrf.mxu0
        %2819 = vmatprep.mubr.bf16.mxu0 0
        %2820 = vmatmul.mubr.bf16.gmra.mxu0 %v2728
        %v2821 = vpop.f32.mrf.mxu0
        %v2822 = vadd.f32 0.0, %v2821
        %v2823 = vpop.f32.mrf.mxu0
        %v2824 = vpop.f32.mrf.mxu0
        %v2825 = vpop.f32.mrf.mxu0
        %2826 = vdwg.mxu0
        %v2828 = vunpack.c.l.b16 %v2671
        %v2829 = vpack.c.b16 %v2828, %v2828
        %v2848 = vunpack.c.l.b16 %v2672
        %v2849 = vunpack.c.l.b16 %v2673
        %v2850 = vunpack.c.l.b16 %v2674
        %v2851 = vunpack.c.l.b16 %v2675
        %v2852 = vunpack.c.l.b16 %v2676
        %v2853 = vunpack.c.l.b16 %v2677
        %v2854 = vunpack.c.l.b16 %v2678
        %v2855 = vunpack.c.l.b16 %v2679
        %v2856 = vunpack.c.l.b16 %v2680
        %v2857 = vunpack.c.l.b16 %v2681
        %v2858 = vunpack.c.l.b16 %v2682
        %v2859 = vunpack.c.l.b16 %v2683
        %v2860 = vunpack.c.l.b16 %v2684
        %v2861 = vunpack.c.l.b16 %v2685
        %v2862 = vunpack.c.l.b16 %v2686
        %v2863 = vunpack.c.l.b16 %v2687
        %v2864 = vpack.c.b16 %v2849, %v2848
        %v2865 = vpack.c.b16 %v2851, %v2850
        %v2866 = vpack.c.b16 %v2853, %v2852
        %v2867 = vpack.c.b16 %v2855, %v2854
        %v2868 = vpack.c.b16 %v2857, %v2856
        %v2869 = vpack.c.b16 %v2859, %v2858
        %v2870 = vpack.c.b16 %v2861, %v2860
        %v2871 = vpack.c.b16 %v2863, %v2862
        %2880 = vmatprep.subr.bf16.mxu0 0
        %2881 = vmatpush1.bf16.msra.mxu0 %v2871
        %2882 = vmatprep.subr.bf16.mxu0 0
        %2883 = vmatpush1.bf16.msra.mxu0 %v2870
        %2884 = vmatprep.subr.bf16.mxu0 0
        %2885 = vmatpush1.bf16.msra.mxu0 %v2869
        %2886 = vmatprep.subr.bf16.mxu0 0
        %2887 = vmatpush1.bf16.msra.mxu0 %v2868
        %2888 = vmatprep.subr.bf16.mxu0 0
        %2889 = vmatpush1.bf16.msra.mxu0 %v2867
        %2890 = vmatprep.subr.bf16.mxu0 0
        %2891 = vmatpush1.bf16.msra.mxu0 %v2866
        %2892 = vmatprep.subr.bf16.mxu0 0
        %2893 = vmatpush1.bf16.msra.mxu0 %v2865
        %2894 = vmatprep.subr.bf16.mxu0 0
        %2895 = vmatpush1.bf16.msra.mxu0 %v2864
        %2896 = vmatprep.subr.bf16.mxu0 0
        %2897 = vmatpush2.bf16.msra.mxu0 0
        %2898 = vmatprep.subr.bf16.mxu0 0
        %2899 = vmatpush2.bf16.msra.mxu0 0
        %2900 = vmatprep.subr.bf16.mxu0 0
        %2901 = vmatpush2.bf16.msra.mxu0 0
        %2902 = vmatprep.subr.bf16.mxu0 0
        %2903 = vmatpush2.bf16.msra.mxu0 0
        %2904 = vmatprep.subr.bf16.mxu0 0
        %2905 = vmatpush2.bf16.msra.mxu0 0
        %2906 = vmatprep.subr.bf16.mxu0 0
        %2907 = vmatpush2.bf16.msra.mxu0 0
        %2908 = vmatprep.subr.bf16.mxu0 0
        %2909 = vmatpush2.bf16.msra.mxu0 0
        %2910 = vmatprep.subr.bf16.mxu0 0
        %2911 = vmatpush2.bf16.msra.mxu0 0
        %2912 = vmatprep.mubr.bf16.mxu0 0
        %2913 = vmatmul.mubr.bf16.gmra.mxu0 %v2712
        %v2914 = vpop.f32.mrf.mxu0
        %v2915 = vadd.f32 %v2814, %v2914
        %v2916 = vpop.f32.mrf.mxu0
        %v2917 = vpop.f32.mrf.mxu0
        %v2918 = vadd.f32 %v2817, %v2917
        %v2919 = vpop.f32.mrf.mxu0
        %2920 = vmatprep.mubr.bf16.mxu0 0
        %2921 = vmatmul.mubr.bf16.gmra.mxu0 %v2829
        %v2922 = vpop.f32.mrf.mxu0
        %v2923 = vadd.f32 %v2822, %v2922
        %v2924 = vpop.f32.mrf.mxu0
        %v2925 = vpop.f32.mrf.mxu0
        %v2926 = vpop.f32.mrf.mxu0
        %2927 = vdwg.mxu0
        %v2928 = vld [vmem:[#allocation2] sm:$0xe]
        %s2929 = scalar_lea.vmem [#allocation10], 128
        %v2930 = vld [vmem:[%s2929] sm:$0xf]
        %v2931 = vld [vmem:[%s2929 + $0x4] sm:$0xf]
        %v2932 = vld [vmem:[%s2929 + $0x8] sm:$0xf]
        %v2933 = vld [vmem:[%s2929 + $0xc] sm:$0xf]
        %v2934 = vld [vmem:[%s2929 + $0x10] sm:$0xf]
        %v2935 = vld [vmem:[%s2929 + $0x14] sm:$0xf]
        %v2936 = vld [vmem:[%s2929 + $0x18] sm:$0xf]
        %v2937 = vld [vmem:[%s2929 + $0x1c] sm:$0xf]
        %v2938 = vld [vmem:[%s2929 + $0x20] sm:$0xf]
        %v2939 = vld [vmem:[%s2929 + $0x24] sm:$0xf]
        %v2940 = vld [vmem:[%s2929 + $0x28] sm:$0xf]
        %v2941 = vld [vmem:[%s2929 + $0x2c] sm:$0xf]
        %v2942 = vld [vmem:[%s2929 + $0x30] sm:$0xf]
        %v2943 = vld [vmem:[%s2929 + $0x34] sm:$0xf]
        %v2944 = vld [vmem:[%s2929 + $0x38] sm:$0xf]
        %v2945 = vld [vmem:[%s2929 + $0x3c] sm:$0xf]
        %v2947 = vunpack.c.l.b16 %v2928
        %v2948 = vpack.c.b16 %v2710, %v2947
        %v2949 = vrot.slane %v2948, 1
        %v2950 = vrot.slane %v2713, 1
        %v2951 = vsel %vm780, %v2949, %v2950
        %v2970 = vunpack.c.l.b16 %v2930
        %v2971 = vunpack.c.l.b16 %v2931
        %v2972 = vunpack.c.l.b16 %v2932
        %v2973 = vunpack.c.l.b16 %v2933
        %v2974 = vunpack.c.l.b16 %v2934
        %v2975 = vunpack.c.l.b16 %v2935
        %v2976 = vunpack.c.l.b16 %v2936
        %v2977 = vunpack.c.l.b16 %v2937
        %v2978 = vunpack.c.l.b16 %v2938
        %v2979 = vunpack.c.l.b16 %v2939
        %v2980 = vunpack.c.l.b16 %v2940
        %v2981 = vunpack.c.l.b16 %v2941
        %v2982 = vunpack.c.l.b16 %v2942
        %v2983 = vunpack.c.l.b16 %v2943
        %v2984 = vunpack.c.l.b16 %v2944
        %v2985 = vunpack.c.l.b16 %v2945
        %v2986 = vpack.c.b16 %v2971, %v2970
        %v2987 = vpack.c.b16 %v2973, %v2972
        %v2988 = vpack.c.b16 %v2975, %v2974
        %v2989 = vpack.c.b16 %v2977, %v2976
        %v2990 = vpack.c.b16 %v2979, %v2978
        %v2991 = vpack.c.b16 %v2981, %v2980
        %v2992 = vpack.c.b16 %v2983, %v2982
        %v2993 = vpack.c.b16 %v2985, %v2984
        %3002 = vmatprep.subr.bf16.mxu0 0
        %3003 = vmatpush1.bf16.msra.mxu0 %v2993
        %3004 = vmatprep.subr.bf16.mxu0 0
        %3005 = vmatpush1.bf16.msra.mxu0 %v2992
        %3006 = vmatprep.subr.bf16.mxu0 0
        %3007 = vmatpush1.bf16.msra.mxu0 %v2991
        %3008 = vmatprep.subr.bf16.mxu0 0
        %3009 = vmatpush1.bf16.msra.mxu0 %v2990
        %3010 = vmatprep.subr.bf16.mxu0 0
        %3011 = vmatpush1.bf16.msra.mxu0 %v2989
        %3012 = vmatprep.subr.bf16.mxu0 0
        %3013 = vmatpush1.bf16.msra.mxu0 %v2988
        %3014 = vmatprep.subr.bf16.mxu0 0
        %3015 = vmatpush1.bf16.msra.mxu0 %v2987
        %3016 = vmatprep.subr.bf16.mxu0 0
        %3017 = vmatpush1.bf16.msra.mxu0 %v2986
        %3018 = vmatprep.subr.bf16.mxu0 0
        %3019 = vmatpush2.bf16.msra.mxu0 0
        %3020 = vmatprep.subr.bf16.mxu0 0
        %3021 = vmatpush2.bf16.msra.mxu0 0
        %3022 = vmatprep.subr.bf16.mxu0 0
        %3023 = vmatpush2.bf16.msra.mxu0 0
        %3024 = vmatprep.subr.bf16.mxu0 0
        %3025 = vmatpush2.bf16.msra.mxu0 0
        %3026 = vmatprep.subr.bf16.mxu0 0
        %3027 = vmatpush2.bf16.msra.mxu0 0
        %3028 = vmatprep.subr.bf16.mxu0 0
        %3029 = vmatpush2.bf16.msra.mxu0 0
        %3030 = vmatprep.subr.bf16.mxu0 0
        %3031 = vmatpush2.bf16.msra.mxu0 0
        %3032 = vmatprep.subr.bf16.mxu0 0
        %3033 = vmatpush2.bf16.msra.mxu0 0
        %3034 = vmatprep.mubr.bf16.mxu0 0
        %3035 = vmatmul.mubr.bf16.gmra.mxu0 %v2951
        %v3036 = vpop.f32.mrf.mxu0
        %v3037 = vadd.f32 0.0, %v3036
        %v3038 = vpop.f32.mrf.mxu0
        %v3039 = vpop.f32.mrf.mxu0
        %v3040 = vadd.f32 0.0, %v3039
        %v3041 = vpop.f32.mrf.mxu0
        %3042 = vmatprep.mubr.bf16.mxu0 0
        %3043 = vmatmul.mubr.bf16.gmra.mxu0 %v2950
        %v3044 = vpop.f32.mrf.mxu0
        %v3045 = vadd.f32 0.0, %v3044
        %v3046 = vpop.f32.mrf.mxu0
        %v3047 = vpop.f32.mrf.mxu0
        %v3048 = vpop.f32.mrf.mxu0
        %3049 = vdwg.mxu0
        %v3050 = vadd.f32 %v2915, %v3037
        %v3051 = vadd.f32 %v2918, %v3040
        %v3052 = vadd.f32 %v2923, %v3045
        %v3053 = vld [vmem:[#allocation2 + $0x8] sm:$0xf]
        %s3054 = scalar_lea.vmem [#allocation10], 192
        %v3055 = vld [vmem:[%s3054] sm:$0xf]
        %v3056 = vld [vmem:[%s3054 + $0x4] sm:$0xf]
        %v3057 = vld [vmem:[%s3054 + $0x8] sm:$0xf]
        %v3058 = vld [vmem:[%s3054 + $0xc] sm:$0xf]
        %v3059 = vld [vmem:[%s3054 + $0x10] sm:$0xf]
        %v3060 = vld [vmem:[%s3054 + $0x14] sm:$0xf]
        %v3061 = vld [vmem:[%s3054 + $0x18] sm:$0xf]
        %v3062 = vld [vmem:[%s3054 + $0x1c] sm:$0xf]
        %v3063 = vld [vmem:[%s3054 + $0x20] sm:$0xf]
        %v3064 = vld [vmem:[%s3054 + $0x24] sm:$0xf]
        %v3065 = vld [vmem:[%s3054 + $0x28] sm:$0xf]
        %v3066 = vld [vmem:[%s3054 + $0x2c] sm:$0xf]
        %v3067 = vld [vmem:[%s3054 + $0x30] sm:$0xf]
        %v3068 = vld [vmem:[%s3054 + $0x34] sm:$0xf]
        %v3069 = vld [vmem:[%s3054 + $0x38] sm:$0xf]
        %v3070 = vld [vmem:[%s3054 + $0x3c] sm:$0xf]
        %v3072 = vunpack.c.l.b16 %v3053
        %v3073 = vpack.c.b16 %v3072, %v3072
        %v3075 = vshrl.u32 %v2948, 16
        %v3077 = vrot.slane %v3075, 1
        %v3078 = vshll.u32 %v2948, 16
        %v3080 = vrot.slane %v3078, 2
        %v3081 = vor.u32 %v3077, %v3080
        %v3083 = vshrl.u32 %v3073, 16
        %v3085 = vrot.slane %v3083, 1
        %v3086 = vshll.u32 %v3073, 16
        %v3088 = vrot.slane %v3086, 2
        %v3089 = vor.u32 %v3085, %v3088
        %v3090 = vsel %vm910, %v3081, %v3089
        %v3109 = vunpack.c.l.b16 %v3055
        %v3110 = vunpack.c.l.b16 %v3056
        %v3111 = vunpack.c.l.b16 %v3057
        %v3112 = vunpack.c.l.b16 %v3058
        %v3113 = vunpack.c.l.b16 %v3059
        %v3114 = vunpack.c.l.b16 %v3060
        %v3115 = vunpack.c.l.b16 %v3061
        %v3116 = vunpack.c.l.b16 %v3062
        %v3117 = vunpack.c.l.b16 %v3063
        %v3118 = vunpack.c.l.b16 %v3064
        %v3119 = vunpack.c.l.b16 %v3065
        %v3120 = vunpack.c.l.b16 %v3066
        %v3121 = vunpack.c.l.b16 %v3067
        %v3122 = vunpack.c.l.b16 %v3068
        %v3123 = vunpack.c.l.b16 %v3069
        %v3124 = vunpack.c.l.b16 %v3070
        %v3125 = vpack.c.b16 %v3110, %v3109
        %v3126 = vpack.c.b16 %v3112, %v3111
        %v3127 = vpack.c.b16 %v3114, %v3113
        %v3128 = vpack.c.b16 %v3116, %v3115
        %v3129 = vpack.c.b16 %v3118, %v3117
        %v3130 = vpack.c.b16 %v3120, %v3119
        %v3131 = vpack.c.b16 %v3122, %v3121
        %v3132 = vpack.c.b16 %v3124, %v3123
        %3141 = vmatprep.subr.bf16.mxu0 0
        %3142 = vmatpush1.bf16.msra.mxu0 %v3132
        %3143 = vmatprep.subr.bf16.mxu0 0
        %3144 = vmatpush1.bf16.msra.mxu0 %v3131
        %3145 = vmatprep.subr.bf16.mxu0 0
        %3146 = vmatpush1.bf16.msra.mxu0 %v3130
        %3147 = vmatprep.subr.bf16.mxu0 0
        %3148 = vmatpush1.bf16.msra.mxu0 %v3129
        %3149 = vmatprep.subr.bf16.mxu0 0
        %3150 = vmatpush1.bf16.msra.mxu0 %v3128
        %3151 = vmatprep.subr.bf16.mxu0 0
        %3152 = vmatpush1.bf16.msra.mxu0 %v3127
        %3153 = vmatprep.subr.bf16.mxu0 0
        %3154 = vmatpush1.bf16.msra.mxu0 %v3126
        %3155 = vmatprep.subr.bf16.mxu0 0
        %3156 = vmatpush1.bf16.msra.mxu0 %v3125
        %3157 = vmatprep.subr.bf16.mxu0 0
        %3158 = vmatpush2.bf16.msra.mxu0 0
        %3159 = vmatprep.subr.bf16.mxu0 0
        %3160 = vmatpush2.bf16.msra.mxu0 0
        %3161 = vmatprep.subr.bf16.mxu0 0
        %3162 = vmatpush2.bf16.msra.mxu0 0
        %3163 = vmatprep.subr.bf16.mxu0 0
        %3164 = vmatpush2.bf16.msra.mxu0 0
        %3165 = vmatprep.subr.bf16.mxu0 0
        %3166 = vmatpush2.bf16.msra.mxu0 0
        %3167 = vmatprep.subr.bf16.mxu0 0
        %3168 = vmatpush2.bf16.msra.mxu0 0
        %3169 = vmatprep.subr.bf16.mxu0 0
        %3170 = vmatpush2.bf16.msra.mxu0 0
        %3171 = vmatprep.subr.bf16.mxu0 0
        %3172 = vmatpush2.bf16.msra.mxu0 0
        %3173 = vmatprep.mubr.bf16.mxu0 0
        %3174 = vmatmul.mubr.bf16.gmra.mxu0 %v3090
        %v3175 = vpop.f32.mrf.mxu0
        %v3176 = vadd.f32 0.0, %v3175
        %v3177 = vpop.f32.mrf.mxu0
        %v3178 = vpop.f32.mrf.mxu0
        %v3179 = vadd.f32 0.0, %v3178
        %v3180 = vpop.f32.mrf.mxu0
        %3181 = vmatprep.mubr.bf16.mxu0 0
        %3182 = vmatmul.mubr.bf16.gmra.mxu0 %v3089
        %v3183 = vpop.f32.mrf.mxu0
        %v3184 = vadd.f32 0.0, %v3183
        %v3185 = vpop.f32.mrf.mxu0
        %v3186 = vpop.f32.mrf.mxu0
        %v3187 = vpop.f32.mrf.mxu0
        %3188 = vdwg.mxu0
        %v3189 = vadd.f32 %v3050, %v3176
        %v3190 = vadd.f32 %v3051, %v3179
        %v3191 = vadd.f32 %v3052, %v3184
        %v3192 = vld [vmem:[#allocation2] sm:$0xc]
        %s3193 = scalar_lea.vmem [#allocation10], 256
        %v3194 = vld [vmem:[%s3193] sm:$0xf]
        %v3195 = vld [vmem:[%s3193 + $0x4] sm:$0xf]
        %v3196 = vld [vmem:[%s3193 + $0x8] sm:$0xf]
        %v3197 = vld [vmem:[%s3193 + $0xc] sm:$0xf]
        %v3198 = vld [vmem:[%s3193 + $0x10] sm:$0xf]
        %v3199 = vld [vmem:[%s3193 + $0x14] sm:$0xf]
        %v3200 = vld [vmem:[%s3193 + $0x18] sm:$0xf]
        %v3201 = vld [vmem:[%s3193 + $0x1c] sm:$0xf]
        %v3202 = vld [vmem:[%s3193 + $0x20] sm:$0xf]
        %v3203 = vld [vmem:[%s3193 + $0x24] sm:$0xf]
        %v3204 = vld [vmem:[%s3193 + $0x28] sm:$0xf]
        %v3205 = vld [vmem:[%s3193 + $0x2c] sm:$0xf]
        %v3206 = vld [vmem:[%s3193 + $0x30] sm:$0xf]
        %v3207 = vld [vmem:[%s3193 + $0x34] sm:$0xf]
        %v3208 = vld [vmem:[%s3193 + $0x38] sm:$0xf]
        %v3209 = vld [vmem:[%s3193 + $0x3c] sm:$0xf]
        %v3211 = vunpack.c.l.b16 %v3192
        %v3212 = vpack.c.b16 %v2710, %v3211
        %v3213 = vrot.slane %v3212, 2
        %v3214 = vrot.slane %v3073, 2
        %v3215 = vsel %vm1056, %v3213, %v3214
        %v3234 = vunpack.c.l.b16 %v3194
        %v3235 = vunpack.c.l.b16 %v3195
        %v3236 = vunpack.c.l.b16 %v3196
        %v3237 = vunpack.c.l.b16 %v3197
        %v3238 = vunpack.c.l.b16 %v3198
        %v3239 = vunpack.c.l.b16 %v3199
        %v3240 = vunpack.c.l.b16 %v3200
        %v3241 = vunpack.c.l.b16 %v3201
        %v3242 = vunpack.c.l.b16 %v3202
        %v3243 = vunpack.c.l.b16 %v3203
        %v3244 = vunpack.c.l.b16 %v3204
        %v3245 = vunpack.c.l.b16 %v3205
        %v3246 = vunpack.c.l.b16 %v3206
        %v3247 = vunpack.c.l.b16 %v3207
        %v3248 = vunpack.c.l.b16 %v3208
        %v3249 = vunpack.c.l.b16 %v3209
        %v3250 = vpack.c.b16 %v3235, %v3234
        %v3251 = vpack.c.b16 %v3237, %v3236
        %v3252 = vpack.c.b16 %v3239, %v3238
        %v3253 = vpack.c.b16 %v3241, %v3240
        %v3254 = vpack.c.b16 %v3243, %v3242
        %v3255 = vpack.c.b16 %v3245, %v3244
        %v3256 = vpack.c.b16 %v3247, %v3246
        %v3257 = vpack.c.b16 %v3249, %v3248
        %3266 = vmatprep.subr.bf16.mxu0 0
        %3267 = vmatpush1.bf16.msra.mxu0 %v3257
        %3268 = vmatprep.subr.bf16.mxu0 0
        %3269 = vmatpush1.bf16.msra.mxu0 %v3256
        %3270 = vmatprep.subr.bf16.mxu0 0
        %3271 = vmatpush1.bf16.msra.mxu0 %v3255
        %3272 = vmatprep.subr.bf16.mxu0 0
        %3273 = vmatpush1.bf16.msra.mxu0 %v3254
        %3274 = vmatprep.subr.bf16.mxu0 0
        %3275 = vmatpush1.bf16.msra.mxu0 %v3253
        %3276 = vmatprep.subr.bf16.mxu0 0
        %3277 = vmatpush1.bf16.msra.mxu0 %v3252
        %3278 = vmatprep.subr.bf16.mxu0 0
        %3279 = vmatpush1.bf16.msra.mxu0 %v3251
        %3280 = vmatprep.subr.bf16.mxu0 0
        %3281 = vmatpush1.bf16.msra.mxu0 %v3250
        %3282 = vmatprep.subr.bf16.mxu0 0
        %3283 = vmatpush2.bf16.msra.mxu0 0
        %3284 = vmatprep.subr.bf16.mxu0 0
        %3285 = vmatpush2.bf16.msra.mxu0 0
        %3286 = vmatprep.subr.bf16.mxu0 0
        %3287 = vmatpush2.bf16.msra.mxu0 0
        %3288 = vmatprep.subr.bf16.mxu0 0
        %3289 = vmatpush2.bf16.msra.mxu0 0
        %3290 = vmatprep.subr.bf16.mxu0 0
        %3291 = vmatpush2.bf16.msra.mxu0 0
        %3292 = vmatprep.subr.bf16.mxu0 0
        %3293 = vmatpush2.bf16.msra.mxu0 0
        %3294 = vmatprep.subr.bf16.mxu0 0
        %3295 = vmatpush2.bf16.msra.mxu0 0
        %3296 = vmatprep.subr.bf16.mxu0 0
        %3297 = vmatpush2.bf16.msra.mxu0 0
        %3298 = vmatprep.mubr.bf16.mxu0 0
        %3299 = vmatmul.mubr.bf16.gmra.mxu0 %v3215
        %v3300 = vpop.f32.mrf.mxu0
        %v3301 = vadd.f32 0.0, %v3300
        %v3302 = vpop.f32.mrf.mxu0
        %v3303 = vpop.f32.mrf.mxu0
        %v3304 = vadd.f32 0.0, %v3303
        %v3305 = vpop.f32.mrf.mxu0
        %3306 = vmatprep.mubr.bf16.mxu0 0
        %3307 = vmatmul.mubr.bf16.gmra.mxu0 %v3214
        %v3308 = vpop.f32.mrf.mxu0
        %v3309 = vadd.f32 0.0, %v3308
        %v3310 = vpop.f32.mrf.mxu0
        %v3311 = vpop.f32.mrf.mxu0
        %v3312 = vpop.f32.mrf.mxu0
        %3313 = vdwg.mxu0
        %v3314 = vadd.f32 %v3189, %v3301
        %v3315 = vadd.f32 %v3190, %v3304
        %v3316 = vadd.f32 %v3191, %v3309
        %v3317 = vld [vmem:[%s8] sm:$0x1]
        %v3319 = vlaneseq
        %v3320 = vshrl.u32 %v3319, 7
        %v3321 = vsub.s32 0, %v3320
        %v3322 = vrot.slane %v3317, %v3321
        %v3324 = vadd.f32 %v3314, %v3322
        %v3325 = vadd.f32 %v3315, %v3322
        %v3326 = vadd.f32 %v3316, %v3322
        %v3327 = vtanh.pop %v3324
        %v3328 = vtanh.pop %v3325
        %v3329 = vtanh.pop %v3326
        %s3330 = sadd.s32 %s488, 4294967294
        %v3331 = vstv %s3330
        %v3332 = vadd.s32 %v3331, %v1182
        %v3333 = vadd.s32 %v3331, %v1183
        %v3334 = vadd.s32 %v3331, %v1184
        %vm3335 = vcmp.ge.s32.totalorder %v3332, 0
        %vm3336 = vcmp.ge.s32.totalorder %v3333, 0
        %vm3337 = vcmp.ge.s32.totalorder %v3334, 0
        %vm3338 = vcmp.lt.s32.totalorder %v3332, 30
        %vm3339 = vcmp.lt.s32.totalorder %v3333, 30
        %vm3340 = vcmp.lt.s32.totalorder %v3334, 30
        %vm3341 = vmand %vm3335, %vm3338
        %vm3342 = vmand %vm3336, %vm3339
        %vm3343 = vmand %vm3337, %vm3340
        %v3344 = vsel %vm3341, 1, 0
        %v3345 = vsel %vm3342, 1, 0
        %v3346 = vsel %vm3343, 1, 0
        %vm3347 = vcmp.eq.s32.totalorder %v3344, 1
        %vm3348 = vcmp.eq.s32.totalorder %v3345, 1
        %vm3349 = vcmp.eq.s32.totalorder %v3346, 1
        %v3350 = vsel %vm3347, %v3327, 0.0
        %v3351 = vsel %vm3348, %v3328, 0.0
        %v3352 = vsel %vm3349, %v3329, 0.0
        %v3353 = vpack.c.bf16 %v3351, %v3350
        %v3354 = vpack.c.bf16 %v3352, %v3352
        %v3357 = vunpack.c.l.b16 %v3353
        %v3358 = vunpack.c.h.b16 %v3353
        %v3359 = vunpack.c.l.b16 %v3354
        %v3360 = vpack.c.b16 %v3357, %v3357
        %v3361 = vpack.c.b16 %v3358, %v3358
        %v3362 = vpack.c.b16 %v3359, %v3359
        %3366 = vst [vmem:[#allocation3] sm:$0xf] %v3360
        %3367 = vst [vmem:[#allocation3 + $0x4] sm:$0xf] %v3361
        %3368 = vst [vmem:[#allocation3 + $0x8] sm:$0x3] %v3362
        %v3369 = vld [vmem:[#allocation3] sm:$0xf]
        %v3370 = vld [vmem:[#allocation3 + $0x4] sm:$0xf]
        %v3371 = vld [vmem:[#allocation12] sm:$0xf]
        %v3372 = vld [vmem:[#allocation12 + $0x4] sm:$0xf]
        %v3373 = vld [vmem:[#allocation12 + $0x8] sm:$0xf]
        %v3374 = vld [vmem:[#allocation12 + $0xc] sm:$0xf]
        %v3375 = vld [vmem:[#allocation12 + $0x10] sm:$0xf]
        %v3376 = vld [vmem:[#allocation12 + $0x14] sm:$0xf]
        %v3377 = vld [vmem:[#allocation12 + $0x18] sm:$0xf]
        %v3378 = vld [vmem:[#allocation12 + $0x1c] sm:$0xf]
        %v3379 = vld [vmem:[#allocation12 + $0x20] sm:$0xf]
        %v3380 = vld [vmem:[#allocation12 + $0x24] sm:$0xf]
        %v3381 = vld [vmem:[#allocation12 + $0x28] sm:$0xf]
        %v3382 = vld [vmem:[#allocation12 + $0x2c] sm:$0xf]
        %v3383 = vld [vmem:[#allocation12 + $0x30] sm:$0xf]
        %v3384 = vld [vmem:[#allocation12 + $0x34] sm:$0xf]
        %v3385 = vld [vmem:[#allocation12 + $0x38] sm:$0xf]
        %v3386 = vld [vmem:[#allocation12 + $0x3c] sm:$0xf]
        %v3387 = vld [vmem:[#allocation3 + $0x8] sm:$0x1]
        %s3388 = scalar_lea.vmem [#allocation12], 64
        %v3389 = vld [vmem:[%s3388] sm:$0xf]
        %v3390 = vld [vmem:[%s3388 + $0x4] sm:$0xf]
        %v3391 = vld [vmem:[%s3388 + $0x8] sm:$0xf]
        %v3392 = vld [vmem:[%s3388 + $0xc] sm:$0xf]
        %v3393 = vld [vmem:[%s3388 + $0x10] sm:$0xf]
        %v3394 = vld [vmem:[%s3388 + $0x14] sm:$0xf]
        %v3395 = vld [vmem:[%s3388 + $0x18] sm:$0xf]
        %v3396 = vld [vmem:[%s3388 + $0x1c] sm:$0xf]
        %v3397 = vld [vmem:[%s3388 + $0x20] sm:$0xf]
        %v3398 = vld [vmem:[%s3388 + $0x24] sm:$0xf]
        %v3399 = vld [vmem:[%s3388 + $0x28] sm:$0xf]
        %v3400 = vld [vmem:[%s3388 + $0x2c] sm:$0xf]
        %v3401 = vld [vmem:[%s3388 + $0x30] sm:$0xf]
        %v3402 = vld [vmem:[%s3388 + $0x34] sm:$0xf]
        %v3403 = vld [vmem:[%s3388 + $0x38] sm:$0xf]
        %v3404 = vld [vmem:[%s3388 + $0x3c] sm:$0xf]
        %v3408 = vunpack.c.l.b16 %v3369
        %v3409 = vunpack.c.l.b16 %v3370
        %v3410 = vunpack.c.l.b16 %v3387
        %v3411 = vpack.c.b16 %v3409, %v3408
        %v3412 = vpack.c.b16 %v3410, %v3410
        %v3414 = vshrl.u32 %v3411, 16
        %v3416 = vshll.u32 %v3411, 16
        %v3418 = vrot.slane %v3416, 1
        %v3419 = vor.u32 %v3414, %v3418
        %v3421 = vshll.u32 %v3412, 16
        %v3423 = vrot.slane %v3421, 1
        %v3424 = vsel %vm540, %v3419, %v3423
        %v3442 = vunpack.c.l.b16 %v3389
        %v3443 = vunpack.c.l.b16 %v3390
        %v3444 = vunpack.c.l.b16 %v3391
        %v3445 = vunpack.c.l.b16 %v3392
        %v3446 = vunpack.c.l.b16 %v3393
        %v3447 = vunpack.c.l.b16 %v3394
        %v3448 = vunpack.c.l.b16 %v3395
        %v3449 = vunpack.c.l.b16 %v3396
        %v3450 = vunpack.c.l.b16 %v3397
        %v3451 = vunpack.c.l.b16 %v3398
        %v3452 = vunpack.c.l.b16 %v3399
        %v3453 = vunpack.c.l.b16 %v3400
        %v3454 = vunpack.c.l.b16 %v3401
        %v3455 = vunpack.c.l.b16 %v3402
        %v3456 = vunpack.c.l.b16 %v3403
        %v3457 = vunpack.c.l.b16 %v3404
        %v3458 = vpack.c.b16 %v3443, %v3442
        %v3459 = vpack.c.b16 %v3445, %v3444
        %v3460 = vpack.c.b16 %v3447, %v3446
        %v3461 = vpack.c.b16 %v3449, %v3448
        %v3462 = vpack.c.b16 %v3451, %v3450
        %v3463 = vpack.c.b16 %v3453, %v3452
        %v3464 = vpack.c.b16 %v3455, %v3454
        %v3465 = vpack.c.b16 %v3457, %v3456
        %3474 = vmatprep.subr.bf16.mxu0 0
        %3475 = vmatpush1.bf16.msra.mxu0 %v3465
        %3476 = vmatprep.subr.bf16.mxu0 0
        %3477 = vmatpush1.bf16.msra.mxu0 %v3464
        %3478 = vmatprep.subr.bf16.mxu0 0
        %3479 = vmatpush1.bf16.msra.mxu0 %v3463
        %3480 = vmatprep.subr.bf16.mxu0 0
        %3481 = vmatpush1.bf16.msra.mxu0 %v3462
        %3482 = vmatprep.subr.bf16.mxu0 0
        %3483 = vmatpush1.bf16.msra.mxu0 %v3461
        %3484 = vmatprep.subr.bf16.mxu0 0
        %3485 = vmatpush1.bf16.msra.mxu0 %v3460
        %3486 = vmatprep.subr.bf16.mxu0 0
        %3487 = vmatpush1.bf16.msra.mxu0 %v3459
        %3488 = vmatprep.subr.bf16.mxu0 0
        %3489 = vmatpush1.bf16.msra.mxu0 %v3458
        %3490 = vmatprep.subr.bf16.mxu0 0
        %3491 = vmatpush2.bf16.msra.mxu0 0
        %3492 = vmatprep.subr.bf16.mxu0 0
        %3493 = vmatpush2.bf16.msra.mxu0 0
        %3494 = vmatprep.subr.bf16.mxu0 0
        %3495 = vmatpush2.bf16.msra.mxu0 0
        %3496 = vmatprep.subr.bf16.mxu0 0
        %3497 = vmatpush2.bf16.msra.mxu0 0
        %3498 = vmatprep.subr.bf16.mxu0 0
        %3499 = vmatpush2.bf16.msra.mxu0 0
        %3500 = vmatprep.subr.bf16.mxu0 0
        %3501 = vmatpush2.bf16.msra.mxu0 0
        %3502 = vmatprep.subr.bf16.mxu0 0
        %3503 = vmatpush2.bf16.msra.mxu0 0
        %3504 = vmatprep.subr.bf16.mxu0 0
        %3505 = vmatpush2.bf16.msra.mxu0 0
        %3506 = vmatprep.mubr.bf16.mxu0 0
        %3507 = vmatmul.mubr.bf16.gmra.mxu0 %v3424
        %v3508 = vpop.f32.mrf.mxu0
        %v3509 = vadd.f32 0.0, %v3508
        %v3510 = vpop.f32.mrf.mxu0
        %v3511 = vpop.f32.mrf.mxu0
        %v3512 = vadd.f32 0.0, %v3511
        %v3513 = vpop.f32.mrf.mxu0
        %3514 = vdwg.mxu0
        %v3532 = vunpack.c.l.b16 %v3371
        %v3533 = vunpack.c.l.b16 %v3372
        %v3534 = vunpack.c.l.b16 %v3373
        %v3535 = vunpack.c.l.b16 %v3374
        %v3536 = vunpack.c.l.b16 %v3375
        %v3537 = vunpack.c.l.b16 %v3376
        %v3538 = vunpack.c.l.b16 %v3377
        %v3539 = vunpack.c.l.b16 %v3378
        %v3540 = vunpack.c.l.b16 %v3379
        %v3541 = vunpack.c.l.b16 %v3380
        %v3542 = vunpack.c.l.b16 %v3381
        %v3543 = vunpack.c.l.b16 %v3382
        %v3544 = vunpack.c.l.b16 %v3383
        %v3545 = vunpack.c.l.b16 %v3384
        %v3546 = vunpack.c.l.b16 %v3385
        %v3547 = vunpack.c.l.b16 %v3386
        %v3548 = vpack.c.b16 %v3533, %v3532
        %v3549 = vpack.c.b16 %v3535, %v3534
        %v3550 = vpack.c.b16 %v3537, %v3536
        %v3551 = vpack.c.b16 %v3539, %v3538
        %v3552 = vpack.c.b16 %v3541, %v3540
        %v3553 = vpack.c.b16 %v3543, %v3542
        %v3554 = vpack.c.b16 %v3545, %v3544
        %v3555 = vpack.c.b16 %v3547, %v3546
        %3564 = vmatprep.subr.bf16.mxu0 0
        %3565 = vmatpush1.bf16.msra.mxu0 %v3555
        %3566 = vmatprep.subr.bf16.mxu0 0
        %3567 = vmatpush1.bf16.msra.mxu0 %v3554
        %3568 = vmatprep.subr.bf16.mxu0 0
        %3569 = vmatpush1.bf16.msra.mxu0 %v3553
        %3570 = vmatprep.subr.bf16.mxu0 0
        %3571 = vmatpush1.bf16.msra.mxu0 %v3552
        %3572 = vmatprep.subr.bf16.mxu0 0
        %3573 = vmatpush1.bf16.msra.mxu0 %v3551
        %3574 = vmatprep.subr.bf16.mxu0 0
        %3575 = vmatpush1.bf16.msra.mxu0 %v3550
        %3576 = vmatprep.subr.bf16.mxu0 0
        %3577 = vmatpush1.bf16.msra.mxu0 %v3549
        %3578 = vmatprep.subr.bf16.mxu0 0
        %3579 = vmatpush1.bf16.msra.mxu0 %v3548
        %3580 = vmatprep.subr.bf16.mxu0 0
        %3581 = vmatpush2.bf16.msra.mxu0 0
        %3582 = vmatprep.subr.bf16.mxu0 0
        %3583 = vmatpush2.bf16.msra.mxu0 0
        %3584 = vmatprep.subr.bf16.mxu0 0
        %3585 = vmatpush2.bf16.msra.mxu0 0
        %3586 = vmatprep.subr.bf16.mxu0 0
        %3587 = vmatpush2.bf16.msra.mxu0 0
        %3588 = vmatprep.subr.bf16.mxu0 0
        %3589 = vmatpush2.bf16.msra.mxu0 0
        %3590 = vmatprep.subr.bf16.mxu0 0
        %3591 = vmatpush2.bf16.msra.mxu0 0
        %3592 = vmatprep.subr.bf16.mxu0 0
        %3593 = vmatpush2.bf16.msra.mxu0 0
        %3594 = vmatprep.subr.bf16.mxu0 0
        %3595 = vmatpush2.bf16.msra.mxu0 0
        %3596 = vmatprep.mubr.bf16.mxu0 0
        %3597 = vmatmul.mubr.bf16.gmra.mxu0 %v3411
        %v3598 = vpop.f32.mrf.mxu0
        %v3599 = vadd.f32 %v3509, %v3598
        %v3600 = vpop.f32.mrf.mxu0
        %v3601 = vpop.f32.mrf.mxu0
        %v3602 = vadd.f32 %v3512, %v3601
        %v3603 = vpop.f32.mrf.mxu0
        %3604 = vdwg.mxu0
        %v3605 = vld [vmem:[#allocation3] sm:$0xe]
        %s3606 = scalar_lea.vmem [#allocation12], 128
        %v3607 = vld [vmem:[%s3606] sm:$0xf]
        %v3608 = vld [vmem:[%s3606 + $0x4] sm:$0xf]
        %v3609 = vld [vmem:[%s3606 + $0x8] sm:$0xf]
        %v3610 = vld [vmem:[%s3606 + $0xc] sm:$0xf]
        %v3611 = vld [vmem:[%s3606 + $0x10] sm:$0xf]
        %v3612 = vld [vmem:[%s3606 + $0x14] sm:$0xf]
        %v3613 = vld [vmem:[%s3606 + $0x18] sm:$0xf]
        %v3614 = vld [vmem:[%s3606 + $0x1c] sm:$0xf]
        %v3615 = vld [vmem:[%s3606 + $0x20] sm:$0xf]
        %v3616 = vld [vmem:[%s3606 + $0x24] sm:$0xf]
        %v3617 = vld [vmem:[%s3606 + $0x28] sm:$0xf]
        %v3618 = vld [vmem:[%s3606 + $0x2c] sm:$0xf]
        %v3619 = vld [vmem:[%s3606 + $0x30] sm:$0xf]
        %v3620 = vld [vmem:[%s3606 + $0x34] sm:$0xf]
        %v3621 = vld [vmem:[%s3606 + $0x38] sm:$0xf]
        %v3622 = vld [vmem:[%s3606 + $0x3c] sm:$0xf]
        %v3624 = vunpack.c.l.b16 %v3605
        %v3625 = vpack.c.b16 %v3409, %v3624
        %v3626 = vrot.slane %v3625, 1
        %v3627 = vrot.slane %v3412, 1
        %v3628 = vsel %vm780, %v3626, %v3627
        %v3646 = vunpack.c.l.b16 %v3607
        %v3647 = vunpack.c.l.b16 %v3608
        %v3648 = vunpack.c.l.b16 %v3609
        %v3649 = vunpack.c.l.b16 %v3610
        %v3650 = vunpack.c.l.b16 %v3611
        %v3651 = vunpack.c.l.b16 %v3612
        %v3652 = vunpack.c.l.b16 %v3613
        %v3653 = vunpack.c.l.b16 %v3614
        %v3654 = vunpack.c.l.b16 %v3615
        %v3655 = vunpack.c.l.b16 %v3616
        %v3656 = vunpack.c.l.b16 %v3617
        %v3657 = vunpack.c.l.b16 %v3618
        %v3658 = vunpack.c.l.b16 %v3619
        %v3659 = vunpack.c.l.b16 %v3620
        %v3660 = vunpack.c.l.b16 %v3621
        %v3661 = vunpack.c.l.b16 %v3622
        %v3662 = vpack.c.b16 %v3647, %v3646
        %v3663 = vpack.c.b16 %v3649, %v3648
        %v3664 = vpack.c.b16 %v3651, %v3650
        %v3665 = vpack.c.b16 %v3653, %v3652
        %v3666 = vpack.c.b16 %v3655, %v3654
        %v3667 = vpack.c.b16 %v3657, %v3656
        %v3668 = vpack.c.b16 %v3659, %v3658
        %v3669 = vpack.c.b16 %v3661, %v3660
        %3678 = vmatprep.subr.bf16.mxu0 0
        %3679 = vmatpush1.bf16.msra.mxu0 %v3669
        %3680 = vmatprep.subr.bf16.mxu0 0
        %3681 = vmatpush1.bf16.msra.mxu0 %v3668
        %3682 = vmatprep.subr.bf16.mxu0 0
        %3683 = vmatpush1.bf16.msra.mxu0 %v3667
        %3684 = vmatprep.subr.bf16.mxu0 0
        %3685 = vmatpush1.bf16.msra.mxu0 %v3666
        %3686 = vmatprep.subr.bf16.mxu0 0
        %3687 = vmatpush1.bf16.msra.mxu0 %v3665
        %3688 = vmatprep.subr.bf16.mxu0 0
        %3689 = vmatpush1.bf16.msra.mxu0 %v3664
        %3690 = vmatprep.subr.bf16.mxu0 0
        %3691 = vmatpush1.bf16.msra.mxu0 %v3663
        %3692 = vmatprep.subr.bf16.mxu0 0
        %3693 = vmatpush1.bf16.msra.mxu0 %v3662
        %3694 = vmatprep.subr.bf16.mxu0 0
        %3695 = vmatpush2.bf16.msra.mxu0 0
        %3696 = vmatprep.subr.bf16.mxu0 0
        %3697 = vmatpush2.bf16.msra.mxu0 0
        %3698 = vmatprep.subr.bf16.mxu0 0
        %3699 = vmatpush2.bf16.msra.mxu0 0
        %3700 = vmatprep.subr.bf16.mxu0 0
        %3701 = vmatpush2.bf16.msra.mxu0 0
        %3702 = vmatprep.subr.bf16.mxu0 0
        %3703 = vmatpush2.bf16.msra.mxu0 0
        %3704 = vmatprep.subr.bf16.mxu0 0
        %3705 = vmatpush2.bf16.msra.mxu0 0
        %3706 = vmatprep.subr.bf16.mxu0 0
        %3707 = vmatpush2.bf16.msra.mxu0 0
        %3708 = vmatprep.subr.bf16.mxu0 0
        %3709 = vmatpush2.bf16.msra.mxu0 0
        %3710 = vmatprep.mubr.bf16.mxu0 0
        %3711 = vmatmul.mubr.bf16.gmra.mxu0 %v3628
        %v3712 = vpop.f32.mrf.mxu0
        %v3713 = vadd.f32 0.0, %v3712
        %v3714 = vpop.f32.mrf.mxu0
        %v3715 = vpop.f32.mrf.mxu0
        %v3716 = vadd.f32 0.0, %v3715
        %v3717 = vpop.f32.mrf.mxu0
        %3718 = vdwg.mxu0
        %v3719 = vadd.f32 %v3599, %v3713
        %v3720 = vadd.f32 %v3602, %v3716
        %v3721 = vld [vmem:[#allocation3 + $0x8] sm:$0x3]
        %s3722 = scalar_lea.vmem [#allocation12], 192
        %v3723 = vld [vmem:[%s3722] sm:$0xf]
        %v3724 = vld [vmem:[%s3722 + $0x4] sm:$0xf]
        %v3725 = vld [vmem:[%s3722 + $0x8] sm:$0xf]
        %v3726 = vld [vmem:[%s3722 + $0xc] sm:$0xf]
        %v3727 = vld [vmem:[%s3722 + $0x10] sm:$0xf]
        %v3728 = vld [vmem:[%s3722 + $0x14] sm:$0xf]
        %v3729 = vld [vmem:[%s3722 + $0x18] sm:$0xf]
        %v3730 = vld [vmem:[%s3722 + $0x1c] sm:$0xf]
        %v3731 = vld [vmem:[%s3722 + $0x20] sm:$0xf]
        %v3732 = vld [vmem:[%s3722 + $0x24] sm:$0xf]
        %v3733 = vld [vmem:[%s3722 + $0x28] sm:$0xf]
        %v3734 = vld [vmem:[%s3722 + $0x2c] sm:$0xf]
        %v3735 = vld [vmem:[%s3722 + $0x30] sm:$0xf]
        %v3736 = vld [vmem:[%s3722 + $0x34] sm:$0xf]
        %v3737 = vld [vmem:[%s3722 + $0x38] sm:$0xf]
        %v3738 = vld [vmem:[%s3722 + $0x3c] sm:$0xf]
        %v3740 = vunpack.c.l.b16 %v3721
        %v3741 = vpack.c.b16 %v3740, %v3740
        %v3743 = vshrl.u32 %v3625, 16
        %v3745 = vrot.slane %v3743, 1
        %v3746 = vshll.u32 %v3625, 16
        %v3748 = vrot.slane %v3746, 2
        %v3749 = vor.u32 %v3745, %v3748
        %v3751 = vshrl.u32 %v3741, 16
        %v3753 = vrot.slane %v3751, 1
        %v3754 = vshll.u32 %v3741, 16
        %v3756 = vrot.slane %v3754, 2
        %v3757 = vor.u32 %v3753, %v3756
        %v3758 = vsel %vm910, %v3749, %v3757
        %v3776 = vunpack.c.l.b16 %v3723
        %v3777 = vunpack.c.l.b16 %v3724
        %v3778 = vunpack.c.l.b16 %v3725
        %v3779 = vunpack.c.l.b16 %v3726
        %v3780 = vunpack.c.l.b16 %v3727
        %v3781 = vunpack.c.l.b16 %v3728
        %v3782 = vunpack.c.l.b16 %v3729
        %v3783 = vunpack.c.l.b16 %v3730
        %v3784 = vunpack.c.l.b16 %v3731
        %v3785 = vunpack.c.l.b16 %v3732
        %v3786 = vunpack.c.l.b16 %v3733
        %v3787 = vunpack.c.l.b16 %v3734
        %v3788 = vunpack.c.l.b16 %v3735
        %v3789 = vunpack.c.l.b16 %v3736
        %v3790 = vunpack.c.l.b16 %v3737
        %v3791 = vunpack.c.l.b16 %v3738
        %v3792 = vpack.c.b16 %v3777, %v3776
        %v3793 = vpack.c.b16 %v3779, %v3778
        %v3794 = vpack.c.b16 %v3781, %v3780
        %v3795 = vpack.c.b16 %v3783, %v3782
        %v3796 = vpack.c.b16 %v3785, %v3784
        %v3797 = vpack.c.b16 %v3787, %v3786
        %v3798 = vpack.c.b16 %v3789, %v3788
        %v3799 = vpack.c.b16 %v3791, %v3790
        %3808 = vmatprep.subr.bf16.mxu0 0
        %3809 = vmatpush1.bf16.msra.mxu0 %v3799
        %3810 = vmatprep.subr.bf16.mxu0 0
        %3811 = vmatpush1.bf16.msra.mxu0 %v3798
        %3812 = vmatprep.subr.bf16.mxu0 0
        %3813 = vmatpush1.bf16.msra.mxu0 %v3797
        %3814 = vmatprep.subr.bf16.mxu0 0
        %3815 = vmatpush1.bf16.msra.mxu0 %v3796
        %3816 = vmatprep.subr.bf16.mxu0 0
        %3817 = vmatpush1.bf16.msra.mxu0 %v3795
        %3818 = vmatprep.subr.bf16.mxu0 0
        %3819 = vmatpush1.bf16.msra.mxu0 %v3794
        %3820 = vmatprep.subr.bf16.mxu0 0
        %3821 = vmatpush1.bf16.msra.mxu0 %v3793
        %3822 = vmatprep.subr.bf16.mxu0 0
        %3823 = vmatpush1.bf16.msra.mxu0 %v3792
        %3824 = vmatprep.subr.bf16.mxu0 0
        %3825 = vmatpush2.bf16.msra.mxu0 0
        %3826 = vmatprep.subr.bf16.mxu0 0
        %3827 = vmatpush2.bf16.msra.mxu0 0
        %3828 = vmatprep.subr.bf16.mxu0 0
        %3829 = vmatpush2.bf16.msra.mxu0 0
        %3830 = vmatprep.subr.bf16.mxu0 0
        %3831 = vmatpush2.bf16.msra.mxu0 0
        %3832 = vmatprep.subr.bf16.mxu0 0
        %3833 = vmatpush2.bf16.msra.mxu0 0
        %3834 = vmatprep.subr.bf16.mxu0 0
        %3835 = vmatpush2.bf16.msra.mxu0 0
        %3836 = vmatprep.subr.bf16.mxu0 0
        %3837 = vmatpush2.bf16.msra.mxu0 0
        %3838 = vmatprep.subr.bf16.mxu0 0
        %3839 = vmatpush2.bf16.msra.mxu0 0
        %3840 = vmatprep.mubr.bf16.mxu0 0
        %3841 = vmatmul.mubr.bf16.gmra.mxu0 %v3758
        %v3842 = vpop.f32.mrf.mxu0
        %v3843 = vadd.f32 0.0, %v3842
        %v3844 = vpop.f32.mrf.mxu0
        %v3845 = vpop.f32.mrf.mxu0
        %v3846 = vadd.f32 0.0, %v3845
        %v3847 = vpop.f32.mrf.mxu0
        %3848 = vdwg.mxu0
        %v3849 = vadd.f32 %v3719, %v3843
        %v3850 = vadd.f32 %v3720, %v3846
        %v3851 = vld [vmem:[#allocation3] sm:$0xc]
        %s3852 = scalar_lea.vmem [#allocation12], 256
        %v3853 = vld [vmem:[%s3852] sm:$0xf]
        %v3854 = vld [vmem:[%s3852 + $0x4] sm:$0xf]
        %v3855 = vld [vmem:[%s3852 + $0x8] sm:$0xf]
        %v3856 = vld [vmem:[%s3852 + $0xc] sm:$0xf]
        %v3857 = vld [vmem:[%s3852 + $0x10] sm:$0xf]
        %v3858 = vld [vmem:[%s3852 + $0x14] sm:$0xf]
        %v3859 = vld [vmem:[%s3852 + $0x18] sm:$0xf]
        %v3860 = vld [vmem:[%s3852 + $0x1c] sm:$0xf]
        %v3861 = vld [vmem:[%s3852 + $0x20] sm:$0xf]
        %v3862 = vld [vmem:[%s3852 + $0x24] sm:$0xf]
        %v3863 = vld [vmem:[%s3852 + $0x28] sm:$0xf]
        %v3864 = vld [vmem:[%s3852 + $0x2c] sm:$0xf]
        %v3865 = vld [vmem:[%s3852 + $0x30] sm:$0xf]
        %v3866 = vld [vmem:[%s3852 + $0x34] sm:$0xf]
        %v3867 = vld [vmem:[%s3852 + $0x38] sm:$0xf]
        %v3868 = vld [vmem:[%s3852 + $0x3c] sm:$0xf]
        %v3870 = vunpack.c.l.b16 %v3851
        %v3871 = vpack.c.b16 %v3409, %v3870
        %v3872 = vrot.slane %v3871, 2
        %v3873 = vrot.slane %v3741, 2
        %v3874 = vsel %vm1056, %v3872, %v3873
        %v3892 = vunpack.c.l.b16 %v3853
        %v3893 = vunpack.c.l.b16 %v3854
        %v3894 = vunpack.c.l.b16 %v3855
        %v3895 = vunpack.c.l.b16 %v3856
        %v3896 = vunpack.c.l.b16 %v3857
        %v3897 = vunpack.c.l.b16 %v3858
        %v3898 = vunpack.c.l.b16 %v3859
        %v3899 = vunpack.c.l.b16 %v3860
        %v3900 = vunpack.c.l.b16 %v3861
        %v3901 = vunpack.c.l.b16 %v3862
        %v3902 = vunpack.c.l.b16 %v3863
        %v3903 = vunpack.c.l.b16 %v3864
        %v3904 = vunpack.c.l.b16 %v3865
        %v3905 = vunpack.c.l.b16 %v3866
        %v3906 = vunpack.c.l.b16 %v3867
        %v3907 = vunpack.c.l.b16 %v3868
        %v3908 = vpack.c.b16 %v3893, %v3892
        %v3909 = vpack.c.b16 %v3895, %v3894
        %v3910 = vpack.c.b16 %v3897, %v3896
        %v3911 = vpack.c.b16 %v3899, %v3898
        %v3912 = vpack.c.b16 %v3901, %v3900
        %v3913 = vpack.c.b16 %v3903, %v3902
        %v3914 = vpack.c.b16 %v3905, %v3904
        %v3915 = vpack.c.b16 %v3907, %v3906
        %3924 = vmatprep.subr.bf16.mxu0 0
        %3925 = vmatpush1.bf16.msra.mxu0 %v3915
        %3926 = vmatprep.subr.bf16.mxu0 0
        %3927 = vmatpush1.bf16.msra.mxu0 %v3914
        %3928 = vmatprep.subr.bf16.mxu0 0
        %3929 = vmatpush1.bf16.msra.mxu0 %v3913
        %3930 = vmatprep.subr.bf16.mxu0 0
        %3931 = vmatpush1.bf16.msra.mxu0 %v3912
        %3932 = vmatprep.subr.bf16.mxu0 0
        %3933 = vmatpush1.bf16.msra.mxu0 %v3911
        %3934 = vmatprep.subr.bf16.mxu0 0
        %3935 = vmatpush1.bf16.msra.mxu0 %v3910
        %3936 = vmatprep.subr.bf16.mxu0 0
        %3937 = vmatpush1.bf16.msra.mxu0 %v3909
        %3938 = vmatprep.subr.bf16.mxu0 0
        %3939 = vmatpush1.bf16.msra.mxu0 %v3908
        %3940 = vmatprep.subr.bf16.mxu0 0
        %3941 = vmatpush2.bf16.msra.mxu0 0
        %3942 = vmatprep.subr.bf16.mxu0 0
        %3943 = vmatpush2.bf16.msra.mxu0 0
        %3944 = vmatprep.subr.bf16.mxu0 0
        %3945 = vmatpush2.bf16.msra.mxu0 0
        %3946 = vmatprep.subr.bf16.mxu0 0
        %3947 = vmatpush2.bf16.msra.mxu0 0
        %3948 = vmatprep.subr.bf16.mxu0 0
        %3949 = vmatpush2.bf16.msra.mxu0 0
        %3950 = vmatprep.subr.bf16.mxu0 0
        %3951 = vmatpush2.bf16.msra.mxu0 0
        %3952 = vmatprep.subr.bf16.mxu0 0
        %3953 = vmatpush2.bf16.msra.mxu0 0
        %3954 = vmatprep.subr.bf16.mxu0 0
        %3955 = vmatpush2.bf16.msra.mxu0 0
        %3956 = vmatprep.mubr.bf16.mxu0 0
        %3957 = vmatmul.mubr.bf16.gmra.mxu0 %v3874
        %v3958 = vpop.f32.mrf.mxu0
        %v3959 = vadd.f32 0.0, %v3958
        %v3960 = vpop.f32.mrf.mxu0
        %v3961 = vpop.f32.mrf.mxu0
        %v3962 = vadd.f32 0.0, %v3961
        %v3963 = vpop.f32.mrf.mxu0
        %3964 = vdwg.mxu0
        %v3965 = vadd.f32 %v3849, %v3959
        %v3966 = vadd.f32 %v3850, %v3962
        %v3967 = vld [vmem:[%s10] sm:$0x1]
        %v3969 = vlaneseq
        %v3970 = vshrl.u32 %v3969, 7
        %v3971 = vsub.s32 0, %v3970
        %v3972 = vrot.slane %v3967, %v3971
        %v3974 = vadd.f32 %v3965, %v3972
        %v3975 = vadd.f32 %v3966, %v3972
        %3976 = vst [vmem:[%s476] sm:$0xff] %v3974
        %3977 = vst [vmem:[%s476 + $0x8] sm:$0xff] %v3975
        %s3978 = sand.u32 %s288, 1
        %s3979 = scalar_lea.sflag [#allocation6], %s3978
        %s3980 = sand.u32 %s288, 1
        %s3981 = smul.addr %s3980, 16
        %s3982 = scalar_lea.vmem [#allocation13], %s3981
        // Predicated region
        $region85: #{tpu_custom_call.1} parent=63 // pred_check
          %p3983 = pneg %p298
        $region86: #{tpu_custom_call.1} parent=63 // pred_check_branch
          %3985 = sbr.rel (%p3983) target = $region88
        $region87: #{tpu_custom_call.1} parent=63 // pred_region
          %s3986 = smul.u32 2, %s33
          %s3988 = ssub.s32 256, 256
          %3989 = vsyncadd %s3979, %s3988
          %s3990 = smul.addr %s32, 4
          %s3991 = sadd.s32 %s3986, %s3990
          %s3992 = smul.addr %s3991, 128
          %s3993 = scalar_lea.hbm %s11, %s3992
          %s3994 = sshll.u32 %s3982, 4
          %s3995 = int_to_ptr.vmem [resolvable:$true] %s3994
          %4000 = dma.vmem_to_hbm [thread:$0]  %s3995, 256, %s3993, %s3979, 128, 128, 8
        $region88: #{tpu_custom_call.1} parent=63 // pred_fallthru
          _
      $region64: #{tpu_custom_call.1} parent=5 // pred_fallthru
        _
      %p4001 = scmp.le.s32.totalorder 2, %s23
      // Predicated region
      $region89: #{tpu_custom_call.1} parent=5 // pred_check
        %p4002 = pneg %p4001
      $region90: #{tpu_custom_call.1} parent=5 // pred_check_branch
        %4004 = sbr.rel (%p4002) target = $region92
      $region91: #{tpu_custom_call.1} parent=5 // pred_region
        %s4005 = ssub.s32 %s23, 2
        // Predicated region
        $region93: #{tpu_custom_call.1} parent=91 // pred_check
          %p4006 = pneg %p304
        $region94: #{tpu_custom_call.1} parent=91 // pred_check_branch
          %4008 = sbr.rel (%p4006) target = $region96
        $region95: #{tpu_custom_call.1} parent=91 // pred_region
          %s4009 = sand.u32 %s289, 1
          %s4010 = scalar_lea.sflag [#allocation6], %s4009
          %s4011 = sand.u32 %s289, 1
          %s4012 = smul.addr %s4011, 16
          %s4013 = scalar_lea.vmem [#allocation13], %s4012
          %4014 = dma.done %s4010, 256
        $region96: #{tpu_custom_call.1} parent=91 // pred_fallthru
          _
      $region92: #{tpu_custom_call.1} parent=5 // pred_fallthru
        _
    $region6: #{tpu_custom_call.1} parent=1 // loop_footer
      %s27 = sadd.s32 1, %s23
    $region7: #{tpu_custom_call.1} parent=1 // loop_footer_branch
      %22 = sbr.rel target = $region3
    $region8: #{tpu_custom_call.1} parent=1 // loop_exit
      _
    %4015 = vsyncpa [#allocation5], 1
    %s4016 = scalar_lea.sflag [#allocation5], 1
    %4017 = vsyncpa %s4016, 1
    %4018 = vsyncpa [#allocation8], 1
    %4019 = vsyncpa [#allocation11], 1
    %4020 = vsyncpa [#allocation6], 1
    %s4021 = scalar_lea.sflag [#allocation6], 1
    %4022 = vsyncpa %s4021, 1

// kernel: tpu_custom_call.1
$region0: #{tpu_custom_call.1}
  #allocation0 [shape = 'u32[]', space=smem, size = 0x4, offset = 0x4, fixed_abs, tag = 'smem constant byte address 0x4 - core index']
  #allocation1 [shape = 'u32[144,128]{1,0:T(1,128)}', space=vmem, size = 0x12000, scoped, tag = 'internal scratch']
  #allocation2 [shape = 'bf16[32,128]{1,0:T(8,128)(2,1)}', space=vmem, size = 0x2000, scoped, tag = 'scratch operand']
  #allocation3 [shape = 'bf16[32,128]{1,0:T(8,128)(2,1)}', space=vmem, size = 0x2000, scoped, tag = 'scratch operand']
  %s0 = inlined_call_operand.vmem [shape: bf16[2,2,36,128], index: 0, kind: input, shape index: {}]
  %s1 = inlined_call_operand.hbm [shape: bf16[5,128,128], index: 1, kind: input, shape index: {}]
  %s2 = inlined_call_operand.vmem [shape: f32[1,128], index: 2, kind: input, shape index: {}]
  %s3 = inlined_call_operand.hbm [shape: bf16[5,128,128], index: 3, kind: input, shape index: {}]
  %s4 = inlined_call_operand.vmem [shape: f32[1,128], index: 4, kind: input, shape index: {}]
  %s5 = inlined_call_operand.hbm [shape: bf16[5,128,128], index: 5, kind: input, shape index: {}]
  %s6 = inlined_call_operand.vmem [shape: f32[1,128], index: 6, kind: input, shape index: {}]
  %s7 = inlined_call_operand.hbm [shape: bf16[5,128,128], index: 7, kind: input, shape index: {}]
  %s8 = inlined_call_operand.vmem [shape: f32[1,128], index: 8, kind: input, shape index: {}]
  %s9 = inlined_call_operand.hbm [shape: bf16[5,128,128], index: 9, kind: input, shape index: {}]
  %s10 = inlined_call_operand.vmem [shape: f32[1,128], index: 10, kind: input, shape index: {}]
  %s11 = inlined_call_operand.hbm [shape: f32[2,32,128], index: 11, kind: output, shape index: {}]
  %s12 = sld [smem:[#allocation0]]
  $region97: #{tpu_custom_call.1} parent=0
    _
  %s14 = ssub.s32 1, %s12
  %s15 = scalar_select 0, %s14, %s12
  $region1: #{tpu_custom_call.1} parent=0
    #allocation4 [shape = 'u8[163840]{0}', space=vmem, size = 0x28000, scoped, tag = 'input window, operand 1, single buffered']
    #allocation5 [shape = 's32[2]{0}', space=sflag, size = 0x8, scoped, tag = 'scoped memory for tpu_custom_call.1']
    #allocation6 [shape = 's32[2]{0}', space=sflag, size = 0x8, scoped, tag = 'scoped memory for tpu_custom_call.1']
    #allocation7 [shape = 'u8[163840]{0}', space=vmem, size = 0x28000, scoped, tag = 'input window, operand 3, single buffered']
    #allocation8 [shape = 's32[1]{0}', space=sflag, size = 0x4, scoped, tag = 'scoped memory for tpu_custom_call.1']
    #allocation9 [shape = 'u8[163840]{0}', space=vmem, size = 0x28000, scoped, tag = 'input window, operand 5, single buffered']
    #allocation10 [shape = 'u8[163840]{0}', space=vmem, size = 0x28000, scoped, tag = 'input window, operand 7, single buffered']
    #allocation11 [shape = 's32[1]{0}', space=sflag, size = 0x4, scoped, tag = 'scoped memory for tpu_custom_call.1']
    #allocation12 [shape = 'u8[163840]{0}', space=vmem, size = 0x28000, scoped, tag = 'input window, operand 9, single buffered']
    #allocation13 [shape = 'u8[16384]{0}', space=vmem, size = 0x4000, scoped, tag = 'output window, operand 0']
    %16 = vsyncpa [#allocation5], 0
    %17 = vsyncpa [#allocation8], 0
    %18 = vsyncpa [#allocation11], 0
    %19 = vsyncpa [#allocation6], 0
    %s20 = scalar_lea.sflag [#allocation6], 1
    %21 = vsyncpa %s20, 0
    loop: start=0, step=1, limit=6
    $region2: #{tpu_custom_call.1} parent=1 // loop_pre_header
      _
    $region3: #{tpu_custom_call.1} parent=1 // loop_header
      %s23 = sphi 0, %s27
      %p24 = scmp.ge.s32.totalorder %s23, 6
      %s30 = sphi 0, %s42
      %s31 = sphi 0, %s38
      %s32 = sphi 0, %s30
      %s33 = sphi 0, %s31
      %s34 = sphi 0, %s32
      %s35 = sphi 0, %s33
      %s47 = sphi 0, %s49
      %s50 = sphi 0, %s47
      %s51 = sphi 0, %s50
      %s67 = sphi 0, %s51
      %s71 = sphi 0, %s71
      %s73 = sphi 0, %s71
      %s74 = sphi 0, %s73
      %s88 = sphi 0, %s74
      %s92 = sphi 0, %s92
      %s94 = sphi 0, %s92
      %s95 = sphi 0, %s94
      %s109 = sphi 0, %s95
      %s113 = sphi 0, %s113
      %s115 = sphi 0, %s113
      %s116 = sphi 0, %s115
      %s130 = sphi 0, %s116
      %s134 = sphi 0, %s134
      %s136 = sphi 0, %s134
      %s137 = sphi 0, %s136
      %s151 = sphi 0, %s137
      %s155 = sphi 0, %s155
      %s157 = sphi 0, %s155
      %s158 = sphi 0, %s157
      %s172 = sphi 0, %s158
      %s176 = sphi 0, %s176
      %s178 = sphi 0, %s176
      %s179 = sphi 0, %s178
      %s193 = sphi 0, %s179
      %s197 = sphi 0, %s197
      %s199 = sphi 0, %s197
      %s200 = sphi 0, %s199
      %s214 = sphi 0, %s200
      %s218 = sphi 0, %s218
      %s220 = sphi 0, %s218
      %s221 = sphi 0, %s220
      %s235 = sphi 0, %s221
      %s239 = sphi 0, %s239
      %s241 = sphi 0, %s239
      %s242 = sphi 0, %s241
      %s256 = sphi 0, %s242
      %s260 = sphi 0, %s260
      %s262 = sphi 0, %s260
      %s263 = sphi 0, %s262
      %s277 = sphi 0, %s263
      %s285 = sphi 0, %s287
      %s288 = sphi 0, %s285
      %s289 = sphi 0, %s288
      %s305 = sphi 0, %s289
    $region4: #{tpu_custom_call.1} parent=1 // loop_header_branch
      %26 = sbr.rel (%p24) target = $region8
    $region5: #{tpu_custom_call.1} parent=1 // loop_body
      %s28 = ssub.s32 %s23, 1
      %s29 = ssub.s32 %s23, 2
      %s36 = sadd.s32 1, %s31
      %p37 = scmp.ge.s32.totalorder %s36, 2
      %s38 = scalar_select %p37, 0, %s36
      %s39 = sadd.s32 1, %s30
      %s40 = scalar_select %p37, %s39, %s30
      %p41 = scmp.ge.s32.totalorder %s40, 2
      %s42 = scalar_select %p41, 0, %s40
      %s43 = ssub.s32 %s30, %s42
      %s44 = ssub.s32 %s31, %s38
      %s45 = sor.u32 %s43, %s44
      %p46 = scmp.eq.s32.totalorder %s45, 0
      %s48 = sadd.s32 %s47, 1
      %s49 = scalar_select %p46, %s47, %s48
      %p52 = pneg %p46
      %p53 = scmp.eq.s32.totalorder %s23, 3
      %p54 = por %p52, %p53
      %p55 = scmp.ne.s32.totalorder %s47, %s50
      %p56 = scmp.eq.s32.totalorder %s23, 0
      %p57 = por %p55, %p56
      %p58 = scmp.ne.s32.totalorder %s47, %s50
      %p59 = scmp.eq.s32.totalorder %s28, 3
      %p60 = por %p58, %p59
      %p61 = scmp.ne.s32.totalorder %s50, %s51
      %p62 = scmp.eq.s32.totalorder %s28, 0
      %p63 = por %p61, %p62
      %p64 = scmp.ne.s32.totalorder %s50, %s51
      %p65 = scmp.eq.s32.totalorder %s29, 3
      %p66 = por %p64, %p65
      %p68 = scmp.ne.s32.totalorder %s51, %s67
      %p69 = scmp.eq.s32.totalorder %s29, 0
      %p70 = por %p68, %p69
      %s72 = sadd.s32 %s71, 1
      %p75 = scmp.eq.s32.totalorder %s23, 3
      %p76 = scmp.ne.s32.totalorder %s71, %s73
      %p77 = scmp.eq.s32.totalorder %s23, 0
      %p78 = por %p76, %p77
      %p79 = scmp.ne.s32.totalorder %s71, %s73
      %p80 = scmp.eq.s32.totalorder %s28, 3
      %p81 = por %p79, %p80
      %p82 = scmp.ne.s32.totalorder %s73, %s74
      %p83 = scmp.eq.s32.totalorder %s28, 0
      %p84 = por %p82, %p83
      %p85 = scmp.ne.s32.totalorder %s73, %s74
      %p86 = scmp.eq.s32.totalorder %s29, 3
      %p87 = por %p85, %p86
      %p89 = scmp.ne.s32.totalorder %s74, %s88
      %p90 = scmp.eq.s32.totalorder %s29, 0
      %p91 = por %p89, %p90
      %s93 = sadd.s32 %s92, 1
      %p96 = scmp.eq.s32.totalorder %s23, 3
      %p97 = scmp.ne.s32.totalorder %s92, %s94
      %p98 = scmp.eq.s32.totalorder %s23, 0
      %p99 = por %p97, %p98
      %p100 = scmp.ne.s32.totalorder %s92, %s94
      %p101 = scmp.eq.s32.totalorder %s28, 3
      %p102 = por %p100, %p101
      %p103 = scmp.ne.s32.totalorder %s94, %s95
      %p104 = scmp.eq.s32.totalorder %s28, 0
      %p105 = por %p103, %p104
      %p106 = scmp.ne.s32.totalorder %s94, %s95
      %p107 = scmp.eq.s32.totalorder %s29, 3
      %p108 = por %p106, %p107
      %p110 = scmp.ne.s32.totalorder %s95, %s109
      %p111 = scmp.eq.s32.totalorder %s29, 0
      %p112 = por %p110, %p111
      %s114 = sadd.s32 %s113, 1
      %p117 = scmp.eq.s32.totalorder %s23, 3
      %p118 = scmp.ne.s32.totalorder %s113, %s115
      %p119 = scmp.eq.s32.totalorder %s23, 0
      %p120 = por %p118, %p119
      %p121 = scmp.ne.s32.totalorder %s113, %s115
      %p122 = scmp.eq.s32.totalorder %s28, 3
      %p123 = por %p121, %p122
      %p124 = scmp.ne.s32.totalorder %s115, %s116
      %p125 = scmp.eq.s32.totalorder %s28, 0
      %p126 = por %p124, %p125
      %p127 = scmp.ne.s32.totalorder %s115, %s116
      %p128 = scmp.eq.s32.totalorder %s29, 3
      %p129 = por %p127, %p128
      %p131 = scmp.ne.s32.totalorder %s116, %s130
      %p132 = scmp.eq.s32.totalorder %s29, 0
      %p133 = por %p131, %p132
      %s135 = sadd.s32 %s134, 1
      %p138 = scmp.eq.s32.totalorder %s23, 3
      %p139 = scmp.ne.s32.totalorder %s134, %s136
      %p140 = scmp.eq.s32.totalorder %s23, 0
      %p141 = por %p139, %p140
      %p142 = scmp.ne.s32.totalorder %s134, %s136
      %p143 = scmp.eq.s32.totalorder %s28, 3
      %p144 = por %p142, %p143
      %p145 = scmp.ne.s32.totalorder %s136, %s137
      %p146 = scmp.eq.s32.totalorder %s28, 0
      %p147 = por %p145, %p146
      %p148 = scmp.ne.s32.totalorder %s136, %s137
      %p149 = scmp.eq.s32.totalorder %s29, 3
      %p150 = por %p148, %p149
      %p152 = scmp.ne.s32.totalorder %s137, %s151
      %p153 = scmp.eq.s32.totalorder %s29, 0
      %p154 = por %p152, %p153
      %s156 = sadd.s32 %s155, 1
      %p159 = scmp.eq.s32.totalorder %s23, 3
      %p160 = scmp.ne.s32.totalorder %s155, %s157
      %p161 = scmp.eq.s32.totalorder %s23, 0
      %p162 = por %p160, %p161
      %p163 = scmp.ne.s32.totalorder %s155, %s157
      %p164 = scmp.eq.s32.totalorder %s28, 3
      %p165 = por %p163, %p164
      %p166 = scmp.ne.s32.totalorder %s157, %s158
      %p167 = scmp.eq.s32.totalorder %s28, 0
      %p168 = por %p166, %p167
      %p169 = scmp.ne.s32.totalorder %s157, %s158
      %p170 = scmp.eq.s32.totalorder %s29, 3
      %p171 = por %p169, %p170
      %p173 = scmp.ne.s32.totalorder %s158, %s172
      %p174 = scmp.eq.s32.totalorder %s29, 0
      %p175 = por %p173, %p174
      %s177 = sadd.s32 %s176, 1
      %p180 = scmp.eq.s32.totalorder %s23, 3
      %p181 = scmp.ne.s32.totalorder %s176, %s178
      %p182 = scmp.eq.s32.totalorder %s23, 0
      %p183 = por %p181, %p182
      %p184 = scmp.ne.s32.totalorder %s176, %s178
      %p185 = scmp.eq.s32.totalorder %s28, 3
      %p186 = por %p184, %p185
      %p187 = scmp.ne.s32.totalorder %s178, %s179
      %p188 = scmp.eq.s32.totalorder %s28, 0
      %p189 = por %p187, %p188
      %p190 = scmp.ne.s32.totalorder %s178, %s179
      %p191 = scmp.eq.s32.totalorder %s29, 3
      %p192 = por %p190, %p191
      %p194 = scmp.ne.s32.totalorder %s179, %s193
      %p195 = scmp.eq.s32.totalorder %s29, 0
      %p196 = por %p194, %p195
      %s198 = sadd.s32 %s197, 1
      %p201 = scmp.eq.s32.totalorder %s23, 3
      %p202 = scmp.ne.s32.totalorder %s197, %s199
      %p203 = scmp.eq.s32.totalorder %s23, 0
      %p204 = por %p202, %p203
      %p205 = scmp.ne.s32.totalorder %s197, %s199
      %p206 = scmp.eq.s32.totalorder %s28, 3
      %p207 = por %p205, %p206
      %p208 = scmp.ne.s32.totalorder %s199, %s200
      %p209 = scmp.eq.s32.totalorder %s28, 0
      %p210 = por %p208, %p209
      %p211 = scmp.ne.s32.totalorder %s199, %s200
      %p212 = scmp.eq.s32.totalorder %s29, 3
      %p213 = por %p211, %p212
      %p215 = scmp.ne.s32.totalorder %s200, %s214
      %p216 = scmp.eq.s32.totalorder %s29, 0
      %p217 = por %p215, %p216
      %s219 = sadd.s32 %s218, 1
      %p222 = scmp.eq.s32.totalorder %s23, 3
      %p223 = scmp.ne.s32.totalorder %s218, %s220
      %p224 = scmp.eq.s32.totalorder %s23, 0
      %p225 = por %p223, %p224
      %p226 = scmp.ne.s32.totalorder %s218, %s220
      %p227 = scmp.eq.s32.totalorder %s28, 3
      %p228 = por %p226, %p227
      %p229 = scmp.ne.s32.totalorder %s220, %s221
      %p230 = scmp.eq.s32.totalorder %s28, 0
      %p231 = por %p229, %p230
      %p232 = scmp.ne.s32.totalorder %s220, %s221
      %p233 = scmp.eq.s32.totalorder %s29, 3
      %p234 = por %p232, %p233
      %p236 = scmp.ne.s32.totalorder %s221, %s235
      %p237 = scmp.eq.s32.totalorder %s29, 0
      %p238 = por %p236, %p237
      %s240 = sadd.s32 %s239, 1
      %p243 = scmp.eq.s32.totalorder %s23, 3
      %p244 = scmp.ne.s32.totalorder %s239, %s241
      %p245 = scmp.eq.s32.totalorder %s23, 0
      %p246 = por %p244, %p245
      %p247 = scmp.ne.s32.totalorder %s239, %s241
      %p248 = scmp.eq.s32.totalorder %s28, 3
      %p249 = por %p247, %p248
      %p250 = scmp.ne.s32.totalorder %s241, %s242
      %p251 = scmp.eq.s32.totalorder %s28, 0
      %p252 = por %p250, %p251
      %p253 = scmp.ne.s32.totalorder %s241, %s242
      %p254 = scmp.eq.s32.totalorder %s29, 3
      %p255 = por %p253, %p254
      %p257 = scmp.ne.s32.totalorder %s242, %s256
      %p258 = scmp.eq.s32.totalorder %s29, 0
      %p259 = por %p257, %p258
      %s261 = sadd.s32 %s260, 1
      %p264 = scmp.eq.s32.totalorder %s23, 3
      %p265 = scmp.ne.s32.totalorder %s260, %s262
      %p266 = scmp.eq.s32.totalorder %s23, 0
      %p267 = por %p265, %p266
      %p268 = scmp.ne.s32.totalorder %s260, %s262
      %p269 = scmp.eq.s32.totalorder %s28, 3
      %p270 = por %p268, %p269
      %p271 = scmp.ne.s32.totalorder %s262, %s263
      %p272 = scmp.eq.s32.totalorder %s28, 0
      %p273 = por %p271, %p272
      %p274 = scmp.ne.s32.totalorder %s262, %s263
      %p275 = scmp.eq.s32.totalorder %s29, 3
      %p276 = por %p274, %p275
      %p278 = scmp.ne.s32.totalorder %s263, %s277
      %p279 = scmp.eq.s32.totalorder %s29, 0
      %p280 = por %p278, %p279
      %s281 = ssub.s32 %s30, %s42
      %s282 = ssub.s32 %s31, %s38
      %s283 = sor.u32 %s281, %s282
      %p284 = scmp.eq.s32.totalorder %s283, 0
      %s286 = sadd.s32 %s285, 1
      %s287 = scalar_select %p284, %s285, %s286
      %p290 = pneg %p284
      %p291 = scmp.eq.s32.totalorder %s23, 3
      %p292 = por %p290, %p291
      %p293 = scmp.ne.s32.totalorder %s285, %s288
      %p294 = scmp.eq.s32.totalorder %s23, 0
      %p295 = por %p293, %p294
      %p296 = scmp.ne.s32.totalorder %s285, %s288
      %p297 = scmp.eq.s32.totalorder %s28, 3
      %p298 = por %p296, %p297
      %p299 = scmp.ne.s32.totalorder %s288, %s289
      %p300 = scmp.eq.s32.totalorder %s28, 0
      %p301 = por %p299, %p300
      %p302 = scmp.ne.s32.totalorder %s288, %s289
      %p303 = scmp.eq.s32.totalorder %s29, 3
      %p304 = por %p302, %p303
      %p306 = scmp.ne.s32.totalorder %s289, %s305
      %p307 = scmp.eq.s32.totalorder %s29, 0
      %p308 = por %p306, %p307
      %p309 = scmp.le.s32.totalorder 1, %s23
      %p310 = scmp.lt.s32.totalorder %s23, 5
      %p311 = pnand %p309, %p310
      %p312 = pneg %p311
      // Predicated region
      $region9: #{tpu_custom_call.1} parent=5 // pred_check
        _
      $region10: #{tpu_custom_call.1} parent=5 // pred_check_branch
        %314 = sbr.rel (%p311) target = $region12
      $region11: #{tpu_custom_call.1} parent=5 // pred_region
        %s315 = ssub.s32 %s23, 1
        // Predicated region
        $region13: #{tpu_custom_call.1} parent=11 // pred_check
          %p316 = pneg %p84
        $region14: #{tpu_custom_call.1} parent=11 // pred_check_branch
          %318 = sbr.rel (%p316) target = $region16
        $region15: #{tpu_custom_call.1} parent=11 // pred_region
          %s320 = ssub.s32 5120, 5120
          %321 = vsyncadd [#allocation5], %s320
          %s322 = sshll.u32 [#allocation4], 4
          %s323 = int_to_ptr.vmem [resolvable:$true] %s322
          %328 = dma.hbm_to_vmem [thread:$0]  %s1, 5120, %s323, [#allocation5], 64, 64, 4
        $region16: #{tpu_custom_call.1} parent=11 // pred_fallthru
          _
        // Predicated region
        $region17: #{tpu_custom_call.1} parent=11 // pred_check
          %p329 = pneg %p105
        $region18: #{tpu_custom_call.1} parent=11 // pred_check_branch
          %331 = sbr.rel (%p329) target = $region20
        $region19: #{tpu_custom_call.1} parent=11 // pred_region
          _
        $region20: #{tpu_custom_call.1} parent=11 // pred_fallthru
          _
        // Predicated region
        $region21: #{tpu_custom_call.1} parent=11 // pred_check
          %p332 = pneg %p126
        $region22: #{tpu_custom_call.1} parent=11 // pred_check_branch
          %334 = sbr.rel (%p332) target = $region24
        $region23: #{tpu_custom_call.1} parent=11 // pred_region
          %s336 = ssub.s32 5120, 5120
          %337 = vsyncadd [#allocation8], %s336
          %s338 = sshll.u32 [#allocation7], 4
          %s339 = int_to_ptr.vmem [resolvable:$true] %s338
          %344 = dma.hbm_to_vmem [thread:$0]  %s3, 5120, %s339, [#allocation8], 64, 64, 4
        $region24: #{tpu_custom_call.1} parent=11 // pred_fallthru
          _
        // Predicated region
        $region25: #{tpu_custom_call.1} parent=11 // pred_check
          %p345 = pneg %p147
        $region26: #{tpu_custom_call.1} parent=11 // pred_check_branch
          %347 = sbr.rel (%p345) target = $region28
        $region27: #{tpu_custom_call.1} parent=11 // pred_region
          _
        $region28: #{tpu_custom_call.1} parent=11 // pred_fallthru
          _
        // Predicated region
        $region29: #{tpu_custom_call.1} parent=11 // pred_check
          %p348 = pneg %p168
        $region30: #{tpu_custom_call.1} parent=11 // pred_check_branch
          %350 = sbr.rel (%p348) target = $region32
        $region31: #{tpu_custom_call.1} parent=11 // pred_region
          %s352 = ssub.s32 5120, 5120
          %353 = vsyncadd [#allocation8], %s352
          %s354 = sshll.u32 [#allocation9], 4
          %s355 = int_to_ptr.vmem [resolvable:$true] %s354
          %360 = dma.hbm_to_vmem [thread:$0]  %s5, 5120, %s355, [#allocation8], 64, 64, 4
        $region32: #{tpu_custom_call.1} parent=11 // pred_fallthru
          _
        // Predicated region
        $region33: #{tpu_custom_call.1} parent=11 // pred_check
          %p361 = pneg %p189
        $region34: #{tpu_custom_call.1} parent=11 // pred_check_branch
          %363 = sbr.rel (%p361) target = $region36
        $region35: #{tpu_custom_call.1} parent=11 // pred_region
          _
        $region36: #{tpu_custom_call.1} parent=11 // pred_fallthru
          _
        // Predicated region
        $region37: #{tpu_custom_call.1} parent=11 // pred_check
          %p364 = pneg %p210
        $region38: #{tpu_custom_call.1} parent=11 // pred_check_branch
          %366 = sbr.rel (%p364) target = $region40
        $region39: #{tpu_custom_call.1} parent=11 // pred_region
          %s368 = ssub.s32 5120, 5120
          %369 = vsyncadd [#allocation11], %s368
          %s370 = sshll.u32 [#allocation10], 4
          %s371 = int_to_ptr.vmem [resolvable:$true] %s370
          %376 = dma.hbm_to_vmem [thread:$0]  %s7, 5120, %s371, [#allocation11], 64, 64, 4
        $region40: #{tpu_custom_call.1} parent=11 // pred_fallthru
          _
        // Predicated region
        $region41: #{tpu_custom_call.1} parent=11 // pred_check
          %p377 = pneg %p231
        $region42: #{tpu_custom_call.1} parent=11 // pred_check_branch
          %379 = sbr.rel (%p377) target = $region44
        $region43: #{tpu_custom_call.1} parent=11 // pred_region
          _
        $region44: #{tpu_custom_call.1} parent=11 // pred_fallthru
          _
        // Predicated region
        $region45: #{tpu_custom_call.1} parent=11 // pred_check
          %p380 = pneg %p252
        $region46: #{tpu_custom_call.1} parent=11 // pred_check_branch
          %382 = sbr.rel (%p380) target = $region48
        $region47: #{tpu_custom_call.1} parent=11 // pred_region
          %s384 = ssub.s32 5120, 5120
          %385 = vsyncadd [#allocation11], %s384
          %s386 = sshll.u32 [#allocation12], 4
          %s387 = int_to_ptr.vmem [resolvable:$true] %s386
          %392 = dma.hbm_to_vmem [thread:$0]  %s9, 5120, %s387, [#allocation11], 64, 64, 4
        $region48: #{tpu_custom_call.1} parent=11 // pred_fallthru
          _
        // Predicated region
        $region49: #{tpu_custom_call.1} parent=11 // pred_check
          %p393 = pneg %p273
        $region50: #{tpu_custom_call.1} parent=11 // pred_check_branch
          %395 = sbr.rel (%p393) target = $region52
        $region51: #{tpu_custom_call.1} parent=11 // pred_region
          _
        $region52: #{tpu_custom_call.1} parent=11 // pred_fallthru
          _
      $region12: #{tpu_custom_call.1} parent=5 // pred_fallthru
        _
      %p396 = scmp.lt.s32.totalorder %s23, 4
      // Predicated region
      $region53: #{tpu_custom_call.1} parent=5 // pred_check
        %p397 = pneg %p396
      $region54: #{tpu_custom_call.1} parent=5 // pred_check_branch
        %399 = sbr.rel (%p397) target = $region56
      $region55: #{tpu_custom_call.1} parent=5 // pred_region
        // Predicated region
        $region57: #{tpu_custom_call.1} parent=55 // pred_check
          %p400 = pneg %p57
        $region58: #{tpu_custom_call.1} parent=55 // pred_check_branch
          %402 = sbr.rel (%p400) target = $region60
        $region59: #{tpu_custom_call.1} parent=55 // pred_region
          %p403 = scmp.lt.s32.totalorder %s30, 1
          %s404 = scalar_select %p403, %s30, 1
          %p405 = scmp.lt.s32.totalorder %s31, 1
          %s406 = scalar_select %p405, %s31, 1
          %s407 = smul.addr %s406, 5
          %s408 = smul.addr %s404, 10
          %s409 = sadd.s32 %s407, %s408
          %s410 = smul.addr %s409, 4
          %s411 = scalar_lea.vmem %s0, %s410
        $region60: #{tpu_custom_call.1} parent=55 // pred_fallthru
          _
      $region56: #{tpu_custom_call.1} parent=5 // pred_fallthru
        _
      %p412 = scmp.le.s32.totalorder 1, %s23
      %p413 = scmp.lt.s32.totalorder %s23, 5
      %p414 = pnand %p412, %p413
      %p415 = pneg %p414
      // Predicated region
      $region61: #{tpu_custom_call.1} parent=5 // pred_check
        _
      $region62: #{tpu_custom_call.1} parent=5 // pred_check_branch
        %417 = sbr.rel (%p414) target = $region64
      $region63: #{tpu_custom_call.1} parent=5 // pred_region
        %s418 = ssub.s32 %s23, 1
        // Predicated region
        $region65: #{tpu_custom_call.1} parent=63 // pred_check
          %p419 = pneg %p84
        $region66: #{tpu_custom_call.1} parent=63 // pred_check_branch
          %421 = sbr.rel (%p419) target = $region68
        $region67: #{tpu_custom_call.1} parent=63 // pred_region
          %422 = dma.done [#allocation5], 5120
        $region68: #{tpu_custom_call.1} parent=63 // pred_fallthru
          _
        // Predicated region
        $region69: #{tpu_custom_call.1} parent=63 // pred_check
          %p423 = pneg %p126
        $region70: #{tpu_custom_call.1} parent=63 // pred_check_branch
          %425 = sbr.rel (%p423) target = $region72
        $region71: #{tpu_custom_call.1} parent=63 // pred_region
          %426 = dma.done [#allocation8], 5120
        $region72: #{tpu_custom_call.1} parent=63 // pred_fallthru
          _
        // Predicated region
        $region73: #{tpu_custom_call.1} parent=63 // pred_check
          %p427 = pneg %p168
        $region74: #{tpu_custom_call.1} parent=63 // pred_check_branch
          %429 = sbr.rel (%p427) target = $region76
        $region75: #{tpu_custom_call.1} parent=63 // pred_region
          %430 = dma.done [#allocation8], 5120
        $region76: #{tpu_custom_call.1} parent=63 // pred_fallthru
          _
        // Predicated region
        $region77: #{tpu_custom_call.1} parent=63 // pred_check
          %p431 = pneg %p210
        $region78: #{tpu_custom_call.1} parent=63 // pred_check_branch
          %433 = sbr.rel (%p431) target = $region80
        $region79: #{tpu_custom_call.1} parent=63 // pred_region
          %434 = dma.done [#allocation11], 5120
        $region80: #{tpu_custom_call.1} parent=63 // pred_fallthru
          _
        // Predicated region
        $region81: #{tpu_custom_call.1} parent=63 // pred_check
          %p435 = pneg %p252
        $region82: #{tpu_custom_call.1} parent=63 // pred_check_branch
          %437 = sbr.rel (%p435) target = $region84
        $region83: #{tpu_custom_call.1} parent=63 // pred_region
          %438 = dma.done [#allocation11], 5120
        $region84: #{tpu_custom_call.1} parent=63 // pred_fallthru
          _
        %p439 = scmp.lt.s32.totalorder %s32, 1
        %s440 = scalar_select %p439, %s32, 1
        %p441 = scmp.lt.s32.totalorder %s33, 1
        %s442 = scalar_select %p441, %s33, 1
        %s443 = smul.addr %s442, 5
        %s444 = smul.addr %s440, 10
        %s445 = sadd.s32 %s443, %s444
        %s446 = smul.addr %s445, 4
        %s447 = scalar_lea.vmem %s0, %s446
        %p448 = pneg %p63
        %p449 = pneg %p60
        %p450 = pneg %p84
        %p451 = pneg %p81
        %p452 = pneg %p105
        %p453 = pneg %p102
        %p454 = pneg %p126
        %p455 = pneg %p123
        %p456 = pneg %p147
        %p457 = pneg %p144
        %p458 = pneg %p168
        %p459 = pneg %p165
        %p460 = pneg %p189
        %p461 = pneg %p186
        %p462 = pneg %p210
        %p463 = pneg %p207
        %p464 = pneg %p231
        %p465 = pneg %p228
        %p466 = pneg %p252
        %p467 = pneg %p249
        %p468 = pneg %p273
        %p469 = pneg %p270
        %p470 = pneg %p301
        %p471 = pneg %p298
        %s472 = sand.u32 %s288, 1
        %s473 = scalar_lea.sflag [#allocation6], %s472
        %s474 = sand.u32 %s288, 1
        %s475 = smul.addr %s474, 16
        %s476 = scalar_lea.vmem [#allocation13], %s475
        %p477 = scmp.lt.s32.totalorder %s32, 1
        %s478 = scalar_select %p477, %s32, 1
        %p479 = scmp.lt.s32.totalorder %s33, 1
        %s480 = scalar_select %p479, %s33, 1
        %s481 = smul.addr %s480, 5
        %s482 = smul.addr %s478, 10
        %s483 = sadd.s32 %s481, %s482
        %s484 = smul.addr %s483, 4
        %s485 = scalar_lea.vmem %s0, %s484
        %s486 = smul.u32 2, %s33
        %s488 = smul.u32 %s33, 16
        %v489 = vld [vmem:[%s485] sm:$0xf]
        %v490 = vld [vmem:[%s485 + $0x4] sm:$0xf]
        %v491 = vld [vmem:[%s485 + $0x8] sm:$0xf]
        %v492 = vld [vmem:[%s485 + $0xc] sm:$0xf]
        %v493 = vld [vmem:[#allocation4] sm:$0xf]
        %v494 = vld [vmem:[#allocation4 + $0x4] sm:$0xf]
        %v495 = vld [vmem:[#allocation4 + $0x8] sm:$0xf]
        %v496 = vld [vmem:[#allocation4 + $0xc] sm:$0xf]
        %v497 = vld [vmem:[#allocation4 + $0x10] sm:$0xf]
        %v498 = vld [vmem:[#allocation4 + $0x14] sm:$0xf]
        %v499 = vld [vmem:[#allocation4 + $0x18] sm:$0xf]
        %v500 = vld [vmem:[#allocation4 + $0x1c] sm:$0xf]
        %v501 = vld [vmem:[#allocation4 + $0x20] sm:$0xf]
        %v502 = vld [vmem:[#allocation4 + $0x24] sm:$0xf]
        %v503 = vld [vmem:[#allocation4 + $0x28] sm:$0xf]
        %v504 = vld [vmem:[#allocation4 + $0x2c] sm:$0xf]
        %v505 = vld [vmem:[#allocation4 + $0x30] sm:$0xf]
        %v506 = vld [vmem:[#allocation4 + $0x34] sm:$0xf]
        %v507 = vld [vmem:[#allocation4 + $0x38] sm:$0xf]
        %v508 = vld [vmem:[#allocation4 + $0x3c] sm:$0xf]
        %v509 = vld [vmem:[%s485 + $0x10] sm:$0x1]
        %s510 = scalar_lea.vmem [#allocation4], 64
        %v511 = vld [vmem:[%s510] sm:$0xf]
        %v512 = vld [vmem:[%s510 + $0x4] sm:$0xf]
        %v513 = vld [vmem:[%s510 + $0x8] sm:$0xf]
        %v514 = vld [vmem:[%s510 + $0xc] sm:$0xf]
        %v515 = vld [vmem:[%s510 + $0x10] sm:$0xf]
        %v516 = vld [vmem:[%s510 + $0x14] sm:$0xf]
        %v517 = vld [vmem:[%s510 + $0x18] sm:$0xf]
        %v518 = vld [vmem:[%s510 + $0x1c] sm:$0xf]
        %v519 = vld [vmem:[%s510 + $0x20] sm:$0xf]
        %v520 = vld [vmem:[%s510 + $0x24] sm:$0xf]
        %v521 = vld [vmem:[%s510 + $0x28] sm:$0xf]
        %v522 = vld [vmem:[%s510 + $0x2c] sm:$0xf]
        %v523 = vld [vmem:[%s510 + $0x30] sm:$0xf]
        %v524 = vld [vmem:[%s510 + $0x34] sm:$0xf]
        %v525 = vld [vmem:[%s510 + $0x38] sm:$0xf]
        %v526 = vld [vmem:[%s510 + $0x3c] sm:$0xf]
        %v532 = vunpack.c.l.b16 %v489
        %v533 = vunpack.c.l.b16 %v490
        %v534 = vunpack.c.l.b16 %v491
        %v535 = vunpack.c.l.b16 %v492
        %v536 = vunpack.c.l.b16 %v509
        %v537 = vpack.c.b16 %v533, %v532
        %v538 = vpack.c.b16 %v535, %v534
        %v539 = vpack.c.b16 %v536, %v536
        %vm540 = vsmask.f32 7424
        %v542 = vshrl.u32 %v537, 16
        %v544 = vshll.u32 %v537, 16
        %v546 = vrot.slane %v544, 1
        %v547 = vor.u32 %v542, %v546
        %v549 = vshll.u32 %v538, 16
        %v551 = vrot.slane %v549, 1
        %v552 = vsel %vm540, %v547, %v551
        %v553 = vshrl.u32 %v538, 16
        %v555 = vor.u32 %v553, %v551
        %v557 = vshll.u32 %v539, 16
        %v559 = vrot.slane %v557, 1
        %v560 = vsel %vm540, %v555, %v559
        %v579 = vunpack.c.l.b16 %v511
        %v580 = vunpack.c.l.b16 %v512
        %v581 = vunpack.c.l.b16 %v513
        %v582 = vunpack.c.l.b16 %v514
        %v583 = vunpack.c.l.b16 %v515
        %v584 = vunpack.c.l.b16 %v516
        %v585 = vunpack.c.l.b16 %v517
        %v586 = vunpack.c.l.b16 %v518
        %v587 = vunpack.c.l.b16 %v519
        %v588 = vunpack.c.l.b16 %v520
        %v589 = vunpack.c.l.b16 %v521
        %v590 = vunpack.c.l.b16 %v522
        %v591 = vunpack.c.l.b16 %v523
        %v592 = vunpack.c.l.b16 %v524
        %v593 = vunpack.c.l.b16 %v525
        %v594 = vunpack.c.l.b16 %v526
        %v595 = vpack.c.b16 %v580, %v579
        %v596 = vpack.c.b16 %v582, %v581
        %v597 = vpack.c.b16 %v584, %v583
        %v598 = vpack.c.b16 %v586, %v585
        %v599 = vpack.c.b16 %v588, %v587
        %v600 = vpack.c.b16 %v590, %v589
        %v601 = vpack.c.b16 %v592, %v591
        %v602 = vpack.c.b16 %v594, %v593
        %611 = vmatprep.subr.bf16.mxu0 0
        %612 = vmatpush1.bf16.msra.mxu0 %v602
        %613 = vmatprep.subr.bf16.mxu0 0
        %614 = vmatpush1.bf16.msra.mxu0 %v601
        %615 = vmatprep.subr.bf16.mxu0 0
        %616 = vmatpush1.bf16.msra.mxu0 %v600
        %617 = vmatprep.subr.bf16.mxu0 0
        %618 = vmatpush1.bf16.msra.mxu0 %v599
        %619 = vmatprep.subr.bf16.mxu0 0
        %620 = vmatpush1.bf16.msra.mxu0 %v598
        %621 = vmatprep.subr.bf16.mxu0 0
        %622 = vmatpush1.bf16.msra.mxu0 %v597
        %623 = vmatprep.subr.bf16.mxu0 0
        %624 = vmatpush1.bf16.msra.mxu0 %v596
        %625 = vmatprep.subr.bf16.mxu0 0
        %626 = vmatpush1.bf16.msra.mxu0 %v595
        %627 = vmatprep.subr.bf16.mxu0 0
        %628 = vmatpush2.bf16.msra.mxu0 0
        %629 = vmatprep.subr.bf16.mxu0 0
        %630 = vmatpush2.bf16.msra.mxu0 0
        %631 = vmatprep.subr.bf16.mxu0 0
        %632 = vmatpush2.bf16.msra.mxu0 0
        %633 = vmatprep.subr.bf16.mxu0 0
        %634 = vmatpush2.bf16.msra.mxu0 0
        %635 = vmatprep.subr.bf16.mxu0 0
        %636 = vmatpush2.bf16.msra.mxu0 0
        %637 = vmatprep.subr.bf16.mxu0 0
        %638 = vmatpush2.bf16.msra.mxu0 0
        %639 = vmatprep.subr.bf16.mxu0 0
        %640 = vmatpush2.bf16.msra.mxu0 0
        %641 = vmatprep.subr.bf16.mxu0 0
        %642 = vmatpush2.bf16.msra.mxu0 0
        %643 = vmatprep.mubr.bf16.mxu0 0
        %644 = vmatmul.mubr.bf16.gmra.mxu0 %v552
        %v645 = vpop.f32.mrf.mxu0
        %v646 = vadd.f32 0.0, %v645
        %v647 = vpop.f32.mrf.mxu0
        %v648 = vpop.f32.mrf.mxu0
        %v649 = vadd.f32 0.0, %v648
        %v650 = vpop.f32.mrf.mxu0
        %651 = vmatprep.mubr.bf16.mxu0 0
        %652 = vmatmul.mubr.bf16.gmra.mxu0 %v560
        %v653 = vpop.f32.mrf.mxu0
        %v654 = vadd.f32 0.0, %v653
        %v655 = vpop.f32.mrf.mxu0
        %v656 = vpop.f32.mrf.mxu0
        %v657 = vadd.f32 0.0, %v656
        %v658 = vpop.f32.mrf.mxu0
        %659 = vdwg.mxu0
        %v678 = vunpack.c.l.b16 %v493
        %v679 = vunpack.c.l.b16 %v494
        %v680 = vunpack.c.l.b16 %v495
        %v681 = vunpack.c.l.b16 %v496
        %v682 = vunpack.c.l.b16 %v497
        %v683 = vunpack.c.l.b16 %v498
        %v684 = vunpack.c.l.b16 %v499
        %v685 = vunpack.c.l.b16 %v500
        %v686 = vunpack.c.l.b16 %v501
        %v687 = vunpack.c.l.b16 %v502
        %v688 = vunpack.c.l.b16 %v503
        %v689 = vunpack.c.l.b16 %v504
        %v690 = vunpack.c.l.b16 %v505
        %v691 = vunpack.c.l.b16 %v506
        %v692 = vunpack.c.l.b16 %v507
        %v693 = vunpack.c.l.b16 %v508
        %v694 = vpack.c.b16 %v679, %v678
        %v695 = vpack.c.b16 %v681, %v680
        %v696 = vpack.c.b16 %v683, %v682
        %v697 = vpack.c.b16 %v685, %v684
        %v698 = vpack.c.b16 %v687, %v686
        %v699 = vpack.c.b16 %v689, %v688
        %v700 = vpack.c.b16 %v691, %v690
        %v701 = vpack.c.b16 %v693, %v692
        %710 = vmatprep.subr.bf16.mxu0 0
        %711 = vmatpush1.bf16.msra.mxu0 %v701
        %712 = vmatprep.subr.bf16.mxu0 0
        %713 = vmatpush1.bf16.msra.mxu0 %v700
        %714 = vmatprep.subr.bf16.mxu0 0
        %715 = vmatpush1.bf16.msra.mxu0 %v699
        %716 = vmatprep.subr.bf16.mxu0 0
        %717 = vmatpush1.bf16.msra.mxu0 %v698
        %718 = vmatprep.subr.bf16.mxu0 0
        %719 = vmatpush1.bf16.msra.mxu0 %v697
        %720 = vmatprep.subr.bf16.mxu0 0
        %721 = vmatpush1.bf16.msra.mxu0 %v696
        %722 = vmatprep.subr.bf16.mxu0 0
        %723 = vmatpush1.bf16.msra.mxu0 %v695
        %724 = vmatprep.subr.bf16.mxu0 0
        %725 = vmatpush1.bf16.msra.mxu0 %v694
        %726 = vmatprep.subr.bf16.mxu0 0
        %727 = vmatpush2.bf16.msra.mxu0 0
        %728 = vmatprep.subr.bf16.mxu0 0
        %729 = vmatpush2.bf16.msra.mxu0 0
        %730 = vmatprep.subr.bf16.mxu0 0
        %731 = vmatpush2.bf16.msra.mxu0 0
        %732 = vmatprep.subr.bf16.mxu0 0
        %733 = vmatpush2.bf16.msra.mxu0 0
        %734 = vmatprep.subr.bf16.mxu0 0
        %735 = vmatpush2.bf16.msra.mxu0 0
        %736 = vmatprep.subr.bf16.mxu0 0
        %737 = vmatpush2.bf16.msra.mxu0 0
        %738 = vmatprep.subr.bf16.mxu0 0
        %739 = vmatpush2.bf16.msra.mxu0 0
        %740 = vmatprep.subr.bf16.mxu0 0
        %741 = vmatpush2.bf16.msra.mxu0 0
        %742 = vmatprep.mubr.bf16.mxu0 0
        %743 = vmatmul.mubr.bf16.gmra.mxu0 %v537
        %v744 = vpop.f32.mrf.mxu0
        %v745 = vadd.f32 %v646, %v744
        %v746 = vpop.f32.mrf.mxu0
        %v747 = vpop.f32.mrf.mxu0
        %v748 = vadd.f32 %v649, %v747
        %v749 = vpop.f32.mrf.mxu0
        %750 = vmatprep.mubr.bf16.mxu0 0
        %751 = vmatmul.mubr.bf16.gmra.mxu0 %v538
        %v752 = vpop.f32.mrf.mxu0
        %v753 = vadd.f32 %v654, %v752
        %v754 = vpop.f32.mrf.mxu0
        %v755 = vpop.f32.mrf.mxu0
        %v756 = vadd.f32 %v657, %v755
        %v757 = vpop.f32.mrf.mxu0
        %758 = vdwg.mxu0
        %v759 = vld [vmem:[%s485] sm:$0xe]
        %s760 = scalar_lea.vmem [#allocation4], 128
        %v761 = vld [vmem:[%s760] sm:$0xf]
        %v762 = vld [vmem:[%s760 + $0x4] sm:$0xf]
        %v763 = vld [vmem:[%s760 + $0x8] sm:$0xf]
        %v764 = vld [vmem:[%s760 + $0xc] sm:$0xf]
        %v765 = vld [vmem:[%s760 + $0x10] sm:$0xf]
        %v766 = vld [vmem:[%s760 + $0x14] sm:$0xf]
        %v767 = vld [vmem:[%s760 + $0x18] sm:$0xf]
        %v768 = vld [vmem:[%s760 + $0x1c] sm:$0xf]
        %v769 = vld [vmem:[%s760 + $0x20] sm:$0xf]
        %v770 = vld [vmem:[%s760 + $0x24] sm:$0xf]
        %v771 = vld [vmem:[%s760 + $0x28] sm:$0xf]
        %v772 = vld [vmem:[%s760 + $0x2c] sm:$0xf]
        %v773 = vld [vmem:[%s760 + $0x30] sm:$0xf]
        %v774 = vld [vmem:[%s760 + $0x34] sm:$0xf]
        %v775 = vld [vmem:[%s760 + $0x38] sm:$0xf]
        %v776 = vld [vmem:[%s760 + $0x3c] sm:$0xf]
        %v778 = vunpack.c.l.b16 %v759
        %v779 = vpack.c.b16 %v533, %v778
        %vm780 = vcmask 1046528
        %v781 = vrot.slane %v779, 1
        %v782 = vrot.slane %v538, 1
        %v783 = vsel %vm780, %v781, %v782
        %v784 = vrot.slane %v539, 1
        %v785 = vsel %vm780, %v782, %v784
        %v804 = vunpack.c.l.b16 %v761
        %v805 = vunpack.c.l.b16 %v762
        %v806 = vunpack.c.l.b16 %v763
        %v807 = vunpack.c.l.b16 %v764
        %v808 = vunpack.c.l.b16 %v765
        %v809 = vunpack.c.l.b16 %v766
        %v810 = vunpack.c.l.b16 %v767
        %v811 = vunpack.c.l.b16 %v768
        %v812 = vunpack.c.l.b16 %v769
        %v813 = vunpack.c.l.b16 %v770
        %v814 = vunpack.c.l.b16 %v771
        %v815 = vunpack.c.l.b16 %v772
        %v816 = vunpack.c.l.b16 %v773
        %v817 = vunpack.c.l.b16 %v774
        %v818 = vunpack.c.l.b16 %v775
        %v819 = vunpack.c.l.b16 %v776
        %v820 = vpack.c.b16 %v805, %v804
        %v821 = vpack.c.b16 %v807, %v806
        %v822 = vpack.c.b16 %v809, %v808
        %v823 = vpack.c.b16 %v811, %v810
        %v824 = vpack.c.b16 %v813, %v812
        %v825 = vpack.c.b16 %v815, %v814
        %v826 = vpack.c.b16 %v817, %v816
        %v827 = vpack.c.b16 %v819, %v818
        %836 = vmatprep.subr.bf16.mxu0 0
        %837 = vmatpush1.bf16.msra.mxu0 %v827
        %838 = vmatprep.subr.bf16.mxu0 0
        %839 = vmatpush1.bf16.msra.mxu0 %v826
        %840 = vmatprep.subr.bf16.mxu0 0
        %841 = vmatpush1.bf16.msra.mxu0 %v825
        %842 = vmatprep.subr.bf16.mxu0 0
        %843 = vmatpush1.bf16.msra.mxu0 %v824
        %844 = vmatprep.subr.bf16.mxu0 0
        %845 = vmatpush1.bf16.msra.mxu0 %v823
        %846 = vmatprep.subr.bf16.mxu0 0
        %847 = vmatpush1.bf16.msra.mxu0 %v822
        %848 = vmatprep.subr.bf16.mxu0 0
        %849 = vmatpush1.bf16.msra.mxu0 %v821
        %850 = vmatprep.subr.bf16.mxu0 0
        %851 = vmatpush1.bf16.msra.mxu0 %v820
        %852 = vmatprep.subr.bf16.mxu0 0
        %853 = vmatpush2.bf16.msra.mxu0 0
        %854 = vmatprep.subr.bf16.mxu0 0
        %855 = vmatpush2.bf16.msra.mxu0 0
        %856 = vmatprep.subr.bf16.mxu0 0
        %857 = vmatpush2.bf16.msra.mxu0 0
        %858 = vmatprep.subr.bf16.mxu0 0
        %859 = vmatpush2.bf16.msra.mxu0 0
        %860 = vmatprep.subr.bf16.mxu0 0
        %861 = vmatpush2.bf16.msra.mxu0 0
        %862 = vmatprep.subr.bf16.mxu0 0
        %863 = vmatpush2.bf16.msra.mxu0 0
        %864 = vmatprep.subr.bf16.mxu0 0
        %865 = vmatpush2.bf16.msra.mxu0 0
        %866 = vmatprep.subr.bf16.mxu0 0
        %867 = vmatpush2.bf16.msra.mxu0 0
        %868 = vmatprep.mubr.bf16.mxu0 0
        %869 = vmatmul.mubr.bf16.gmra.mxu0 %v783
        %v870 = vpop.f32.mrf.mxu0
        %v871 = vadd.f32 0.0, %v870
        %v872 = vpop.f32.mrf.mxu0
        %v873 = vpop.f32.mrf.mxu0
        %v874 = vadd.f32 0.0, %v873
        %v875 = vpop.f32.mrf.mxu0
        %876 = vmatprep.mubr.bf16.mxu0 0
        %877 = vmatmul.mubr.bf16.gmra.mxu0 %v785
        %v878 = vpop.f32.mrf.mxu0
        %v879 = vadd.f32 0.0, %v878
        %v880 = vpop.f32.mrf.mxu0
        %v881 = vpop.f32.mrf.mxu0
        %v882 = vadd.f32 0.0, %v881
        %v883 = vpop.f32.mrf.mxu0
        %884 = vdwg.mxu0
        %v885 = vadd.f32 %v745, %v871
        %v886 = vadd.f32 %v748, %v874
        %v887 = vadd.f32 %v753, %v879
        %v888 = vadd.f32 %v756, %v882
        %v889 = vld [vmem:[%s485 + $0x10] sm:$0x3]
        %s890 = scalar_lea.vmem [#allocation4], 192
        %v891 = vld [vmem:[%s890] sm:$0xf]
        %v892 = vld [vmem:[%s890 + $0x4] sm:$0xf]
        %v893 = vld [vmem:[%s890 + $0x8] sm:$0xf]
        %v894 = vld [vmem:[%s890 + $0xc] sm:$0xf]
        %v895 = vld [vmem:[%s890 + $0x10] sm:$0xf]
        %v896 = vld [vmem:[%s890 + $0x14] sm:$0xf]
        %v897 = vld [vmem:[%s890 + $0x18] sm:$0xf]
        %v898 = vld [vmem:[%s890 + $0x1c] sm:$0xf]
        %v899 = vld [vmem:[%s890 + $0x20] sm:$0xf]
        %v900 = vld [vmem:[%s890 + $0x24] sm:$0xf]
        %v901 = vld [vmem:[%s890 + $0x28] sm:$0xf]
        %v902 = vld [vmem:[%s890 + $0x2c] sm:$0xf]
        %v903 = vld [vmem:[%s890 + $0x30] sm:$0xf]
        %v904 = vld [vmem:[%s890 + $0x34] sm:$0xf]
        %v905 = vld [vmem:[%s890 + $0x38] sm:$0xf]
        %v906 = vld [vmem:[%s890 + $0x3c] sm:$0xf]
        %v908 = vunpack.c.l.b16 %v889
        %v909 = vpack.c.b16 %v908, %v908
        %vm910 = vsmask.f32 6400
        %v912 = vshrl.u32 %v779, 16
        %v914 = vrot.slane %v912, 1
        %v915 = vshll.u32 %v779, 16
        %v917 = vrot.slane %v915, 2
        %v918 = vor.u32 %v914, %v917
        %v919 = vrot.slane %v553, 1
        %v920 = vrot.slane %v549, 2
        %v921 = vor.u32 %v919, %v920
        %v922 = vsel %vm910, %v918, %v921
        %v924 = vshrl.u32 %v909, 16
        %v926 = vrot.slane %v924, 1
        %v927 = vshll.u32 %v909, 16
        %v929 = vrot.slane %v927, 2
        %v930 = vor.u32 %v926, %v929
        %v931 = vsel %vm910, %v921, %v930
        %v950 = vunpack.c.l.b16 %v891
        %v951 = vunpack.c.l.b16 %v892
        %v952 = vunpack.c.l.b16 %v893
        %v953 = vunpack.c.l.b16 %v894
        %v954 = vunpack.c.l.b16 %v895
        %v955 = vunpack.c.l.b16 %v896
        %v956 = vunpack.c.l.b16 %v897
        %v957 = vunpack.c.l.b16 %v898
        %v958 = vunpack.c.l.b16 %v899
        %v959 = vunpack.c.l.b16 %v900
        %v960 = vunpack.c.l.b16 %v901
        %v961 = vunpack.c.l.b16 %v902
        %v962 = vunpack.c.l.b16 %v903
        %v963 = vunpack.c.l.b16 %v904
        %v964 = vunpack.c.l.b16 %v905
        %v965 = vunpack.c.l.b16 %v906
        %v966 = vpack.c.b16 %v951, %v950
        %v967 = vpack.c.b16 %v953, %v952
        %v968 = vpack.c.b16 %v955, %v954
        %v969 = vpack.c.b16 %v957, %v956
        %v970 = vpack.c.b16 %v959, %v958
        %v971 = vpack.c.b16 %v961, %v960
        %v972 = vpack.c.b16 %v963, %v962
        %v973 = vpack.c.b16 %v965, %v964
        %982 = vmatprep.subr.bf16.mxu0 0
        %983 = vmatpush1.bf16.msra.mxu0 %v973
        %984 = vmatprep.subr.bf16.mxu0 0
        %985 = vmatpush1.bf16.msra.mxu0 %v972
        %986 = vmatprep.subr.bf16.mxu0 0
        %987 = vmatpush1.bf16.msra.mxu0 %v971
        %988 = vmatprep.subr.bf16.mxu0 0
        %989 = vmatpush1.bf16.msra.mxu0 %v970
        %990 = vmatprep.subr.bf16.mxu0 0
        %991 = vmatpush1.bf16.msra.mxu0 %v969
        %992 = vmatprep.subr.bf16.mxu0 0
        %993 = vmatpush1.bf16.msra.mxu0 %v968
        %994 = vmatprep.subr.bf16.mxu0 0
        %995 = vmatpush1.bf16.msra.mxu0 %v967
        %996 = vmatprep.subr.bf16.mxu0 0
        %997 = vmatpush1.bf16.msra.mxu0 %v966
        %998 = vmatprep.subr.bf16.mxu0 0
        %999 = vmatpush2.bf16.msra.mxu0 0
        %1000 = vmatprep.subr.bf16.mxu0 0
        %1001 = vmatpush2.bf16.msra.mxu0 0
        %1002 = vmatprep.subr.bf16.mxu0 0
        %1003 = vmatpush2.bf16.msra.mxu0 0
        %1004 = vmatprep.subr.bf16.mxu0 0
        %1005 = vmatpush2.bf16.msra.mxu0 0
        %1006 = vmatprep.subr.bf16.mxu0 0
        %1007 = vmatpush2.bf16.msra.mxu0 0
        %1008 = vmatprep.subr.bf16.mxu0 0
        %1009 = vmatpush2.bf16.msra.mxu0 0
        %1010 = vmatprep.subr.bf16.mxu0 0
        %1011 = vmatpush2.bf16.msra.mxu0 0
        %1012 = vmatprep.subr.bf16.mxu0 0
        %1013 = vmatpush2.bf16.msra.mxu0 0
        %1014 = vmatprep.mubr.bf16.mxu0 0
        %1015 = vmatmul.mubr.bf16.gmra.mxu0 %v922
        %v1016 = vpop.f32.mrf.mxu0
        %v1017 = vadd.f32 0.0, %v1016
        %v1018 = vpop.f32.mrf.mxu0
        %v1019 = vpop.f32.mrf.mxu0
        %v1020 = vadd.f32 0.0, %v1019
        %v1021 = vpop.f32.mrf.mxu0
        %1022 = vmatprep.mubr.bf16.mxu0 0
        %1023 = vmatmul.mubr.bf16.gmra.mxu0 %v931
        %v1024 = vpop.f32.mrf.mxu0
        %v1025 = vadd.f32 0.0, %v1024
        %v1026 = vpop.f32.mrf.mxu0
        %v1027 = vpop.f32.mrf.mxu0
        %v1028 = vadd.f32 0.0, %v1027
        %v1029 = vpop.f32.mrf.mxu0
        %1030 = vdwg.mxu0
        %v1031 = vadd.f32 %v885, %v1017
        %v1032 = vadd.f32 %v886, %v1020
        %v1033 = vadd.f32 %v887, %v1025
        %v1034 = vadd.f32 %v888, %v1028
        %v1035 = vld [vmem:[%s485] sm:$0xc]
        %s1036 = scalar_lea.vmem [#allocation4], 256
        %v1037 = vld [vmem:[%s1036] sm:$0xf]
        %v1038 = vld [vmem:[%s1036 + $0x4] sm:$0xf]
        %v1039 = vld [vmem:[%s1036 + $0x8] sm:$0xf]
        %v1040 = vld [vmem:[%s1036 + $0xc] sm:$0xf]
        %v1041 = vld [vmem:[%s1036 + $0x10] sm:$0xf]
        %v1042 = vld [vmem:[%s1036 + $0x14] sm:$0xf]
        %v1043 = vld [vmem:[%s1036 + $0x18] sm:$0xf]
        %v1044 = vld [vmem:[%s1036 + $0x1c] sm:$0xf]
        %v1045 = vld [vmem:[%s1036 + $0x20] sm:$0xf]
        %v1046 = vld [vmem:[%s1036 + $0x24] sm:$0xf]
        %v1047 = vld [vmem:[%s1036 + $0x28] sm:$0xf]
        %v1048 = vld [vmem:[%s1036 + $0x2c] sm:$0xf]
        %v1049 = vld [vmem:[%s1036 + $0x30] sm:$0xf]
        %v1050 = vld [vmem:[%s1036 + $0x34] sm:$0xf]
        %v1051 = vld [vmem:[%s1036 + $0x38] sm:$0xf]
        %v1052 = vld [vmem:[%s1036 + $0x3c] sm:$0xf]
        %v1054 = vunpack.c.l.b16 %v1035
        %v1055 = vpack.c.b16 %v533, %v1054
        %vm1056 = vcmask 1045504
        %v1057 = vrot.slane %v1055, 2
        %v1058 = vrot.slane %v538, 2
        %v1059 = vsel %vm1056, %v1057, %v1058
        %v1060 = vrot.slane %v909, 2
        %v1061 = vsel %vm1056, %v1058, %v1060
        %v1080 = vunpack.c.l.b16 %v1037
        %v1081 = vunpack.c.l.b16 %v1038
        %v1082 = vunpack.c.l.b16 %v1039
        %v1083 = vunpack.c.l.b16 %v1040
        %v1084 = vunpack.c.l.b16 %v1041
        %v1085 = vunpack.c.l.b16 %v1042
        %v1086 = vunpack.c.l.b16 %v1043
        %v1087 = vunpack.c.l.b16 %v1044
        %v1088 = vunpack.c.l.b16 %v1045
        %v1089 = vunpack.c.l.b16 %v1046
        %v1090 = vunpack.c.l.b16 %v1047
        %v1091 = vunpack.c.l.b16 %v1048
        %v1092 = vunpack.c.l.b16 %v1049
        %v1093 = vunpack.c.l.b16 %v1050
        %v1094 = vunpack.c.l.b16 %v1051
        %v1095 = vunpack.c.l.b16 %v1052
        %v1096 = vpack.c.b16 %v1081, %v1080
        %v1097 = vpack.c.b16 %v1083, %v1082
        %v1098 = vpack.c.b16 %v1085, %v1084
        %v1099 = vpack.c.b16 %v1087, %v1086
        %v1100 = vpack.c.b16 %v1089, %v1088
        %v1101 = vpack.c.b16 %v1091, %v1090
        %v1102 = vpack.c.b16 %v1093, %v1092
        %v1103 = vpack.c.b16 %v1095, %v1094
        %1112 = vmatprep.subr.bf16.mxu0 0
        %1113 = vmatpush1.bf16.msra.mxu0 %v1103
        %1114 = vmatprep.subr.bf16.mxu0 0
        %1115 = vmatpush1.bf16.msra.mxu0 %v1102
        %1116 = vmatprep.subr.bf16.mxu0 0
        %1117 = vmatpush1.bf16.msra.mxu0 %v1101
        %1118 = vmatprep.subr.bf16.mxu0 0
        %1119 = vmatpush1.bf16.msra.mxu0 %v1100
        %1120 = vmatprep.subr.bf16.mxu0 0
        %1121 = vmatpush1.bf16.msra.mxu0 %v1099
        %1122 = vmatprep.subr.bf16.mxu0 0
        %1123 = vmatpush1.bf16.msra.mxu0 %v1098
        %1124 = vmatprep.subr.bf16.mxu0 0
        %1125 = vmatpush1.bf16.msra.mxu0 %v1097
        %1126 = vmatprep.subr.bf16.mxu0 0
        %1127 = vmatpush1.bf16.msra.mxu0 %v1096
        %1128 = vmatprep.subr.bf16.mxu0 0
        %1129 = vmatpush2.bf16.msra.mxu0 0
        %1130 = vmatprep.subr.bf16.mxu0 0
        %1131 = vmatpush2.bf16.msra.mxu0 0
        %1132 = vmatprep.subr.bf16.mxu0 0
        %1133 = vmatpush2.bf16.msra.mxu0 0
        %1134 = vmatprep.subr.bf16.mxu0 0
        %1135 = vmatpush2.bf16.msra.mxu0 0
        %1136 = vmatprep.subr.bf16.mxu0 0
        %1137 = vmatpush2.bf16.msra.mxu0 0
        %1138 = vmatprep.subr.bf16.mxu0 0
        %1139 = vmatpush2.bf16.msra.mxu0 0
        %1140 = vmatprep.subr.bf16.mxu0 0
        %1141 = vmatpush2.bf16.msra.mxu0 0
        %1142 = vmatprep.subr.bf16.mxu0 0
        %1143 = vmatpush2.bf16.msra.mxu0 0
        %1144 = vmatprep.mubr.bf16.mxu0 0
        %1145 = vmatmul.mubr.bf16.gmra.mxu0 %v1059
        %v1146 = vpop.f32.mrf.mxu0
        %v1147 = vadd.f32 0.0, %v1146
        %v1148 = vpop.f32.mrf.mxu0
        %v1149 = vpop.f32.mrf.mxu0
        %v1150 = vadd.f32 0.0, %v1149
        %v1151 = vpop.f32.mrf.mxu0
        %1152 = vmatprep.mubr.bf16.mxu0 0
        %1153 = vmatmul.mubr.bf16.gmra.mxu0 %v1061
        %v1154 = vpop.f32.mrf.mxu0
        %v1155 = vadd.f32 0.0, %v1154
        %v1156 = vpop.f32.mrf.mxu0
        %v1157 = vpop.f32.mrf.mxu0
        %v1158 = vadd.f32 0.0, %v1157
        %v1159 = vpop.f32.mrf.mxu0
        %1160 = vdwg.mxu0
        %v1161 = vadd.f32 %v1031, %v1147
        %v1162 = vadd.f32 %v1032, %v1150
        %v1163 = vadd.f32 %v1033, %v1155
        %v1164 = vadd.f32 %v1034, %v1158
        %v1165 = vld [vmem:[%s2] sm:$0x1]
        %v1167 = vlaneseq
        %v1168 = vshrl.u32 %v1167, 7
        %v1169 = vsub.s32 0, %v1168
        %v1170 = vrot.slane %v1165, %v1169
        %v1172 = vadd.f32 %v1161, %v1170
        %v1173 = vadd.f32 %v1162, %v1170
        %v1174 = vadd.f32 %v1163, %v1170
        %v1175 = vadd.f32 %v1164, %v1170
        %v1176 = vtanh.pop %v1172
        %v1177 = vtanh.pop %v1173
        %v1178 = vtanh.pop %v1174
        %v1179 = vtanh.pop %v1175
        %s1180 = sadd.s32 %s488, 4294967288
        %v1181 = vlaneseq
        %v1182 = vshrl.u32 %v1181, 7
        %v1183 = vadd.s32 %v1182, 8
        %v1184 = vadd.s32 %v1182, 16
        %v1185 = vadd.s32 %v1182, 24
        %v1186 = vstv %s1180
        %v1187 = vadd.s32 %v1186, %v1182
        %v1188 = vadd.s32 %v1186, %v1183
        %v1189 = vadd.s32 %v1186, %v1184
        %v1190 = vadd.s32 %v1186, %v1185
        %vm1191 = vcmp.ge.s32.totalorder %v1187, 0
        %vm1192 = vcmp.ge.s32.totalorder %v1188, 0
        %vm1193 = vcmp.ge.s32.totalorder %v1189, 0
        %vm1194 = vcmp.ge.s32.totalorder %v1190, 0
        %vm1195 = vcmp.lt.s32.totalorder %v1187, 30
        %vm1196 = vcmp.lt.s32.totalorder %v1188, 30
        %vm1197 = vcmp.lt.s32.totalorder %v1189, 30
        %vm1198 = vcmp.lt.s32.totalorder %v1190, 30
        %vm1199 = vmand %vm1191, %vm1195
        %vm1200 = vmand %vm1192, %vm1196
        %vm1201 = vmand %vm1193, %vm1197
        %vm1202 = vmand %vm1194, %vm1198
        %v1203 = vsel %vm1199, 1, 0
        %v1204 = vsel %vm1200, 1, 0
        %v1205 = vsel %vm1201, 1, 0
        %v1206 = vsel %vm1202, 1, 0
        %vm1207 = vcmp.eq.s32.totalorder %v1203, 1
        %vm1208 = vcmp.eq.s32.totalorder %v1204, 1
        %vm1209 = vcmp.eq.s32.totalorder %v1205, 1
        %vm1210 = vcmp.eq.s32.totalorder %v1206, 1
        %v1211 = vsel %vm1207, %v1176, 0.0
        %v1212 = vsel %vm1208, %v1177, 0.0
        %v1213 = vsel %vm1209, %v1178, 0.0
        %v1214 = vsel %vm1210, %v1179, 0.0
        %v1215 = vpack.c.bf16 %v1212, %v1211
        %v1216 = vpack.c.bf16 %v1214, %v1213
        %v1219 = vunpack.c.l.b16 %v1215
        %v1220 = vunpack.c.h.b16 %v1215
        %v1221 = vunpack.c.l.b16 %v1216
        %v1222 = vunpack.c.h.b16 %v1216
        %v1223 = vpack.c.b16 %v1219, %v1219
        %v1224 = vpack.c.b16 %v1220, %v1220
        %v1225 = vpack.c.b16 %v1221, %v1221
        %v1226 = vpack.c.b16 %v1222, %v1222
        %1231 = vst [vmem:[#allocation2] sm:$0xf] %v1223
        %1232 = vst [vmem:[#allocation2 + $0x4] sm:$0xf] %v1224
        %1233 = vst [vmem:[#allocation2 + $0x8] sm:$0xf] %v1225
        %1234 = vst [vmem:[#allocation2 + $0xc] sm:$0xf] %v1226
        %v1235 = vld [vmem:[#allocation2] sm:$0xf]
        %v1236 = vld [vmem:[#allocation2 + $0x4] sm:$0xf]
        %v1237 = vld [vmem:[#allocation2 + $0x8] sm:$0xf]
        %v1238 = vld [vmem:[#allocation2 + $0xc] sm:$0x3]
        %v1239 = vld [vmem:[#allocation7] sm:$0xf]
        %v1240 = vld [vmem:[#allocation7 + $0x4] sm:$0xf]
        %v1241 = vld [vmem:[#allocation7 + $0x8] sm:$0xf]
        %v1242 = vld [vmem:[#allocation7 + $0xc] sm:$0xf]
        %v1243 = vld [vmem:[#allocation7 + $0x10] sm:$0xf]
        %v1244 = vld [vmem:[#allocation7 + $0x14] sm:$0xf]
        %v1245 = vld [vmem:[#allocation7 + $0x18] sm:$0xf]
        %v1246 = vld [vmem:[#allocation7 + $0x1c] sm:$0xf]
        %v1247 = vld [vmem:[#allocation7 + $0x20] sm:$0xf]
        %v1248 = vld [vmem:[#allocation7 + $0x24] sm:$0xf]
        %v1249 = vld [vmem:[#allocation7 + $0x28] sm:$0xf]
        %v1250 = vld [vmem:[#allocation7 + $0x2c] sm:$0xf]
        %v1251 = vld [vmem:[#allocation7 + $0x30] sm:$0xf]
        %v1252 = vld [vmem:[#allocation7 + $0x34] sm:$0xf]
        %v1253 = vld [vmem:[#allocation7 + $0x38] sm:$0xf]
        %v1254 = vld [vmem:[#allocation7 + $0x3c] sm:$0xf]
        %v1255 = vld [vmem:[#allocation2 + $0xc] sm:$0x7]
        %s1256 = scalar_lea.vmem [#allocation7], 64
        %v1257 = vld [vmem:[%s1256] sm:$0xf]
        %v1258 = vld [vmem:[%s1256 + $0x4] sm:$0xf]
        %v1259 = vld [vmem:[%s1256 + $0x8] sm:$0xf]
        %v1260 = vld [vmem:[%s1256 + $0xc] sm:$0xf]
        %v1261 = vld [vmem:[%s1256 + $0x10] sm:$0xf]
        %v1262 = vld [vmem:[%s1256 + $0x14] sm:$0xf]
        %v1263 = vld [vmem:[%s1256 + $0x18] sm:$0xf]
        %v1264 = vld [vmem:[%s1256 + $0x1c] sm:$0xf]
        %v1265 = vld [vmem:[%s1256 + $0x20] sm:$0xf]
        %v1266 = vld [vmem:[%s1256 + $0x24] sm:$0xf]
        %v1267 = vld [vmem:[%s1256 + $0x28] sm:$0xf]
        %v1268 = vld [vmem:[%s1256 + $0x2c] sm:$0xf]
        %v1269 = vld [vmem:[%s1256 + $0x30] sm:$0xf]
        %v1270 = vld [vmem:[%s1256 + $0x34] sm:$0xf]
        %v1271 = vld [vmem:[%s1256 + $0x38] sm:$0xf]
        %v1272 = vld [vmem:[%s1256 + $0x3c] sm:$0xf]
        %v1277 = vunpack.c.l.b16 %v1235
        %v1278 = vunpack.c.l.b16 %v1236
        %v1279 = vunpack.c.l.b16 %v1237
        %v1280 = vunpack.c.l.b16 %v1255
        %v1281 = vpack.c.b16 %v1278, %v1277
        %v1282 = vpack.c.b16 %v1280, %v1279
        %v1284 = vshrl.u32 %v1281, 16
        %v1286 = vshll.u32 %v1281, 16
        %v1288 = vrot.slane %v1286, 1
        %v1289 = vor.u32 %v1284, %v1288
        %v1291 = vshll.u32 %v1282, 16
        %v1293 = vrot.slane %v1291, 1
        %v1294 = vsel %vm540, %v1289, %v1293
        %v1295 = vshrl.u32 %v1282, 16
        %v1297 = vor.u32 %v1295, %v1293
        %v1316 = vunpack.c.l.b16 %v1257
        %v1317 = vunpack.c.l.b16 %v1258
        %v1318 = vunpack.c.l.b16 %v1259
        %v1319 = vunpack.c.l.b16 %v1260
        %v1320 = vunpack.c.l.b16 %v1261
        %v1321 = vunpack.c.l.b16 %v1262
        %v1322 = vunpack.c.l.b16 %v1263
        %v1323 = vunpack.c.l.b16 %v1264
        %v1324 = vunpack.c.l.b16 %v1265
        %v1325 = vunpack.c.l.b16 %v1266
        %v1326 = vunpack.c.l.b16 %v1267
        %v1327 = vunpack.c.l.b16 %v1268
        %v1328 = vunpack.c.l.b16 %v1269
        %v1329 = vunpack.c.l.b16 %v1270
        %v1330 = vunpack.c.l.b16 %v1271
        %v1331 = vunpack.c.l.b16 %v1272
        %v1332 = vpack.c.b16 %v1317, %v1316
        %v1333 = vpack.c.b16 %v1319, %v1318
        %v1334 = vpack.c.b16 %v1321, %v1320
        %v1335 = vpack.c.b16 %v1323, %v1322
        %v1336 = vpack.c.b16 %v1325, %v1324
        %v1337 = vpack.c.b16 %v1327, %v1326
        %v1338 = vpack.c.b16 %v1329, %v1328
        %v1339 = vpack.c.b16 %v1331, %v1330
        %1348 = vmatprep.subr.bf16.mxu0 0
        %1349 = vmatpush1.bf16.msra.mxu0 %v1339
        %1350 = vmatprep.subr.bf16.mxu0 0
        %1351 = vmatpush1.bf16.msra.mxu0 %v1338
        %1352 = vmatprep.subr.bf16.mxu0 0
        %1353 = vmatpush1.bf16.msra.mxu0 %v1337
        %1354 = vmatprep.subr.bf16.mxu0 0
        %1355 = vmatpush1.bf16.msra.mxu0 %v1336
        %1356 = vmatprep.subr.bf16.mxu0 0
        %1357 = vmatpush1.bf16.msra.mxu0 %v1335
        %1358 = vmatprep.subr.bf16.mxu0 0
        %1359 = vmatpush1.bf16.msra.mxu0 %v1334
        %1360 = vmatprep.subr.bf16.mxu0 0
        %1361 = vmatpush1.bf16.msra.mxu0 %v1333
        %1362 = vmatprep.subr.bf16.mxu0 0
        %1363 = vmatpush1.bf16.msra.mxu0 %v1332
        %1364 = vmatprep.subr.bf16.mxu0 0
        %1365 = vmatpush2.bf16.msra.mxu0 0
        %1366 = vmatprep.subr.bf16.mxu0 0
        %1367 = vmatpush2.bf16.msra.mxu0 0
        %1368 = vmatprep.subr.bf16.mxu0 0
        %1369 = vmatpush2.bf16.msra.mxu0 0
        %1370 = vmatprep.subr.bf16.mxu0 0
        %1371 = vmatpush2.bf16.msra.mxu0 0
        %1372 = vmatprep.subr.bf16.mxu0 0
        %1373 = vmatpush2.bf16.msra.mxu0 0
        %1374 = vmatprep.subr.bf16.mxu0 0
        %1375 = vmatpush2.bf16.msra.mxu0 0
        %1376 = vmatprep.subr.bf16.mxu0 0
        %1377 = vmatpush2.bf16.msra.mxu0 0
        %1378 = vmatprep.subr.bf16.mxu0 0
        %1379 = vmatpush2.bf16.msra.mxu0 0
        %1380 = vmatprep.mubr.bf16.mxu0 0
        %1381 = vmatmul.mubr.bf16.gmra.mxu0 %v1294
        %v1382 = vpop.f32.mrf.mxu0
        %v1383 = vadd.f32 0.0, %v1382
        %v1384 = vpop.f32.mrf.mxu0
        %v1385 = vpop.f32.mrf.mxu0
        %v1386 = vadd.f32 0.0, %v1385
        %v1387 = vpop.f32.mrf.mxu0
        %1388 = vmatprep.mubr.bf16.mxu0 0
        %1389 = vmatmul.mubr.bf16.gmra.mxu0 %v1297
        %v1390 = vpop.f32.mrf.mxu0
        %v1391 = vadd.f32 0.0, %v1390
        %v1392 = vpop.f32.mrf.mxu0
        %v1393 = vpop.f32.mrf.mxu0
        %v1394 = vadd.f32 0.0, %v1393
        %v1395 = vpop.f32.mrf.mxu0
        %1396 = vdwg.mxu0
        %v1398 = vunpack.c.l.b16 %v1238
        %v1399 = vpack.c.b16 %v1398, %v1279
        %v1418 = vunpack.c.l.b16 %v1239
        %v1419 = vunpack.c.l.b16 %v1240
        %v1420 = vunpack.c.l.b16 %v1241
        %v1421 = vunpack.c.l.b16 %v1242
        %v1422 = vunpack.c.l.b16 %v1243
        %v1423 = vunpack.c.l.b16 %v1244
        %v1424 = vunpack.c.l.b16 %v1245
        %v1425 = vunpack.c.l.b16 %v1246
        %v1426 = vunpack.c.l.b16 %v1247
        %v1427 = vunpack.c.l.b16 %v1248
        %v1428 = vunpack.c.l.b16 %v1249
        %v1429 = vunpack.c.l.b16 %v1250
        %v1430 = vunpack.c.l.b16 %v1251
        %v1431 = vunpack.c.l.b16 %v1252
        %v1432 = vunpack.c.l.b16 %v1253
        %v1433 = vunpack.c.l.b16 %v1254
        %v1434 = vpack.c.b16 %v1419, %v1418
        %v1435 = vpack.c.b16 %v1421, %v1420
        %v1436 = vpack.c.b16 %v1423, %v1422
        %v1437 = vpack.c.b16 %v1425, %v1424
        %v1438 = vpack.c.b16 %v1427, %v1426
        %v1439 = vpack.c.b16 %v1429, %v1428
        %v1440 = vpack.c.b16 %v1431, %v1430
        %v1441 = vpack.c.b16 %v1433, %v1432
        %1450 = vmatprep.subr.bf16.mxu0 0
        %1451 = vmatpush1.bf16.msra.mxu0 %v1441
        %1452 = vmatprep.subr.bf16.mxu0 0
        %1453 = vmatpush1.bf16.msra.mxu0 %v1440
        %1454 = vmatprep.subr.bf16.mxu0 0
        %1455 = vmatpush1.bf16.msra.mxu0 %v1439
        %1456 = vmatprep.subr.bf16.mxu0 0
        %1457 = vmatpush1.bf16.msra.mxu0 %v1438
        %1458 = vmatprep.subr.bf16.mxu0 0
        %1459 = vmatpush1.bf16.msra.mxu0 %v1437
        %1460 = vmatprep.subr.bf16.mxu0 0
        %1461 = vmatpush1.bf16.msra.mxu0 %v1436
        %1462 = vmatprep.subr.bf16.mxu0 0
        %1463 = vmatpush1.bf16.msra.mxu0 %v1435
        %1464 = vmatprep.subr.bf16.mxu0 0
        %1465 = vmatpush1.bf16.msra.mxu0 %v1434
        %1466 = vmatprep.subr.bf16.mxu0 0
        %1467 = vmatpush2.bf16.msra.mxu0 0
        %1468 = vmatprep.subr.bf16.mxu0 0
        %1469 = vmatpush2.bf16.msra.mxu0 0
        %1470 = vmatprep.subr.bf16.mxu0 0
        %1471 = vmatpush2.bf16.msra.mxu0 0
        %1472 = vmatprep.subr.bf16.mxu0 0
        %1473 = vmatpush2.bf16.msra.mxu0 0
        %1474 = vmatprep.subr.bf16.mxu0 0
        %1475 = vmatpush2.bf16.msra.mxu0 0
        %1476 = vmatprep.subr.bf16.mxu0 0
        %1477 = vmatpush2.bf16.msra.mxu0 0
        %1478 = vmatprep.subr.bf16.mxu0 0
        %1479 = vmatpush2.bf16.msra.mxu0 0
        %1480 = vmatprep.subr.bf16.mxu0 0
        %1481 = vmatpush2.bf16.msra.mxu0 0
        %1482 = vmatprep.mubr.bf16.mxu0 0
        %1483 = vmatmul.mubr.bf16.gmra.mxu0 %v1281
        %v1484 = vpop.f32.mrf.mxu0
        %v1485 = vadd.f32 %v1383, %v1484
        %v1486 = vpop.f32.mrf.mxu0
        %v1487 = vpop.f32.mrf.mxu0
        %v1488 = vadd.f32 %v1386, %v1487
        %v1489 = vpop.f32.mrf.mxu0
        %1490 = vmatprep.mubr.bf16.mxu0 0
        %1491 = vmatmul.mubr.bf16.gmra.mxu0 %v1399
        %v1492 = vpop.f32.mrf.mxu0
        %v1493 = vadd.f32 %v1391, %v1492
        %v1494 = vpop.f32.mrf.mxu0
        %v1495 = vpop.f32.mrf.mxu0
        %v1496 = vadd.f32 %v1394, %v1495
        %v1497 = vpop.f32.mrf.mxu0
        %1498 = vdwg.mxu0
        %v1499 = vld [vmem:[#allocation2] sm:$0xe]
        %s1500 = scalar_lea.vmem [#allocation7], 128
        %v1501 = vld [vmem:[%s1500] sm:$0xf]
        %v1502 = vld [vmem:[%s1500 + $0x4] sm:$0xf]
        %v1503 = vld [vmem:[%s1500 + $0x8] sm:$0xf]
        %v1504 = vld [vmem:[%s1500 + $0xc] sm:$0xf]
        %v1505 = vld [vmem:[%s1500 + $0x10] sm:$0xf]
        %v1506 = vld [vmem:[%s1500 + $0x14] sm:$0xf]
        %v1507 = vld [vmem:[%s1500 + $0x18] sm:$0xf]
        %v1508 = vld [vmem:[%s1500 + $0x1c] sm:$0xf]
        %v1509 = vld [vmem:[%s1500 + $0x20] sm:$0xf]
        %v1510 = vld [vmem:[%s1500 + $0x24] sm:$0xf]
        %v1511 = vld [vmem:[%s1500 + $0x28] sm:$0xf]
        %v1512 = vld [vmem:[%s1500 + $0x2c] sm:$0xf]
        %v1513 = vld [vmem:[%s1500 + $0x30] sm:$0xf]
        %v1514 = vld [vmem:[%s1500 + $0x34] sm:$0xf]
        %v1515 = vld [vmem:[%s1500 + $0x38] sm:$0xf]
        %v1516 = vld [vmem:[%s1500 + $0x3c] sm:$0xf]
        %v1518 = vunpack.c.l.b16 %v1499
        %v1519 = vpack.c.b16 %v1278, %v1518
        %v1520 = vrot.slane %v1519, 1
        %v1521 = vrot.slane %v1282, 1
        %v1522 = vsel %vm780, %v1520, %v1521
        %v1541 = vunpack.c.l.b16 %v1501
        %v1542 = vunpack.c.l.b16 %v1502
        %v1543 = vunpack.c.l.b16 %v1503
        %v1544 = vunpack.c.l.b16 %v1504
        %v1545 = vunpack.c.l.b16 %v1505
        %v1546 = vunpack.c.l.b16 %v1506
        %v1547 = vunpack.c.l.b16 %v1507
        %v1548 = vunpack.c.l.b16 %v1508
        %v1549 = vunpack.c.l.b16 %v1509
        %v1550 = vunpack.c.l.b16 %v1510
        %v1551 = vunpack.c.l.b16 %v1511
        %v1552 = vunpack.c.l.b16 %v1512
        %v1553 = vunpack.c.l.b16 %v1513
        %v1554 = vunpack.c.l.b16 %v1514
        %v1555 = vunpack.c.l.b16 %v1515
        %v1556 = vunpack.c.l.b16 %v1516
        %v1557 = vpack.c.b16 %v1542, %v1541
        %v1558 = vpack.c.b16 %v1544, %v1543
        %v1559 = vpack.c.b16 %v1546, %v1545
        %v1560 = vpack.c.b16 %v1548, %v1547
        %v1561 = vpack.c.b16 %v1550, %v1549
        %v1562 = vpack.c.b16 %v1552, %v1551
        %v1563 = vpack.c.b16 %v1554, %v1553
        %v1564 = vpack.c.b16 %v1556, %v1555
        %1573 = vmatprep.subr.bf16.mxu0 0
        %1574 = vmatpush1.bf16.msra.mxu0 %v1564
        %1575 = vmatprep.subr.bf16.mxu0 0
        %1576 = vmatpush1.bf16.msra.mxu0 %v1563
        %1577 = vmatprep.subr.bf16.mxu0 0
        %1578 = vmatpush1.bf16.msra.mxu0 %v1562
        %1579 = vmatprep.subr.bf16.mxu0 0
        %1580 = vmatpush1.bf16.msra.mxu0 %v1561
        %1581 = vmatprep.subr.bf16.mxu0 0
        %1582 = vmatpush1.bf16.msra.mxu0 %v1560
        %1583 = vmatprep.subr.bf16.mxu0 0
        %1584 = vmatpush1.bf16.msra.mxu0 %v1559
        %1585 = vmatprep.subr.bf16.mxu0 0
        %1586 = vmatpush1.bf16.msra.mxu0 %v1558
        %1587 = vmatprep.subr.bf16.mxu0 0
        %1588 = vmatpush1.bf16.msra.mxu0 %v1557
        %1589 = vmatprep.subr.bf16.mxu0 0
        %1590 = vmatpush2.bf16.msra.mxu0 0
        %1591 = vmatprep.subr.bf16.mxu0 0
        %1592 = vmatpush2.bf16.msra.mxu0 0
        %1593 = vmatprep.subr.bf16.mxu0 0
        %1594 = vmatpush2.bf16.msra.mxu0 0
        %1595 = vmatprep.subr.bf16.mxu0 0
        %1596 = vmatpush2.bf16.msra.mxu0 0
        %1597 = vmatprep.subr.bf16.mxu0 0
        %1598 = vmatpush2.bf16.msra.mxu0 0
        %1599 = vmatprep.subr.bf16.mxu0 0
        %1600 = vmatpush2.bf16.msra.mxu0 0
        %1601 = vmatprep.subr.bf16.mxu0 0
        %1602 = vmatpush2.bf16.msra.mxu0 0
        %1603 = vmatprep.subr.bf16.mxu0 0
        %1604 = vmatpush2.bf16.msra.mxu0 0
        %1605 = vmatprep.mubr.bf16.mxu0 0
        %1606 = vmatmul.mubr.bf16.gmra.mxu0 %v1522
        %v1607 = vpop.f32.mrf.mxu0
        %v1608 = vadd.f32 0.0, %v1607
        %v1609 = vpop.f32.mrf.mxu0
        %v1610 = vpop.f32.mrf.mxu0
        %v1611 = vadd.f32 0.0, %v1610
        %v1612 = vpop.f32.mrf.mxu0
        %1613 = vmatprep.mubr.bf16.mxu0 0
        %1614 = vmatmul.mubr.bf16.gmra.mxu0 %v1521
        %v1615 = vpop.f32.mrf.mxu0
        %v1616 = vadd.f32 0.0, %v1615
        %v1617 = vpop.f32.mrf.mxu0
        %v1618 = vpop.f32.mrf.mxu0
        %v1619 = vadd.f32 0.0, %v1618
        %v1620 = vpop.f32.mrf.mxu0
        %1621 = vdwg.mxu0
        %v1622 = vadd.f32 %v1485, %v1608
        %v1623 = vadd.f32 %v1488, %v1611
        %v1624 = vadd.f32 %v1493, %v1616
        %v1625 = vadd.f32 %v1496, %v1619
        %v1626 = vld [vmem:[#allocation2 + $0xc] sm:$0xf]
        %s1627 = scalar_lea.vmem [#allocation7], 192
        %v1628 = vld [vmem:[%s1627] sm:$0xf]
        %v1629 = vld [vmem:[%s1627 + $0x4] sm:$0xf]
        %v1630 = vld [vmem:[%s1627 + $0x8] sm:$0xf]
        %v1631 = vld [vmem:[%s1627 + $0xc] sm:$0xf]
        %v1632 = vld [vmem:[%s1627 + $0x10] sm:$0xf]
        %v1633 = vld [vmem:[%s1627 + $0x14] sm:$0xf]
        %v1634 = vld [vmem:[%s1627 + $0x18] sm:$0xf]
        %v1635 = vld [vmem:[%s1627 + $0x1c] sm:$0xf]
        %v1636 = vld [vmem:[%s1627 + $0x20] sm:$0xf]
        %v1637 = vld [vmem:[%s1627 + $0x24] sm:$0xf]
        %v1638 = vld [vmem:[%s1627 + $0x28] sm:$0xf]
        %v1639 = vld [vmem:[%s1627 + $0x2c] sm:$0xf]
        %v1640 = vld [vmem:[%s1627 + $0x30] sm:$0xf]
        %v1641 = vld [vmem:[%s1627 + $0x34] sm:$0xf]
        %v1642 = vld [vmem:[%s1627 + $0x38] sm:$0xf]
        %v1643 = vld [vmem:[%s1627 + $0x3c] sm:$0xf]
        %v1645 = vunpack.c.l.b16 %v1626
        %v1646 = vpack.c.b16 %v1645, %v1279
        %v1648 = vshrl.u32 %v1519, 16
        %v1650 = vrot.slane %v1648, 1
        %v1651 = vshll.u32 %v1519, 16
        %v1653 = vrot.slane %v1651, 2
        %v1654 = vor.u32 %v1650, %v1653
        %v1656 = vshrl.u32 %v1646, 16
        %v1658 = vrot.slane %v1656, 1
        %v1659 = vshll.u32 %v1646, 16
        %v1661 = vrot.slane %v1659, 2
        %v1662 = vor.u32 %v1658, %v1661
        %v1663 = vsel %vm910, %v1654, %v1662
        %v1682 = vunpack.c.l.b16 %v1628
        %v1683 = vunpack.c.l.b16 %v1629
        %v1684 = vunpack.c.l.b16 %v1630
        %v1685 = vunpack.c.l.b16 %v1631
        %v1686 = vunpack.c.l.b16 %v1632
        %v1687 = vunpack.c.l.b16 %v1633
        %v1688 = vunpack.c.l.b16 %v1634
        %v1689 = vunpack.c.l.b16 %v1635
        %v1690 = vunpack.c.l.b16 %v1636
        %v1691 = vunpack.c.l.b16 %v1637
        %v1692 = vunpack.c.l.b16 %v1638
        %v1693 = vunpack.c.l.b16 %v1639
        %v1694 = vunpack.c.l.b16 %v1640
        %v1695 = vunpack.c.l.b16 %v1641
        %v1696 = vunpack.c.l.b16 %v1642
        %v1697 = vunpack.c.l.b16 %v1643
        %v1698 = vpack.c.b16 %v1683, %v1682
        %v1699 = vpack.c.b16 %v1685, %v1684
        %v1700 = vpack.c.b16 %v1687, %v1686
        %v1701 = vpack.c.b16 %v1689, %v1688
        %v1702 = vpack.c.b16 %v1691, %v1690
        %v1703 = vpack.c.b16 %v1693, %v1692
        %v1704 = vpack.c.b16 %v1695, %v1694
        %v1705 = vpack.c.b16 %v1697, %v1696
        %1714 = vmatprep.subr.bf16.mxu0 0
        %1715 = vmatpush1.bf16.msra.mxu0 %v1705
        %1716 = vmatprep.subr.bf16.mxu0 0
        %1717 = vmatpush1.bf16.msra.mxu0 %v1704
        %1718 = vmatprep.subr.bf16.mxu0 0
        %1719 = vmatpush1.bf16.msra.mxu0 %v1703
        %1720 = vmatprep.subr.bf16.mxu0 0
        %1721 = vmatpush1.bf16.msra.mxu0 %v1702
        %1722 = vmatprep.subr.bf16.mxu0 0
        %1723 = vmatpush1.bf16.msra.mxu0 %v1701
        %1724 = vmatprep.subr.bf16.mxu0 0
        %1725 = vmatpush1.bf16.msra.mxu0 %v1700
        %1726 = vmatprep.subr.bf16.mxu0 0
        %1727 = vmatpush1.bf16.msra.mxu0 %v1699
        %1728 = vmatprep.subr.bf16.mxu0 0
        %1729 = vmatpush1.bf16.msra.mxu0 %v1698
        %1730 = vmatprep.subr.bf16.mxu0 0
        %1731 = vmatpush2.bf16.msra.mxu0 0
        %1732 = vmatprep.subr.bf16.mxu0 0
        %1733 = vmatpush2.bf16.msra.mxu0 0
        %1734 = vmatprep.subr.bf16.mxu0 0
        %1735 = vmatpush2.bf16.msra.mxu0 0
        %1736 = vmatprep.subr.bf16.mxu0 0
        %1737 = vmatpush2.bf16.msra.mxu0 0
        %1738 = vmatprep.subr.bf16.mxu0 0
        %1739 = vmatpush2.bf16.msra.mxu0 0
        %1740 = vmatprep.subr.bf16.mxu0 0
        %1741 = vmatpush2.bf16.msra.mxu0 0
        %1742 = vmatprep.subr.bf16.mxu0 0
        %1743 = vmatpush2.bf16.msra.mxu0 0
        %1744 = vmatprep.subr.bf16.mxu0 0
        %1745 = vmatpush2.bf16.msra.mxu0 0
        %1746 = vmatprep.mubr.bf16.mxu0 0
        %1747 = vmatmul.mubr.bf16.gmra.mxu0 %v1663
        %v1748 = vpop.f32.mrf.mxu0
        %v1749 = vadd.f32 0.0, %v1748
        %v1750 = vpop.f32.mrf.mxu0
        %v1751 = vpop.f32.mrf.mxu0
        %v1752 = vadd.f32 0.0, %v1751
        %v1753 = vpop.f32.mrf.mxu0
        %1754 = vmatprep.mubr.bf16.mxu0 0
        %1755 = vmatmul.mubr.bf16.gmra.mxu0 %v1662
        %v1756 = vpop.f32.mrf.mxu0
        %v1757 = vadd.f32 0.0, %v1756
        %v1758 = vpop.f32.mrf.mxu0
        %v1759 = vpop.f32.mrf.mxu0
        %v1760 = vadd.f32 0.0, %v1759
        %v1761 = vpop.f32.mrf.mxu0
        %1762 = vdwg.mxu0
        %v1763 = vadd.f32 %v1622, %v1749
        %v1764 = vadd.f32 %v1623, %v1752
        %v1765 = vadd.f32 %v1624, %v1757
        %v1766 = vadd.f32 %v1625, %v1760
        %v1767 = vld [vmem:[#allocation2] sm:$0xc]
        %s1768 = scalar_lea.vmem [#allocation7], 256
        %v1769 = vld [vmem:[%s1768] sm:$0xf]
        %v1770 = vld [vmem:[%s1768 + $0x4] sm:$0xf]
        %v1771 = vld [vmem:[%s1768 + $0x8] sm:$0xf]
        %v1772 = vld [vmem:[%s1768 + $0xc] sm:$0xf]
        %v1773 = vld [vmem:[%s1768 + $0x10] sm:$0xf]
        %v1774 = vld [vmem:[%s1768 + $0x14] sm:$0xf]
        %v1775 = vld [vmem:[%s1768 + $0x18] sm:$0xf]
        %v1776 = vld [vmem:[%s1768 + $0x1c] sm:$0xf]
        %v1777 = vld [vmem:[%s1768 + $0x20] sm:$0xf]
        %v1778 = vld [vmem:[%s1768 + $0x24] sm:$0xf]
        %v1779 = vld [vmem:[%s1768 + $0x28] sm:$0xf]
        %v1780 = vld [vmem:[%s1768 + $0x2c] sm:$0xf]
        %v1781 = vld [vmem:[%s1768 + $0x30] sm:$0xf]
        %v1782 = vld [vmem:[%s1768 + $0x34] sm:$0xf]
        %v1783 = vld [vmem:[%s1768 + $0x38] sm:$0xf]
        %v1784 = vld [vmem:[%s1768 + $0x3c] sm:$0xf]
        %v1786 = vunpack.c.l.b16 %v1767
        %v1787 = vpack.c.b16 %v1278, %v1786
        %v1788 = vrot.slane %v1787, 2
        %v1789 = vrot.slane %v1646, 2
        %v1790 = vsel %vm1056, %v1788, %v1789
        %v1809 = vunpack.c.l.b16 %v1769
        %v1810 = vunpack.c.l.b16 %v1770
        %v1811 = vunpack.c.l.b16 %v1771
        %v1812 = vunpack.c.l.b16 %v1772
        %v1813 = vunpack.c.l.b16 %v1773
        %v1814 = vunpack.c.l.b16 %v1774
        %v1815 = vunpack.c.l.b16 %v1775
        %v1816 = vunpack.c.l.b16 %v1776
        %v1817 = vunpack.c.l.b16 %v1777
        %v1818 = vunpack.c.l.b16 %v1778
        %v1819 = vunpack.c.l.b16 %v1779
        %v1820 = vunpack.c.l.b16 %v1780
        %v1821 = vunpack.c.l.b16 %v1781
        %v1822 = vunpack.c.l.b16 %v1782
        %v1823 = vunpack.c.l.b16 %v1783
        %v1824 = vunpack.c.l.b16 %v1784
        %v1825 = vpack.c.b16 %v1810, %v1809
        %v1826 = vpack.c.b16 %v1812, %v1811
        %v1827 = vpack.c.b16 %v1814, %v1813
        %v1828 = vpack.c.b16 %v1816, %v1815
        %v1829 = vpack.c.b16 %v1818, %v1817
        %v1830 = vpack.c.b16 %v1820, %v1819
        %v1831 = vpack.c.b16 %v1822, %v1821
        %v1832 = vpack.c.b16 %v1824, %v1823
        %1841 = vmatprep.subr.bf16.mxu0 0
        %1842 = vmatpush1.bf16.msra.mxu0 %v1832
        %1843 = vmatprep.subr.bf16.mxu0 0
        %1844 = vmatpush1.bf16.msra.mxu0 %v1831
        %1845 = vmatprep.subr.bf16.mxu0 0
        %1846 = vmatpush1.bf16.msra.mxu0 %v1830
        %1847 = vmatprep.subr.bf16.mxu0 0
        %1848 = vmatpush1.bf16.msra.mxu0 %v1829
        %1849 = vmatprep.subr.bf16.mxu0 0
        %1850 = vmatpush1.bf16.msra.mxu0 %v1828
        %1851 = vmatprep.subr.bf16.mxu0 0
        %1852 = vmatpush1.bf16.msra.mxu0 %v1827
        %1853 = vmatprep.subr.bf16.mxu0 0
        %1854 = vmatpush1.bf16.msra.mxu0 %v1826
        %1855 = vmatprep.subr.bf16.mxu0 0
        %1856 = vmatpush1.bf16.msra.mxu0 %v1825
        %1857 = vmatprep.subr.bf16.mxu0 0
        %1858 = vmatpush2.bf16.msra.mxu0 0
        %1859 = vmatprep.subr.bf16.mxu0 0
        %1860 = vmatpush2.bf16.msra.mxu0 0
        %1861 = vmatprep.subr.bf16.mxu0 0
        %1862 = vmatpush2.bf16.msra.mxu0 0
        %1863 = vmatprep.subr.bf16.mxu0 0
        %1864 = vmatpush2.bf16.msra.mxu0 0
        %1865 = vmatprep.subr.bf16.mxu0 0
        %1866 = vmatpush2.bf16.msra.mxu0 0
        %1867 = vmatprep.subr.bf16.mxu0 0
        %1868 = vmatpush2.bf16.msra.mxu0 0
        %1869 = vmatprep.subr.bf16.mxu0 0
        %1870 = vmatpush2.bf16.msra.mxu0 0
        %1871 = vmatprep.subr.bf16.mxu0 0
        %1872 = vmatpush2.bf16.msra.mxu0 0
        %1873 = vmatprep.mubr.bf16.mxu0 0
        %1874 = vmatmul.mubr.bf16.gmra.mxu0 %v1790
        %v1875 = vpop.f32.mrf.mxu0
        %v1876 = vadd.f32 0.0, %v1875
        %v1877 = vpop.f32.mrf.mxu0
        %v1878 = vpop.f32.mrf.mxu0
        %v1879 = vadd.f32 0.0, %v1878
        %v1880 = vpop.f32.mrf.mxu0
        %1881 = vmatprep.mubr.bf16.mxu0 0
        %1882 = vmatmul.mubr.bf16.gmra.mxu0 %v1789
        %v1883 = vpop.f32.mrf.mxu0
        %v1884 = vadd.f32 0.0, %v1883
        %v1885 = vpop.f32.mrf.mxu0
        %v1886 = vpop.f32.mrf.mxu0
        %v1887 = vadd.f32 0.0, %v1886
        %v1888 = vpop.f32.mrf.mxu0
        %1889 = vdwg.mxu0
        %v1890 = vadd.f32 %v1763, %v1876
        %v1891 = vadd.f32 %v1764, %v1879
        %v1892 = vadd.f32 %v1765, %v1884
        %v1893 = vadd.f32 %v1766, %v1887
        %v1894 = vld [vmem:[%s4] sm:$0x1]
        %v1896 = vlaneseq
        %v1897 = vshrl.u32 %v1896, 7
        %v1898 = vsub.s32 0, %v1897
        %v1899 = vrot.slane %v1894, %v1898
        %v1901 = vadd.f32 %v1890, %v1899
        %v1902 = vadd.f32 %v1891, %v1899
        %v1903 = vadd.f32 %v1892, %v1899
        %v1904 = vadd.f32 %v1893, %v1899
        %v1905 = vtanh.pop %v1901
        %v1906 = vtanh.pop %v1902
        %v1907 = vtanh.pop %v1903
        %v1908 = vtanh.pop %v1904
        %s1909 = sadd.s32 %s488, 4294967290
        %v1910 = vstv %s1909
        %v1911 = vadd.s32 %v1910, %v1182
        %v1912 = vadd.s32 %v1910, %v1183
        %v1913 = vadd.s32 %v1910, %v1184
        %v1914 = vadd.s32 %v1910, %v1185
        %vm1915 = vcmp.ge.s32.totalorder %v1911, 0
        %vm1916 = vcmp.ge.s32.totalorder %v1912, 0
        %vm1917 = vcmp.ge.s32.totalorder %v1913, 0
        %vm1918 = vcmp.ge.s32.totalorder %v1914, 0
        %vm1919 = vcmp.lt.s32.totalorder %v1911, 30
        %vm1920 = vcmp.lt.s32.totalorder %v1912, 30
        %vm1921 = vcmp.lt.s32.totalorder %v1913, 30
        %vm1922 = vcmp.lt.s32.totalorder %v1914, 30
        %vm1923 = vmand %vm1915, %vm1919
        %vm1924 = vmand %vm1916, %vm1920
        %vm1925 = vmand %vm1917, %vm1921
        %vm1926 = vmand %vm1918, %vm1922
        %v1927 = vsel %vm1923, 1, 0
        %v1928 = vsel %vm1924, 1, 0
        %v1929 = vsel %vm1925, 1, 0
        %v1930 = vsel %vm1926, 1, 0
        %vm1931 = vcmp.eq.s32.totalorder %v1927, 1
        %vm1932 = vcmp.eq.s32.totalorder %v1928, 1
        %vm1933 = vcmp.eq.s32.totalorder %v1929, 1
        %vm1934 = vcmp.eq.s32.totalorder %v1930, 1
        %v1935 = vsel %vm1931, %v1905, 0.0
        %v1936 = vsel %vm1932, %v1906, 0.0
        %v1937 = vsel %vm1933, %v1907, 0.0
        %v1938 = vsel %vm1934, %v1908, 0.0
        %v1939 = vpack.c.bf16 %v1936, %v1935
        %v1940 = vpack.c.bf16 %v1938, %v1937
        %v1943 = vunpack.c.l.b16 %v1939
        %v1944 = vunpack.c.h.b16 %v1939
        %v1945 = vunpack.c.l.b16 %v1940
        %v1946 = vunpack.c.h.b16 %v1940
        %v1947 = vpack.c.b16 %v1943, %v1943
        %v1948 = vpack.c.b16 %v1944, %v1944
        %v1949 = vpack.c.b16 %v1945, %v1945
        %v1950 = vpack.c.b16 %v1946, %v1946
        %1955 = vst [vmem:[#allocation3] sm:$0xf] %v1947
        %1956 = vst [vmem:[#allocation3 + $0x4] sm:$0xf] %v1948
        %1957 = vst [vmem:[#allocation3 + $0x8] sm:$0xf] %v1949
        %1958 = vst [vmem:[#allocation3 + $0xc] sm:$0x3] %v1950
        %v1959 = vld [vmem:[#allocation3] sm:$0xf]
        %v1960 = vld [vmem:[#allocation3 + $0x4] sm:$0xf]
        %v1961 = vld [vmem:[#allocation3 + $0x8] sm:$0xf]
        %v1962 = vld [vmem:[#allocation9] sm:$0xf]
        %v1963 = vld [vmem:[#allocation9 + $0x4] sm:$0xf]
        %v1964 = vld [vmem:[#allocation9 + $0x8] sm:$0xf]
        %v1965 = vld [vmem:[#allocation9 + $0xc] sm:$0xf]
        %v1966 = vld [vmem:[#allocation9 + $0x10] sm:$0xf]
        %v1967 = vld [vmem:[#allocation9 + $0x14] sm:$0xf]
        %v1968 = vld [vmem:[#allocation9 + $0x18] sm:$0xf]
        %v1969 = vld [vmem:[#allocation9 + $0x1c] sm:$0xf]
        %v1970 = vld [vmem:[#allocation9 + $0x20] sm:$0xf]
        %v1971 = vld [vmem:[#allocation9 + $0x24] sm:$0xf]
        %v1972 = vld [vmem:[#allocation9 + $0x28] sm:$0xf]
        %v1973 = vld [vmem:[#allocation9 + $0x2c] sm:$0xf]
        %v1974 = vld [vmem:[#allocation9 + $0x30] sm:$0xf]
        %v1975 = vld [vmem:[#allocation9 + $0x34] sm:$0xf]
        %v1976 = vld [vmem:[#allocation9 + $0x38] sm:$0xf]
        %v1977 = vld [vmem:[#allocation9 + $0x3c] sm:$0xf]
        %v1978 = vld [vmem:[#allocation3] sm:$0xf]
        %v1979 = vld [vmem:[#allocation3 + $0x4] sm:$0xf]
        %v1980 = vld [vmem:[#allocation3 + $0x8] sm:$0xf]
        %v1981 = vld [vmem:[#allocation3 + $0xc] sm:$0x1]
        %s1982 = scalar_lea.vmem [#allocation9], 64
        %v1983 = vld [vmem:[%s1982] sm:$0xf]
        %v1984 = vld [vmem:[%s1982 + $0x4] sm:$0xf]
        %v1985 = vld [vmem:[%s1982 + $0x8] sm:$0xf]
        %v1986 = vld [vmem:[%s1982 + $0xc] sm:$0xf]
        %v1987 = vld [vmem:[%s1982 + $0x10] sm:$0xf]
        %v1988 = vld [vmem:[%s1982 + $0x14] sm:$0xf]
        %v1989 = vld [vmem:[%s1982 + $0x18] sm:$0xf]
        %v1990 = vld [vmem:[%s1982 + $0x1c] sm:$0xf]
        %v1991 = vld [vmem:[%s1982 + $0x20] sm:$0xf]
        %v1992 = vld [vmem:[%s1982 + $0x24] sm:$0xf]
        %v1993 = vld [vmem:[%s1982 + $0x28] sm:$0xf]
        %v1994 = vld [vmem:[%s1982 + $0x2c] sm:$0xf]
        %v1995 = vld [vmem:[%s1982 + $0x30] sm:$0xf]
        %v1996 = vld [vmem:[%s1982 + $0x34] sm:$0xf]
        %v1997 = vld [vmem:[%s1982 + $0x38] sm:$0xf]
        %v1998 = vld [vmem:[%s1982 + $0x3c] sm:$0xf]
        %v2003 = vunpack.c.l.b16 %v1978
        %v2004 = vunpack.c.l.b16 %v1979
        %v2005 = vunpack.c.l.b16 %v1980
        %v2006 = vunpack.c.l.b16 %v1981
        %v2007 = vpack.c.b16 %v2004, %v2003
        %v2008 = vpack.c.b16 %v2006, %v2005
        %v2010 = vshrl.u32 %v2007, 16
        %v2012 = vshll.u32 %v2007, 16
        %v2014 = vrot.slane %v2012, 1
        %v2015 = vor.u32 %v2010, %v2014
        %v2017 = vshll.u32 %v2008, 16
        %v2019 = vrot.slane %v2017, 1
        %v2020 = vsel %vm540, %v2015, %v2019
        %v2021 = vshrl.u32 %v2008, 16
        %v2023 = vor.u32 %v2021, %v2019
        %v2042 = vunpack.c.l.b16 %v1983
        %v2043 = vunpack.c.l.b16 %v1984
        %v2044 = vunpack.c.l.b16 %v1985
        %v2045 = vunpack.c.l.b16 %v1986
        %v2046 = vunpack.c.l.b16 %v1987
        %v2047 = vunpack.c.l.b16 %v1988
        %v2048 = vunpack.c.l.b16 %v1989
        %v2049 = vunpack.c.l.b16 %v1990
        %v2050 = vunpack.c.l.b16 %v1991
        %v2051 = vunpack.c.l.b16 %v1992
        %v2052 = vunpack.c.l.b16 %v1993
        %v2053 = vunpack.c.l.b16 %v1994
        %v2054 = vunpack.c.l.b16 %v1995
        %v2055 = vunpack.c.l.b16 %v1996
        %v2056 = vunpack.c.l.b16 %v1997
        %v2057 = vunpack.c.l.b16 %v1998
        %v2058 = vpack.c.b16 %v2043, %v2042
        %v2059 = vpack.c.b16 %v2045, %v2044
        %v2060 = vpack.c.b16 %v2047, %v2046
        %v2061 = vpack.c.b16 %v2049, %v2048
        %v2062 = vpack.c.b16 %v2051, %v2050
        %v2063 = vpack.c.b16 %v2053, %v2052
        %v2064 = vpack.c.b16 %v2055, %v2054
        %v2065 = vpack.c.b16 %v2057, %v2056
        %2074 = vmatprep.subr.bf16.mxu0 0
        %2075 = vmatpush1.bf16.msra.mxu0 %v2065
        %2076 = vmatprep.subr.bf16.mxu0 0
        %2077 = vmatpush1.bf16.msra.mxu0 %v2064
        %2078 = vmatprep.subr.bf16.mxu0 0
        %2079 = vmatpush1.bf16.msra.mxu0 %v2063
        %2080 = vmatprep.subr.bf16.mxu0 0
        %2081 = vmatpush1.bf16.msra.mxu0 %v2062
        %2082 = vmatprep.subr.bf16.mxu0 0
        %2083 = vmatpush1.bf16.msra.mxu0 %v2061
        %2084 = vmatprep.subr.bf16.mxu0 0
        %2085 = vmatpush1.bf16.msra.mxu0 %v2060
        %2086 = vmatprep.subr.bf16.mxu0 0
        %2087 = vmatpush1.bf16.msra.mxu0 %v2059
        %2088 = vmatprep.subr.bf16.mxu0 0
        %2089 = vmatpush1.bf16.msra.mxu0 %v2058
        %2090 = vmatprep.subr.bf16.mxu0 0
        %2091 = vmatpush2.bf16.msra.mxu0 0
        %2092 = vmatprep.subr.bf16.mxu0 0
        %2093 = vmatpush2.bf16.msra.mxu0 0
        %2094 = vmatprep.subr.bf16.mxu0 0
        %2095 = vmatpush2.bf16.msra.mxu0 0
        %2096 = vmatprep.subr.bf16.mxu0 0
        %2097 = vmatpush2.bf16.msra.mxu0 0
        %2098 = vmatprep.subr.bf16.mxu0 0
        %2099 = vmatpush2.bf16.msra.mxu0 0
        %2100 = vmatprep.subr.bf16.mxu0 0
        %2101 = vmatpush2.bf16.msra.mxu0 0
        %2102 = vmatprep.subr.bf16.mxu0 0
        %2103 = vmatpush2.bf16.msra.mxu0 0
        %2104 = vmatprep.subr.bf16.mxu0 0
        %2105 = vmatpush2.bf16.msra.mxu0 0
        %2106 = vmatprep.mubr.bf16.mxu0 0
        %2107 = vmatmul.mubr.bf16.gmra.mxu0 %v2020
        %v2108 = vpop.f32.mrf.mxu0
        %v2109 = vadd.f32 0.0, %v2108
        %v2110 = vpop.f32.mrf.mxu0
        %v2111 = vpop.f32.mrf.mxu0
        %v2112 = vadd.f32 0.0, %v2111
        %v2113 = vpop.f32.mrf.mxu0
        %2114 = vmatprep.mubr.bf16.mxu0 0
        %2115 = vmatmul.mubr.bf16.gmra.mxu0 %v2023
        %v2116 = vpop.f32.mrf.mxu0
        %v2117 = vadd.f32 0.0, %v2116
        %v2118 = vpop.f32.mrf.mxu0
        %v2119 = vpop.f32.mrf.mxu0
        %v2120 = vpop.f32.mrf.mxu0
        %2121 = vdwg.mxu0
        %v2125 = vunpack.c.l.b16 %v1959
        %v2126 = vunpack.c.l.b16 %v1960
        %v2127 = vunpack.c.l.b16 %v1961
        %v2128 = vpack.c.b16 %v2126, %v2125
        %v2129 = vpack.c.b16 %v2127, %v2127
        %v2148 = vunpack.c.l.b16 %v1962
        %v2149 = vunpack.c.l.b16 %v1963
        %v2150 = vunpack.c.l.b16 %v1964
        %v2151 = vunpack.c.l.b16 %v1965
        %v2152 = vunpack.c.l.b16 %v1966
        %v2153 = vunpack.c.l.b16 %v1967
        %v2154 = vunpack.c.l.b16 %v1968
        %v2155 = vunpack.c.l.b16 %v1969
        %v2156 = vunpack.c.l.b16 %v1970
        %v2157 = vunpack.c.l.b16 %v1971
        %v2158 = vunpack.c.l.b16 %v1972
        %v2159 = vunpack.c.l.b16 %v1973
        %v2160 = vunpack.c.l.b16 %v1974
        %v2161 = vunpack.c.l.b16 %v1975
        %v2162 = vunpack.c.l.b16 %v1976
        %v2163 = vunpack.c.l.b16 %v1977
        %v2164 = vpack.c.b16 %v2149, %v2148
        %v2165 = vpack.c.b16 %v2151, %v2150
        %v2166 = vpack.c.b16 %v2153, %v2152
        %v2167 = vpack.c.b16 %v2155, %v2154
        %v2168 = vpack.c.b16 %v2157, %v2156
        %v2169 = vpack.c.b16 %v2159, %v2158
        %v2170 = vpack.c.b16 %v2161, %v2160
        %v2171 = vpack.c.b16 %v2163, %v2162
        %2180 = vmatprep.subr.bf16.mxu0 0
        %2181 = vmatpush1.bf16.msra.mxu0 %v2171
        %2182 = vmatprep.subr.bf16.mxu0 0
        %2183 = vmatpush1.bf16.msra.mxu0 %v2170
        %2184 = vmatprep.subr.bf16.mxu0 0
        %2185 = vmatpush1.bf16.msra.mxu0 %v2169
        %2186 = vmatprep.subr.bf16.mxu0 0
        %2187 = vmatpush1.bf16.msra.mxu0 %v2168
        %2188 = vmatprep.subr.bf16.mxu0 0
        %2189 = vmatpush1.bf16.msra.mxu0 %v2167
        %2190 = vmatprep.subr.bf16.mxu0 0
        %2191 = vmatpush1.bf16.msra.mxu0 %v2166
        %2192 = vmatprep.subr.bf16.mxu0 0
        %2193 = vmatpush1.bf16.msra.mxu0 %v2165
        %2194 = vmatprep.subr.bf16.mxu0 0
        %2195 = vmatpush1.bf16.msra.mxu0 %v2164
        %2196 = vmatprep.subr.bf16.mxu0 0
        %2197 = vmatpush2.bf16.msra.mxu0 0
        %2198 = vmatprep.subr.bf16.mxu0 0
        %2199 = vmatpush2.bf16.msra.mxu0 0
        %2200 = vmatprep.subr.bf16.mxu0 0
        %2201 = vmatpush2.bf16.msra.mxu0 0
        %2202 = vmatprep.subr.bf16.mxu0 0
        %2203 = vmatpush2.bf16.msra.mxu0 0
        %2204 = vmatprep.subr.bf16.mxu0 0
        %2205 = vmatpush2.bf16.msra.mxu0 0
        %2206 = vmatprep.subr.bf16.mxu0 0
        %2207 = vmatpush2.bf16.msra.mxu0 0
        %2208 = vmatprep.subr.bf16.mxu0 0
        %2209 = vmatpush2.bf16.msra.mxu0 0
        %2210 = vmatprep.subr.bf16.mxu0 0
        %2211 = vmatpush2.bf16.msra.mxu0 0
        %2212 = vmatprep.mubr.bf16.mxu0 0
        %2213 = vmatmul.mubr.bf16.gmra.mxu0 %v2128
        %v2214 = vpop.f32.mrf.mxu0
        %v2215 = vadd.f32 %v2109, %v2214
        %v2216 = vpop.f32.mrf.mxu0
        %v2217 = vpop.f32.mrf.mxu0
        %v2218 = vadd.f32 %v2112, %v2217
        %v2219 = vpop.f32.mrf.mxu0
        %2220 = vmatprep.mubr.bf16.mxu0 0
        %2221 = vmatmul.mubr.bf16.gmra.mxu0 %v2129
        %v2222 = vpop.f32.mrf.mxu0
        %v2223 = vadd.f32 %v2117, %v2222
        %v2224 = vpop.f32.mrf.mxu0
        %v2225 = vpop.f32.mrf.mxu0
        %v2226 = vpop.f32.mrf.mxu0
        %2227 = vdwg.mxu0
        %v2228 = vld [vmem:[#allocation3] sm:$0xe]
        %s2229 = scalar_lea.vmem [#allocation9], 128
        %v2230 = vld [vmem:[%s2229] sm:$0xf]
        %v2231 = vld [vmem:[%s2229 + $0x4] sm:$0xf]
        %v2232 = vld [vmem:[%s2229 + $0x8] sm:$0xf]
        %v2233 = vld [vmem:[%s2229 + $0xc] sm:$0xf]
        %v2234 = vld [vmem:[%s2229 + $0x10] sm:$0xf]
        %v2235 = vld [vmem:[%s2229 + $0x14] sm:$0xf]
        %v2236 = vld [vmem:[%s2229 + $0x18] sm:$0xf]
        %v2237 = vld [vmem:[%s2229 + $0x1c] sm:$0xf]
        %v2238 = vld [vmem:[%s2229 + $0x20] sm:$0xf]
        %v2239 = vld [vmem:[%s2229 + $0x24] sm:$0xf]
        %v2240 = vld [vmem:[%s2229 + $0x28] sm:$0xf]
        %v2241 = vld [vmem:[%s2229 + $0x2c] sm:$0xf]
        %v2242 = vld [vmem:[%s2229 + $0x30] sm:$0xf]
        %v2243 = vld [vmem:[%s2229 + $0x34] sm:$0xf]
        %v2244 = vld [vmem:[%s2229 + $0x38] sm:$0xf]
        %v2245 = vld [vmem:[%s2229 + $0x3c] sm:$0xf]
        %v2247 = vunpack.c.l.b16 %v2228
        %v2248 = vpack.c.b16 %v2004, %v2247
        %v2249 = vrot.slane %v2248, 1
        %v2250 = vrot.slane %v2008, 1
        %v2251 = vsel %vm780, %v2249, %v2250
        %v2270 = vunpack.c.l.b16 %v2230
        %v2271 = vunpack.c.l.b16 %v2231
        %v2272 = vunpack.c.l.b16 %v2232
        %v2273 = vunpack.c.l.b16 %v2233
        %v2274 = vunpack.c.l.b16 %v2234
        %v2275 = vunpack.c.l.b16 %v2235
        %v2276 = vunpack.c.l.b16 %v2236
        %v2277 = vunpack.c.l.b16 %v2237
        %v2278 = vunpack.c.l.b16 %v2238
        %v2279 = vunpack.c.l.b16 %v2239
        %v2280 = vunpack.c.l.b16 %v2240
        %v2281 = vunpack.c.l.b16 %v2241
        %v2282 = vunpack.c.l.b16 %v2242
        %v2283 = vunpack.c.l.b16 %v2243
        %v2284 = vunpack.c.l.b16 %v2244
        %v2285 = vunpack.c.l.b16 %v2245
        %v2286 = vpack.c.b16 %v2271, %v2270
        %v2287 = vpack.c.b16 %v2273, %v2272
        %v2288 = vpack.c.b16 %v2275, %v2274
        %v2289 = vpack.c.b16 %v2277, %v2276
        %v2290 = vpack.c.b16 %v2279, %v2278
        %v2291 = vpack.c.b16 %v2281, %v2280
        %v2292 = vpack.c.b16 %v2283, %v2282
        %v2293 = vpack.c.b16 %v2285, %v2284
        %2302 = vmatprep.subr.bf16.mxu0 0
        %2303 = vmatpush1.bf16.msra.mxu0 %v2293
        %2304 = vmatprep.subr.bf16.mxu0 0
        %2305 = vmatpush1.bf16.msra.mxu0 %v2292
        %2306 = vmatprep.subr.bf16.mxu0 0
        %2307 = vmatpush1.bf16.msra.mxu0 %v2291
        %2308 = vmatprep.subr.bf16.mxu0 0
        %2309 = vmatpush1.bf16.msra.mxu0 %v2290
        %2310 = vmatprep.subr.bf16.mxu0 0
        %2311 = vmatpush1.bf16.msra.mxu0 %v2289
        %2312 = vmatprep.subr.bf16.mxu0 0
        %2313 = vmatpush1.bf16.msra.mxu0 %v2288
        %2314 = vmatprep.subr.bf16.mxu0 0
        %2315 = vmatpush1.bf16.msra.mxu0 %v2287
        %2316 = vmatprep.subr.bf16.mxu0 0
        %2317 = vmatpush1.bf16.msra.mxu0 %v2286
        %2318 = vmatprep.subr.bf16.mxu0 0
        %2319 = vmatpush2.bf16.msra.mxu0 0
        %2320 = vmatprep.subr.bf16.mxu0 0
        %2321 = vmatpush2.bf16.msra.mxu0 0
        %2322 = vmatprep.subr.bf16.mxu0 0
        %2323 = vmatpush2.bf16.msra.mxu0 0
        %2324 = vmatprep.subr.bf16.mxu0 0
        %2325 = vmatpush2.bf16.msra.mxu0 0
        %2326 = vmatprep.subr.bf16.mxu0 0
        %2327 = vmatpush2.bf16.msra.mxu0 0
        %2328 = vmatprep.subr.bf16.mxu0 0
        %2329 = vmatpush2.bf16.msra.mxu0 0
        %2330 = vmatprep.subr.bf16.mxu0 0
        %2331 = vmatpush2.bf16.msra.mxu0 0
        %2332 = vmatprep.subr.bf16.mxu0 0
        %2333 = vmatpush2.bf16.msra.mxu0 0
        %2334 = vmatprep.mubr.bf16.mxu0 0
        %2335 = vmatmul.mubr.bf16.gmra.mxu0 %v2251
        %v2336 = vpop.f32.mrf.mxu0
        %v2337 = vadd.f32 0.0, %v2336
        %v2338 = vpop.f32.mrf.mxu0
        %v2339 = vpop.f32.mrf.mxu0
        %v2340 = vadd.f32 0.0, %v2339
        %v2341 = vpop.f32.mrf.mxu0
        %2342 = vmatprep.mubr.bf16.mxu0 0
        %2343 = vmatmul.mubr.bf16.gmra.mxu0 %v2250
        %v2344 = vpop.f32.mrf.mxu0
        %v2345 = vadd.f32 0.0, %v2344
        %v2346 = vpop.f32.mrf.mxu0
        %v2347 = vpop.f32.mrf.mxu0
        %v2348 = vpop.f32.mrf.mxu0
        %2349 = vdwg.mxu0
        %v2350 = vadd.f32 %v2215, %v2337
        %v2351 = vadd.f32 %v2218, %v2340
        %v2352 = vadd.f32 %v2223, %v2345
        %v2353 = vld [vmem:[#allocation3 + $0xc] sm:$0x3]
        %s2354 = scalar_lea.vmem [#allocation9], 192
        %v2355 = vld [vmem:[%s2354] sm:$0xf]
        %v2356 = vld [vmem:[%s2354 + $0x4] sm:$0xf]
        %v2357 = vld [vmem:[%s2354 + $0x8] sm:$0xf]
        %v2358 = vld [vmem:[%s2354 + $0xc] sm:$0xf]
        %v2359 = vld [vmem:[%s2354 + $0x10] sm:$0xf]
        %v2360 = vld [vmem:[%s2354 + $0x14] sm:$0xf]
        %v2361 = vld [vmem:[%s2354 + $0x18] sm:$0xf]
        %v2362 = vld [vmem:[%s2354 + $0x1c] sm:$0xf]
        %v2363 = vld [vmem:[%s2354 + $0x20] sm:$0xf]
        %v2364 = vld [vmem:[%s2354 + $0x24] sm:$0xf]
        %v2365 = vld [vmem:[%s2354 + $0x28] sm:$0xf]
        %v2366 = vld [vmem:[%s2354 + $0x2c] sm:$0xf]
        %v2367 = vld [vmem:[%s2354 + $0x30] sm:$0xf]
        %v2368 = vld [vmem:[%s2354 + $0x34] sm:$0xf]
        %v2369 = vld [vmem:[%s2354 + $0x38] sm:$0xf]
        %v2370 = vld [vmem:[%s2354 + $0x3c] sm:$0xf]
        %v2372 = vunpack.c.l.b16 %v2353
        %v2373 = vpack.c.b16 %v2372, %v2005
        %v2375 = vshrl.u32 %v2248, 16
        %v2377 = vrot.slane %v2375, 1
        %v2378 = vshll.u32 %v2248, 16
        %v2380 = vrot.slane %v2378, 2
        %v2381 = vor.u32 %v2377, %v2380
        %v2383 = vshrl.u32 %v2373, 16
        %v2385 = vrot.slane %v2383, 1
        %v2386 = vshll.u32 %v2373, 16
        %v2388 = vrot.slane %v2386, 2
        %v2389 = vor.u32 %v2385, %v2388
        %v2390 = vsel %vm910, %v2381, %v2389
        %v2409 = vunpack.c.l.b16 %v2355
        %v2410 = vunpack.c.l.b16 %v2356
        %v2411 = vunpack.c.l.b16 %v2357
        %v2412 = vunpack.c.l.b16 %v2358
        %v2413 = vunpack.c.l.b16 %v2359
        %v2414 = vunpack.c.l.b16 %v2360
        %v2415 = vunpack.c.l.b16 %v2361
        %v2416 = vunpack.c.l.b16 %v2362
        %v2417 = vunpack.c.l.b16 %v2363
        %v2418 = vunpack.c.l.b16 %v2364
        %v2419 = vunpack.c.l.b16 %v2365
        %v2420 = vunpack.c.l.b16 %v2366
        %v2421 = vunpack.c.l.b16 %v2367
        %v2422 = vunpack.c.l.b16 %v2368
        %v2423 = vunpack.c.l.b16 %v2369
        %v2424 = vunpack.c.l.b16 %v2370
        %v2425 = vpack.c.b16 %v2410, %v2409
        %v2426 = vpack.c.b16 %v2412, %v2411
        %v2427 = vpack.c.b16 %v2414, %v2413
        %v2428 = vpack.c.b16 %v2416, %v2415
        %v2429 = vpack.c.b16 %v2418, %v2417
        %v2430 = vpack.c.b16 %v2420, %v2419
        %v2431 = vpack.c.b16 %v2422, %v2421
        %v2432 = vpack.c.b16 %v2424, %v2423
        %2441 = vmatprep.subr.bf16.mxu0 0
        %2442 = vmatpush1.bf16.msra.mxu0 %v2432
        %2443 = vmatprep.subr.bf16.mxu0 0
        %2444 = vmatpush1.bf16.msra.mxu0 %v2431
        %2445 = vmatprep.subr.bf16.mxu0 0
        %2446 = vmatpush1.bf16.msra.mxu0 %v2430
        %2447 = vmatprep.subr.bf16.mxu0 0
        %2448 = vmatpush1.bf16.msra.mxu0 %v2429
        %2449 = vmatprep.subr.bf16.mxu0 0
        %2450 = vmatpush1.bf16.msra.mxu0 %v2428
        %2451 = vmatprep.subr.bf16.mxu0 0
        %2452 = vmatpush1.bf16.msra.mxu0 %v2427
        %2453 = vmatprep.subr.bf16.mxu0 0
        %2454 = vmatpush1.bf16.msra.mxu0 %v2426
        %2455 = vmatprep.subr.bf16.mxu0 0
        %2456 = vmatpush1.bf16.msra.mxu0 %v2425
        %2457 = vmatprep.subr.bf16.mxu0 0
        %2458 = vmatpush2.bf16.msra.mxu0 0
        %2459 = vmatprep.subr.bf16.mxu0 0
        %2460 = vmatpush2.bf16.msra.mxu0 0
        %2461 = vmatprep.subr.bf16.mxu0 0
        %2462 = vmatpush2.bf16.msra.mxu0 0
        %2463 = vmatprep.subr.bf16.mxu0 0
        %2464 = vmatpush2.bf16.msra.mxu0 0
        %2465 = vmatprep.subr.bf16.mxu0 0
        %2466 = vmatpush2.bf16.msra.mxu0 0
        %2467 = vmatprep.subr.bf16.mxu0 0
        %2468 = vmatpush2.bf16.msra.mxu0 0
        %2469 = vmatprep.subr.bf16.mxu0 0
        %2470 = vmatpush2.bf16.msra.mxu0 0
        %2471 = vmatprep.subr.bf16.mxu0 0
        %2472 = vmatpush2.bf16.msra.mxu0 0
        %2473 = vmatprep.mubr.bf16.mxu0 0
        %2474 = vmatmul.mubr.bf16.gmra.mxu0 %v2390
        %v2475 = vpop.f32.mrf.mxu0
        %v2476 = vadd.f32 0.0, %v2475
        %v2477 = vpop.f32.mrf.mxu0
        %v2478 = vpop.f32.mrf.mxu0
        %v2479 = vadd.f32 0.0, %v2478
        %v2480 = vpop.f32.mrf.mxu0
        %2481 = vmatprep.mubr.bf16.mxu0 0
        %2482 = vmatmul.mubr.bf16.gmra.mxu0 %v2389
        %v2483 = vpop.f32.mrf.mxu0
        %v2484 = vadd.f32 0.0, %v2483
        %v2485 = vpop.f32.mrf.mxu0
        %v2486 = vpop.f32.mrf.mxu0
        %v2487 = vpop.f32.mrf.mxu0
        %2488 = vdwg.mxu0
        %v2489 = vadd.f32 %v2350, %v2476
        %v2490 = vadd.f32 %v2351, %v2479
        %v2491 = vadd.f32 %v2352, %v2484
        %v2492 = vld [vmem:[#allocation3] sm:$0xc]
        %s2493 = scalar_lea.vmem [#allocation9], 256
        %v2494 = vld [vmem:[%s2493] sm:$0xf]
        %v2495 = vld [vmem:[%s2493 + $0x4] sm:$0xf]
        %v2496 = vld [vmem:[%s2493 + $0x8] sm:$0xf]
        %v2497 = vld [vmem:[%s2493 + $0xc] sm:$0xf]
        %v2498 = vld [vmem:[%s2493 + $0x10] sm:$0xf]
        %v2499 = vld [vmem:[%s2493 + $0x14] sm:$0xf]
        %v2500 = vld [vmem:[%s2493 + $0x18] sm:$0xf]
        %v2501 = vld [vmem:[%s2493 + $0x1c] sm:$0xf]
        %v2502 = vld [vmem:[%s2493 + $0x20] sm:$0xf]
        %v2503 = vld [vmem:[%s2493 + $0x24] sm:$0xf]
        %v2504 = vld [vmem:[%s2493 + $0x28] sm:$0xf]
        %v2505 = vld [vmem:[%s2493 + $0x2c] sm:$0xf]
        %v2506 = vld [vmem:[%s2493 + $0x30] sm:$0xf]
        %v2507 = vld [vmem:[%s2493 + $0x34] sm:$0xf]
        %v2508 = vld [vmem:[%s2493 + $0x38] sm:$0xf]
        %v2509 = vld [vmem:[%s2493 + $0x3c] sm:$0xf]
        %v2511 = vunpack.c.l.b16 %v2492
        %v2512 = vpack.c.b16 %v2004, %v2511
        %v2513 = vrot.slane %v2512, 2
        %v2514 = vrot.slane %v2373, 2
        %v2515 = vsel %vm1056, %v2513, %v2514
        %v2534 = vunpack.c.l.b16 %v2494
        %v2535 = vunpack.c.l.b16 %v2495
        %v2536 = vunpack.c.l.b16 %v2496
        %v2537 = vunpack.c.l.b16 %v2497
        %v2538 = vunpack.c.l.b16 %v2498
        %v2539 = vunpack.c.l.b16 %v2499
        %v2540 = vunpack.c.l.b16 %v2500
        %v2541 = vunpack.c.l.b16 %v2501
        %v2542 = vunpack.c.l.b16 %v2502
        %v2543 = vunpack.c.l.b16 %v2503
        %v2544 = vunpack.c.l.b16 %v2504
        %v2545 = vunpack.c.l.b16 %v2505
        %v2546 = vunpack.c.l.b16 %v2506
        %v2547 = vunpack.c.l.b16 %v2507
        %v2548 = vunpack.c.l.b16 %v2508
        %v2549 = vunpack.c.l.b16 %v2509
        %v2550 = vpack.c.b16 %v2535, %v2534
        %v2551 = vpack.c.b16 %v2537, %v2536
        %v2552 = vpack.c.b16 %v2539, %v2538
        %v2553 = vpack.c.b16 %v2541, %v2540
        %v2554 = vpack.c.b16 %v2543, %v2542
        %v2555 = vpack.c.b16 %v2545, %v2544
        %v2556 = vpack.c.b16 %v2547, %v2546
        %v2557 = vpack.c.b16 %v2549, %v2548
        %2566 = vmatprep.subr.bf16.mxu0 0
        %2567 = vmatpush1.bf16.msra.mxu0 %v2557
        %2568 = vmatprep.subr.bf16.mxu0 0
        %2569 = vmatpush1.bf16.msra.mxu0 %v2556
        %2570 = vmatprep.subr.bf16.mxu0 0
        %2571 = vmatpush1.bf16.msra.mxu0 %v2555
        %2572 = vmatprep.subr.bf16.mxu0 0
        %2573 = vmatpush1.bf16.msra.mxu0 %v2554
        %2574 = vmatprep.subr.bf16.mxu0 0
        %2575 = vmatpush1.bf16.msra.mxu0 %v2553
        %2576 = vmatprep.subr.bf16.mxu0 0
        %2577 = vmatpush1.bf16.msra.mxu0 %v2552
        %2578 = vmatprep.subr.bf16.mxu0 0
        %2579 = vmatpush1.bf16.msra.mxu0 %v2551
        %2580 = vmatprep.subr.bf16.mxu0 0
        %2581 = vmatpush1.bf16.msra.mxu0 %v2550
        %2582 = vmatprep.subr.bf16.mxu0 0
        %2583 = vmatpush2.bf16.msra.mxu0 0
        %2584 = vmatprep.subr.bf16.mxu0 0
        %2585 = vmatpush2.bf16.msra.mxu0 0
        %2586 = vmatprep.subr.bf16.mxu0 0
        %2587 = vmatpush2.bf16.msra.mxu0 0
        %2588 = vmatprep.subr.bf16.mxu0 0
        %2589 = vmatpush2.bf16.msra.mxu0 0
        %2590 = vmatprep.subr.bf16.mxu0 0
        %2591 = vmatpush2.bf16.msra.mxu0 0
        %2592 = vmatprep.subr.bf16.mxu0 0
        %2593 = vmatpush2.bf16.msra.mxu0 0
        %2594 = vmatprep.subr.bf16.mxu0 0
        %2595 = vmatpush2.bf16.msra.mxu0 0
        %2596 = vmatprep.subr.bf16.mxu0 0
        %2597 = vmatpush2.bf16.msra.mxu0 0
        %2598 = vmatprep.mubr.bf16.mxu0 0
        %2599 = vmatmul.mubr.bf16.gmra.mxu0 %v2515
        %v2600 = vpop.f32.mrf.mxu0
        %v2601 = vadd.f32 0.0, %v2600
        %v2602 = vpop.f32.mrf.mxu0
        %v2603 = vpop.f32.mrf.mxu0
        %v2604 = vadd.f32 0.0, %v2603
        %v2605 = vpop.f32.mrf.mxu0
        %2606 = vmatprep.mubr.bf16.mxu0 0
        %2607 = vmatmul.mubr.bf16.gmra.mxu0 %v2514
        %v2608 = vpop.f32.mrf.mxu0
        %v2609 = vadd.f32 0.0, %v2608
        %v2610 = vpop.f32.mrf.mxu0
        %v2611 = vpop.f32.mrf.mxu0
        %v2612 = vpop.f32.mrf.mxu0
        %2613 = vdwg.mxu0
        %v2614 = vadd.f32 %v2489, %v2601
        %v2615 = vadd.f32 %v2490, %v2604
        %v2616 = vadd.f32 %v2491, %v2609
        %v2617 = vld [vmem:[%s6] sm:$0x1]
        %v2619 = vlaneseq
        %v2620 = vshrl.u32 %v2619, 7
        %v2621 = vsub.s32 0, %v2620
        %v2622 = vrot.slane %v2617, %v2621
        %v2624 = vadd.f32 %v2614, %v2622
        %v2625 = vadd.f32 %v2615, %v2622
        %v2626 = vadd.f32 %v2616, %v2622
        %v2627 = vtanh.pop %v2624
        %v2628 = vtanh.pop %v2625
        %v2629 = vtanh.pop %v2626
        %s2630 = sadd.s32 %s488, 4294967292
        %v2631 = vstv %s2630
        %v2632 = vadd.s32 %v2631, %v1182
        %v2633 = vadd.s32 %v2631, %v1183
        %v2634 = vadd.s32 %v2631, %v1184
        %vm2635 = vcmp.ge.s32.totalorder %v2632, 0
        %vm2636 = vcmp.ge.s32.totalorder %v2633, 0
        %vm2637 = vcmp.ge.s32.totalorder %v2634, 0
        %vm2638 = vcmp.lt.s32.totalorder %v2632, 30
        %vm2639 = vcmp.lt.s32.totalorder %v2633, 30
        %vm2640 = vcmp.lt.s32.totalorder %v2634, 30
        %vm2641 = vmand %vm2635, %vm2638
        %vm2642 = vmand %vm2636, %vm2639
        %vm2643 = vmand %vm2637, %vm2640
        %v2644 = vsel %vm2641, 1, 0
        %v2645 = vsel %vm2642, 1, 0
        %v2646 = vsel %vm2643, 1, 0
        %vm2647 = vcmp.eq.s32.totalorder %v2644, 1
        %vm2648 = vcmp.eq.s32.totalorder %v2645, 1
        %vm2649 = vcmp.eq.s32.totalorder %v2646, 1
        %v2650 = vsel %vm2647, %v2627, 0.0
        %v2651 = vsel %vm2648, %v2628, 0.0
        %v2652 = vsel %vm2649, %v2629, 0.0
        %v2653 = vpack.c.bf16 %v2651, %v2650
        %v2654 = vpack.c.bf16 %v2652, %v2652
        %v2657 = vunpack.c.l.b16 %v2653
        %v2658 = vunpack.c.h.b16 %v2653
        %v2659 = vunpack.c.l.b16 %v2654
        %v2660 = vpack.c.b16 %v2657, %v2657
        %v2661 = vpack.c.b16 %v2658, %v2658
        %v2662 = vpack.c.b16 %v2659, %v2659
        %2666 = vst [vmem:[#allocation2] sm:$0xf] %v2660
        %2667 = vst [vmem:[#allocation2 + $0x4] sm:$0xf] %v2661
        %2668 = vst [vmem:[#allocation2 + $0x8] sm:$0xf] %v2662
        %v2669 = vld [vmem:[#allocation2] sm:$0xf]
        %v2670 = vld [vmem:[#allocation2 + $0x4] sm:$0xf]
        %v2671 = vld [vmem:[#allocation2 + $0x8] sm:$0x3]
        %v2672 = vld [vmem:[#allocation10] sm:$0xf]
        %v2673 = vld [vmem:[#allocation10 + $0x4] sm:$0xf]
        %v2674 = vld [vmem:[#allocation10 + $0x8] sm:$0xf]
        %v2675 = vld [vmem:[#allocation10 + $0xc] sm:$0xf]
        %v2676 = vld [vmem:[#allocation10 + $0x10] sm:$0xf]
        %v2677 = vld [vmem:[#allocation10 + $0x14] sm:$0xf]
        %v2678 = vld [vmem:[#allocation10 + $0x18] sm:$0xf]
        %v2679 = vld [vmem:[#allocation10 + $0x1c] sm:$0xf]
        %v2680 = vld [vmem:[#allocation10 + $0x20] sm:$0xf]
        %v2681 = vld [vmem:[#allocation10 + $0x24] sm:$0xf]
        %v2682 = vld [vmem:[#allocation10 + $0x28] sm:$0xf]
        %v2683 = vld [vmem:[#allocation10 + $0x2c] sm:$0xf]
        %v2684 = vld [vmem:[#allocation10 + $0x30] sm:$0xf]
        %v2685 = vld [vmem:[#allocation10 + $0x34] sm:$0xf]
        %v2686 = vld [vmem:[#allocation10 + $0x38] sm:$0xf]
        %v2687 = vld [vmem:[#allocation10 + $0x3c] sm:$0xf]
        %v2688 = vld [vmem:[#allocation2 + $0x8] sm:$0x7]
        %s2689 = scalar_lea.vmem [#allocation10], 64
        %v2690 = vld [vmem:[%s2689] sm:$0xf]
        %v2691 = vld [vmem:[%s2689 + $0x4] sm:$0xf]
        %v2692 = vld [vmem:[%s2689 + $0x8] sm:$0xf]
        %v2693 = vld [vmem:[%s2689 + $0xc] sm:$0xf]
        %v2694 = vld [vmem:[%s2689 + $0x10] sm:$0xf]
        %v2695 = vld [vmem:[%s2689 + $0x14] sm:$0xf]
        %v2696 = vld [vmem:[%s2689 + $0x18] sm:$0xf]
        %v2697 = vld [vmem:[%s2689 + $0x1c] sm:$0xf]
        %v2698 = vld [vmem:[%s2689 + $0x20] sm:$0xf]
        %v2699 = vld [vmem:[%s2689 + $0x24] sm:$0xf]
        %v2700 = vld [vmem:[%s2689 + $0x28] sm:$0xf]
        %v2701 = vld [vmem:[%s2689 + $0x2c] sm:$0xf]
        %v2702 = vld [vmem:[%s2689 + $0x30] sm:$0xf]
        %v2703 = vld [vmem:[%s2689 + $0x34] sm:$0xf]
        %v2704 = vld [vmem:[%s2689 + $0x38] sm:$0xf]
        %v2705 = vld [vmem:[%s2689 + $0x3c] sm:$0xf]
        %v2709 = vunpack.c.l.b16 %v2669
        %v2710 = vunpack.c.l.b16 %v2670
        %v2711 = vunpack.c.l.b16 %v2688
        %v2712 = vpack.c.b16 %v2710, %v2709
        %v2713 = vpack.c.b16 %v2711, %v2711
        %v2715 = vshrl.u32 %v2712, 16
        %v2717 = vshll.u32 %v2712, 16
        %v2719 = vrot.slane %v2717, 1
        %v2720 = vor.u32 %v2715, %v2719
        %v2722 = vshll.u32 %v2713, 16
        %v2724 = vrot.slane %v2722, 1
        %v2725 = vsel %vm540, %v2720, %v2724
        %v2726 = vshrl.u32 %v2713, 16
        %v2728 = vor.u32 %v2726, %v2724
        %v2747 = vunpack.c.l.b16 %v2690
        %v2748 = vunpack.c.l.b16 %v2691
        %v2749 = vunpack.c.l.b16 %v2692
        %v2750 = vunpack.c.l.b16 %v2693
        %v2751 = vunpack.c.l.b16 %v2694
        %v2752 = vunpack.c.l.b16 %v2695
        %v2753 = vunpack.c.l.b16 %v2696
        %v2754 = vunpack.c.l.b16 %v2697
        %v2755 = vunpack.c.l.b16 %v2698
        %v2756 = vunpack.c.l.b16 %v2699
        %v2757 = vunpack.c.l.b16 %v2700
        %v2758 = vunpack.c.l.b16 %v2701
        %v2759 = vunpack.c.l.b16 %v2702
        %v2760 = vunpack.c.l.b16 %v2703
        %v2761 = vunpack.c.l.b16 %v2704
        %v2762 = vunpack.c.l.b16 %v2705
        %v2763 = vpack.c.b16 %v2748, %v2747
        %v2764 = vpack.c.b16 %v2750, %v2749
        %v2765 = vpack.c.b16 %v2752, %v2751
        %v2766 = vpack.c.b16 %v2754, %v2753
        %v2767 = vpack.c.b16 %v2756, %v2755
        %v2768 = vpack.c.b16 %v2758, %v2757
        %v2769 = vpack.c.b16 %v2760, %v2759
        %v2770 = vpack.c.b16 %v2762, %v2761
        %2779 = vmatprep.subr.bf16.mxu0 0
        %2780 = vmatpush1.bf16.msra.mxu0 %v2770
        %2781 = vmatprep.subr.bf16.mxu0 0
        %2782 = vmatpush1.bf16.msra.mxu0 %v2769
        %2783 = vmatprep.subr.bf16.mxu0 0
        %2784 = vmatpush1.bf16.msra.mxu0 %v2768
        %2785 = vmatprep.subr.bf16.mxu0 0
        %2786 = vmatpush1.bf16.msra.mxu0 %v2767
        %2787 = vmatprep.subr.bf16.mxu0 0
        %2788 = vmatpush1.bf16.msra.mxu0 %v2766
        %2789 = vmatprep.subr.bf16.mxu0 0
        %2790 = vmatpush1.bf16.msra.mxu0 %v2765
        %2791 = vmatprep.subr.bf16.mxu0 0
        %2792 = vmatpush1.bf16.msra.mxu0 %v2764
        %2793 = vmatprep.subr.bf16.mxu0 0
        %2794 = vmatpush1.bf16.msra.mxu0 %v2763
        %2795 = vmatprep.subr.bf16.mxu0 0
        %2796 = vmatpush2.bf16.msra.mxu0 0
        %2797 = vmatprep.subr.bf16.mxu0 0
        %2798 = vmatpush2.bf16.msra.mxu0 0
        %2799 = vmatprep.subr.bf16.mxu0 0
        %2800 = vmatpush2.bf16.msra.mxu0 0
        %2801 = vmatprep.subr.bf16.mxu0 0
        %2802 = vmatpush2.bf16.msra.mxu0 0
        %2803 = vmatprep.subr.bf16.mxu0 0
        %2804 = vmatpush2.bf16.msra.mxu0 0
        %2805 = vmatprep.subr.bf16.mxu0 0
        %2806 = vmatpush2.bf16.msra.mxu0 0
        %2807 = vmatprep.subr.bf16.mxu0 0
        %2808 = vmatpush2.bf16.msra.mxu0 0
        %2809 = vmatprep.subr.bf16.mxu0 0
        %2810 = vmatpush2.bf16.msra.mxu0 0
        %2811 = vmatprep.mubr.bf16.mxu0 0
        %2812 = vmatmul.mubr.bf16.gmra.mxu0 %v2725
        %v2813 = vpop.f32.mrf.mxu0
        %v2814 = vadd.f32 0.0, %v2813
        %v2815 = vpop.f32.mrf.mxu0
        %v2816 = vpop.f32.mrf.mxu0
        %v2817 = vadd.f32 0.0, %v2816
        %v2818 = vpop.f32.mrf.mxu0
        %2819 = vmatprep.mubr.bf16.mxu0 0
        %2820 = vmatmul.mubr.bf16.gmra.mxu0 %v2728
        %v2821 = vpop.f32.mrf.mxu0
        %v2822 = vadd.f32 0.0, %v2821
        %v2823 = vpop.f32.mrf.mxu0
        %v2824 = vpop.f32.mrf.mxu0
        %v2825 = vpop.f32.mrf.mxu0
        %2826 = vdwg.mxu0
        %v2828 = vunpack.c.l.b16 %v2671
        %v2829 = vpack.c.b16 %v2828, %v2828
        %v2848 = vunpack.c.l.b16 %v2672
        %v2849 = vunpack.c.l.b16 %v2673
        %v2850 = vunpack.c.l.b16 %v2674
        %v2851 = vunpack.c.l.b16 %v2675
        %v2852 = vunpack.c.l.b16 %v2676
        %v2853 = vunpack.c.l.b16 %v2677
        %v2854 = vunpack.c.l.b16 %v2678
        %v2855 = vunpack.c.l.b16 %v2679
        %v2856 = vunpack.c.l.b16 %v2680
        %v2857 = vunpack.c.l.b16 %v2681
        %v2858 = vunpack.c.l.b16 %v2682
        %v2859 = vunpack.c.l.b16 %v2683
        %v2860 = vunpack.c.l.b16 %v2684
        %v2861 = vunpack.c.l.b16 %v2685
        %v2862 = vunpack.c.l.b16 %v2686
        %v2863 = vunpack.c.l.b16 %v2687
        %v2864 = vpack.c.b16 %v2849, %v2848
        %v2865 = vpack.c.b16 %v2851, %v2850
        %v2866 = vpack.c.b16 %v2853, %v2852
        %v2867 = vpack.c.b16 %v2855, %v2854
        %v2868 = vpack.c.b16 %v2857, %v2856
        %v2869 = vpack.c.b16 %v2859, %v2858
        %v2870 = vpack.c.b16 %v2861, %v2860
        %v2871 = vpack.c.b16 %v2863, %v2862
        %2880 = vmatprep.subr.bf16.mxu0 0
        %2881 = vmatpush1.bf16.msra.mxu0 %v2871
        %2882 = vmatprep.subr.bf16.mxu0 0
        %2883 = vmatpush1.bf16.msra.mxu0 %v2870
        %2884 = vmatprep.subr.bf16.mxu0 0
        %2885 = vmatpush1.bf16.msra.mxu0 %v2869
        %2886 = vmatprep.subr.bf16.mxu0 0
        %2887 = vmatpush1.bf16.msra.mxu0 %v2868
        %2888 = vmatprep.subr.bf16.mxu0 0
        %2889 = vmatpush1.bf16.msra.mxu0 %v2867
        %2890 = vmatprep.subr.bf16.mxu0 0
        %2891 = vmatpush1.bf16.msra.mxu0 %v2866
        %2892 = vmatprep.subr.bf16.mxu0 0
        %2893 = vmatpush1.bf16.msra.mxu0 %v2865
        %2894 = vmatprep.subr.bf16.mxu0 0
        %2895 = vmatpush1.bf16.msra.mxu0 %v2864
        %2896 = vmatprep.subr.bf16.mxu0 0
        %2897 = vmatpush2.bf16.msra.mxu0 0
        %2898 = vmatprep.subr.bf16.mxu0 0
        %2899 = vmatpush2.bf16.msra.mxu0 0
        %2900 = vmatprep.subr.bf16.mxu0 0
        %2901 = vmatpush2.bf16.msra.mxu0 0
        %2902 = vmatprep.subr.bf16.mxu0 0
        %2903 = vmatpush2.bf16.msra.mxu0 0
        %2904 = vmatprep.subr.bf16.mxu0 0
        %2905 = vmatpush2.bf16.msra.mxu0 0
        %2906 = vmatprep.subr.bf16.mxu0 0
        %2907 = vmatpush2.bf16.msra.mxu0 0
        %2908 = vmatprep.subr.bf16.mxu0 0
        %2909 = vmatpush2.bf16.msra.mxu0 0
        %2910 = vmatprep.subr.bf16.mxu0 0
        %2911 = vmatpush2.bf16.msra.mxu0 0
        %2912 = vmatprep.mubr.bf16.mxu0 0
        %2913 = vmatmul.mubr.bf16.gmra.mxu0 %v2712
        %v2914 = vpop.f32.mrf.mxu0
        %v2915 = vadd.f32 %v2814, %v2914
        %v2916 = vpop.f32.mrf.mxu0
        %v2917 = vpop.f32.mrf.mxu0
        %v2918 = vadd.f32 %v2817, %v2917
        %v2919 = vpop.f32.mrf.mxu0
        %2920 = vmatprep.mubr.bf16.mxu0 0
        %2921 = vmatmul.mubr.bf16.gmra.mxu0 %v2829
        %v2922 = vpop.f32.mrf.mxu0
        %v2923 = vadd.f32 %v2822, %v2922
        %v2924 = vpop.f32.mrf.mxu0
        %v2925 = vpop.f32.mrf.mxu0
        %v2926 = vpop.f32.mrf.mxu0
        %2927 = vdwg.mxu0
        %v2928 = vld [vmem:[#allocation2] sm:$0xe]
        %s2929 = scalar_lea.vmem [#allocation10], 128
        %v2930 = vld [vmem:[%s2929] sm:$0xf]
        %v2931 = vld [vmem:[%s2929 + $0x4] sm:$0xf]
        %v2932 = vld [vmem:[%s2929 + $0x8] sm:$0xf]
        %v2933 = vld [vmem:[%s2929 + $0xc] sm:$0xf]
        %v2934 = vld [vmem:[%s2929 + $0x10] sm:$0xf]
        %v2935 = vld [vmem:[%s2929 + $0x14] sm:$0xf]
        %v2936 = vld [vmem:[%s2929 + $0x18] sm:$0xf]
        %v2937 = vld [vmem:[%s2929 + $0x1c] sm:$0xf]
        %v2938 = vld [vmem:[%s2929 + $0x20] sm:$0xf]
        %v2939 = vld [vmem:[%s2929 + $0x24] sm:$0xf]
        %v2940 = vld [vmem:[%s2929 + $0x28] sm:$0xf]
        %v2941 = vld [vmem:[%s2929 + $0x2c] sm:$0xf]
        %v2942 = vld [vmem:[%s2929 + $0x30] sm:$0xf]
        %v2943 = vld [vmem:[%s2929 + $0x34] sm:$0xf]
        %v2944 = vld [vmem:[%s2929 + $0x38] sm:$0xf]
        %v2945 = vld [vmem:[%s2929 + $0x3c] sm:$0xf]
        %v2947 = vunpack.c.l.b16 %v2928
        %v2948 = vpack.c.b16 %v2710, %v2947
        %v2949 = vrot.slane %v2948, 1
        %v2950 = vrot.slane %v2713, 1
        %v2951 = vsel %vm780, %v2949, %v2950
        %v2970 = vunpack.c.l.b16 %v2930
        %v2971 = vunpack.c.l.b16 %v2931
        %v2972 = vunpack.c.l.b16 %v2932
        %v2973 = vunpack.c.l.b16 %v2933
        %v2974 = vunpack.c.l.b16 %v2934
        %v2975 = vunpack.c.l.b16 %v2935
        %v2976 = vunpack.c.l.b16 %v2936
        %v2977 = vunpack.c.l.b16 %v2937
        %v2978 = vunpack.c.l.b16 %v2938
        %v2979 = vunpack.c.l.b16 %v2939
        %v2980 = vunpack.c.l.b16 %v2940
        %v2981 = vunpack.c.l.b16 %v2941
        %v2982 = vunpack.c.l.b16 %v2942
        %v2983 = vunpack.c.l.b16 %v2943
        %v2984 = vunpack.c.l.b16 %v2944
        %v2985 = vunpack.c.l.b16 %v2945
        %v2986 = vpack.c.b16 %v2971, %v2970
        %v2987 = vpack.c.b16 %v2973, %v2972
        %v2988 = vpack.c.b16 %v2975, %v2974
        %v2989 = vpack.c.b16 %v2977, %v2976
        %v2990 = vpack.c.b16 %v2979, %v2978
        %v2991 = vpack.c.b16 %v2981, %v2980
        %v2992 = vpack.c.b16 %v2983, %v2982
        %v2993 = vpack.c.b16 %v2985, %v2984
        %3002 = vmatprep.subr.bf16.mxu0 0
        %3003 = vmatpush1.bf16.msra.mxu0 %v2993
        %3004 = vmatprep.subr.bf16.mxu0 0
        %3005 = vmatpush1.bf16.msra.mxu0 %v2992
        %3006 = vmatprep.subr.bf16.mxu0 0
        %3007 = vmatpush1.bf16.msra.mxu0 %v2991
        %3008 = vmatprep.subr.bf16.mxu0 0
        %3009 = vmatpush1.bf16.msra.mxu0 %v2990
        %3010 = vmatprep.subr.bf16.mxu0 0
        %3011 = vmatpush1.bf16.msra.mxu0 %v2989
        %3012 = vmatprep.subr.bf16.mxu0 0
        %3013 = vmatpush1.bf16.msra.mxu0 %v2988
        %3014 = vmatprep.subr.bf16.mxu0 0
        %3015 = vmatpush1.bf16.msra.mxu0 %v2987
        %3016 = vmatprep.subr.bf16.mxu0 0
        %3017 = vmatpush1.bf16.msra.mxu0 %v2986
        %3018 = vmatprep.subr.bf16.mxu0 0
        %3019 = vmatpush2.bf16.msra.mxu0 0
        %3020 = vmatprep.subr.bf16.mxu0 0
        %3021 = vmatpush2.bf16.msra.mxu0 0
        %3022 = vmatprep.subr.bf16.mxu0 0
        %3023 = vmatpush2.bf16.msra.mxu0 0
        %3024 = vmatprep.subr.bf16.mxu0 0
        %3025 = vmatpush2.bf16.msra.mxu0 0
        %3026 = vmatprep.subr.bf16.mxu0 0
        %3027 = vmatpush2.bf16.msra.mxu0 0
        %3028 = vmatprep.subr.bf16.mxu0 0
        %3029 = vmatpush2.bf16.msra.mxu0 0
        %3030 = vmatprep.subr.bf16.mxu0 0
        %3031 = vmatpush2.bf16.msra.mxu0 0
        %3032 = vmatprep.subr.bf16.mxu0 0
        %3033 = vmatpush2.bf16.msra.mxu0 0
        %3034 = vmatprep.mubr.bf16.mxu0 0
        %3035 = vmatmul.mubr.bf16.gmra.mxu0 %v2951
        %v3036 = vpop.f32.mrf.mxu0
        %v3037 = vadd.f32 0.0, %v3036
        %v3038 = vpop.f32.mrf.mxu0
        %v3039 = vpop.f32.mrf.mxu0
        %v3040 = vadd.f32 0.0, %v3039
        %v3041 = vpop.f32.mrf.mxu0
        %3042 = vmatprep.mubr.bf16.mxu0 0
        %3043 = vmatmul.mubr.bf16.gmra.mxu0 %v2950
        %v3044 = vpop.f32.mrf.mxu0
        %v3045 = vadd.f32 0.0, %v3044
        %v3046 = vpop.f32.mrf.mxu0
        %v3047 = vpop.f32.mrf.mxu0
        %v3048 = vpop.f32.mrf.mxu0
        %3049 = vdwg.mxu0
        %v3050 = vadd.f32 %v2915, %v3037
        %v3051 = vadd.f32 %v2918, %v3040
        %v3052 = vadd.f32 %v2923, %v3045
        %v3053 = vld [vmem:[#allocation2 + $0x8] sm:$0xf]
        %s3054 = scalar_lea.vmem [#allocation10], 192
        %v3055 = vld [vmem:[%s3054] sm:$0xf]
        %v3056 = vld [vmem:[%s3054 + $0x4] sm:$0xf]
        %v3057 = vld [vmem:[%s3054 + $0x8] sm:$0xf]
        %v3058 = vld [vmem:[%s3054 + $0xc] sm:$0xf]
        %v3059 = vld [vmem:[%s3054 + $0x10] sm:$0xf]
        %v3060 = vld [vmem:[%s3054 + $0x14] sm:$0xf]
        %v3061 = vld [vmem:[%s3054 + $0x18] sm:$0xf]
        %v3062 = vld [vmem:[%s3054 + $0x1c] sm:$0xf]
        %v3063 = vld [vmem:[%s3054 + $0x20] sm:$0xf]
        %v3064 = vld [vmem:[%s3054 + $0x24] sm:$0xf]
        %v3065 = vld [vmem:[%s3054 + $0x28] sm:$0xf]
        %v3066 = vld [vmem:[%s3054 + $0x2c] sm:$0xf]
        %v3067 = vld [vmem:[%s3054 + $0x30] sm:$0xf]
        %v3068 = vld [vmem:[%s3054 + $0x34] sm:$0xf]
        %v3069 = vld [vmem:[%s3054 + $0x38] sm:$0xf]
        %v3070 = vld [vmem:[%s3054 + $0x3c] sm:$0xf]
        %v3072 = vunpack.c.l.b16 %v3053
        %v3073 = vpack.c.b16 %v3072, %v3072
        %v3075 = vshrl.u32 %v2948, 16
        %v3077 = vrot.slane %v3075, 1
        %v3078 = vshll.u32 %v2948, 16
        %v3080 = vrot.slane %v3078, 2
        %v3081 = vor.u32 %v3077, %v3080
        %v3083 = vshrl.u32 %v3073, 16
        %v3085 = vrot.slane %v3083, 1
        %v3086 = vshll.u32 %v3073, 16
        %v3088 = vrot.slane %v3086, 2
        %v3089 = vor.u32 %v3085, %v3088
        %v3090 = vsel %vm910, %v3081, %v3089
        %v3109 = vunpack.c.l.b16 %v3055
        %v3110 = vunpack.c.l.b16 %v3056
        %v3111 = vunpack.c.l.b16 %v3057
        %v3112 = vunpack.c.l.b16 %v3058
        %v3113 = vunpack.c.l.b16 %v3059
        %v3114 = vunpack.c.l.b16 %v3060
        %v3115 = vunpack.c.l.b16 %v3061
        %v3116 = vunpack.c.l.b16 %v3062
        %v3117 = vunpack.c.l.b16 %v3063
        %v3118 = vunpack.c.l.b16 %v3064
        %v3119 = vunpack.c.l.b16 %v3065
        %v3120 = vunpack.c.l.b16 %v3066
        %v3121 = vunpack.c.l.b16 %v3067
        %v3122 = vunpack.c.l.b16 %v3068
        %v3123 = vunpack.c.l.b16 %v3069
        %v3124 = vunpack.c.l.b16 %v3070
        %v3125 = vpack.c.b16 %v3110, %v3109
        %v3126 = vpack.c.b16 %v3112, %v3111
        %v3127 = vpack.c.b16 %v3114, %v3113
        %v3128 = vpack.c.b16 %v3116, %v3115
        %v3129 = vpack.c.b16 %v3118, %v3117
        %v3130 = vpack.c.b16 %v3120, %v3119
        %v3131 = vpack.c.b16 %v3122, %v3121
        %v3132 = vpack.c.b16 %v3124, %v3123
        %3141 = vmatprep.subr.bf16.mxu0 0
        %3142 = vmatpush1.bf16.msra.mxu0 %v3132
        %3143 = vmatprep.subr.bf16.mxu0 0
        %3144 = vmatpush1.bf16.msra.mxu0 %v3131
        %3145 = vmatprep.subr.bf16.mxu0 0
        %3146 = vmatpush1.bf16.msra.mxu0 %v3130
        %3147 = vmatprep.subr.bf16.mxu0 0
        %3148 = vmatpush1.bf16.msra.mxu0 %v3129
        %3149 = vmatprep.subr.bf16.mxu0 0
        %3150 = vmatpush1.bf16.msra.mxu0 %v3128
        %3151 = vmatprep.subr.bf16.mxu0 0
        %3152 = vmatpush1.bf16.msra.mxu0 %v3127
        %3153 = vmatprep.subr.bf16.mxu0 0
        %3154 = vmatpush1.bf16.msra.mxu0 %v3126
        %3155 = vmatprep.subr.bf16.mxu0 0
        %3156 = vmatpush1.bf16.msra.mxu0 %v3125
        %3157 = vmatprep.subr.bf16.mxu0 0
        %3158 = vmatpush2.bf16.msra.mxu0 0
        %3159 = vmatprep.subr.bf16.mxu0 0
        %3160 = vmatpush2.bf16.msra.mxu0 0
        %3161 = vmatprep.subr.bf16.mxu0 0
        %3162 = vmatpush2.bf16.msra.mxu0 0
        %3163 = vmatprep.subr.bf16.mxu0 0
        %3164 = vmatpush2.bf16.msra.mxu0 0
        %3165 = vmatprep.subr.bf16.mxu0 0
        %3166 = vmatpush2.bf16.msra.mxu0 0
        %3167 = vmatprep.subr.bf16.mxu0 0
        %3168 = vmatpush2.bf16.msra.mxu0 0
        %3169 = vmatprep.subr.bf16.mxu0 0
        %3170 = vmatpush2.bf16.msra.mxu0 0
        %3171 = vmatprep.subr.bf16.mxu0 0
        %3172 = vmatpush2.bf16.msra.mxu0 0
        %3173 = vmatprep.mubr.bf16.mxu0 0
        %3174 = vmatmul.mubr.bf16.gmra.mxu0 %v3090
        %v3175 = vpop.f32.mrf.mxu0
        %v3176 = vadd.f32 0.0, %v3175
        %v3177 = vpop.f32.mrf.mxu0
        %v3178 = vpop.f32.mrf.mxu0
        %v3179 = vadd.f32 0.0, %v3178
        %v3180 = vpop.f32.mrf.mxu0
        %3181 = vmatprep.mubr.bf16.mxu0 0
        %3182 = vmatmul.mubr.bf16.gmra.mxu0 %v3089
        %v3183 = vpop.f32.mrf.mxu0
        %v3184 = vadd.f32 0.0, %v3183
        %v3185 = vpop.f32.mrf.mxu0
        %v3186 = vpop.f32.mrf.mxu0
        %v3187 = vpop.f32.mrf.mxu0
        %3188 = vdwg.mxu0
        %v3189 = vadd.f32 %v3050, %v3176
        %v3190 = vadd.f32 %v3051, %v3179
        %v3191 = vadd.f32 %v3052, %v3184
        %v3192 = vld [vmem:[#allocation2] sm:$0xc]
        %s3193 = scalar_lea.vmem [#allocation10], 256
        %v3194 = vld [vmem:[%s3193] sm:$0xf]
        %v3195 = vld [vmem:[%s3193 + $0x4] sm:$0xf]
        %v3196 = vld [vmem:[%s3193 + $0x8] sm:$0xf]
        %v3197 = vld [vmem:[%s3193 + $0xc] sm:$0xf]
        %v3198 = vld [vmem:[%s3193 + $0x10] sm:$0xf]
        %v3199 = vld [vmem:[%s3193 + $0x14] sm:$0xf]
        %v3200 = vld [vmem:[%s3193 + $0x18] sm:$0xf]
        %v3201 = vld [vmem:[%s3193 + $0x1c] sm:$0xf]
        %v3202 = vld [vmem:[%s3193 + $0x20] sm:$0xf]
        %v3203 = vld [vmem:[%s3193 + $0x24] sm:$0xf]
        %v3204 = vld [vmem:[%s3193 + $0x28] sm:$0xf]
        %v3205 = vld [vmem:[%s3193 + $0x2c] sm:$0xf]
        %v3206 = vld [vmem:[%s3193 + $0x30] sm:$0xf]
        %v3207 = vld [vmem:[%s3193 + $0x34] sm:$0xf]
        %v3208 = vld [vmem:[%s3193 + $0x38] sm:$0xf]
        %v3209 = vld [vmem:[%s3193 + $0x3c] sm:$0xf]
        %v3211 = vunpack.c.l.b16 %v3192
        %v3212 = vpack.c.b16 %v2710, %v3211
        %v3213 = vrot.slane %v3212, 2
        %v3214 = vrot.slane %v3073, 2
        %v3215 = vsel %vm1056, %v3213, %v3214
        %v3234 = vunpack.c.l.b16 %v3194
        %v3235 = vunpack.c.l.b16 %v3195
        %v3236 = vunpack.c.l.b16 %v3196
        %v3237 = vunpack.c.l.b16 %v3197
        %v3238 = vunpack.c.l.b16 %v3198
        %v3239 = vunpack.c.l.b16 %v3199
        %v3240 = vunpack.c.l.b16 %v3200
        %v3241 = vunpack.c.l.b16 %v3201
        %v3242 = vunpack.c.l.b16 %v3202
        %v3243 = vunpack.c.l.b16 %v3203
        %v3244 = vunpack.c.l.b16 %v3204
        %v3245 = vunpack.c.l.b16 %v3205
        %v3246 = vunpack.c.l.b16 %v3206
        %v3247 = vunpack.c.l.b16 %v3207
        %v3248 = vunpack.c.l.b16 %v3208
        %v3249 = vunpack.c.l.b16 %v3209
        %v3250 = vpack.c.b16 %v3235, %v3234
        %v3251 = vpack.c.b16 %v3237, %v3236
        %v3252 = vpack.c.b16 %v3239, %v3238
        %v3253 = vpack.c.b16 %v3241, %v3240
        %v3254 = vpack.c.b16 %v3243, %v3242
        %v3255 = vpack.c.b16 %v3245, %v3244
        %v3256 = vpack.c.b16 %v3247, %v3246
        %v3257 = vpack.c.b16 %v3249, %v3248
        %3266 = vmatprep.subr.bf16.mxu0 0
        %3267 = vmatpush1.bf16.msra.mxu0 %v3257
        %3268 = vmatprep.subr.bf16.mxu0 0
        %3269 = vmatpush1.bf16.msra.mxu0 %v3256
        %3270 = vmatprep.subr.bf16.mxu0 0
        %3271 = vmatpush1.bf16.msra.mxu0 %v3255
        %3272 = vmatprep.subr.bf16.mxu0 0
        %3273 = vmatpush1.bf16.msra.mxu0 %v3254
        %3274 = vmatprep.subr.bf16.mxu0 0
        %3275 = vmatpush1.bf16.msra.mxu0 %v3253
        %3276 = vmatprep.subr.bf16.mxu0 0
        %3277 = vmatpush1.bf16.msra.mxu0 %v3252
        %3278 = vmatprep.subr.bf16.mxu0 0
        %3279 = vmatpush1.bf16.msra.mxu0 %v3251
        %3280 = vmatprep.subr.bf16.mxu0 0
        %3281 = vmatpush1.bf16.msra.mxu0 %v3250
        %3282 = vmatprep.subr.bf16.mxu0 0
        %3283 = vmatpush2.bf16.msra.mxu0 0
        %3284 = vmatprep.subr.bf16.mxu0 0
        %3285 = vmatpush2.bf16.msra.mxu0 0
        %3286 = vmatprep.subr.bf16.mxu0 0
        %3287 = vmatpush2.bf16.msra.mxu0 0
        %3288 = vmatprep.subr.bf16.mxu0 0
        %3289 = vmatpush2.bf16.msra.mxu0 0
        %3290 = vmatprep.subr.bf16.mxu0 0
        %3291 = vmatpush2.bf16.msra.mxu0 0
        %3292 = vmatprep.subr.bf16.mxu0 0
        %3293 = vmatpush2.bf16.msra.mxu0 0
        %3294 = vmatprep.subr.bf16.mxu0 0
        %3295 = vmatpush2.bf16.msra.mxu0 0
        %3296 = vmatprep.subr.bf16.mxu0 0
        %3297 = vmatpush2.bf16.msra.mxu0 0
        %3298 = vmatprep.mubr.bf16.mxu0 0
        %3299 = vmatmul.mubr.bf16.gmra.mxu0 %v3215
        %v3300 = vpop.f32.mrf.mxu0
        %v3301 = vadd.f32 0.0, %v3300
        %v3302 = vpop.f32.mrf.mxu0
        %v3303 = vpop.f32.mrf.mxu0
        %v3304 = vadd.f32 0.0, %v3303
        %v3305 = vpop.f32.mrf.mxu0
        %3306 = vmatprep.mubr.bf16.mxu0 0
        %3307 = vmatmul.mubr.bf16.gmra.mxu0 %v3214
        %v3308 = vpop.f32.mrf.mxu0
        %v3309 = vadd.f32 0.0, %v3308
        %v3310 = vpop.f32.mrf.mxu0
        %v3311 = vpop.f32.mrf.mxu0
        %v3312 = vpop.f32.mrf.mxu0
        %3313 = vdwg.mxu0
        %v3314 = vadd.f32 %v3189, %v3301
        %v3315 = vadd.f32 %v3190, %v3304
        %v3316 = vadd.f32 %v3191, %v3309
        %v3317 = vld [vmem:[%s8] sm:$0x1]
        %v3319 = vlaneseq
        %v3320 = vshrl.u32 %v3319, 7
        %v3321 = vsub.s32 0, %v3320
        %v3322 = vrot.slane %v3317, %v3321
        %v3324 = vadd.f32 %v3314, %v3322
        %v3325 = vadd.f32 %v3315, %v3322
        %v3326 = vadd.f32 %v3316, %v3322
        %v3327 = vtanh.pop %v3324
        %v3328 = vtanh.pop %v3325
        %v3329 = vtanh.pop %v3326
        %s3330 = sadd.s32 %s488, 4294967294
        %v3331 = vstv %s3330
        %v3332 = vadd.s32 %v3331, %v1182
        %v3333 = vadd.s32 %v3331, %v1183
        %v3334 = vadd.s32 %v3331, %v1184
        %vm3335 = vcmp.ge.s32.totalorder %v3332, 0
        %vm3336 = vcmp.ge.s32.totalorder %v3333, 0
        %vm3337 = vcmp.ge.s32.totalorder %v3334, 0
        %vm3338 = vcmp.lt.s32.totalorder %v3332, 30
        %vm3339 = vcmp.lt.s32.totalorder %v3333, 30
        %vm3340 = vcmp.lt.s32.totalorder %v3334, 30
        %vm3341 = vmand %vm3335, %vm3338
        %vm3342 = vmand %vm3336, %vm3339
        %vm3343 = vmand %vm3337, %vm3340
        %v3344 = vsel %vm3341, 1, 0
        %v3345 = vsel %vm3342, 1, 0
        %v3346 = vsel %vm3343, 1, 0
        %vm3347 = vcmp.eq.s32.totalorder %v3344, 1
        %vm3348 = vcmp.eq.s32.totalorder %v3345, 1
        %vm3349 = vcmp.eq.s32.totalorder %v3346, 1
        %v3350 = vsel %vm3347, %v3327, 0.0
        %v3351 = vsel %vm3348, %v3328, 0.0
        %v3352 = vsel %vm3349, %v3329, 0.0
        %v3353 = vpack.c.bf16 %v3351, %v3350
        %v3354 = vpack.c.bf16 %v3352, %v3352
        %v3357 = vunpack.c.l.b16 %v3353
        %v3358 = vunpack.c.h.b16 %v3353
        %v3359 = vunpack.c.l.b16 %v3354
        %v3360 = vpack.c.b16 %v3357, %v3357
        %v3361 = vpack.c.b16 %v3358, %v3358
        %v3362 = vpack.c.b16 %v3359, %v3359
        %3366 = vst [vmem:[#allocation3] sm:$0xf] %v3360
        %3367 = vst [vmem:[#allocation3 + $0x4] sm:$0xf] %v3361
        %3368 = vst [vmem:[#allocation3 + $0x8] sm:$0x3] %v3362
        %v3369 = vld [vmem:[#allocation3] sm:$0xf]
        %v3370 = vld [vmem:[#allocation3 + $0x4] sm:$0xf]
        %v3371 = vld [vmem:[#allocation12] sm:$0xf]
        %v3372 = vld [vmem:[#allocation12 + $0x4] sm:$0xf]
        %v3373 = vld [vmem:[#allocation12 + $0x8] sm:$0xf]
        %v3374 = vld [vmem:[#allocation12 + $0xc] sm:$0xf]
        %v3375 = vld [vmem:[#allocation12 + $0x10] sm:$0xf]
        %v3376 = vld [vmem:[#allocation12 + $0x14] sm:$0xf]
        %v3377 = vld [vmem:[#allocation12 + $0x18] sm:$0xf]
        %v3378 = vld [vmem:[#allocation12 + $0x1c] sm:$0xf]
        %v3379 = vld [vmem:[#allocation12 + $0x20] sm:$0xf]
        %v3380 = vld [vmem:[#allocation12 + $0x24] sm:$0xf]
        %v3381 = vld [vmem:[#allocation12 + $0x28] sm:$0xf]
        %v3382 = vld [vmem:[#allocation12 + $0x2c] sm:$0xf]
        %v3383 = vld [vmem:[#allocation12 + $0x30] sm:$0xf]
        %v3384 = vld [vmem:[#allocation12 + $0x34] sm:$0xf]
        %v3385 = vld [vmem:[#allocation12 + $0x38] sm:$0xf]
        %v3386 = vld [vmem:[#allocation12 + $0x3c] sm:$0xf]
        %v3387 = vld [vmem:[#allocation3 + $0x8] sm:$0x1]
        %s3388 = scalar_lea.vmem [#allocation12], 64
        %v3389 = vld [vmem:[%s3388] sm:$0xf]
        %v3390 = vld [vmem:[%s3388 + $0x4] sm:$0xf]
        %v3391 = vld [vmem:[%s3388 + $0x8] sm:$0xf]
        %v3392 = vld [vmem:[%s3388 + $0xc] sm:$0xf]
        %v3393 = vld [vmem:[%s3388 + $0x10] sm:$0xf]
        %v3394 = vld [vmem:[%s3388 + $0x14] sm:$0xf]
        %v3395 = vld [vmem:[%s3388 + $0x18] sm:$0xf]
        %v3396 = vld [vmem:[%s3388 + $0x1c] sm:$0xf]
        %v3397 = vld [vmem:[%s3388 + $0x20] sm:$0xf]
        %v3398 = vld [vmem:[%s3388 + $0x24] sm:$0xf]
        %v3399 = vld [vmem:[%s3388 + $0x28] sm:$0xf]
        %v3400 = vld [vmem:[%s3388 + $0x2c] sm:$0xf]
        %v3401 = vld [vmem:[%s3388 + $0x30] sm:$0xf]
        %v3402 = vld [vmem:[%s3388 + $0x34] sm:$0xf]
        %v3403 = vld [vmem:[%s3388 + $0x38] sm:$0xf]
        %v3404 = vld [vmem:[%s3388 + $0x3c] sm:$0xf]
        %v3408 = vunpack.c.l.b16 %v3369
        %v3409 = vunpack.c.l.b16 %v3370
        %v3410 = vunpack.c.l.b16 %v3387
        %v3411 = vpack.c.b16 %v3409, %v3408
        %v3412 = vpack.c.b16 %v3410, %v3410
        %v3414 = vshrl.u32 %v3411, 16
        %v3416 = vshll.u32 %v3411, 16
        %v3418 = vrot.slane %v3416, 1
        %v3419 = vor.u32 %v3414, %v3418
        %v3421 = vshll.u32 %v3412, 16
        %v3423 = vrot.slane %v3421, 1
        %v3424 = vsel %vm540, %v3419, %v3423
        %v3442 = vunpack.c.l.b16 %v3389
        %v3443 = vunpack.c.l.b16 %v3390
        %v3444 = vunpack.c.l.b16 %v3391
        %v3445 = vunpack.c.l.b16 %v3392
        %v3446 = vunpack.c.l.b16 %v3393
        %v3447 = vunpack.c.l.b16 %v3394
        %v3448 = vunpack.c.l.b16 %v3395
        %v3449 = vunpack.c.l.b16 %v3396
        %v3450 = vunpack.c.l.b16 %v3397
        %v3451 = vunpack.c.l.b16 %v3398
        %v3452 = vunpack.c.l.b16 %v3399
        %v3453 = vunpack.c.l.b16 %v3400
        %v3454 = vunpack.c.l.b16 %v3401
        %v3455 = vunpack.c.l.b16 %v3402
        %v3456 = vunpack.c.l.b16 %v3403
        %v3457 = vunpack.c.l.b16 %v3404
        %v3458 = vpack.c.b16 %v3443, %v3442
        %v3459 = vpack.c.b16 %v3445, %v3444
        %v3460 = vpack.c.b16 %v3447, %v3446
        %v3461 = vpack.c.b16 %v3449, %v3448
        %v3462 = vpack.c.b16 %v3451, %v3450
        %v3463 = vpack.c.b16 %v3453, %v3452
        %v3464 = vpack.c.b16 %v3455, %v3454
        %v3465 = vpack.c.b16 %v3457, %v3456
        %3474 = vmatprep.subr.bf16.mxu0 0
        %3475 = vmatpush1.bf16.msra.mxu0 %v3465
        %3476 = vmatprep.subr.bf16.mxu0 0
        %3477 = vmatpush1.bf16.msra.mxu0 %v3464
        %3478 = vmatprep.subr.bf16.mxu0 0
        %3479 = vmatpush1.bf16.msra.mxu0 %v3463
        %3480 = vmatprep.subr.bf16.mxu0 0
        %3481 = vmatpush1.bf16.msra.mxu0 %v3462
        %3482 = vmatprep.subr.bf16.mxu0 0
        %3483 = vmatpush1.bf16.msra.mxu0 %v3461
        %3484 = vmatprep.subr.bf16.mxu0 0
        %3485 = vmatpush1.bf16.msra.mxu0 %v3460
        %3486 = vmatprep.subr.bf16.mxu0 0
        %3487 = vmatpush1.bf16.msra.mxu0 %v3459
        %3488 = vmatprep.subr.bf16.mxu0 0
        %3489 = vmatpush1.bf16.msra.mxu0 %v3458
        %3490 = vmatprep.subr.bf16.mxu0 0
        %3491 = vmatpush2.bf16.msra.mxu0 0
        %3492 = vmatprep.subr.bf16.mxu0 0
        %3493 = vmatpush2.bf16.msra.mxu0 0
        %3494 = vmatprep.subr.bf16.mxu0 0
        %3495 = vmatpush2.bf16.msra.mxu0 0
        %3496 = vmatprep.subr.bf16.mxu0 0
        %3497 = vmatpush2.bf16.msra.mxu0 0
        %3498 = vmatprep.subr.bf16.mxu0 0
        %3499 = vmatpush2.bf16.msra.mxu0 0
        %3500 = vmatprep.subr.bf16.mxu0 0
        %3501 = vmatpush2.bf16.msra.mxu0 0
        %3502 = vmatprep.subr.bf16.mxu0 0
        %3503 = vmatpush2.bf16.msra.mxu0 0
        %3504 = vmatprep.subr.bf16.mxu0 0
        %3505 = vmatpush2.bf16.msra.mxu0 0
        %3506 = vmatprep.mubr.bf16.mxu0 0
        %3507 = vmatmul.mubr.bf16.gmra.mxu0 %v3424
        %v3508 = vpop.f32.mrf.mxu0
        %v3509 = vadd.f32 0.0, %v3508
        %v3510 = vpop.f32.mrf.mxu0
        %v3511 = vpop.f32.mrf.mxu0
        %v3512 = vadd.f32 0.0, %v3511
        %v3513 = vpop.f32.mrf.mxu0
        %3514 = vdwg.mxu0
        %v3532 = vunpack.c.l.b16 %v3371
        %v3533 = vunpack.c.l.b16 %v3372
        %v3534 = vunpack.c.l.b16 %v3373
        %v3535 = vunpack.c.l.b16 %v3374
        %v3536 = vunpack.c.l.b16 %v3375
        %v3537 = vunpack.c.l.b16 %v3376
        %v3538 = vunpack.c.l.b16 %v3377
        %v3539 = vunpack.c.l.b16 %v3378
        %v3540 = vunpack.c.l.b16 %v3379
        %v3541 = vunpack.c.l.b16 %v3380
        %v3542 = vunpack.c.l.b16 %v3381
        %v3543 = vunpack.c.l.b16 %v3382
        %v3544 = vunpack.c.l.b16 %v3383
        %v3545 = vunpack.c.l.b16 %v3384
        %v3546 = vunpack.c.l.b16 %v3385
        %v3547 = vunpack.c.l.b16 %v3386
        %v3548 = vpack.c.b16 %v3533, %v3532
        %v3549 = vpack.c.b16 %v3535, %v3534
        %v3550 = vpack.c.b16 %v3537, %v3536
        %v3551 = vpack.c.b16 %v3539, %v3538
        %v3552 = vpack.c.b16 %v3541, %v3540
        %v3553 = vpack.c.b16 %v3543, %v3542
        %v3554 = vpack.c.b16 %v3545, %v3544
        %v3555 = vpack.c.b16 %v3547, %v3546
        %3564 = vmatprep.subr.bf16.mxu0 0
        %3565 = vmatpush1.bf16.msra.mxu0 %v3555
        %3566 = vmatprep.subr.bf16.mxu0 0
        %3567 = vmatpush1.bf16.msra.mxu0 %v3554
        %3568 = vmatprep.subr.bf16.mxu0 0
        %3569 = vmatpush1.bf16.msra.mxu0 %v3553
        %3570 = vmatprep.subr.bf16.mxu0 0
        %3571 = vmatpush1.bf16.msra.mxu0 %v3552
        %3572 = vmatprep.subr.bf16.mxu0 0
        %3573 = vmatpush1.bf16.msra.mxu0 %v3551
        %3574 = vmatprep.subr.bf16.mxu0 0
        %3575 = vmatpush1.bf16.msra.mxu0 %v3550
        %3576 = vmatprep.subr.bf16.mxu0 0
        %3577 = vmatpush1.bf16.msra.mxu0 %v3549
        %3578 = vmatprep.subr.bf16.mxu0 0
        %3579 = vmatpush1.bf16.msra.mxu0 %v3548
        %3580 = vmatprep.subr.bf16.mxu0 0
        %3581 = vmatpush2.bf16.msra.mxu0 0
        %3582 = vmatprep.subr.bf16.mxu0 0
        %3583 = vmatpush2.bf16.msra.mxu0 0
        %3584 = vmatprep.subr.bf16.mxu0 0
        %3585 = vmatpush2.bf16.msra.mxu0 0
        %3586 = vmatprep.subr.bf16.mxu0 0
        %3587 = vmatpush2.bf16.msra.mxu0 0
        %3588 = vmatprep.subr.bf16.mxu0 0
        %3589 = vmatpush2.bf16.msra.mxu0 0
        %3590 = vmatprep.subr.bf16.mxu0 0
        %3591 = vmatpush2.bf16.msra.mxu0 0
        %3592 = vmatprep.subr.bf16.mxu0 0
        %3593 = vmatpush2.bf16.msra.mxu0 0
        %3594 = vmatprep.subr.bf16.mxu0 0
        %3595 = vmatpush2.bf16.msra.mxu0 0
        %3596 = vmatprep.mubr.bf16.mxu0 0
        %3597 = vmatmul.mubr.bf16.gmra.mxu0 %v3411
        %v3598 = vpop.f32.mrf.mxu0
        %v3599 = vadd.f32 %v3509, %v3598
        %v3600 = vpop.f32.mrf.mxu0
        %v3601 = vpop.f32.mrf.mxu0
        %v3602 = vadd.f32 %v3512, %v3601
        %v3603 = vpop.f32.mrf.mxu0
        %3604 = vdwg.mxu0
        %v3605 = vld [vmem:[#allocation3] sm:$0xe]
        %s3606 = scalar_lea.vmem [#allocation12], 128
        %v3607 = vld [vmem:[%s3606] sm:$0xf]
        %v3608 = vld [vmem:[%s3606 + $0x4] sm:$0xf]
        %v3609 = vld [vmem:[%s3606 + $0x8] sm:$0xf]
        %v3610 = vld [vmem:[%s3606 + $0xc] sm:$0xf]
        %v3611 = vld [vmem:[%s3606 + $0x10] sm:$0xf]
        %v3612 = vld [vmem:[%s3606 + $0x14] sm:$0xf]
        %v3613 = vld [vmem:[%s3606 + $0x18] sm:$0xf]
        %v3614 = vld [vmem:[%s3606 + $0x1c] sm:$0xf]
        %v3615 = vld [vmem:[%s3606 + $0x20] sm:$0xf]
        %v3616 = vld [vmem:[%s3606 + $0x24] sm:$0xf]
        %v3617 = vld [vmem:[%s3606 + $0x28] sm:$0xf]
        %v3618 = vld [vmem:[%s3606 + $0x2c] sm:$0xf]
        %v3619 = vld [vmem:[%s3606 + $0x30] sm:$0xf]
        %v3620 = vld [vmem:[%s3606 + $0x34] sm:$0xf]
        %v3621 = vld [vmem:[%s3606 + $0x38] sm:$0xf]
        %v3622 = vld [vmem:[%s3606 + $0x3c] sm:$0xf]
        %v3624 = vunpack.c.l.b16 %v3605
        %v3625 = vpack.c.b16 %v3409, %v3624
        %v3626 = vrot.slane %v3625, 1
        %v3627 = vrot.slane %v3412, 1
        %v3628 = vsel %vm780, %v3626, %v3627
        %v3646 = vunpack.c.l.b16 %v3607
        %v3647 = vunpack.c.l.b16 %v3608
        %v3648 = vunpack.c.l.b16 %v3609
        %v3649 = vunpack.c.l.b16 %v3610
        %v3650 = vunpack.c.l.b16 %v3611
        %v3651 = vunpack.c.l.b16 %v3612
        %v3652 = vunpack.c.l.b16 %v3613
        %v3653 = vunpack.c.l.b16 %v3614
        %v3654 = vunpack.c.l.b16 %v3615
        %v3655 = vunpack.c.l.b16 %v3616
        %v3656 = vunpack.c.l.b16 %v3617
        %v3657 = vunpack.c.l.b16 %v3618
        %v3658 = vunpack.c.l.b16 %v3619
        %v3659 = vunpack.c.l.b16 %v3620
        %v3660 = vunpack.c.l.b16 %v3621
        %v3661 = vunpack.c.l.b16 %v3622
        %v3662 = vpack.c.b16 %v3647, %v3646
        %v3663 = vpack.c.b16 %v3649, %v3648
        %v3664 = vpack.c.b16 %v3651, %v3650
        %v3665 = vpack.c.b16 %v3653, %v3652
        %v3666 = vpack.c.b16 %v3655, %v3654
        %v3667 = vpack.c.b16 %v3657, %v3656
        %v3668 = vpack.c.b16 %v3659, %v3658
        %v3669 = vpack.c.b16 %v3661, %v3660
        %3678 = vmatprep.subr.bf16.mxu0 0
        %3679 = vmatpush1.bf16.msra.mxu0 %v3669
        %3680 = vmatprep.subr.bf16.mxu0 0
        %3681 = vmatpush1.bf16.msra.mxu0 %v3668
        %3682 = vmatprep.subr.bf16.mxu0 0
        %3683 = vmatpush1.bf16.msra.mxu0 %v3667
        %3684 = vmatprep.subr.bf16.mxu0 0
        %3685 = vmatpush1.bf16.msra.mxu0 %v3666
        %3686 = vmatprep.subr.bf16.mxu0 0
        %3687 = vmatpush1.bf16.msra.mxu0 %v3665
        %3688 = vmatprep.subr.bf16.mxu0 0
        %3689 = vmatpush1.bf16.msra.mxu0 %v3664
        %3690 = vmatprep.subr.bf16.mxu0 0
        %3691 = vmatpush1.bf16.msra.mxu0 %v3663
        %3692 = vmatprep.subr.bf16.mxu0 0
        %3693 = vmatpush1.bf16.msra.mxu0 %v3662
        %3694 = vmatprep.subr.bf16.mxu0 0
        %3695 = vmatpush2.bf16.msra.mxu0 0
        %3696 = vmatprep.subr.bf16.mxu0 0
        %3697 = vmatpush2.bf16.msra.mxu0 0
        %3698 = vmatprep.subr.bf16.mxu0 0
        %3699 = vmatpush2.bf16.msra.mxu0 0
        %3700 = vmatprep.subr.bf16.mxu0 0
        %3701 = vmatpush2.bf16.msra.mxu0 0
        %3702 = vmatprep.subr.bf16.mxu0 0
        %3703 = vmatpush2.bf16.msra.mxu0 0
        %3704 = vmatprep.subr.bf16.mxu0 0
        %3705 = vmatpush2.bf16.msra.mxu0 0
        %3706 = vmatprep.subr.bf16.mxu0 0
        %3707 = vmatpush2.bf16.msra.mxu0 0
        %3708 = vmatprep.subr.bf16.mxu0 0
        %3709 = vmatpush2.bf16.msra.mxu0 0
        %3710 = vmatprep.mubr.bf16.mxu0 0
        %3711 = vmatmul.mubr.bf16.gmra.mxu0 %v3628
        %v3712 = vpop.f32.mrf.mxu0
        %v3713 = vadd.f32 0.0, %v3712
        %v3714 = vpop.f32.mrf.mxu0
        %v3715 = vpop.f32.mrf.mxu0
        %v3716 = vadd.f32 0.0, %v3715
        %v3717 = vpop.f32.mrf.mxu0
        %3718 = vdwg.mxu0
        %v3719 = vadd.f32 %v3599, %v3713
        %v3720 = vadd.f32 %v3602, %v3716
        %v3721 = vld [vmem:[#allocation3 + $0x8] sm:$0x3]
        %s3722 = scalar_lea.vmem [#allocation12], 192
        %v3723 = vld [vmem:[%s3722] sm:$0xf]
        %v3724 = vld [vmem:[%s3722 + $0x4] sm:$0xf]
        %v3725 = vld [vmem:[%s3722 + $0x8] sm:$0xf]
        %v3726 = vld [vmem:[%s3722 + $0xc] sm:$0xf]
        %v3727 = vld [vmem:[%s3722 + $0x10] sm:$0xf]
        %v3728 = vld [vmem:[%s3722 + $0x14] sm:$0xf]
        %v3729 = vld [vmem:[%s3722 + $0x18] sm:$0xf]
        %v3730 = vld [vmem:[%s3722 + $0x1c] sm:$0xf]
        %v3731 = vld [vmem:[%s3722 + $0x20] sm:$0xf]
        %v3732 = vld [vmem:[%s3722 + $0x24] sm:$0xf]
        %v3733 = vld [vmem:[%s3722 + $0x28] sm:$0xf]
        %v3734 = vld [vmem:[%s3722 + $0x2c] sm:$0xf]
        %v3735 = vld [vmem:[%s3722 + $0x30] sm:$0xf]
        %v3736 = vld [vmem:[%s3722 + $0x34] sm:$0xf]
        %v3737 = vld [vmem:[%s3722 + $0x38] sm:$0xf]
        %v3738 = vld [vmem:[%s3722 + $0x3c] sm:$0xf]
        %v3740 = vunpack.c.l.b16 %v3721
        %v3741 = vpack.c.b16 %v3740, %v3740
        %v3743 = vshrl.u32 %v3625, 16
        %v3745 = vrot.slane %v3743, 1
        %v3746 = vshll.u32 %v3625, 16
        %v3748 = vrot.slane %v3746, 2
        %v3749 = vor.u32 %v3745, %v3748
        %v3751 = vshrl.u32 %v3741, 16
        %v3753 = vrot.slane %v3751, 1
        %v3754 = vshll.u32 %v3741, 16
        %v3756 = vrot.slane %v3754, 2
        %v3757 = vor.u32 %v3753, %v3756
        %v3758 = vsel %vm910, %v3749, %v3757
        %v3776 = vunpack.c.l.b16 %v3723
        %v3777 = vunpack.c.l.b16 %v3724
        %v3778 = vunpack.c.l.b16 %v3725
        %v3779 = vunpack.c.l.b16 %v3726
        %v3780 = vunpack.c.l.b16 %v3727
        %v3781 = vunpack.c.l.b16 %v3728
        %v3782 = vunpack.c.l.b16 %v3729
        %v3783 = vunpack.c.l.b16 %v3730
        %v3784 = vunpack.c.l.b16 %v3731
        %v3785 = vunpack.c.l.b16 %v3732
        %v3786 = vunpack.c.l.b16 %v3733
        %v3787 = vunpack.c.l.b16 %v3734
        %v3788 = vunpack.c.l.b16 %v3735
        %v3789 = vunpack.c.l.b16 %v3736
        %v3790 = vunpack.c.l.b16 %v3737
        %v3791 = vunpack.c.l.b16 %v3738
        %v3792 = vpack.c.b16 %v3777, %v3776
        %v3793 = vpack.c.b16 %v3779, %v3778
        %v3794 = vpack.c.b16 %v3781, %v3780
        %v3795 = vpack.c.b16 %v3783, %v3782
        %v3796 = vpack.c.b16 %v3785, %v3784
        %v3797 = vpack.c.b16 %v3787, %v3786
        %v3798 = vpack.c.b16 %v3789, %v3788
        %v3799 = vpack.c.b16 %v3791, %v3790
        %3808 = vmatprep.subr.bf16.mxu0 0
        %3809 = vmatpush1.bf16.msra.mxu0 %v3799
        %3810 = vmatprep.subr.bf16.mxu0 0
        %3811 = vmatpush1.bf16.msra.mxu0 %v3798
        %3812 = vmatprep.subr.bf16.mxu0 0
        %3813 = vmatpush1.bf16.msra.mxu0 %v3797
        %3814 = vmatprep.subr.bf16.mxu0 0
        %3815 = vmatpush1.bf16.msra.mxu0 %v3796
        %3816 = vmatprep.subr.bf16.mxu0 0
        %3817 = vmatpush1.bf16.msra.mxu0 %v3795
        %3818 = vmatprep.subr.bf16.mxu0 0
        %3819 = vmatpush1.bf16.msra.mxu0 %v3794
        %3820 = vmatprep.subr.bf16.mxu0 0
        %3821 = vmatpush1.bf16.msra.mxu0 %v3793
        %3822 = vmatprep.subr.bf16.mxu0 0
        %3823 = vmatpush1.bf16.msra.mxu0 %v3792
        %3824 = vmatprep.subr.bf16.mxu0 0
        %3825 = vmatpush2.bf16.msra.mxu0 0
        %3826 = vmatprep.subr.bf16.mxu0 0
        %3827 = vmatpush2.bf16.msra.mxu0 0
        %3828 = vmatprep.subr.bf16.mxu0 0
        %3829 = vmatpush2.bf16.msra.mxu0 0
        %3830 = vmatprep.subr.bf16.mxu0 0
        %3831 = vmatpush2.bf16.msra.mxu0 0
        %3832 = vmatprep.subr.bf16.mxu0 0
        %3833 = vmatpush2.bf16.msra.mxu0 0
        %3834 = vmatprep.subr.bf16.mxu0 0
        %3835 = vmatpush2.bf16.msra.mxu0 0
        %3836 = vmatprep.subr.bf16.mxu0 0
        %3837 = vmatpush2.bf16.msra.mxu0 0
        %3838 = vmatprep.subr.bf16.mxu0 0
        %3839 = vmatpush2.bf16.msra.mxu0 0
        %3840 = vmatprep.mubr.bf16.mxu0 0
        %3841 = vmatmul.mubr.bf16.gmra.mxu0 %v3758
        %v3842 = vpop.f32.mrf.mxu0
        %v3843 = vadd.f32 0.0, %v3842
        %v3844 = vpop.f32.mrf.mxu0
        %v3845 = vpop.f32.mrf.mxu0
        %v3846 = vadd.f32 0.0, %v3845
        %v3847 = vpop.f32.mrf.mxu0
        %3848 = vdwg.mxu0
        %v3849 = vadd.f32 %v3719, %v3843
        %v3850 = vadd.f32 %v3720, %v3846
        %v3851 = vld [vmem:[#allocation3] sm:$0xc]
        %s3852 = scalar_lea.vmem [#allocation12], 256
        %v3853 = vld [vmem:[%s3852] sm:$0xf]
        %v3854 = vld [vmem:[%s3852 + $0x4] sm:$0xf]
        %v3855 = vld [vmem:[%s3852 + $0x8] sm:$0xf]
        %v3856 = vld [vmem:[%s3852 + $0xc] sm:$0xf]
        %v3857 = vld [vmem:[%s3852 + $0x10] sm:$0xf]
        %v3858 = vld [vmem:[%s3852 + $0x14] sm:$0xf]
        %v3859 = vld [vmem:[%s3852 + $0x18] sm:$0xf]
        %v3860 = vld [vmem:[%s3852 + $0x1c] sm:$0xf]
        %v3861 = vld [vmem:[%s3852 + $0x20] sm:$0xf]
        %v3862 = vld [vmem:[%s3852 + $0x24] sm:$0xf]
        %v3863 = vld [vmem:[%s3852 + $0x28] sm:$0xf]
        %v3864 = vld [vmem:[%s3852 + $0x2c] sm:$0xf]
        %v3865 = vld [vmem:[%s3852 + $0x30] sm:$0xf]
        %v3866 = vld [vmem:[%s3852 + $0x34] sm:$0xf]
        %v3867 = vld [vmem:[%s3852 + $0x38] sm:$0xf]
        %v3868 = vld [vmem:[%s3852 + $0x3c] sm:$0xf]
        %v3870 = vunpack.c.l.b16 %v3851
        %v3871 = vpack.c.b16 %v3409, %v3870
        %v3872 = vrot.slane %v3871, 2
        %v3873 = vrot.slane %v3741, 2
        %v3874 = vsel %vm1056, %v3872, %v3873
        %v3892 = vunpack.c.l.b16 %v3853
        %v3893 = vunpack.c.l.b16 %v3854
        %v3894 = vunpack.c.l.b16 %v3855
        %v3895 = vunpack.c.l.b16 %v3856
        %v3896 = vunpack.c.l.b16 %v3857
        %v3897 = vunpack.c.l.b16 %v3858
        %v3898 = vunpack.c.l.b16 %v3859
        %v3899 = vunpack.c.l.b16 %v3860
        %v3900 = vunpack.c.l.b16 %v3861
        %v3901 = vunpack.c.l.b16 %v3862
        %v3902 = vunpack.c.l.b16 %v3863
        %v3903 = vunpack.c.l.b16 %v3864
        %v3904 = vunpack.c.l.b16 %v3865
        %v3905 = vunpack.c.l.b16 %v3866
        %v3906 = vunpack.c.l.b16 %v3867
        %v3907 = vunpack.c.l.b16 %v3868
        %v3908 = vpack.c.b16 %v3893, %v3892
        %v3909 = vpack.c.b16 %v3895, %v3894
        %v3910 = vpack.c.b16 %v3897, %v3896
        %v3911 = vpack.c.b16 %v3899, %v3898
        %v3912 = vpack.c.b16 %v3901, %v3900
        %v3913 = vpack.c.b16 %v3903, %v3902
        %v3914 = vpack.c.b16 %v3905, %v3904
        %v3915 = vpack.c.b16 %v3907, %v3906
        %3924 = vmatprep.subr.bf16.mxu0 0
        %3925 = vmatpush1.bf16.msra.mxu0 %v3915
        %3926 = vmatprep.subr.bf16.mxu0 0
        %3927 = vmatpush1.bf16.msra.mxu0 %v3914
        %3928 = vmatprep.subr.bf16.mxu0 0
        %3929 = vmatpush1.bf16.msra.mxu0 %v3913
        %3930 = vmatprep.subr.bf16.mxu0 0
        %3931 = vmatpush1.bf16.msra.mxu0 %v3912
        %3932 = vmatprep.subr.bf16.mxu0 0
        %3933 = vmatpush1.bf16.msra.mxu0 %v3911
        %3934 = vmatprep.subr.bf16.mxu0 0
        %3935 = vmatpush1.bf16.msra.mxu0 %v3910
        %3936 = vmatprep.subr.bf16.mxu0 0
        %3937 = vmatpush1.bf16.msra.mxu0 %v3909
        %3938 = vmatprep.subr.bf16.mxu0 0
        %3939 = vmatpush1.bf16.msra.mxu0 %v3908
        %3940 = vmatprep.subr.bf16.mxu0 0
        %3941 = vmatpush2.bf16.msra.mxu0 0
        %3942 = vmatprep.subr.bf16.mxu0 0
        %3943 = vmatpush2.bf16.msra.mxu0 0
        %3944 = vmatprep.subr.bf16.mxu0 0
        %3945 = vmatpush2.bf16.msra.mxu0 0
        %3946 = vmatprep.subr.bf16.mxu0 0
        %3947 = vmatpush2.bf16.msra.mxu0 0
        %3948 = vmatprep.subr.bf16.mxu0 0
        %3949 = vmatpush2.bf16.msra.mxu0 0
        %3950 = vmatprep.subr.bf16.mxu0 0
        %3951 = vmatpush2.bf16.msra.mxu0 0
        %3952 = vmatprep.subr.bf16.mxu0 0
        %3953 = vmatpush2.bf16.msra.mxu0 0
        %3954 = vmatprep.subr.bf16.mxu0 0
        %3955 = vmatpush2.bf16.msra.mxu0 0
        %3956 = vmatprep.mubr.bf16.mxu0 0
        %3957 = vmatmul.mubr.bf16.gmra.mxu0 %v3874
        %v3958 = vpop.f32.mrf.mxu0
        %v3959 = vadd.f32 0.0, %v3958
        %v3960 = vpop.f32.mrf.mxu0
        %v3961 = vpop.f32.mrf.mxu0
        %v3962 = vadd.f32 0.0, %v3961
        %v3963 = vpop.f32.mrf.mxu0
        %3964 = vdwg.mxu0
        %v3965 = vadd.f32 %v3849, %v3959
        %v3966 = vadd.f32 %v3850, %v3962
        %v3967 = vld [vmem:[%s10] sm:$0x1]
        %v3969 = vlaneseq
        %v3970 = vshrl.u32 %v3969, 7
        %v3971 = vsub.s32 0, %v3970
        %v3972 = vrot.slane %v3967, %v3971
        %v3974 = vadd.f32 %v3965, %v3972
        %v3975 = vadd.f32 %v3966, %v3972
        %3976 = vst [vmem:[%s476] sm:$0xff] %v3974
        %3977 = vst [vmem:[%s476 + $0x8] sm:$0xff] %v3975
        %s3978 = sand.u32 %s288, 1
        %s3979 = scalar_lea.sflag [#allocation6], %s3978
        %s3980 = sand.u32 %s288, 1
        %s3981 = smul.addr %s3980, 16
        %s3982 = scalar_lea.vmem [#allocation13], %s3981
        // Predicated region
        $region85: #{tpu_custom_call.1} parent=63 // pred_check
          %p3983 = pneg %p298
        $region86: #{tpu_custom_call.1} parent=63 // pred_check_branch
          %3985 = sbr.rel (%p3983) target = $region88
        $region87: #{tpu_custom_call.1} parent=63 // pred_region
          %s3986 = smul.u32 2, %s33
          %s3988 = ssub.s32 256, 256
          %3989 = vsyncadd %s3979, %s3988
          %s3990 = smul.addr %s32, 4
          %s3991 = sadd.s32 %s3986, %s3990
          %s3992 = smul.addr %s3991, 128
          %s3993 = scalar_lea.hbm %s11, %s3992
          %s3994 = sshll.u32 %s3982, 4
          %s3995 = int_to_ptr.vmem [resolvable:$true] %s3994
          %4000 = dma.vmem_to_hbm [thread:$0]  %s3995, 256, %s3993, %s3979, 128, 128, 8
        $region88: #{tpu_custom_call.1} parent=63 // pred_fallthru
          _
      $region64: #{tpu_custom_call.1} parent=5 // pred_fallthru
        _
      %p4001 = scmp.le.s32.totalorder 2, %s23
      // Predicated region
      $region89: #{tpu_custom_call.1} parent=5 // pred_check
        %p4002 = pneg %p4001
      $region90: #{tpu_custom_call.1} parent=5 // pred_check_branch
        %4004 = sbr.rel (%p4002) target = $region92
      $region91: #{tpu_custom_call.1} parent=5 // pred_region
        %s4005 = ssub.s32 %s23, 2
        // Predicated region
        $region93: #{tpu_custom_call.1} parent=91 // pred_check
          %p4006 = pneg %p304
        $region94: #{tpu_custom_call.1} parent=91 // pred_check_branch
          %4008 = sbr.rel (%p4006) target = $region96
        $region95: #{tpu_custom_call.1} parent=91 // pred_region
          %s4009 = sand.u32 %s289, 1
          %s4010 = scalar_lea.sflag [#allocation6], %s4009
          %s4011 = sand.u32 %s289, 1
          %s4012 = smul.addr %s4011, 16
          %s4013 = scalar_lea.vmem [#allocation13], %s4012
          %4014 = dma.done %s4010, 256
        $region96: #{tpu_custom_call.1} parent=91 // pred_fallthru
          _
      $region92: #{tpu_custom_call.1} parent=5 // pred_fallthru
        _
    $region6: #{tpu_custom_call.1} parent=1 // loop_footer
      %s27 = sadd.s32 1, %s23
    $region7: #{tpu_custom_call.1} parent=1 // loop_footer_branch
      %22 = sbr.rel target = $region3
    $region8: #{tpu_custom_call.1} parent=1 // loop_exit
      _
    %4015 = vsyncpa [#allocation5], 1
    %s4016 = scalar_lea.sflag [#allocation5], 1
    %4017 = vsyncpa %s4016, 1
    %4018 = vsyncpa [#allocation8], 1
    %4019 = vsyncpa [#allocation11], 1
    %4020 = vsyncpa [#allocation6], 1
    %s4021 = scalar_lea.sflag [#allocation6], 1
    %4022 = vsyncpa %s4021, 1

</llo_original>
